<compile_context>
chip_gen: v6e
topology: v6e:2x2x1
jax: 0.10.0
libtpu: 0.0.40
codegen_flags: <defaults>
</compile_context>

<pallas_src>
import functools

import jax
import jax.numpy as jnp
from jax.experimental import pallas as pl
from jax.experimental.pallas import tpu as pltpu


# ------------------------------ fused kernel -------------------------------

def _mygnn_kernel(patches_ref, w1_ref, w2_hbm, sel_ref, wd_hbm, bias_ref,
                  adj_ref, nx_ref,
                  s1w_ref, s2w_ref, s3w_ref, l1w_ref, l2w_ref,
                  o_ref,
                  act_ref, xg_ref, w2_vmem, wd_vmem, sem, *, a):
    """Whole MyGnn forward in VMEM.

    patches_ref: (176, 80) f32  conv1 im2col on the 16-wide grid (dj-folded)
    w1_ref     : (80, 768) bf16 block-diag conv1 weight
    w2_hbm     : (3, 768, 128) bf16 conv2 weight (HBM, manual DMA)
    sel_ref    : (88, 144) bf16 0/1: row q=t*8+g picks grid row (q//9)*16+q%9
    wd_hbm     : (1408, 512) bf16 permuted map-lin weight (HBM, manual DMA)
    bias_ref   : (1, 1792) f32  packed biases (128-lane slots)
    adj_ref    : (N, N) f32 row-normalized (mean) adjacency
    nx_ref     : (N, in_pad) f32 node features (K padded to mult. of 8)
    o_ref      : (N, out) f32  softmax output
    """
    f32, bf16 = jnp.float32, jnp.bfloat16

    # Kick off the two big weight DMAs immediately; conv1 / conv2 / SAGE
    # compute runs while they are in flight.
    w2_cp = pltpu.make_async_copy(w2_hbm, w2_vmem, sem.at[0])
    wd_cp = pltpu.make_async_copy(wd_hbm, wd_vmem, sem.at[1])
    w2_cp.start()
    wd_cp.start()

    # packed biases (zero-initialised but kept for torch semantics)
    b1t = bias_ref[:, 0:768]          # conv1 bias tiled x3 (dj-folded)
    b2 = bias_ref[:, 768:896]         # conv2 bias
    mlb = bias_ref[:, 896:896 + l1w_ref.shape[0]]   # map-lin bias (1, enc)
    s1b = bias_ref[:, 1024:1280]
    s2b = bias_ref[:, 1280:1408]
    s3b = bias_ref[:, 1408:1408 + s3w_ref.shape[1]]
    l1b = bias_ref[:, 1536:1536 + l1w_ref.shape[1]]
    l2b = bias_ref[:, 1664:1664 + l2w_ref.shape[1]]

    # ---- MapEncoder conv1: one im2col MXU matmul per 48/32-row chunk -------
    # act_ref[r, dj*256+c] = relu(conv1)(row r//16, col r%16 + dj, channel c)
    for r0, rs in ((0, 48), (48, 48), (96, 48), (144, 32)):
        blk = jnp.dot(patches_ref[r0:r0 + rs, :].astype(bf16), w1_ref[...],
                      preferred_element_type=f32)
        act_ref[r0:r0 + rs, :] = jnp.maximum(blk + b1t, 0.0).astype(bf16)

    # ---- conv2: dj folded into K, 3 aligned (start 0/16/32) 144-row windows
    w2_cp.wait()
    acc2 = jnp.zeros((144, 128), f32)
    for di in range(3):
        acc2 = acc2 + jnp.dot(act_ref[di * 16:di * 16 + 144, :], w2_vmem[di],
                              preferred_element_type=f32)
    y = jnp.maximum(acc2 + b2, 0.0).astype(bf16)                   # (144, 128)

    # ---- select the 81 valid positions and pack the GEMV LHS (8, 1408) ----
    # xg[g, t*128 + c] = conv2_out(spatial q = t*8 + g, channel c)  (0 if q>80)
    sel_y = jnp.dot(sel_ref[...], y, preferred_element_type=f32)   # (88, 128)
    for t in range(11):
        xg_ref[:, t * 128:(t + 1) * 128] = sel_y[t * 8:(t + 1) * 8, :].astype(bf16)

    # ---- NodeEncoder: 3x SAGEConv(mean): lin_l(adj @ h) + lin_r(h) + b -----
    adj = adj_ref[...].astype(bf16)
    h = nx_ref[...].astype(bf16)

    t1 = jnp.dot(h, s1w_ref[...], preferred_element_type=f32)      # (N, 512)
    h = jnp.maximum(jnp.dot(adj, t1[:, :256].astype(bf16),
                            preferred_element_type=f32) + t1[:, 256:] + s1b,
                    0.0).astype(bf16)

    t2 = jnp.dot(h, s2w_ref[...], preferred_element_type=f32)      # (N, 256)
    h = jnp.maximum(jnp.dot(adj, t2[:, :128].astype(bf16),
                            preferred_element_type=f32) + t2[:, 128:] + s2b,
                    0.0).astype(bf16)

    agg = jnp.dot(adj, h, preferred_element_type=f32).astype(bf16)  # (N, 128)
    ne = jnp.dot(jnp.concatenate([agg, h], axis=1), s3w_ref[...],
                 preferred_element_type=f32) + s3b                  # (N, enc)

    # ---- map-lin GEMV in chunked form (the 1.44 MB weight DMA ends here) ---
    wd_cp.wait()
    r_mat = jnp.dot(xg_ref[...], wd_vmem[...],
                    preferred_element_type=f32)                     # (8, 8*enc)
    enc = r_mat.shape[1] // 8
    me = r_mat[0:1, 0:enc]
    for g in range(1, 8):
        me = me + r_mat[g:g + 1, g * enc:(g + 1) * enc]
    me = me + mlb                                                   # (1, enc)

    # ---- head: global min/max norm, 0.35/0.65 blend, MLP, softmax(dim=1) ---
    def norm(v):
        mn = jnp.min(v, keepdims=True)
        mx = jnp.max(v, keepdims=True)
        # exact division (matches torch; no epsilon, like the reference)
        return (v - mn) / (mx - mn)

    xh = (a * norm(ne) + (1.0 - a) * norm(me)).astype(bf16)         # (N, enc)
    hh = jnp.maximum(
        jnp.dot(xh, l1w_ref[...], preferred_element_type=f32) + l1b,
        0.0).astype(bf16)
    logits = jnp.dot(hh, l2w_ref[...], preferred_element_type=f32) + l2b
    logits = logits - jnp.max(logits, axis=-1, keepdims=True)
    e = jnp.exp(logits)
    o_ref[...] = (e / jnp.sum(e, axis=-1, keepdims=True)).astype(o_ref.dtype)


def mygnn_pallas(patches, node_x, adj, p, a=0.35):
    n_nodes = node_x.shape[0]
    out_dim = p["l2w"].shape[1]
    vm = pl.BlockSpec(memory_space=pltpu.MemorySpace.VMEM)
    hbm = pl.BlockSpec(memory_space=pl.ANY)
    operands = (patches, p["w1bd"], p["w2f"], p["sel"], p["wd"],
                p["bias_pack"], adj, node_x,
                p["s1w"], p["s2w"], p["s3w"], p["l1w"], p["l2w"])
    in_specs = [vm, vm, hbm, vm, hbm, vm, vm, vm, vm, vm, vm, vm, vm]
    return pl.pallas_call(
        functools.partial(_mygnn_kernel, a=a),
        out_shape=jax.ShapeDtypeStruct((n_nodes, out_dim), jnp.float32),
        in_specs=in_specs,
        out_specs=vm,
        scratch_shapes=[
            pltpu.VMEM((176, 768), jnp.bfloat16),      # conv1 acts (dj-folded)
            pltpu.VMEM((8, 1408), jnp.bfloat16),       # chunked map-GEMV LHS
            pltpu.VMEM((3, 768, 128), jnp.bfloat16),   # conv2 weight (DMA dst)
            pltpu.VMEM((1408, 512), jnp.bfloat16),     # map-lin weight (DMA dst)
            pltpu.SemaphoreType.DMA((2,)),
        ],
    )(*operands)


# ------------------------------- JAX wrapper --------------------------------

def _build_conv1_patches(map_img):
    """(176, 80) f32 im2col on the 16-wide grid, dj shift folded into K.

    patches[r, dj*25 + ki*5 + kj] = img[r//16 + ki, r%16 + dj + kj]
    (zero when the column runs past the 15-wide image; those rows only feed
     never-selected conv2 positions). Columns 75..79 are zero K-padding.
    """
    img = map_img.reshape(15, 15).astype(jnp.float32)
    imgp = jnp.pad(img, ((0, 0), (0, 7)))                     # (15, 22)
    r = jnp.arange(176)
    i, j = r // 16, r % 16
    ki = jnp.arange(5)
    kj = jnp.arange(5)
    dj = jnp.arange(3)
    rows = jnp.broadcast_to(i[:, None, None, None] + ki[None, None, :, None],
                            (176, 3, 5, 5))
    cols = (j[:, None, None, None] + dj[None, :, None, None]
            + kj[None, None, None, :])
    patches = imgp[rows, cols].reshape(176, 75)
    return jnp.pad(patches, ((0, 0), (0, 5)))                 # (176, 80)


def build_mean_adj(edge_index, num_nodes):
    """Dense row-normalized adjacency: A[i, j] = (# edges j->i) / in_deg(i)."""
    src, dst = edge_index[0], edge_index[1]
    A = jnp.zeros((num_nodes, num_nodes), jnp.float32)
    A = A.at[dst, src].add(1.0)
    deg = A.sum(axis=1, keepdims=True)
    return A / jnp.maximum(deg, 1.0)


@jax.jit
def my_gnn_forward(p, node_x, adj, map_img):
    # TODO(synk): if map_img is static across calls, hoist the whole map
    # branch (conv + map-lin GEMV) out of the hot path and cache `me` (1, 64).
    patches = _build_conv1_patches(map_img)                   # tiny XLA gather
    pad = (-node_x.shape[1]) % 8
    node_x = jnp.pad(node_x, ((0, 0), (0, pad)))
    return mygnn_pallas(patches, node_x, adj, p, a=0.35)


# --------------------------- deterministic params ---------------------------

def init_params(key, in_channel, out_channel, encode_size=64):
    ks = jax.random.split(key, 12)
    bf16 = jnp.bfloat16

    def nrm(k, shape, scale=0.05):
        return (scale * jax.random.normal(k, shape)).astype(jnp.float32)

    p = {}
    in_pad = -(-in_channel // 8) * 8

    # NodeEncoder (SAGEConv, mean aggr). (in, out) layout; layers 1-2 keep
    # [lin_l | lin_r] concatenated on the output dim, layer 3 stacks them on
    # the input dim so the kernel does concat([agg, h]) @ s3w.
    w1l, w1r = nrm(ks[0], (in_channel, 256)), nrm(ks[1], (in_channel, 256))
    s1w = jnp.concatenate([w1l, w1r], axis=1)
    p["s1w"] = jnp.pad(s1w, ((0, in_pad - in_channel), (0, 0))).astype(bf16)
    w2l, w2r = nrm(ks[2], (256, 128)), nrm(ks[3], (256, 128))
    p["s2w"] = jnp.concatenate([w2l, w2r], axis=1).astype(bf16)    # (256, 256)
    w3l, w3r = nrm(ks[4], (128, encode_size)), nrm(ks[5], (128, encode_size))
    p["s3w"] = jnp.concatenate([w3l, w3r], axis=0).astype(bf16)    # (256, enc)

    # MapEncoder conv1: block-diagonal over the 3 folded dj shifts.
    w1 = nrm(ks[6], (25, 256))          # w1[ki*5+kj, c] == conv1.weight[c,0,ki,kj]
    w1bd = jnp.zeros((80, 768), jnp.float32)
    for dj in range(3):
        w1bd = w1bd.at[dj * 25:(dj + 1) * 25, dj * 256:(dj + 1) * 256].set(w1)
    p["w1bd"] = w1bd.astype(bf16)

    # conv2: w2f[di, dj*256+ci, co] == conv2.weight[co, ci, di, dj]
    p["w2f"] = nrm(ks[7], (3, 768, 128)).astype(bf16)

    # map lin, chunked layout: wd[t*128+c, g*enc+o] == lin.weight[o, c*81+(t*8+g)]
    wmap = nrm(ks[8], (81, 128, encode_size), scale=0.01)
    wpad = jnp.zeros((88, 128, encode_size), jnp.float32).at[:81].set(wmap)
    p["wd"] = (wpad.reshape(11, 8, 128, encode_size)
               .transpose(0, 2, 1, 3)
               .reshape(11 * 128, 8 * encode_size).astype(bf16))   # (1408, 512)

    # 0/1 selection: row q = t*8+g (q <= 80) picks conv2 grid row (q//9)*16+q%9
    q = jnp.arange(81)
    sel = jnp.zeros((88, 144), jnp.float32).at[q, (q // 9) * 16 + q % 9].set(1.0)
    p["sel"] = sel.astype(bf16)

    # head
    p["l1w"] = nrm(ks[9], (encode_size, 64)).astype(bf16)
    p["l2w"] = nrm(ks[10], (64, out_channel)).astype(bf16)

    # packed biases (zero-init, 128-lane slots):
    #  [0:768) conv1(x3) | [768:896) conv2 | [896:1024) map-lin |
    #  [1024:1280) sage1 | [1280:1408) sage2 | [1408:1536) sage3 |
    #  [1536:1664) lin1  | [1664:1792) lin2
    p["bias_pack"] = jnp.zeros((1, 1792), jnp.float32)
    return p


# ---------------------------------- main ------------------------------------

if __name__ == "__main__":
    key = jax.random.PRNGKey(0)
    k_params, k_x, k_src, k_dst, k_img = jax.random.split(key, 5)

    N_NODES, IN_CH, OUT_CH, ENC = 16, 4, 3, 64
    N_EDGES = 40

    params = init_params(k_params, IN_CH, OUT_CH, ENC)

    node_x = jax.random.normal(k_x, (N_NODES, IN_CH), jnp.float32)
    src = jax.random.randint(k_src, (N_EDGES,), 0, N_NODES)
    dst = jax.random.randint(k_dst, (N_EDGES,), 0, N_NODES)
    edge_index = jnp.stack([src, dst])                 # (2, E), source -> target
    adj = build_mean_adj(edge_index, N_NODES)

    # MapEncoder requires a 15x15 input so flatten(conv output) == 10368.
    map_img = jax.random.normal(k_img, (1, 1, 15, 15), jnp.float32)

    out = my_gnn_forward(params, node_x, adj, map_img)
    out = jax.block_until_ready(out)

    assert out.shape == (N_NODES, OUT_CH), out.shape
    assert bool(jnp.all(jnp.isfinite(out)))
    # rows of a softmax must sum to 1
    assert bool(jnp.allclose(out.sum(axis=1), 1.0, atol=1e-4))
    print("KERNEL_OK")
</pallas_src>

<mosaic_0001>
module attributes {stable_mosaic.version = 11 : i64} {
  func.func @_mygnn_kernel(%arg0: memref<176x80xf32, #tpu.memory_space<vmem>>, %arg1: memref<80x768xbf16, #tpu.memory_space<vmem>>, %arg2: memref<3x768x128xbf16, #tpu.memory_space<any>>, %arg3: memref<88x144xbf16, #tpu.memory_space<vmem>>, %arg4: memref<1408x512xbf16, #tpu.memory_space<any>>, %arg5: memref<1x1792xf32, #tpu.memory_space<vmem>>, %arg6: memref<16x16xf32, #tpu.memory_space<vmem>>, %arg7: memref<16x8xf32, #tpu.memory_space<vmem>>, %arg8: memref<8x512xbf16, #tpu.memory_space<vmem>>, %arg9: memref<256x256xbf16, #tpu.memory_space<vmem>>, %arg10: memref<256x64xbf16, #tpu.memory_space<vmem>>, %arg11: memref<64x64xbf16, #tpu.memory_space<vmem>>, %arg12: memref<64x3xbf16, #tpu.memory_space<vmem>>, %arg13: memref<16x3xf32, #tpu.memory_space<vmem>>, %arg14: memref<176x768xbf16, #tpu.memory_space<vmem>>, %arg15: memref<8x1408xbf16, #tpu.memory_space<vmem>>, %arg16: memref<3x768x128xbf16, #tpu.memory_space<vmem>>, %arg17: memref<1408x512xbf16, #tpu.memory_space<vmem>>, %arg18: memref<2x!tpu.dma_semaphore, #tpu.memory_space<semaphore_mem>>) attributes {dimension_semantics = [], scalar_prefetch = 0 : i64, scratch_operands = 5 : i64, tpu.core_type = #tpu.core_type<tc>} {
    %c0_i32 = arith.constant 0 : i32
    %0 = tpu.memref_slice %arg18[%c0_i32] : memref<2x!tpu.dma_semaphore, #tpu.memory_space<semaphore_mem>> -> memref<1x!tpu.dma_semaphore, #tpu.memory_space<semaphore_mem>>
    %1 = tpu.memref_squeeze %0 : memref<1x!tpu.dma_semaphore, #tpu.memory_space<semaphore_mem>> -> memref<!tpu.dma_semaphore, #tpu.memory_space<semaphore_mem>>
    tpu.enqueue_dma source(%arg2 : memref<3x768x128xbf16, #tpu.memory_space<any>>) target(%arg16 : memref<3x768x128xbf16, #tpu.memory_space<vmem>>) target_semaphore(%1 : memref<!tpu.dma_semaphore, #tpu.memory_space<semaphore_mem>>)
    %c1_i32 = arith.constant 1 : i32
    %2 = tpu.memref_slice %arg18[%c1_i32] : memref<2x!tpu.dma_semaphore, #tpu.memory_space<semaphore_mem>> -> memref<1x!tpu.dma_semaphore, #tpu.memory_space<semaphore_mem>>
    %3 = tpu.memref_squeeze %2 : memref<1x!tpu.dma_semaphore, #tpu.memory_space<semaphore_mem>> -> memref<!tpu.dma_semaphore, #tpu.memory_space<semaphore_mem>>
    tpu.enqueue_dma source(%arg4 : memref<1408x512xbf16, #tpu.memory_space<any>>) target(%arg17 : memref<1408x512xbf16, #tpu.memory_space<vmem>>) target_semaphore(%3 : memref<!tpu.dma_semaphore, #tpu.memory_space<semaphore_mem>>)
    %c0 = arith.constant 0 : index
    %c0_0 = arith.constant 0 : index
    %4 = vector.load %arg5[%c0, %c0_0] : memref<1x1792xf32, #tpu.memory_space<vmem>>, vector<1x768xf32>
    %c0_1 = arith.constant 0 : index
    %c768 = arith.constant 768 : index
    %5 = vector.load %arg5[%c0_1, %c768] : memref<1x1792xf32, #tpu.memory_space<vmem>>, vector<1x128xf32>
    %c0_2 = arith.constant 0 : index
    %c896 = arith.constant 896 : index
    %6 = vector.load %arg5[%c0_2, %c896] : memref<1x1792xf32, #tpu.memory_space<vmem>>, vector<1x64xf32>
    %c0_3 = arith.constant 0 : index
    %c1024 = arith.constant 1024 : index
    %7 = vector.load %arg5[%c0_3, %c1024] : memref<1x1792xf32, #tpu.memory_space<vmem>>, vector<1x256xf32>
    %c0_4 = arith.constant 0 : index
    %c1280 = arith.constant 1280 : index
    %8 = vector.load %arg5[%c0_4, %c1280] : memref<1x1792xf32, #tpu.memory_space<vmem>>, vector<1x128xf32>
    %c0_5 = arith.constant 0 : index
    %c1408 = arith.constant 1408 : index
    %9 = vector.load %arg5[%c0_5, %c1408] : memref<1x1792xf32, #tpu.memory_space<vmem>>, vector<1x64xf32>
    %c0_6 = arith.constant 0 : index
    %c1536 = arith.constant 1536 : index
    %10 = vector.load %arg5[%c0_6, %c1536] : memref<1x1792xf32, #tpu.memory_space<vmem>>, vector<1x64xf32>
    %c0_7 = arith.constant 0 : index
    %c1664 = arith.constant 1664 : index
    %11 = vector.load %arg5[%c0_7, %c1664] : memref<1x1792xf32, #tpu.memory_space<vmem>>, vector<1x3xf32>
    %c0_8 = arith.constant 0 : index
    %c0_9 = arith.constant 0 : index
    %12 = vector.load %arg0[%c0_8, %c0_9] : memref<176x80xf32, #tpu.memory_space<vmem>>, vector<48x80xf32>
    %13 = arith.truncf %12 : vector<48x80xf32> to vector<48x80xbf16>
    %c0_10 = arith.constant 0 : index
    %c0_11 = arith.constant 0 : index
    %14 = vector.load %arg1[%c0_10, %c0_11] : memref<80x768xbf16, #tpu.memory_space<vmem>>, vector<80x768xbf16>
    %cst = arith.constant dense<0.000000e+00> : vector<48x768xf32>
    %15 = tpu.matmul %13, %14, %cst {dimension_numbers = #tpu.dot_dimension_numbers<[1], [0], [0], [1], [0, 0, 1, 1], [], []>} : vector<48x80xbf16>, vector<80x768xbf16>, vector<48x768xf32> -> vector<48x768xf32>
    %16 = vector.broadcast %4 : vector<1x768xf32> to vector<48x768xf32>
    %17 = arith.addf %15, %16 : vector<48x768xf32>
    %cst_12 = arith.constant 0.000000e+00 : f32
    %18 = vector.broadcast %cst_12 : f32 to vector<48x768xf32>
    %19 = arith.maximumf %17, %18 : vector<48x768xf32>
    %20 = arith.truncf %19 : vector<48x768xf32> to vector<48x768xbf16>
    %c0_13 = arith.constant 0 : index
    %c0_14 = arith.constant 0 : index
    %21 = vector.load %arg14[%c0_13, %c0_14] : memref<176x768xbf16, #tpu.memory_space<vmem>>, vector<48x768xbf16>
    tpu.vector_store %arg14[%c0_13, %c0_14], %20 {strides = array<i32>} : memref<176x768xbf16, #tpu.memory_space<vmem>>, vector<48x768xbf16>,
    %c48 = arith.constant 48 : index
    %c0_15 = arith.constant 0 : index
    %22 = vector.load %arg0[%c48, %c0_15] : memref<176x80xf32, #tpu.memory_space<vmem>>, vector<48x80xf32>
    %23 = arith.truncf %22 : vector<48x80xf32> to vector<48x80xbf16>
    %c0_16 = arith.constant 0 : index
    %c0_17 = arith.constant 0 : index
    %24 = vector.load %arg1[%c0_16, %c0_17] : memref<80x768xbf16, #tpu.memory_space<vmem>>, vector<80x768xbf16>
    %cst_18 = arith.constant dense<0.000000e+00> : vector<48x768xf32>
    %25 = tpu.matmul %23, %24, %cst_18 {dimension_numbers = #tpu.dot_dimension_numbers<[1], [0], [0], [1], [0, 0, 1, 1], [], []>} : vector<48x80xbf16>, vector<80x768xbf16>, vector<48x768xf32> -> vector<48x768xf32>
    %26 = vector.broadcast %4 : vector<1x768xf32> to vector<48x768xf32>
    %27 = arith.addf %25, %26 : vector<48x768xf32>
    %cst_19 = arith.constant 0.000000e+00 : f32
    %28 = vector.broadcast %cst_19 : f32 to vector<48x768xf32>
    %29 = arith.maximumf %27, %28 : vector<48x768xf32>
    %30 = arith.truncf %29 : vector<48x768xf32> to vector<48x768xbf16>
    %c48_20 = arith.constant 48 : index
    %c0_21 = arith.constant 0 : index
    %31 = vector.load %arg14[%c48_20, %c0_21] : memref<176x768xbf16, #tpu.memory_space<vmem>>, vector<48x768xbf16>
    tpu.vector_store %arg14[%c48_20, %c0_21], %30 {strides = array<i32>} : memref<176x768xbf16, #tpu.memory_space<vmem>>, vector<48x768xbf16>,
    %c96 = arith.constant 96 : index
    %c0_22 = arith.constant 0 : index
    %32 = vector.load %arg0[%c96, %c0_22] : memref<176x80xf32, #tpu.memory_space<vmem>>, vector<48x80xf32>
    %33 = arith.truncf %32 : vector<48x80xf32> to vector<48x80xbf16>
    %c0_23 = arith.constant 0 : index
    %c0_24 = arith.constant 0 : index
    %34 = vector.load %arg1[%c0_23, %c0_24] : memref<80x768xbf16, #tpu.memory_space<vmem>>, vector<80x768xbf16>
    %cst_25 = arith.constant dense<0.000000e+00> : vector<48x768xf32>
    %35 = tpu.matmul %33, %34, %cst_25 {dimension_numbers = #tpu.dot_dimension_numbers<[1], [0], [0], [1], [0, 0, 1, 1], [], []>} : vector<48x80xbf16>, vector<80x768xbf16>, vector<48x768xf32> -> vector<48x768xf32>
    %36 = vector.broadcast %4 : vector<1x768xf32> to vector<48x768xf32>
    %37 = arith.addf %35, %36 : vector<48x768xf32>
    %cst_26 = arith.constant 0.000000e+00 : f32
    %38 = vector.broadcast %cst_26 : f32 to vector<48x768xf32>
    %39 = arith.maximumf %37, %38 : vector<48x768xf32>
    %40 = arith.truncf %39 : vector<48x768xf32> to vector<48x768xbf16>
    %c96_27 = arith.constant 96 : index
    %c0_28 = arith.constant 0 : index
    %41 = vector.load %arg14[%c96_27, %c0_28] : memref<176x768xbf16, #tpu.memory_space<vmem>>, vector<48x768xbf16>
    tpu.vector_store %arg14[%c96_27, %c0_28], %40 {strides = array<i32>} : memref<176x768xbf16, #tpu.memory_space<vmem>>, vector<48x768xbf16>,
    %c144 = arith.constant 144 : index
    %c0_29 = arith.constant 0 : index
    %42 = vector.load %arg0[%c144, %c0_29] : memref<176x80xf32, #tpu.memory_space<vmem>>, vector<32x80xf32>
    %43 = arith.truncf %42 : vector<32x80xf32> to vector<32x80xbf16>
    %c0_30 = arith.constant 0 : index
    %c0_31 = arith.constant 0 : index
    %44 = vector.load %arg1[%c0_30, %c0_31] : memref<80x768xbf16, #tpu.memory_space<vmem>>, vector<80x768xbf16>
    %cst_32 = arith.constant dense<0.000000e+00> : vector<32x768xf32>
    %45 = tpu.matmul %43, %44, %cst_32 {dimension_numbers = #tpu.dot_dimension_numbers<[1], [0], [0], [1], [0, 0, 1, 1], [], []>} : vector<32x80xbf16>, vector<80x768xbf16>, vector<32x768xf32> -> vector<32x768xf32>
    %46 = vector.broadcast %4 : vector<1x768xf32> to vector<32x768xf32>
    %47 = arith.addf %45, %46 : vector<32x768xf32>
    %cst_33 = arith.constant 0.000000e+00 : f32
    %48 = vector.broadcast %cst_33 : f32 to vector<32x768xf32>
    %49 = arith.maximumf %47, %48 : vector<32x768xf32>
    %50 = arith.truncf %49 : vector<32x768xf32> to vector<32x768xbf16>
    %c144_34 = arith.constant 144 : index
    %c0_35 = arith.constant 0 : index
    %51 = vector.load %arg14[%c144_34, %c0_35] : memref<176x768xbf16, #tpu.memory_space<vmem>>, vector<32x768xbf16>
    tpu.vector_store %arg14[%c144_34, %c0_35], %50 {strides = array<i32>} : memref<176x768xbf16, #tpu.memory_space<vmem>>, vector<32x768xbf16>,
    %c0_i32_36 = arith.constant 0 : i32
    %52 = tpu.memref_slice %arg18[%c0_i32_36] : memref<2x!tpu.dma_semaphore, #tpu.memory_space<semaphore_mem>> -> memref<1x!tpu.dma_semaphore, #tpu.memory_space<semaphore_mem>>
    %53 = tpu.memref_squeeze %52 : memref<1x!tpu.dma_semaphore, #tpu.memory_space<semaphore_mem>> -> memref<!tpu.dma_semaphore, #tpu.memory_space<semaphore_mem>>
    tpu.wait_dma2 semaphore(%53 : memref<!tpu.dma_semaphore, #tpu.memory_space<semaphore_mem>>) src(%arg2 : memref<3x768x128xbf16, #tpu.memory_space<any>>) dst(%arg16 : memref<3x768x128xbf16, #tpu.memory_space<vmem>>)
    %cst_37 = arith.constant 0.000000e+00 : f32
    %54 = vector.broadcast %cst_37 : f32 to vector<144x128xf32>
    %c0_38 = arith.constant 0 : index
    %c0_39 = arith.constant 0 : index
    %55 = vector.load %arg14[%c0_38, %c0_39] : memref<176x768xbf16, #tpu.memory_space<vmem>>, vector<144x768xbf16>
    %c0_40 = arith.constant 0 : index
    %c0_41 = arith.constant 0 : index
    %c0_42 = arith.constant 0 : index
    %56 = vector.load %arg16[%c0_40, %c0_41, %c0_42] : memref<3x768x128xbf16, #tpu.memory_space<vmem>>, vector<1x768x128xbf16>
    %57 = vector.shape_cast %56 : vector<1x768x128xbf16> to vector<768x128xbf16>
    %cst_43 = arith.constant dense<0.000000e+00> : vector<144x128xf32>
    %58 = tpu.matmul %55, %57, %cst_43 {dimension_numbers = #tpu.dot_dimension_numbers<[1], [0], [0], [1], [0, 0, 1, 1], [], []>} : vector<144x768xbf16>, vector<768x128xbf16>, vector<144x128xf32> -> vector<144x128xf32>
    %59 = arith.addf %54, %58 : vector<144x128xf32>
    %c16 = arith.constant 16 : index
    %c0_44 = arith.constant 0 : index
    %60 = vector.load %arg14[%c16, %c0_44] : memref<176x768xbf16, #tpu.memory_space<vmem>>, vector<144x768xbf16>
    %c1 = arith.constant 1 : index
    %c0_45 = arith.constant 0 : index
    %c0_46 = arith.constant 0 : index
    %61 = vector.load %arg16[%c1, %c0_45, %c0_46] : memref<3x768x128xbf16, #tpu.memory_space<vmem>>, vector<1x768x128xbf16>
    %62 = vector.shape_cast %61 : vector<1x768x128xbf16> to vector<768x128xbf16>
    %cst_47 = arith.constant dense<0.000000e+00> : vector<144x128xf32>
    %63 = tpu.matmul %60, %62, %cst_47 {dimension_numbers = #tpu.dot_dimension_numbers<[1], [0], [0], [1], [0, 0, 1, 1], [], []>} : vector<144x768xbf16>, vector<768x128xbf16>, vector<144x128xf32> -> vector<144x128xf32>
    %64 = arith.addf %59, %63 : vector<144x128xf32>
    %c32 = arith.constant 32 : index
    %c0_48 = arith.constant 0 : index
    %65 = vector.load %arg14[%c32, %c0_48] : memref<176x768xbf16, #tpu.memory_space<vmem>>, vector<144x768xbf16>
    %c2 = arith.constant 2 : index
    %c0_49 = arith.constant 0 : index
    %c0_50 = arith.constant 0 : index
    %66 = vector.load %arg16[%c2, %c0_49, %c0_50] : memref<3x768x128xbf16, #tpu.memory_space<vmem>>, vector<1x768x128xbf16>
    %67 = vector.shape_cast %66 : vector<1x768x128xbf16> to vector<768x128xbf16>
    %cst_51 = arith.constant dense<0.000000e+00> : vector<144x128xf32>
    %68 = tpu.matmul %65, %67, %cst_51 {dimension_numbers = #tpu.dot_dimension_numbers<[1], [0], [0], [1], [0, 0, 1, 1], [], []>} : vector<144x768xbf16>, vector<768x128xbf16>, vector<144x128xf32> -> vector<144x128xf32>
    %69 = arith.addf %64, %68 : vector<144x128xf32>
    %70 = vector.broadcast %5 : vector<1x128xf32> to vector<144x128xf32>
    %71 = arith.addf %69, %70 : vector<144x128xf32>
    %cst_52 = arith.constant 0.000000e+00 : f32
    %72 = vector.broadcast %cst_52 : f32 to vector<144x128xf32>
    %73 = arith.maximumf %71, %72 : vector<144x128xf32>
    %74 = arith.truncf %73 : vector<144x128xf32> to vector<144x128xbf16>
    %c0_53 = arith.constant 0 : index
    %c0_54 = arith.constant 0 : index
    %75 = vector.load %arg3[%c0_53, %c0_54] : memref<88x144xbf16, #tpu.memory_space<vmem>>, vector<88x144xbf16>
    %cst_55 = arith.constant dense<0.000000e+00> : vector<88x128xf32>
    %76 = tpu.matmul %75, %74, %cst_55 {dimension_numbers = #tpu.dot_dimension_numbers<[1], [0], [0], [1], [0, 0, 1, 1], [], []>} : vector<88x144xbf16>, vector<144x128xbf16>, vector<88x128xf32> -> vector<88x128xf32>
    %77 = vector.extract_strided_slice %76 {offsets = [0, 0], sizes = [8, 128], strides = [1, 1]} : vector<88x128xf32> to vector<8x128xf32>
    %78 = arith.truncf %77 : vector<8x128xf32> to vector<8x128xbf16>
    %c0_56 = arith.constant 0 : index
    %c0_57 = arith.constant 0 : index
    %79 = vector.load %arg15[%c0_56, %c0_57] : memref<8x1408xbf16, #tpu.memory_space<vmem>>, vector<8x128xbf16>
    tpu.vector_store %arg15[%c0_56, %c0_57], %78 {strides = array<i32>} : memref<8x1408xbf16, #tpu.memory_space<vmem>>, vector<8x128xbf16>,
    %80 = vector.extract_strided_slice %76 {offsets = [8, 0], sizes = [8, 128], strides = [1, 1]} : vector<88x128xf32> to vector<8x128xf32>
    %81 = arith.truncf %80 : vector<8x128xf32> to vector<8x128xbf16>
    %c0_58 = arith.constant 0 : index
    %c128 = arith.constant 128 : index
    %82 = vector.load %arg15[%c0_58, %c128] : memref<8x1408xbf16, #tpu.memory_space<vmem>>, vector<8x128xbf16>
    tpu.vector_store %arg15[%c0_58, %c128], %81 {strides = array<i32>} : memref<8x1408xbf16, #tpu.memory_space<vmem>>, vector<8x128xbf16>,
    %83 = vector.extract_strided_slice %76 {offsets = [16, 0], sizes = [8, 128], strides = [1, 1]} : vector<88x128xf32> to vector<8x128xf32>
    %84 = arith.truncf %83 : vector<8x128xf32> to vector<8x128xbf16>
    %c0_59 = arith.constant 0 : index
    %c256 = arith.constant 256 : index
    %85 = vector.load %arg15[%c0_59, %c256] : memref<8x1408xbf16, #tpu.memory_space<vmem>>, vector<8x128xbf16>
    tpu.vector_store %arg15[%c0_59, %c256], %84 {strides = array<i32>} : memref<8x1408xbf16, #tpu.memory_space<vmem>>, vector<8x128xbf16>,
    %86 = vector.extract_strided_slice %76 {offsets = [24, 0], sizes = [8, 128], strides = [1, 1]} : vector<88x128xf32> to vector<8x128xf32>
    %87 = arith.truncf %86 : vector<8x128xf32> to vector<8x128xbf16>
    %c0_60 = arith.constant 0 : index
    %c384 = arith.constant 384 : index
    %88 = vector.load %arg15[%c0_60, %c384] : memref<8x1408xbf16, #tpu.memory_space<vmem>>, vector<8x128xbf16>
    tpu.vector_store %arg15[%c0_60, %c384], %87 {strides = array<i32>} : memref<8x1408xbf16, #tpu.memory_space<vmem>>, vector<8x128xbf16>,
    %89 = vector.extract_strided_slice %76 {offsets = [32, 0], sizes = [8, 128], strides = [1, 1]} : vector<88x128xf32> to vector<8x128xf32>
    %90 = arith.truncf %89 : vector<8x128xf32> to vector<8x128xbf16>
    %c0_61 = arith.constant 0 : index
    %c512 = arith.constant 512 : index
    %91 = vector.load %arg15[%c0_61, %c512] : memref<8x1408xbf16, #tpu.memory_space<vmem>>, vector<8x128xbf16>
    tpu.vector_store %arg15[%c0_61, %c512], %90 {strides = array<i32>} : memref<8x1408xbf16, #tpu.memory_space<vmem>>, vector<8x128xbf16>,
    %92 = vector.extract_strided_slice %76 {offsets = [40, 0], sizes = [8, 128], strides = [1, 1]} : vector<88x128xf32> to vector<8x128xf32>
    %93 = arith.truncf %92 : vector<8x128xf32> to vector<8x128xbf16>
    %c0_62 = arith.constant 0 : index
    %c640 = arith.constant 640 : index
    %94 = vector.load %arg15[%c0_62, %c640] : memref<8x1408xbf16, #tpu.memory_space<vmem>>, vector<8x128xbf16>
    tpu.vector_store %arg15[%c0_62, %c640], %93 {strides = array<i32>} : memref<8x1408xbf16, #tpu.memory_space<vmem>>, vector<8x128xbf16>,
    %95 = vector.extract_strided_slice %76 {offsets = [48, 0], sizes = [8, 128], strides = [1, 1]} : vector<88x128xf32> to vector<8x128xf32>
    %96 = arith.truncf %95 : vector<8x128xf32> to vector<8x128xbf16>
    %c0_63 = arith.constant 0 : index
    %c768_64 = arith.constant 768 : index
    %97 = vector.load %arg15[%c0_63, %c768_64] : memref<8x1408xbf16, #tpu.memory_space<vmem>>, vector<8x128xbf16>
    tpu.vector_store %arg15[%c0_63, %c768_64], %96 {strides = array<i32>} : memref<8x1408xbf16, #tpu.memory_space<vmem>>, vector<8x128xbf16>,
    %98 = vector.extract_strided_slice %76 {offsets = [56, 0], sizes = [8, 128], strides = [1, 1]} : vector<88x128xf32> to vector<8x128xf32>
    %99 = arith.truncf %98 : vector<8x128xf32> to vector<8x128xbf16>
    %c0_65 = arith.constant 0 : index
    %c896_66 = arith.constant 896 : index
    %100 = vector.load %arg15[%c0_65, %c896_66] : memref<8x1408xbf16, #tpu.memory_space<vmem>>, vector<8x128xbf16>
    tpu.vector_store %arg15[%c0_65, %c896_66], %99 {strides = array<i32>} : memref<8x1408xbf16, #tpu.memory_space<vmem>>, vector<8x128xbf16>,
    %101 = vector.extract_strided_slice %76 {offsets = [64, 0], sizes = [8, 128], strides = [1, 1]} : vector<88x128xf32> to vector<8x128xf32>
    %102 = arith.truncf %101 : vector<8x128xf32> to vector<8x128xbf16>
    %c0_67 = arith.constant 0 : index
    %c1024_68 = arith.constant 1024 : index
    %103 = vector.load %arg15[%c0_67, %c1024_68] : memref<8x1408xbf16, #tpu.memory_space<vmem>>, vector<8x128xbf16>
    tpu.vector_store %arg15[%c0_67, %c1024_68], %102 {strides = array<i32>} : memref<8x1408xbf16, #tpu.memory_space<vmem>>, vector<8x128xbf16>,
    %104 = vector.extract_strided_slice %76 {offsets = [72, 0], sizes = [8, 128], strides = [1, 1]} : vector<88x128xf32> to vector<8x128xf32>
    %105 = arith.truncf %104 : vector<8x128xf32> to vector<8x128xbf16>
    %c0_69 = arith.constant 0 : index
    %c1152 = arith.constant 1152 : index
    %106 = vector.load %arg15[%c0_69, %c1152] : memref<8x1408xbf16, #tpu.memory_space<vmem>>, vector<8x128xbf16>
    tpu.vector_store %arg15[%c0_69, %c1152], %105 {strides = array<i32>} : memref<8x1408xbf16, #tpu.memory_space<vmem>>, vector<8x128xbf16>,
    %107 = vector.extract_strided_slice %76 {offsets = [80, 0], sizes = [8, 128], strides = [1, 1]} : vector<88x128xf32> to vector<8x128xf32>
    %108 = arith.truncf %107 : vector<8x128xf32> to vector<8x128xbf16>
    %c0_70 = arith.constant 0 : index
    %c1280_71 = arith.constant 1280 : index
    %109 = vector.load %arg15[%c0_70, %c1280_71] : memref<8x1408xbf16, #tpu.memory_space<vmem>>, vector<8x128xbf16>
    tpu.vector_store %arg15[%c0_70, %c1280_71], %108 {strides = array<i32>} : memref<8x1408xbf16, #tpu.memory_space<vmem>>, vector<8x128xbf16>,
    %c0_72 = arith.constant 0 : index
    %c0_73 = arith.constant 0 : index
    %110 = vector.load %arg6[%c0_72, %c0_73] : memref<16x16xf32, #tpu.memory_space<vmem>>, vector<16x16xf32>
    %111 = arith.truncf %110 : vector<16x16xf32> to vector<16x16xbf16>
    %c0_74 = arith.constant 0 : index
    %c0_75 = arith.constant 0 : index
    %112 = vector.load %arg7[%c0_74, %c0_75] : memref<16x8xf32, #tpu.memory_space<vmem>>, vector<16x8xf32>
    %113 = arith.truncf %112 : vector<16x8xf32> to vector<16x8xbf16>
    %c0_76 = arith.constant 0 : index
    %c0_77 = arith.constant 0 : index
    %114 = vector.load %arg8[%c0_76, %c0_77] : memref<8x512xbf16, #tpu.memory_space<vmem>>, vector<8x512xbf16>
    %cst_78 = arith.constant dense<0.000000e+00> : vector<16x512xf32>
    %115 = tpu.matmul %113, %114, %cst_78 {dimension_numbers = #tpu.dot_dimension_numbers<[1], [0], [0], [1], [0, 0, 1, 1], [], []>} : vector<16x8xbf16>, vector<8x512xbf16>, vector<16x512xf32> -> vector<16x512xf32>
    %116 = vector.extract_strided_slice %115 {offsets = [0, 0], sizes = [16, 256], strides = [1, 1]} : vector<16x512xf32> to vector<16x256xf32>
    %117 = arith.truncf %116 : vector<16x256xf32> to vector<16x256xbf16>
    %cst_79 = arith.constant dense<0.000000e+00> : vector<16x256xf32>
    %118 = tpu.matmul %111, %117, %cst_79 {dimension_numbers = #tpu.dot_dimension_numbers<[1], [0], [0], [1], [0, 0, 1, 1], [], []>} : vector<16x16xbf16>, vector<16x256xbf16>, vector<16x256xf32> -> vector<16x256xf32>
    %119 = vector.extract_strided_slice %115 {offsets = [0, 256], sizes = [16, 256], strides = [1, 1]} : vector<16x512xf32> to vector<16x256xf32>
    %120 = arith.addf %118, %119 : vector<16x256xf32>
    %121 = vector.broadcast %7 : vector<1x256xf32> to vector<16x256xf32>
    %122 = arith.addf %120, %121 : vector<16x256xf32>
    %cst_80 = arith.constant 0.000000e+00 : f32
    %123 = vector.broadcast %cst_80 : f32 to vector<16x256xf32>
    %124 = arith.maximumf %122, %123 : vector<16x256xf32>
    %125 = arith.truncf %124 : vector<16x256xf32> to vector<16x256xbf16>
    %c0_81 = arith.constant 0 : index
    %c0_82 = arith.constant 0 : index
    %126 = vector.load %arg9[%c0_81, %c0_82] : memref<256x256xbf16, #tpu.memory_space<vmem>>, vector<256x256xbf16>
    %cst_83 = arith.constant dense<0.000000e+00> : vector<16x256xf32>
    %127 = tpu.matmul %125, %126, %cst_83 {dimension_numbers = #tpu.dot_dimension_numbers<[1], [0], [0], [1], [0, 0, 1, 1], [], []>} : vector<16x256xbf16>, vector<256x256xbf16>, vector<16x256xf32> -> vector<16x256xf32>
    %128 = vector.extract_strided_slice %127 {offsets = [0, 0], sizes = [16, 128], strides = [1, 1]} : vector<16x256xf32> to vector<16x128xf32>
    %129 = arith.truncf %128 : vector<16x128xf32> to vector<16x128xbf16>
    %cst_84 = arith.constant dense<0.000000e+00> : vector<16x128xf32>
    %130 = tpu.matmul %111, %129, %cst_84 {dimension_numbers = #tpu.dot_dimension_numbers<[1], [0], [0], [1], [0, 0, 1, 1], [], []>} : vector<16x16xbf16>, vector<16x128xbf16>, vector<16x128xf32> -> vector<16x128xf32>
    %131 = vector.extract_strided_slice %127 {offsets = [0, 128], sizes = [16, 128], strides = [1, 1]} : vector<16x256xf32> to vector<16x128xf32>
    %132 = arith.addf %130, %131 : vector<16x128xf32>
    %133 = vector.broadcast %8 : vector<1x128xf32> to vector<16x128xf32>
    %134 = arith.addf %132, %133 : vector<16x128xf32>
    %cst_85 = arith.constant 0.000000e+00 : f32
    %135 = vector.broadcast %cst_85 : f32 to vector<16x128xf32>
    %136 = arith.maximumf %134, %135 : vector<16x128xf32>
    %137 = arith.truncf %136 : vector<16x128xf32> to vector<16x128xbf16>
    %cst_86 = arith.constant dense<0.000000e+00> : vector<16x128xf32>
    %138 = tpu.matmul %111, %137, %cst_86 {dimension_numbers = #tpu.dot_dimension_numbers<[1], [0], [0], [1], [0, 0, 1, 1], [], []>} : vector<16x16xbf16>, vector<16x128xbf16>, vector<16x128xf32> -> vector<16x128xf32>
    %139 = arith.truncf %138 : vector<16x128xf32> to vector<16x128xbf16>
    %140 = tpu.concatenate %139, %137 in 1 : vector<16x128xbf16>, vector<16x128xbf16> -> vector<16x256xbf16>
    %c0_87 = arith.constant 0 : index
    %c0_88 = arith.constant 0 : index
    %141 = vector.load %arg10[%c0_87, %c0_88] : memref<256x64xbf16, #tpu.memory_space<vmem>>, vector<256x64xbf16>
    %cst_89 = arith.constant dense<0.000000e+00> : vector<16x64xf32>
    %142 = tpu.matmul %140, %141, %cst_89 {dimension_numbers = #tpu.dot_dimension_numbers<[1], [0], [0], [1], [0, 0, 1, 1], [], []>} : vector<16x256xbf16>, vector<256x64xbf16>, vector<16x64xf32> -> vector<16x64xf32>
    %143 = vector.broadcast %9 : vector<1x64xf32> to vector<16x64xf32>
    %144 = arith.addf %142, %143 : vector<16x64xf32>
    %c1_i32_90 = arith.constant 1 : i32
    %145 = tpu.memref_slice %arg18[%c1_i32_90] : memref<2x!tpu.dma_semaphore, #tpu.memory_space<semaphore_mem>> -> memref<1x!tpu.dma_semaphore, #tpu.memory_space<semaphore_mem>>
    %146 = tpu.memref_squeeze %145 : memref<1x!tpu.dma_semaphore, #tpu.memory_space<semaphore_mem>> -> memref<!tpu.dma_semaphore, #tpu.memory_space<semaphore_mem>>
    tpu.wait_dma2 semaphore(%146 : memref<!tpu.dma_semaphore, #tpu.memory_space<semaphore_mem>>) src(%arg4 : memref<1408x512xbf16, #tpu.memory_space<any>>) dst(%arg17 : memref<1408x512xbf16, #tpu.memory_space<vmem>>)
    %c0_91 = arith.constant 0 : index
    %c0_92 = arith.constant 0 : index
    %147 = vector.load %arg15[%c0_91, %c0_92] : memref<8x1408xbf16, #tpu.memory_space<vmem>>, vector<8x1408xbf16>
    %c0_93 = arith.constant 0 : index
    %c0_94 = arith.constant 0 : index
    %148 = vector.load %arg17[%c0_93, %c0_94] : memref<1408x512xbf16, #tpu.memory_space<vmem>>, vector<1408x512xbf16>
    %cst_95 = arith.constant dense<0.000000e+00> : vector<8x512xf32>
    %149 = tpu.matmul %147, %148, %cst_95 {dimension_numbers = #tpu.dot_dimension_numbers<[1], [0], [0], [1], [0, 0, 1, 1], [], []>} : vector<8x1408xbf16>, vector<1408x512xbf16>, vector<8x512xf32> -> vector<8x512xf32>
    %150 = vector.extract_strided_slice %149 {offsets = [0, 0], sizes = [1, 64], strides = [1, 1]} : vector<8x512xf32> to vector<1x64xf32>
    %151 = vector.extract_strided_slice %149 {offsets = [1, 64], sizes = [1, 64], strides = [1, 1]} : vector<8x512xf32> to vector<1x64xf32>
    %152 = arith.addf %150, %151 : vector<1x64xf32>
    %153 = vector.extract_strided_slice %149 {offsets = [2, 128], sizes = [1, 64], strides = [1, 1]} : vector<8x512xf32> to vector<1x64xf32>
    %154 = arith.addf %152, %153 : vector<1x64xf32>
    %155 = vector.extract_strided_slice %149 {offsets = [3, 192], sizes = [1, 64], strides = [1, 1]} : vector<8x512xf32> to vector<1x64xf32>
    %156 = arith.addf %154, %155 : vector<1x64xf32>
    %157 = vector.extract_strided_slice %149 {offsets = [4, 256], sizes = [1, 64], strides = [1, 1]} : vector<8x512xf32> to vector<1x64xf32>
    %158 = arith.addf %156, %157 : vector<1x64xf32>
    %159 = vector.extract_strided_slice %149 {offsets = [5, 320], sizes = [1, 64], strides = [1, 1]} : vector<8x512xf32> to vector<1x64xf32>
    %160 = arith.addf %158, %159 : vector<1x64xf32>
    %161 = vector.extract_strided_slice %149 {offsets = [6, 384], sizes = [1, 64], strides = [1, 1]} : vector<8x512xf32> to vector<1x64xf32>
    %162 = arith.addf %160, %161 : vector<1x64xf32>
    %163 = vector.extract_strided_slice %149 {offsets = [7, 448], sizes = [1, 64], strides = [1, 1]} : vector<8x512xf32> to vector<1x64xf32>
    %164 = arith.addf %162, %163 : vector<1x64xf32>
    %165 = arith.addf %164, %6 : vector<1x64xf32>
    %166 = vector.shape_cast %144 : vector<16x64xf32> to vector<1x16x64xf32>
    %cst_96 = arith.constant dense<0x7F800000> : vector<1xf32>
    %167 = vector.multi_reduction <minimumf>, %166, %cst_96 [1, 2] : vector<1x16x64xf32> to vector<1xf32>
    %168 = vector.shape_cast %167 : vector<1xf32> to vector<1x1x1xf32>
    %169 = vector.extract %168[0, 0, 0] : f32 from vector<1x1x1xf32>
    %170 = vector.broadcast %169 : f32 to vector<1x1xf32>
    %171 = vector.shape_cast %144 : vector<16x64xf32> to vector<1x16x64xf32>
    %cst_97 = arith.constant dense<0xFF800000> : vector<1xf32>
    %172 = vector.multi_reduction <maximumf>, %171, %cst_97 [1, 2] : vector<1x16x64xf32> to vector<1xf32>
    %173 = vector.shape_cast %172 : vector<1xf32> to vector<1x1x1xf32>
    %174 = vector.extract %173[0, 0, 0] : f32 from vector<1x1x1xf32>
    %175 = vector.broadcast %174 : f32 to vector<1x1xf32>
    %176 = vector.broadcast %170 : vector<1x1xf32> to vector<16x64xf32>
    %177 = arith.subf %144, %176 : vector<16x64xf32>
    %178 = arith.subf %175, %170 : vector<1x1xf32>
    %179 = vector.broadcast %178 : vector<1x1xf32> to vector<16x64xf32>
    %180 = arith.divf %177, %179 : vector<16x64xf32>
    %cst_98 = arith.constant 3.500000e-01 : f32
    %181 = vector.broadcast %cst_98 : f32 to vector<16x64xf32>
    %182 = arith.mulf %181, %180 : vector<16x64xf32>
    %183 = vector.shape_cast %165 : vector<1x64xf32> to vector<1x1x64xf32>
    %cst_99 = arith.constant dense<0x7F800000> : vector<1xf32>
    %184 = vector.multi_reduction <minimumf>, %183, %cst_99 [1, 2] : vector<1x1x64xf32> to vector<1xf32>
    %185 = vector.shape_cast %184 : vector<1xf32> to vector<1x1x1xf32>
    %186 = vector.extract %185[0, 0, 0] : f32 from vector<1x1x1xf32>
    %187 = vector.broadcast %186 : f32 to vector<1x1xf32>
    %188 = vector.shape_cast %165 : vector<1x64xf32> to vector<1x1x64xf32>
    %cst_100 = arith.constant dense<0xFF800000> : vector<1xf32>
    %189 = vector.multi_reduction <maximumf>, %188, %cst_100 [1, 2] : vector<1x1x64xf32> to vector<1xf32>
    %190 = vector.shape_cast %189 : vector<1xf32> to vector<1x1x1xf32>
    %191 = vector.extract %190[0, 0, 0] : f32 from vector<1x1x1xf32>
    %192 = vector.broadcast %191 : f32 to vector<1x1xf32>
    %193 = vector.broadcast %187 : vector<1x1xf32> to vector<1x64xf32>
    %194 = arith.subf %165, %193 : vector<1x64xf32>
    %195 = arith.subf %192, %187 : vector<1x1xf32>
    %196 = vector.broadcast %195 : vector<1x1xf32> to vector<1x64xf32>
    %197 = arith.divf %194, %196 : vector<1x64xf32>
    %cst_101 = arith.constant 6.500000e-01 : f32
    %198 = vector.broadcast %cst_101 : f32 to vector<1x64xf32>
    %199 = arith.mulf %198, %197 : vector<1x64xf32>
    %200 = vector.broadcast %199 : vector<1x64xf32> to vector<16x64xf32>
    %201 = arith.addf %182, %200 : vector<16x64xf32>
    %202 = arith.truncf %201 : vector<16x64xf32> to vector<16x64xbf16>
    %c0_102 = arith.constant 0 : index
    %c0_103 = arith.constant 0 : index
    %203 = vector.load %arg11[%c0_102, %c0_103] : memref<64x64xbf16, #tpu.memory_space<vmem>>, vector<64x64xbf16>
    %cst_104 = arith.constant dense<0.000000e+00> : vector<16x64xf32>
    %204 = tpu.matmul %202, %203, %cst_104 {dimension_numbers = #tpu.dot_dimension_numbers<[1], [0], [0], [1], [0, 0, 1, 1], [], []>} : vector<16x64xbf16>, vector<64x64xbf16>, vector<16x64xf32> -> vector<16x64xf32>
    %205 = vector.broadcast %10 : vector<1x64xf32> to vector<16x64xf32>
    %206 = arith.addf %204, %205 : vector<16x64xf32>
    %cst_105 = arith.constant 0.000000e+00 : f32
    %207 = vector.broadcast %cst_105 : f32 to vector<16x64xf32>
    %208 = arith.maximumf %206, %207 : vector<16x64xf32>
    %209 = arith.truncf %208 : vector<16x64xf32> to vector<16x64xbf16>
    %c0_106 = arith.constant 0 : index
    %c0_107 = arith.constant 0 : index
    %210 = vector.load %arg12[%c0_106, %c0_107] : memref<64x3xbf16, #tpu.memory_space<vmem>>, vector<64x3xbf16>
    %cst_108 = arith.constant dense<0.000000e+00> : vector<16x3xf32>
    %211 = tpu.matmul %209, %210, %cst_108 {dimension_numbers = #tpu.dot_dimension_numbers<[1], [0], [0], [1], [0, 0, 1, 1], [], []>} : vector<16x64xbf16>, vector<64x3xbf16>, vector<16x3xf32> -> vector<16x3xf32>
    %212 = vector.broadcast %11 : vector<1x3xf32> to vector<16x3xf32>
    %213 = arith.addf %211, %212 : vector<16x3xf32>
    %cst_109 = arith.constant dense<0xFF800000> : vector<16xf32>
    %214 = vector.multi_reduction <maximumf>, %213, %cst_109 [1] : vector<16x3xf32> to vector<16xf32>
    %215 = vector.shape_cast %214 : vector<16xf32> to vector<16x1xf32>
    %216 = vector.broadcast %215 : vector<16x1xf32> to vector<16x3xf32>
    %217 = arith.subf %213, %216 : vector<16x3xf32>
    %218 = math.exp %217 : vector<16x3xf32>
    %cst_110 = arith.constant dense<0.000000e+00> : vector<16xf32>
    %219 = vector.multi_reduction <add>, %218, %cst_110 [1] : vector<16x3xf32> to vector<16xf32>
    %220 = vector.shape_cast %219 : vector<16xf32> to vector<16x1xf32>
    %221 = vector.broadcast %220 : vector<16x1xf32> to vector<16x3xf32>
    %222 = arith.divf %218, %221 : vector<16x3xf32>
    %c0_111 = arith.constant 0 : index
    %c0_112 = arith.constant 0 : index
    %223 = vector.load %arg13[%c0_111, %c0_112] : memref<16x3xf32, #tpu.memory_space<vmem>>, vector<16x3xf32>
    tpu.vector_store %arg13[%c0_111, %c0_112], %222 {strides = array<i32>} : memref<16x3xf32, #tpu.memory_space<vmem>>, vector<16x3xf32>,
    return
  }
}

</mosaic_0001>

<llo_original>
// kernel: my_gnn_forward.1
$region0: #{my_gnn_forward.1}
  #allocation0 [shape = 'u32[]', space=smem, size = 0x4, offset = 0x4, fixed_abs, tag = 'smem constant byte address 0x4 - core index']
  #allocation1 [shape = 'u32[144,128]{1,0:T(1,128)}', space=vmem, size = 0x12000, scoped, tag = 'internal scratch']
  #allocation2 [shape = 'bf16[176,768]{1,0:T(8,128)(2,1)}', space=vmem, size = 0x42000, scoped, tag = 'scratch operand']
  #allocation3 [shape = 'bf16[8,1408]{1,0:T(8,128)(2,1)}', space=vmem, size = 0x5800, scoped, tag = 'scratch operand']
  #allocation4 [shape = 'bf16[3,768,128]{2,1,0:T(8,128)(2,1)}', space=vmem, size = 0x90000, scoped, tag = 'scratch operand']
  #allocation5 [shape = 'bf16[1408,512]{1,0:T(8,128)(2,1)}', space=vmem, size = 0x160000, scoped, tag = 'scratch operand']
  #allocation6 [shape = 's32[2]{0}', space=sflag, size = 0x8, scoped, tag = 'scratch operand']
  #allocation7 [shape = 's32[]', space=sflag, size = 0x4, offset = 0, fixed_abs, tag = 'sflag constant byte address 0x0 - dummy sync flag']
  #allocation8 [shape = 's32[]', space=sflag, size = 0x4, offset = 0, fixed_abs, tag = 'sflag constant byte address 0x0 - dummy sync flag']
  %s0 = inlined_call_operand.vmem [shape: f32[176,80], index: 0, kind: input, shape index: {}]
  %s1 = inlined_call_operand.vmem [shape: bf16[80,768], index: 1, kind: input, shape index: {}]
  %s2 = inlined_call_operand.vmem [shape: bf16[3,768,128], index: 2, kind: input, shape index: {}]
  %s3 = inlined_call_operand.vmem [shape: bf16[88,144], index: 3, kind: input, shape index: {}]
  %s4 = inlined_call_operand.vmem [shape: bf16[1408,512], index: 4, kind: input, shape index: {}]
  %s5 = inlined_call_operand.vmem [shape: f32[1,1792], index: 5, kind: input, shape index: {}]
  %s6 = inlined_call_operand.vmem [shape: f32[16,16], index: 6, kind: input, shape index: {}]
  %s7 = inlined_call_operand.vmem [shape: f32[16,8], index: 7, kind: input, shape index: {}]
  %s8 = inlined_call_operand.vmem [shape: bf16[8,512], index: 8, kind: input, shape index: {}]
  %s9 = inlined_call_operand.vmem [shape: bf16[256,256], index: 9, kind: input, shape index: {}]
  %s10 = inlined_call_operand.vmem [shape: bf16[256,64], index: 10, kind: input, shape index: {}]
  %s11 = inlined_call_operand.vmem [shape: bf16[64,64], index: 11, kind: input, shape index: {}]
  %s12 = inlined_call_operand.vmem [shape: bf16[64,3], index: 12, kind: input, shape index: {}]
  %s13 = inlined_call_operand.vmem [shape: f32[16,3], index: 13, kind: output, shape index: {}]
  %s14 = sld [smem:[#allocation0]]
  $region122: #{my_gnn_forward.1} parent=0
    _
  %s16 = ssub.s32 1, %s14
  %s17 = scalar_select 0, %s16, %s14
  // Predicated region
  $region2: #{my_gnn_forward.1} parent=0 // pred_check
    _
  $region3: #{my_gnn_forward.1} parent=0 // pred_check_branch
    %19 = sbr.rel (0) target = $region5
  $region4: #{my_gnn_forward.1} parent=0 // pred_region
    _
  $region5: #{my_gnn_forward.1} parent=0 // pred_fallthru
    _
  // Predicated region
  $region6: #{my_gnn_forward.1} parent=0 // pred_check
    _
  $region7: #{my_gnn_forward.1} parent=0 // pred_check_branch
    %21 = sbr.rel (0) target = $region9
  $region8: #{my_gnn_forward.1} parent=0 // pred_region
    _
  $region9: #{my_gnn_forward.1} parent=0 // pred_fallthru
    _
  // Predicated region
  $region10: #{my_gnn_forward.1} parent=0 // pred_check
    _
  $region11: #{my_gnn_forward.1} parent=0 // pred_check_branch
    %23 = sbr.rel (0) target = $region13
  $region12: #{my_gnn_forward.1} parent=0 // pred_region
    _
  $region13: #{my_gnn_forward.1} parent=0 // pred_fallthru
    _
  // Predicated region
  $region14: #{my_gnn_forward.1} parent=0 // pred_check
    _
  $region15: #{my_gnn_forward.1} parent=0 // pred_check_branch
    %25 = sbr.rel (0) target = $region17
  $region16: #{my_gnn_forward.1} parent=0 // pred_region
    _
  $region17: #{my_gnn_forward.1} parent=0 // pred_fallthru
    _
  // Predicated region
  $region18: #{my_gnn_forward.1} parent=0 // pred_check
    _
  $region19: #{my_gnn_forward.1} parent=0 // pred_check_branch
    %27 = sbr.rel (0) target = $region21
  $region20: #{my_gnn_forward.1} parent=0 // pred_region
    _
  $region21: #{my_gnn_forward.1} parent=0 // pred_fallthru
    _
  // Predicated region
  $region22: #{my_gnn_forward.1} parent=0 // pred_check
    _
  $region23: #{my_gnn_forward.1} parent=0 // pred_check_branch
    %29 = sbr.rel (0) target = $region25
  $region24: #{my_gnn_forward.1} parent=0 // pred_region
    _
  $region25: #{my_gnn_forward.1} parent=0 // pred_fallthru
    _
  // Predicated region
  $region26: #{my_gnn_forward.1} parent=0 // pred_check
    _
  $region27: #{my_gnn_forward.1} parent=0 // pred_check_branch
    %31 = sbr.rel (0) target = $region29
  $region28: #{my_gnn_forward.1} parent=0 // pred_region
    _
  $region29: #{my_gnn_forward.1} parent=0 // pred_fallthru
    _
  // Predicated region
  $region30: #{my_gnn_forward.1} parent=0 // pred_check
    _
  $region31: #{my_gnn_forward.1} parent=0 // pred_check_branch
    %33 = sbr.rel (0) target = $region33
  $region32: #{my_gnn_forward.1} parent=0 // pred_region
    _
  $region33: #{my_gnn_forward.1} parent=0 // pred_fallthru
    _
  // Predicated region
  $region34: #{my_gnn_forward.1} parent=0 // pred_check
    _
  $region35: #{my_gnn_forward.1} parent=0 // pred_check_branch
    %35 = sbr.rel (0) target = $region37
  $region36: #{my_gnn_forward.1} parent=0 // pred_region
    _
  $region37: #{my_gnn_forward.1} parent=0 // pred_fallthru
    _
  // Predicated region
  $region38: #{my_gnn_forward.1} parent=0 // pred_check
    _
  $region39: #{my_gnn_forward.1} parent=0 // pred_check_branch
    %37 = sbr.rel (0) target = $region41
  $region40: #{my_gnn_forward.1} parent=0 // pred_region
    _
  $region41: #{my_gnn_forward.1} parent=0 // pred_fallthru
    _
  // Predicated region
  $region42: #{my_gnn_forward.1} parent=0 // pred_check
    _
  $region43: #{my_gnn_forward.1} parent=0 // pred_check_branch
    %39 = sbr.rel (0) target = $region45
  $region44: #{my_gnn_forward.1} parent=0 // pred_region
    _
  $region45: #{my_gnn_forward.1} parent=0 // pred_fallthru
    _
  %p42 = scmp.lt.u32.totalorder 1152, 8
  %p43 = pneg %p42
  // Predicated region
  $region46: #{my_gnn_forward.1} parent=0 // pred_check
    _
  $region47: #{my_gnn_forward.1} parent=0 // pred_check_branch
    %45 = sbr.rel (%p42) target = $region49
  $region48: #{my_gnn_forward.1} parent=0 // pred_region
    %s61 = sand.u32 1152, 7
    %p62 = scmp.eq.s32.totalorder %s61, 0
    // Predicated region
    $region61: #{my_gnn_forward.1} parent=48 // pred_check
      %p63 = pneg %p62
    $region62: #{my_gnn_forward.1} parent=48 // pred_check_branch
      %65 = sbr.rel (%p63) target = $region64
    $region63: #{my_gnn_forward.1} parent=48 // pred_region
      loop: start=0, step=1, limit=1
      $region65: #{my_gnn_forward.1} parent=63 // loop_pre_header
        _
      $region66: #{my_gnn_forward.1} parent=63 // loop_header
        %s67 = sphi 0, %s71
        %p68 = scmp.ge.s32.totalorder %s67, 1
        %s72 = sphi %s2, %s2
        %s73 = sphi [#allocation4], [#allocation4]
      $region67: #{my_gnn_forward.1} parent=63 // loop_header_branch
        %70 = sbr.rel (%p68) target = $region71
      $region68: #{my_gnn_forward.1} parent=63 // loop_body
        %v74 = vld [vmem:[%s72] sm:$0xff]
        %75 = vst [vmem:[%s73] sm:$0xff] %v74
        %v76 = vld [vmem:[%s72 + $0x8] sm:$0xff]
        %77 = vst [vmem:[%s73 + $0x8] sm:$0xff] %v76
        %v78 = vld [vmem:[%s72 + $0x10] sm:$0xff]
        %79 = vst [vmem:[%s73 + $0x10] sm:$0xff] %v78
        %v80 = vld [vmem:[%s72 + $0x18] sm:$0xff]
        %81 = vst [vmem:[%s73 + $0x18] sm:$0xff] %v80
        %v82 = vld [vmem:[%s72 + $0x20] sm:$0xff]
        %83 = vst [vmem:[%s73 + $0x20] sm:$0xff] %v82
        %v84 = vld [vmem:[%s72 + $0x28] sm:$0xff]
        %85 = vst [vmem:[%s73 + $0x28] sm:$0xff] %v84
        %v86 = vld [vmem:[%s72 + $0x30] sm:$0xff]
        %87 = vst [vmem:[%s73 + $0x30] sm:$0xff] %v86
        %v88 = vld [vmem:[%s72 + $0x38] sm:$0xff]
        %89 = vst [vmem:[%s73 + $0x38] sm:$0xff] %v88
        %v90 = vld [vmem:[%s72 + $0x40] sm:$0xff]
        %91 = vst [vmem:[%s73 + $0x40] sm:$0xff] %v90
        %v92 = vld [vmem:[%s72 + $0x48] sm:$0xff]
        %93 = vst [vmem:[%s73 + $0x48] sm:$0xff] %v92
        %v94 = vld [vmem:[%s72 + $0x50] sm:$0xff]
        %95 = vst [vmem:[%s73 + $0x50] sm:$0xff] %v94
        %v96 = vld [vmem:[%s72 + $0x58] sm:$0xff]
        %97 = vst [vmem:[%s73 + $0x58] sm:$0xff] %v96
        %v98 = vld [vmem:[%s72 + $0x60] sm:$0xff]
        %99 = vst [vmem:[%s73 + $0x60] sm:$0xff] %v98
        %v100 = vld [vmem:[%s72 + $0x68] sm:$0xff]
        %101 = vst [vmem:[%s73 + $0x68] sm:$0xff] %v100
        %v102 = vld [vmem:[%s72 + $0x70] sm:$0xff]
        %103 = vst [vmem:[%s73 + $0x70] sm:$0xff] %v102
        %v104 = vld [vmem:[%s72 + $0x78] sm:$0xff]
        %105 = vst [vmem:[%s73 + $0x78] sm:$0xff] %v104
        %v106 = vld [vmem:[%s72 + $0x80] sm:$0xff]
        %107 = vst [vmem:[%s73 + $0x80] sm:$0xff] %v106
        %v108 = vld [vmem:[%s72 + $0x88] sm:$0xff]
        %109 = vst [vmem:[%s73 + $0x88] sm:$0xff] %v108
        %v110 = vld [vmem:[%s72 + $0x90] sm:$0xff]
        %111 = vst [vmem:[%s73 + $0x90] sm:$0xff] %v110
        %v112 = vld [vmem:[%s72 + $0x98] sm:$0xff]
        %113 = vst [vmem:[%s73 + $0x98] sm:$0xff] %v112
        %v114 = vld [vmem:[%s72 + $0xa0] sm:$0xff]
        %115 = vst [vmem:[%s73 + $0xa0] sm:$0xff] %v114
        %v116 = vld [vmem:[%s72 + $0xa8] sm:$0xff]
        %117 = vst [vmem:[%s73 + $0xa8] sm:$0xff] %v116
        %v118 = vld [vmem:[%s72 + $0xb0] sm:$0xff]
        %119 = vst [vmem:[%s73 + $0xb0] sm:$0xff] %v118
        %v120 = vld [vmem:[%s72 + $0xb8] sm:$0xff]
        %121 = vst [vmem:[%s73 + $0xb8] sm:$0xff] %v120
        %v122 = vld [vmem:[%s72 + $0xc0] sm:$0xff]
        %123 = vst [vmem:[%s73 + $0xc0] sm:$0xff] %v122
        %v124 = vld [vmem:[%s72 + $0xc8] sm:$0xff]
        %125 = vst [vmem:[%s73 + $0xc8] sm:$0xff] %v124
        %v126 = vld [vmem:[%s72 + $0xd0] sm:$0xff]
        %127 = vst [vmem:[%s73 + $0xd0] sm:$0xff] %v126
        %v128 = vld [vmem:[%s72 + $0xd8] sm:$0xff]
        %129 = vst [vmem:[%s73 + $0xd8] sm:$0xff] %v128
        %v130 = vld [vmem:[%s72 + $0xe0] sm:$0xff]
        %131 = vst [vmem:[%s73 + $0xe0] sm:$0xff] %v130
        %v132 = vld [vmem:[%s72 + $0xe8] sm:$0xff]
        %133 = vst [vmem:[%s73 + $0xe8] sm:$0xff] %v132
        %v134 = vld [vmem:[%s72 + $0xf0] sm:$0xff]
        %135 = vst [vmem:[%s73 + $0xf0] sm:$0xff] %v134
        %v136 = vld [vmem:[%s72 + $0xf8] sm:$0xff]
        %137 = vst [vmem:[%s73 + $0xf8] sm:$0xff] %v136
        %v138 = vld [vmem:[%s72 + $0x100] sm:$0xff]
        %139 = vst [vmem:[%s73 + $0x100] sm:$0xff] %v138
        %v140 = vld [vmem:[%s72 + $0x108] sm:$0xff]
        %141 = vst [vmem:[%s73 + $0x108] sm:$0xff] %v140
        %v142 = vld [vmem:[%s72 + $0x110] sm:$0xff]
        %143 = vst [vmem:[%s73 + $0x110] sm:$0xff] %v142
        %v144 = vld [vmem:[%s72 + $0x118] sm:$0xff]
        %145 = vst [vmem:[%s73 + $0x118] sm:$0xff] %v144
        %v146 = vld [vmem:[%s72 + $0x120] sm:$0xff]
        %147 = vst [vmem:[%s73 + $0x120] sm:$0xff] %v146
        %v148 = vld [vmem:[%s72 + $0x128] sm:$0xff]
        %149 = vst [vmem:[%s73 + $0x128] sm:$0xff] %v148
        %v150 = vld [vmem:[%s72 + $0x130] sm:$0xff]
        %151 = vst [vmem:[%s73 + $0x130] sm:$0xff] %v150
        %v152 = vld [vmem:[%s72 + $0x138] sm:$0xff]
        %153 = vst [vmem:[%s73 + $0x138] sm:$0xff] %v152
        %v154 = vld [vmem:[%s72 + $0x140] sm:$0xff]
        %155 = vst [vmem:[%s73 + $0x140] sm:$0xff] %v154
        %v156 = vld [vmem:[%s72 + $0x148] sm:$0xff]
        %157 = vst [vmem:[%s73 + $0x148] sm:$0xff] %v156
        %v158 = vld [vmem:[%s72 + $0x150] sm:$0xff]
        %159 = vst [vmem:[%s73 + $0x150] sm:$0xff] %v158
        %v160 = vld [vmem:[%s72 + $0x158] sm:$0xff]
        %161 = vst [vmem:[%s73 + $0x158] sm:$0xff] %v160
        %v162 = vld [vmem:[%s72 + $0x160] sm:$0xff]
        %163 = vst [vmem:[%s73 + $0x160] sm:$0xff] %v162
        %v164 = vld [vmem:[%s72 + $0x168] sm:$0xff]
        %165 = vst [vmem:[%s73 + $0x168] sm:$0xff] %v164
        %v166 = vld [vmem:[%s72 + $0x170] sm:$0xff]
        %167 = vst [vmem:[%s73 + $0x170] sm:$0xff] %v166
        %v168 = vld [vmem:[%s72 + $0x178] sm:$0xff]
        %169 = vst [vmem:[%s73 + $0x178] sm:$0xff] %v168
        %v170 = vld [vmem:[%s72 + $0x180] sm:$0xff]
        %171 = vst [vmem:[%s73 + $0x180] sm:$0xff] %v170
        %v172 = vld [vmem:[%s72 + $0x188] sm:$0xff]
        %173 = vst [vmem:[%s73 + $0x188] sm:$0xff] %v172
        %v174 = vld [vmem:[%s72 + $0x190] sm:$0xff]
        %175 = vst [vmem:[%s73 + $0x190] sm:$0xff] %v174
        %v176 = vld [vmem:[%s72 + $0x198] sm:$0xff]
        %177 = vst [vmem:[%s73 + $0x198] sm:$0xff] %v176
        %v178 = vld [vmem:[%s72 + $0x1a0] sm:$0xff]
        %179 = vst [vmem:[%s73 + $0x1a0] sm:$0xff] %v178
        %v180 = vld [vmem:[%s72 + $0x1a8] sm:$0xff]
        %181 = vst [vmem:[%s73 + $0x1a8] sm:$0xff] %v180
        %v182 = vld [vmem:[%s72 + $0x1b0] sm:$0xff]
        %183 = vst [vmem:[%s73 + $0x1b0] sm:$0xff] %v182
        %v184 = vld [vmem:[%s72 + $0x1b8] sm:$0xff]
        %185 = vst [vmem:[%s73 + $0x1b8] sm:$0xff] %v184
        %v186 = vld [vmem:[%s72 + $0x1c0] sm:$0xff]
        %187 = vst [vmem:[%s73 + $0x1c0] sm:$0xff] %v186
        %v188 = vld [vmem:[%s72 + $0x1c8] sm:$0xff]
        %189 = vst [vmem:[%s73 + $0x1c8] sm:$0xff] %v188
        %v190 = vld [vmem:[%s72 + $0x1d0] sm:$0xff]
        %191 = vst [vmem:[%s73 + $0x1d0] sm:$0xff] %v190
        %v192 = vld [vmem:[%s72 + $0x1d8] sm:$0xff]
        %193 = vst [vmem:[%s73 + $0x1d8] sm:$0xff] %v192
        %v194 = vld [vmem:[%s72 + $0x1e0] sm:$0xff]
        %195 = vst [vmem:[%s73 + $0x1e0] sm:$0xff] %v194
        %v196 = vld [vmem:[%s72 + $0x1e8] sm:$0xff]
        %197 = vst [vmem:[%s73 + $0x1e8] sm:$0xff] %v196
        %v198 = vld [vmem:[%s72 + $0x1f0] sm:$0xff]
        %199 = vst [vmem:[%s73 + $0x1f0] sm:$0xff] %v198
        %v200 = vld [vmem:[%s72 + $0x1f8] sm:$0xff]
        %201 = vst [vmem:[%s73 + $0x1f8] sm:$0xff] %v200
        %v202 = vld [vmem:[%s72 + $0x200] sm:$0xff]
        %203 = vst [vmem:[%s73 + $0x200] sm:$0xff] %v202
        %v204 = vld [vmem:[%s72 + $0x208] sm:$0xff]
        %205 = vst [vmem:[%s73 + $0x208] sm:$0xff] %v204
        %v206 = vld [vmem:[%s72 + $0x210] sm:$0xff]
        %207 = vst [vmem:[%s73 + $0x210] sm:$0xff] %v206
        %v208 = vld [vmem:[%s72 + $0x218] sm:$0xff]
        %209 = vst [vmem:[%s73 + $0x218] sm:$0xff] %v208
        %v210 = vld [vmem:[%s72 + $0x220] sm:$0xff]
        %211 = vst [vmem:[%s73 + $0x220] sm:$0xff] %v210
        %v212 = vld [vmem:[%s72 + $0x228] sm:$0xff]
        %213 = vst [vmem:[%s73 + $0x228] sm:$0xff] %v212
        %v214 = vld [vmem:[%s72 + $0x230] sm:$0xff]
        %215 = vst [vmem:[%s73 + $0x230] sm:$0xff] %v214
        %v216 = vld [vmem:[%s72 + $0x238] sm:$0xff]
        %217 = vst [vmem:[%s73 + $0x238] sm:$0xff] %v216
        %v218 = vld [vmem:[%s72 + $0x240] sm:$0xff]
        %219 = vst [vmem:[%s73 + $0x240] sm:$0xff] %v218
        %v220 = vld [vmem:[%s72 + $0x248] sm:$0xff]
        %221 = vst [vmem:[%s73 + $0x248] sm:$0xff] %v220
        %v222 = vld [vmem:[%s72 + $0x250] sm:$0xff]
        %223 = vst [vmem:[%s73 + $0x250] sm:$0xff] %v222
        %v224 = vld [vmem:[%s72 + $0x258] sm:$0xff]
        %225 = vst [vmem:[%s73 + $0x258] sm:$0xff] %v224
        %v226 = vld [vmem:[%s72 + $0x260] sm:$0xff]
        %227 = vst [vmem:[%s73 + $0x260] sm:$0xff] %v226
        %v228 = vld [vmem:[%s72 + $0x268] sm:$0xff]
        %229 = vst [vmem:[%s73 + $0x268] sm:$0xff] %v228
        %v230 = vld [vmem:[%s72 + $0x270] sm:$0xff]
        %231 = vst [vmem:[%s73 + $0x270] sm:$0xff] %v230
        %v232 = vld [vmem:[%s72 + $0x278] sm:$0xff]
        %233 = vst [vmem:[%s73 + $0x278] sm:$0xff] %v232
        %v234 = vld [vmem:[%s72 + $0x280] sm:$0xff]
        %235 = vst [vmem:[%s73 + $0x280] sm:$0xff] %v234
        %v236 = vld [vmem:[%s72 + $0x288] sm:$0xff]
        %237 = vst [vmem:[%s73 + $0x288] sm:$0xff] %v236
        %v238 = vld [vmem:[%s72 + $0x290] sm:$0xff]
        %239 = vst [vmem:[%s73 + $0x290] sm:$0xff] %v238
        %v240 = vld [vmem:[%s72 + $0x298] sm:$0xff]
        %241 = vst [vmem:[%s73 + $0x298] sm:$0xff] %v240
        %v242 = vld [vmem:[%s72 + $0x2a0] sm:$0xff]
        %243 = vst [vmem:[%s73 + $0x2a0] sm:$0xff] %v242
        %v244 = vld [vmem:[%s72 + $0x2a8] sm:$0xff]
        %245 = vst [vmem:[%s73 + $0x2a8] sm:$0xff] %v244
        %v246 = vld [vmem:[%s72 + $0x2b0] sm:$0xff]
        %247 = vst [vmem:[%s73 + $0x2b0] sm:$0xff] %v246
        %v248 = vld [vmem:[%s72 + $0x2b8] sm:$0xff]
        %249 = vst [vmem:[%s73 + $0x2b8] sm:$0xff] %v248
        %v250 = vld [vmem:[%s72 + $0x2c0] sm:$0xff]
        %251 = vst [vmem:[%s73 + $0x2c0] sm:$0xff] %v250
        %v252 = vld [vmem:[%s72 + $0x2c8] sm:$0xff]
        %253 = vst [vmem:[%s73 + $0x2c8] sm:$0xff] %v252
        %v254 = vld [vmem:[%s72 + $0x2d0] sm:$0xff]
        %255 = vst [vmem:[%s73 + $0x2d0] sm:$0xff] %v254
        %v256 = vld [vmem:[%s72 + $0x2d8] sm:$0xff]
        %257 = vst [vmem:[%s73 + $0x2d8] sm:$0xff] %v256
        %v258 = vld [vmem:[%s72 + $0x2e0] sm:$0xff]
        %259 = vst [vmem:[%s73 + $0x2e0] sm:$0xff] %v258
        %v260 = vld [vmem:[%s72 + $0x2e8] sm:$0xff]
        %261 = vst [vmem:[%s73 + $0x2e8] sm:$0xff] %v260
        %v262 = vld [vmem:[%s72 + $0x2f0] sm:$0xff]
        %263 = vst [vmem:[%s73 + $0x2f0] sm:$0xff] %v262
        %v264 = vld [vmem:[%s72 + $0x2f8] sm:$0xff]
        %265 = vst [vmem:[%s73 + $0x2f8] sm:$0xff] %v264
        %v266 = vld [vmem:[%s72 + $0x300] sm:$0xff]
        %267 = vst [vmem:[%s73 + $0x300] sm:$0xff] %v266
        %v268 = vld [vmem:[%s72 + $0x308] sm:$0xff]
        %269 = vst [vmem:[%s73 + $0x308] sm:$0xff] %v268
        %v270 = vld [vmem:[%s72 + $0x310] sm:$0xff]
        %271 = vst [vmem:[%s73 + $0x310] sm:$0xff] %v270
        %v272 = vld [vmem:[%s72 + $0x318] sm:$0xff]
        %273 = vst [vmem:[%s73 + $0x318] sm:$0xff] %v272
        %v274 = vld [vmem:[%s72 + $0x320] sm:$0xff]
        %275 = vst [vmem:[%s73 + $0x320] sm:$0xff] %v274
        %v276 = vld [vmem:[%s72 + $0x328] sm:$0xff]
        %277 = vst [vmem:[%s73 + $0x328] sm:$0xff] %v276
        %v278 = vld [vmem:[%s72 + $0x330] sm:$0xff]
        %279 = vst [vmem:[%s73 + $0x330] sm:$0xff] %v278
        %v280 = vld [vmem:[%s72 + $0x338] sm:$0xff]
        %281 = vst [vmem:[%s73 + $0x338] sm:$0xff] %v280
        %v282 = vld [vmem:[%s72 + $0x340] sm:$0xff]
        %283 = vst [vmem:[%s73 + $0x340] sm:$0xff] %v282
        %v284 = vld [vmem:[%s72 + $0x348] sm:$0xff]
        %285 = vst [vmem:[%s73 + $0x348] sm:$0xff] %v284
        %v286 = vld [vmem:[%s72 + $0x350] sm:$0xff]
        %287 = vst [vmem:[%s73 + $0x350] sm:$0xff] %v286
        %v288 = vld [vmem:[%s72 + $0x358] sm:$0xff]
        %289 = vst [vmem:[%s73 + $0x358] sm:$0xff] %v288
        %v290 = vld [vmem:[%s72 + $0x360] sm:$0xff]
        %291 = vst [vmem:[%s73 + $0x360] sm:$0xff] %v290
        %v292 = vld [vmem:[%s72 + $0x368] sm:$0xff]
        %293 = vst [vmem:[%s73 + $0x368] sm:$0xff] %v292
        %v294 = vld [vmem:[%s72 + $0x370] sm:$0xff]
        %295 = vst [vmem:[%s73 + $0x370] sm:$0xff] %v294
        %v296 = vld [vmem:[%s72 + $0x378] sm:$0xff]
        %297 = vst [vmem:[%s73 + $0x378] sm:$0xff] %v296
        %v298 = vld [vmem:[%s72 + $0x380] sm:$0xff]
        %299 = vst [vmem:[%s73 + $0x380] sm:$0xff] %v298
        %v300 = vld [vmem:[%s72 + $0x388] sm:$0xff]
        %301 = vst [vmem:[%s73 + $0x388] sm:$0xff] %v300
        %v302 = vld [vmem:[%s72 + $0x390] sm:$0xff]
        %303 = vst [vmem:[%s73 + $0x390] sm:$0xff] %v302
        %v304 = vld [vmem:[%s72 + $0x398] sm:$0xff]
        %305 = vst [vmem:[%s73 + $0x398] sm:$0xff] %v304
        %v306 = vld [vmem:[%s72 + $0x3a0] sm:$0xff]
        %307 = vst [vmem:[%s73 + $0x3a0] sm:$0xff] %v306
        %v308 = vld [vmem:[%s72 + $0x3a8] sm:$0xff]
        %309 = vst [vmem:[%s73 + $0x3a8] sm:$0xff] %v308
        %v310 = vld [vmem:[%s72 + $0x3b0] sm:$0xff]
        %311 = vst [vmem:[%s73 + $0x3b0] sm:$0xff] %v310
        %v312 = vld [vmem:[%s72 + $0x3b8] sm:$0xff]
        %313 = vst [vmem:[%s73 + $0x3b8] sm:$0xff] %v312
        %v314 = vld [vmem:[%s72 + $0x3c0] sm:$0xff]
        %315 = vst [vmem:[%s73 + $0x3c0] sm:$0xff] %v314
        %v316 = vld [vmem:[%s72 + $0x3c8] sm:$0xff]
        %317 = vst [vmem:[%s73 + $0x3c8] sm:$0xff] %v316
        %v318 = vld [vmem:[%s72 + $0x3d0] sm:$0xff]
        %319 = vst [vmem:[%s73 + $0x3d0] sm:$0xff] %v318
        %v320 = vld [vmem:[%s72 + $0x3d8] sm:$0xff]
        %321 = vst [vmem:[%s73 + $0x3d8] sm:$0xff] %v320
        %v322 = vld [vmem:[%s72 + $0x3e0] sm:$0xff]
        %323 = vst [vmem:[%s73 + $0x3e0] sm:$0xff] %v322
        %v324 = vld [vmem:[%s72 + $0x3e8] sm:$0xff]
        %325 = vst [vmem:[%s73 + $0x3e8] sm:$0xff] %v324
        %v326 = vld [vmem:[%s72 + $0x3f0] sm:$0xff]
        %327 = vst [vmem:[%s73 + $0x3f0] sm:$0xff] %v326
        %v328 = vld [vmem:[%s72 + $0x3f8] sm:$0xff]
        %329 = vst [vmem:[%s73 + $0x3f8] sm:$0xff] %v328
        %v330 = vld [vmem:[%s72 + $0x400] sm:$0xff]
        %331 = vst [vmem:[%s73 + $0x400] sm:$0xff] %v330
        %v332 = vld [vmem:[%s72 + $0x408] sm:$0xff]
        %333 = vst [vmem:[%s73 + $0x408] sm:$0xff] %v332
        %v334 = vld [vmem:[%s72 + $0x410] sm:$0xff]
        %335 = vst [vmem:[%s73 + $0x410] sm:$0xff] %v334
        %v336 = vld [vmem:[%s72 + $0x418] sm:$0xff]
        %337 = vst [vmem:[%s73 + $0x418] sm:$0xff] %v336
        %v338 = vld [vmem:[%s72 + $0x420] sm:$0xff]
        %339 = vst [vmem:[%s73 + $0x420] sm:$0xff] %v338
        %v340 = vld [vmem:[%s72 + $0x428] sm:$0xff]
        %341 = vst [vmem:[%s73 + $0x428] sm:$0xff] %v340
        %v342 = vld [vmem:[%s72 + $0x430] sm:$0xff]
        %343 = vst [vmem:[%s73 + $0x430] sm:$0xff] %v342
        %v344 = vld [vmem:[%s72 + $0x438] sm:$0xff]
        %345 = vst [vmem:[%s73 + $0x438] sm:$0xff] %v344
        %v346 = vld [vmem:[%s72 + $0x440] sm:$0xff]
        %347 = vst [vmem:[%s73 + $0x440] sm:$0xff] %v346
        %v348 = vld [vmem:[%s72 + $0x448] sm:$0xff]
        %349 = vst [vmem:[%s73 + $0x448] sm:$0xff] %v348
        %v350 = vld [vmem:[%s72 + $0x450] sm:$0xff]
        %351 = vst [vmem:[%s73 + $0x450] sm:$0xff] %v350
        %v352 = vld [vmem:[%s72 + $0x458] sm:$0xff]
        %353 = vst [vmem:[%s73 + $0x458] sm:$0xff] %v352
        %v354 = vld [vmem:[%s72 + $0x460] sm:$0xff]
        %355 = vst [vmem:[%s73 + $0x460] sm:$0xff] %v354
        %v356 = vld [vmem:[%s72 + $0x468] sm:$0xff]
        %357 = vst [vmem:[%s73 + $0x468] sm:$0xff] %v356
        %v358 = vld [vmem:[%s72 + $0x470] sm:$0xff]
        %359 = vst [vmem:[%s73 + $0x470] sm:$0xff] %v358
        %v360 = vld [vmem:[%s72 + $0x478] sm:$0xff]
        %361 = vst [vmem:[%s73 + $0x478] sm:$0xff] %v360
      $region69: #{my_gnn_forward.1} parent=63 // loop_footer
        %s71 = sadd.s32 1, %s67
      $region70: #{my_gnn_forward.1} parent=63 // loop_footer_branch
        %66 = sbr.rel target = $region66
      $region71: #{my_gnn_forward.1} parent=63 // loop_exit
        _
    $region64: #{my_gnn_forward.1} parent=48 // pred_fallthru
      _
    %p362 = pneg %p62
    // Predicated region
    $region72: #{my_gnn_forward.1} parent=48 // pred_check
      _
    $region73: #{my_gnn_forward.1} parent=48 // pred_check_branch
      %364 = sbr.rel (%p62) target = $region75
    $region74: #{my_gnn_forward.1} parent=48 // pred_region
      %s365 = sand.u32 1152, 7
    $region75: #{my_gnn_forward.1} parent=48 // pred_fallthru
      _
  $region49: #{my_gnn_forward.1} parent=0 // pred_fallthru
    _
  // Predicated region
  $region50: #{my_gnn_forward.1} parent=0 // pred_check
    %p46 = pneg %p42
  $region51: #{my_gnn_forward.1} parent=0 // pred_check_branch
    %48 = sbr.rel (%p46) target = $region53
  $region52: #{my_gnn_forward.1} parent=0 // pred_region
    %s49 = sshll.u32 1, 1152
    %s50 = ssub.s32 %s49, 1
    loop: start=0, step=1, limit=1
    $region54: #{my_gnn_forward.1} parent=52 // loop_pre_header
      _
    $region55: #{my_gnn_forward.1} parent=52 // loop_header
      %s52 = sphi 0, %s56
      %p53 = scmp.ge.s32.totalorder %s52, 1
      %s57 = sphi %s2, %s2
      %s58 = sphi [#allocation4], [#allocation4]
    $region56: #{my_gnn_forward.1} parent=52 // loop_header_branch
      %55 = sbr.rel (%p53) target = $region60
    $region57: #{my_gnn_forward.1} parent=52 // loop_body
      %v59 = vld [vmem:[%s57] sm:%s50]
      %60 = vst [vmem:[%s58] sm:%s50] %v59
    $region58: #{my_gnn_forward.1} parent=52 // loop_footer
      %s56 = sadd.s32 1, %s52
    $region59: #{my_gnn_forward.1} parent=52 // loop_footer_branch
      %51 = sbr.rel target = $region55
    $region60: #{my_gnn_forward.1} parent=52 // loop_exit
      _
  $region53: #{my_gnn_forward.1} parent=0 // pred_fallthru
    _
  // Predicated region
  $region76: #{my_gnn_forward.1} parent=0 // pred_check
    _
  $region77: #{my_gnn_forward.1} parent=0 // pred_check_branch
    %368 = sbr.rel (0) target = $region79
  $region78: #{my_gnn_forward.1} parent=0 // pred_region
    %369 = vsyncadd [#allocation6], 18432
  $region79: #{my_gnn_forward.1} parent=0 // pred_fallthru
    _
  %s370 = scalar_lea.sflag [#allocation6], 1
  %p372 = scmp.lt.u32.totalorder 2816, 8
  %p373 = pneg %p372
  // Predicated region
  $region80: #{my_gnn_forward.1} parent=0 // pred_check
    _
  $region81: #{my_gnn_forward.1} parent=0 // pred_check_branch
    %375 = sbr.rel (%p372) target = $region83
  $region82: #{my_gnn_forward.1} parent=0 // pred_region
    %s391 = sand.u32 2816, 7
    %p392 = scmp.eq.s32.totalorder %s391, 0
    // Predicated region
    $region95: #{my_gnn_forward.1} parent=82 // pred_check
      %p393 = pneg %p392
    $region96: #{my_gnn_forward.1} parent=82 // pred_check_branch
      %395 = sbr.rel (%p393) target = $region98
    $region97: #{my_gnn_forward.1} parent=82 // pred_region
      loop: start=0, step=1, limit=1
      $region99: #{my_gnn_forward.1} parent=97 // loop_pre_header
        _
      $region100: #{my_gnn_forward.1} parent=97 // loop_header
        %s397 = sphi 0, %s401
        %p398 = scmp.ge.s32.totalorder %s397, 1
        %s402 = sphi %s4, %s4
        %s403 = sphi [#allocation5], [#allocation5]
      $region101: #{my_gnn_forward.1} parent=97 // loop_header_branch
        %400 = sbr.rel (%p398) target = $region105
      $region102: #{my_gnn_forward.1} parent=97 // loop_body
        %v404 = vld [vmem:[%s402] sm:$0xff]
        %405 = vst [vmem:[%s403] sm:$0xff] %v404
        %v406 = vld [vmem:[%s402 + $0x8] sm:$0xff]
        %407 = vst [vmem:[%s403 + $0x8] sm:$0xff] %v406
        %v408 = vld [vmem:[%s402 + $0x10] sm:$0xff]
        %409 = vst [vmem:[%s403 + $0x10] sm:$0xff] %v408
        %v410 = vld [vmem:[%s402 + $0x18] sm:$0xff]
        %411 = vst [vmem:[%s403 + $0x18] sm:$0xff] %v410
        %v412 = vld [vmem:[%s402 + $0x20] sm:$0xff]
        %413 = vst [vmem:[%s403 + $0x20] sm:$0xff] %v412
        %v414 = vld [vmem:[%s402 + $0x28] sm:$0xff]
        %415 = vst [vmem:[%s403 + $0x28] sm:$0xff] %v414
        %v416 = vld [vmem:[%s402 + $0x30] sm:$0xff]
        %417 = vst [vmem:[%s403 + $0x30] sm:$0xff] %v416
        %v418 = vld [vmem:[%s402 + $0x38] sm:$0xff]
        %419 = vst [vmem:[%s403 + $0x38] sm:$0xff] %v418
        %v420 = vld [vmem:[%s402 + $0x40] sm:$0xff]
        %421 = vst [vmem:[%s403 + $0x40] sm:$0xff] %v420
        %v422 = vld [vmem:[%s402 + $0x48] sm:$0xff]
        %423 = vst [vmem:[%s403 + $0x48] sm:$0xff] %v422
        %v424 = vld [vmem:[%s402 + $0x50] sm:$0xff]
        %425 = vst [vmem:[%s403 + $0x50] sm:$0xff] %v424
        %v426 = vld [vmem:[%s402 + $0x58] sm:$0xff]
        %427 = vst [vmem:[%s403 + $0x58] sm:$0xff] %v426
        %v428 = vld [vmem:[%s402 + $0x60] sm:$0xff]
        %429 = vst [vmem:[%s403 + $0x60] sm:$0xff] %v428
        %v430 = vld [vmem:[%s402 + $0x68] sm:$0xff]
        %431 = vst [vmem:[%s403 + $0x68] sm:$0xff] %v430
        %v432 = vld [vmem:[%s402 + $0x70] sm:$0xff]
        %433 = vst [vmem:[%s403 + $0x70] sm:$0xff] %v432
        %v434 = vld [vmem:[%s402 + $0x78] sm:$0xff]
        %435 = vst [vmem:[%s403 + $0x78] sm:$0xff] %v434
        %v436 = vld [vmem:[%s402 + $0x80] sm:$0xff]
        %437 = vst [vmem:[%s403 + $0x80] sm:$0xff] %v436
        %v438 = vld [vmem:[%s402 + $0x88] sm:$0xff]
        %439 = vst [vmem:[%s403 + $0x88] sm:$0xff] %v438
        %v440 = vld [vmem:[%s402 + $0x90] sm:$0xff]
        %441 = vst [vmem:[%s403 + $0x90] sm:$0xff] %v440
        %v442 = vld [vmem:[%s402 + $0x98] sm:$0xff]
        %443 = vst [vmem:[%s403 + $0x98] sm:$0xff] %v442
        %v444 = vld [vmem:[%s402 + $0xa0] sm:$0xff]
        %445 = vst [vmem:[%s403 + $0xa0] sm:$0xff] %v444
        %v446 = vld [vmem:[%s402 + $0xa8] sm:$0xff]
        %447 = vst [vmem:[%s403 + $0xa8] sm:$0xff] %v446
        %v448 = vld [vmem:[%s402 + $0xb0] sm:$0xff]
        %449 = vst [vmem:[%s403 + $0xb0] sm:$0xff] %v448
        %v450 = vld [vmem:[%s402 + $0xb8] sm:$0xff]
        %451 = vst [vmem:[%s403 + $0xb8] sm:$0xff] %v450
        %v452 = vld [vmem:[%s402 + $0xc0] sm:$0xff]
        %453 = vst [vmem:[%s403 + $0xc0] sm:$0xff] %v452
        %v454 = vld [vmem:[%s402 + $0xc8] sm:$0xff]
        %455 = vst [vmem:[%s403 + $0xc8] sm:$0xff] %v454
        %v456 = vld [vmem:[%s402 + $0xd0] sm:$0xff]
        %457 = vst [vmem:[%s403 + $0xd0] sm:$0xff] %v456
        %v458 = vld [vmem:[%s402 + $0xd8] sm:$0xff]
        %459 = vst [vmem:[%s403 + $0xd8] sm:$0xff] %v458
        %v460 = vld [vmem:[%s402 + $0xe0] sm:$0xff]
        %461 = vst [vmem:[%s403 + $0xe0] sm:$0xff] %v460
        %v462 = vld [vmem:[%s402 + $0xe8] sm:$0xff]
        %463 = vst [vmem:[%s403 + $0xe8] sm:$0xff] %v462
        %v464 = vld [vmem:[%s402 + $0xf0] sm:$0xff]
        %465 = vst [vmem:[%s403 + $0xf0] sm:$0xff] %v464
        %v466 = vld [vmem:[%s402 + $0xf8] sm:$0xff]
        %467 = vst [vmem:[%s403 + $0xf8] sm:$0xff] %v466
        %v468 = vld [vmem:[%s402 + $0x100] sm:$0xff]
        %469 = vst [vmem:[%s403 + $0x100] sm:$0xff] %v468
        %v470 = vld [vmem:[%s402 + $0x108] sm:$0xff]
        %471 = vst [vmem:[%s403 + $0x108] sm:$0xff] %v470
        %v472 = vld [vmem:[%s402 + $0x110] sm:$0xff]
        %473 = vst [vmem:[%s403 + $0x110] sm:$0xff] %v472
        %v474 = vld [vmem:[%s402 + $0x118] sm:$0xff]
        %475 = vst [vmem:[%s403 + $0x118] sm:$0xff] %v474
        %v476 = vld [vmem:[%s402 + $0x120] sm:$0xff]
        %477 = vst [vmem:[%s403 + $0x120] sm:$0xff] %v476
        %v478 = vld [vmem:[%s402 + $0x128] sm:$0xff]
        %479 = vst [vmem:[%s403 + $0x128] sm:$0xff] %v478
        %v480 = vld [vmem:[%s402 + $0x130] sm:$0xff]
        %481 = vst [vmem:[%s403 + $0x130] sm:$0xff] %v480
        %v482 = vld [vmem:[%s402 + $0x138] sm:$0xff]
        %483 = vst [vmem:[%s403 + $0x138] sm:$0xff] %v482
        %v484 = vld [vmem:[%s402 + $0x140] sm:$0xff]
        %485 = vst [vmem:[%s403 + $0x140] sm:$0xff] %v484
        %v486 = vld [vmem:[%s402 + $0x148] sm:$0xff]
        %487 = vst [vmem:[%s403 + $0x148] sm:$0xff] %v486
        %v488 = vld [vmem:[%s402 + $0x150] sm:$0xff]
        %489 = vst [vmem:[%s403 + $0x150] sm:$0xff] %v488
        %v490 = vld [vmem:[%s402 + $0x158] sm:$0xff]
        %491 = vst [vmem:[%s403 + $0x158] sm:$0xff] %v490
        %v492 = vld [vmem:[%s402 + $0x160] sm:$0xff]
        %493 = vst [vmem:[%s403 + $0x160] sm:$0xff] %v492
        %v494 = vld [vmem:[%s402 + $0x168] sm:$0xff]
        %495 = vst [vmem:[%s403 + $0x168] sm:$0xff] %v494
        %v496 = vld [vmem:[%s402 + $0x170] sm:$0xff]
        %497 = vst [vmem:[%s403 + $0x170] sm:$0xff] %v496
        %v498 = vld [vmem:[%s402 + $0x178] sm:$0xff]
        %499 = vst [vmem:[%s403 + $0x178] sm:$0xff] %v498
        %v500 = vld [vmem:[%s402 + $0x180] sm:$0xff]
        %501 = vst [vmem:[%s403 + $0x180] sm:$0xff] %v500
        %v502 = vld [vmem:[%s402 + $0x188] sm:$0xff]
        %503 = vst [vmem:[%s403 + $0x188] sm:$0xff] %v502
        %v504 = vld [vmem:[%s402 + $0x190] sm:$0xff]
        %505 = vst [vmem:[%s403 + $0x190] sm:$0xff] %v504
        %v506 = vld [vmem:[%s402 + $0x198] sm:$0xff]
        %507 = vst [vmem:[%s403 + $0x198] sm:$0xff] %v506
        %v508 = vld [vmem:[%s402 + $0x1a0] sm:$0xff]
        %509 = vst [vmem:[%s403 + $0x1a0] sm:$0xff] %v508
        %v510 = vld [vmem:[%s402 + $0x1a8] sm:$0xff]
        %511 = vst [vmem:[%s403 + $0x1a8] sm:$0xff] %v510
        %v512 = vld [vmem:[%s402 + $0x1b0] sm:$0xff]
        %513 = vst [vmem:[%s403 + $0x1b0] sm:$0xff] %v512
        %v514 = vld [vmem:[%s402 + $0x1b8] sm:$0xff]
        %515 = vst [vmem:[%s403 + $0x1b8] sm:$0xff] %v514
        %v516 = vld [vmem:[%s402 + $0x1c0] sm:$0xff]
        %517 = vst [vmem:[%s403 + $0x1c0] sm:$0xff] %v516
        %v518 = vld [vmem:[%s402 + $0x1c8] sm:$0xff]
        %519 = vst [vmem:[%s403 + $0x1c8] sm:$0xff] %v518
        %v520 = vld [vmem:[%s402 + $0x1d0] sm:$0xff]
        %521 = vst [vmem:[%s403 + $0x1d0] sm:$0xff] %v520
        %v522 = vld [vmem:[%s402 + $0x1d8] sm:$0xff]
        %523 = vst [vmem:[%s403 + $0x1d8] sm:$0xff] %v522
        %v524 = vld [vmem:[%s402 + $0x1e0] sm:$0xff]
        %525 = vst [vmem:[%s403 + $0x1e0] sm:$0xff] %v524
        %v526 = vld [vmem:[%s402 + $0x1e8] sm:$0xff]
        %527 = vst [vmem:[%s403 + $0x1e8] sm:$0xff] %v526
        %v528 = vld [vmem:[%s402 + $0x1f0] sm:$0xff]
        %529 = vst [vmem:[%s403 + $0x1f0] sm:$0xff] %v528
        %v530 = vld [vmem:[%s402 + $0x1f8] sm:$0xff]
        %531 = vst [vmem:[%s403 + $0x1f8] sm:$0xff] %v530
        %v532 = vld [vmem:[%s402 + $0x200] sm:$0xff]
        %533 = vst [vmem:[%s403 + $0x200] sm:$0xff] %v532
        %v534 = vld [vmem:[%s402 + $0x208] sm:$0xff]
        %535 = vst [vmem:[%s403 + $0x208] sm:$0xff] %v534
        %v536 = vld [vmem:[%s402 + $0x210] sm:$0xff]
        %537 = vst [vmem:[%s403 + $0x210] sm:$0xff] %v536
        %v538 = vld [vmem:[%s402 + $0x218] sm:$0xff]
        %539 = vst [vmem:[%s403 + $0x218] sm:$0xff] %v538
        %v540 = vld [vmem:[%s402 + $0x220] sm:$0xff]
        %541 = vst [vmem:[%s403 + $0x220] sm:$0xff] %v540
        %v542 = vld [vmem:[%s402 + $0x228] sm:$0xff]
        %543 = vst [vmem:[%s403 + $0x228] sm:$0xff] %v542
        %v544 = vld [vmem:[%s402 + $0x230] sm:$0xff]
        %545 = vst [vmem:[%s403 + $0x230] sm:$0xff] %v544
        %v546 = vld [vmem:[%s402 + $0x238] sm:$0xff]
        %547 = vst [vmem:[%s403 + $0x238] sm:$0xff] %v546
        %v548 = vld [vmem:[%s402 + $0x240] sm:$0xff]
        %549 = vst [vmem:[%s403 + $0x240] sm:$0xff] %v548
        %v550 = vld [vmem:[%s402 + $0x248] sm:$0xff]
        %551 = vst [vmem:[%s403 + $0x248] sm:$0xff] %v550
        %v552 = vld [vmem:[%s402 + $0x250] sm:$0xff]
        %553 = vst [vmem:[%s403 + $0x250] sm:$0xff] %v552
        %v554 = vld [vmem:[%s402 + $0x258] sm:$0xff]
        %555 = vst [vmem:[%s403 + $0x258] sm:$0xff] %v554
        %v556 = vld [vmem:[%s402 + $0x260] sm:$0xff]
        %557 = vst [vmem:[%s403 + $0x260] sm:$0xff] %v556
        %v558 = vld [vmem:[%s402 + $0x268] sm:$0xff]
        %559 = vst [vmem:[%s403 + $0x268] sm:$0xff] %v558
        %v560 = vld [vmem:[%s402 + $0x270] sm:$0xff]
        %561 = vst [vmem:[%s403 + $0x270] sm:$0xff] %v560
        %v562 = vld [vmem:[%s402 + $0x278] sm:$0xff]
        %563 = vst [vmem:[%s403 + $0x278] sm:$0xff] %v562
        %v564 = vld [vmem:[%s402 + $0x280] sm:$0xff]
        %565 = vst [vmem:[%s403 + $0x280] sm:$0xff] %v564
        %v566 = vld [vmem:[%s402 + $0x288] sm:$0xff]
        %567 = vst [vmem:[%s403 + $0x288] sm:$0xff] %v566
        %v568 = vld [vmem:[%s402 + $0x290] sm:$0xff]
        %569 = vst [vmem:[%s403 + $0x290] sm:$0xff] %v568
        %v570 = vld [vmem:[%s402 + $0x298] sm:$0xff]
        %571 = vst [vmem:[%s403 + $0x298] sm:$0xff] %v570
        %v572 = vld [vmem:[%s402 + $0x2a0] sm:$0xff]
        %573 = vst [vmem:[%s403 + $0x2a0] sm:$0xff] %v572
        %v574 = vld [vmem:[%s402 + $0x2a8] sm:$0xff]
        %575 = vst [vmem:[%s403 + $0x2a8] sm:$0xff] %v574
        %v576 = vld [vmem:[%s402 + $0x2b0] sm:$0xff]
        %577 = vst [vmem:[%s403 + $0x2b0] sm:$0xff] %v576
        %v578 = vld [vmem:[%s402 + $0x2b8] sm:$0xff]
        %579 = vst [vmem:[%s403 + $0x2b8] sm:$0xff] %v578
        %v580 = vld [vmem:[%s402 + $0x2c0] sm:$0xff]
        %581 = vst [vmem:[%s403 + $0x2c0] sm:$0xff] %v580
        %v582 = vld [vmem:[%s402 + $0x2c8] sm:$0xff]
        %583 = vst [vmem:[%s403 + $0x2c8] sm:$0xff] %v582
        %v584 = vld [vmem:[%s402 + $0x2d0] sm:$0xff]
        %585 = vst [vmem:[%s403 + $0x2d0] sm:$0xff] %v584
        %v586 = vld [vmem:[%s402 + $0x2d8] sm:$0xff]
        %587 = vst [vmem:[%s403 + $0x2d8] sm:$0xff] %v586
        %v588 = vld [vmem:[%s402 + $0x2e0] sm:$0xff]
        %589 = vst [vmem:[%s403 + $0x2e0] sm:$0xff] %v588
        %v590 = vld [vmem:[%s402 + $0x2e8] sm:$0xff]
        %591 = vst [vmem:[%s403 + $0x2e8] sm:$0xff] %v590
        %v592 = vld [vmem:[%s402 + $0x2f0] sm:$0xff]
        %593 = vst [vmem:[%s403 + $0x2f0] sm:$0xff] %v592
        %v594 = vld [vmem:[%s402 + $0x2f8] sm:$0xff]
        %595 = vst [vmem:[%s403 + $0x2f8] sm:$0xff] %v594
        %v596 = vld [vmem:[%s402 + $0x300] sm:$0xff]
        %597 = vst [vmem:[%s403 + $0x300] sm:$0xff] %v596
        %v598 = vld [vmem:[%s402 + $0x308] sm:$0xff]
        %599 = vst [vmem:[%s403 + $0x308] sm:$0xff] %v598
        %v600 = vld [vmem:[%s402 + $0x310] sm:$0xff]
        %601 = vst [vmem:[%s403 + $0x310] sm:$0xff] %v600
        %v602 = vld [vmem:[%s402 + $0x318] sm:$0xff]
        %603 = vst [vmem:[%s403 + $0x318] sm:$0xff] %v602
        %v604 = vld [vmem:[%s402 + $0x320] sm:$0xff]
        %605 = vst [vmem:[%s403 + $0x320] sm:$0xff] %v604
        %v606 = vld [vmem:[%s402 + $0x328] sm:$0xff]
        %607 = vst [vmem:[%s403 + $0x328] sm:$0xff] %v606
        %v608 = vld [vmem:[%s402 + $0x330] sm:$0xff]
        %609 = vst [vmem:[%s403 + $0x330] sm:$0xff] %v608
        %v610 = vld [vmem:[%s402 + $0x338] sm:$0xff]
        %611 = vst [vmem:[%s403 + $0x338] sm:$0xff] %v610
        %v612 = vld [vmem:[%s402 + $0x340] sm:$0xff]
        %613 = vst [vmem:[%s403 + $0x340] sm:$0xff] %v612
        %v614 = vld [vmem:[%s402 + $0x348] sm:$0xff]
        %615 = vst [vmem:[%s403 + $0x348] sm:$0xff] %v614
        %v616 = vld [vmem:[%s402 + $0x350] sm:$0xff]
        %617 = vst [vmem:[%s403 + $0x350] sm:$0xff] %v616
        %v618 = vld [vmem:[%s402 + $0x358] sm:$0xff]
        %619 = vst [vmem:[%s403 + $0x358] sm:$0xff] %v618
        %v620 = vld [vmem:[%s402 + $0x360] sm:$0xff]
        %621 = vst [vmem:[%s403 + $0x360] sm:$0xff] %v620
        %v622 = vld [vmem:[%s402 + $0x368] sm:$0xff]
        %623 = vst [vmem:[%s403 + $0x368] sm:$0xff] %v622
        %v624 = vld [vmem:[%s402 + $0x370] sm:$0xff]
        %625 = vst [vmem:[%s403 + $0x370] sm:$0xff] %v624
        %v626 = vld [vmem:[%s402 + $0x378] sm:$0xff]
        %627 = vst [vmem:[%s403 + $0x378] sm:$0xff] %v626
        %v628 = vld [vmem:[%s402 + $0x380] sm:$0xff]
        %629 = vst [vmem:[%s403 + $0x380] sm:$0xff] %v628
        %v630 = vld [vmem:[%s402 + $0x388] sm:$0xff]
        %631 = vst [vmem:[%s403 + $0x388] sm:$0xff] %v630
        %v632 = vld [vmem:[%s402 + $0x390] sm:$0xff]
        %633 = vst [vmem:[%s403 + $0x390] sm:$0xff] %v632
        %v634 = vld [vmem:[%s402 + $0x398] sm:$0xff]
        %635 = vst [vmem:[%s403 + $0x398] sm:$0xff] %v634
        %v636 = vld [vmem:[%s402 + $0x3a0] sm:$0xff]
        %637 = vst [vmem:[%s403 + $0x3a0] sm:$0xff] %v636
        %v638 = vld [vmem:[%s402 + $0x3a8] sm:$0xff]
        %639 = vst [vmem:[%s403 + $0x3a8] sm:$0xff] %v638
        %v640 = vld [vmem:[%s402 + $0x3b0] sm:$0xff]
        %641 = vst [vmem:[%s403 + $0x3b0] sm:$0xff] %v640
        %v642 = vld [vmem:[%s402 + $0x3b8] sm:$0xff]
        %643 = vst [vmem:[%s403 + $0x3b8] sm:$0xff] %v642
        %v644 = vld [vmem:[%s402 + $0x3c0] sm:$0xff]
        %645 = vst [vmem:[%s403 + $0x3c0] sm:$0xff] %v644
        %v646 = vld [vmem:[%s402 + $0x3c8] sm:$0xff]
        %647 = vst [vmem:[%s403 + $0x3c8] sm:$0xff] %v646
        %v648 = vld [vmem:[%s402 + $0x3d0] sm:$0xff]
        %649 = vst [vmem:[%s403 + $0x3d0] sm:$0xff] %v648
        %v650 = vld [vmem:[%s402 + $0x3d8] sm:$0xff]
        %651 = vst [vmem:[%s403 + $0x3d8] sm:$0xff] %v650
        %v652 = vld [vmem:[%s402 + $0x3e0] sm:$0xff]
        %653 = vst [vmem:[%s403 + $0x3e0] sm:$0xff] %v652
        %v654 = vld [vmem:[%s402 + $0x3e8] sm:$0xff]
        %655 = vst [vmem:[%s403 + $0x3e8] sm:$0xff] %v654
        %v656 = vld [vmem:[%s402 + $0x3f0] sm:$0xff]
        %657 = vst [vmem:[%s403 + $0x3f0] sm:$0xff] %v656
        %v658 = vld [vmem:[%s402 + $0x3f8] sm:$0xff]
        %659 = vst [vmem:[%s403 + $0x3f8] sm:$0xff] %v658
        %v660 = vld [vmem:[%s402 + $0x400] sm:$0xff]
        %661 = vst [vmem:[%s403 + $0x400] sm:$0xff] %v660
        %v662 = vld [vmem:[%s402 + $0x408] sm:$0xff]
        %663 = vst [vmem:[%s403 + $0x408] sm:$0xff] %v662
        %v664 = vld [vmem:[%s402 + $0x410] sm:$0xff]
        %665 = vst [vmem:[%s403 + $0x410] sm:$0xff] %v664
        %v666 = vld [vmem:[%s402 + $0x418] sm:$0xff]
        %667 = vst [vmem:[%s403 + $0x418] sm:$0xff] %v666
        %v668 = vld [vmem:[%s402 + $0x420] sm:$0xff]
        %669 = vst [vmem:[%s403 + $0x420] sm:$0xff] %v668
        %v670 = vld [vmem:[%s402 + $0x428] sm:$0xff]
        %671 = vst [vmem:[%s403 + $0x428] sm:$0xff] %v670
        %v672 = vld [vmem:[%s402 + $0x430] sm:$0xff]
        %673 = vst [vmem:[%s403 + $0x430] sm:$0xff] %v672
        %v674 = vld [vmem:[%s402 + $0x438] sm:$0xff]
        %675 = vst [vmem:[%s403 + $0x438] sm:$0xff] %v674
        %v676 = vld [vmem:[%s402 + $0x440] sm:$0xff]
        %677 = vst [vmem:[%s403 + $0x440] sm:$0xff] %v676
        %v678 = vld [vmem:[%s402 + $0x448] sm:$0xff]
        %679 = vst [vmem:[%s403 + $0x448] sm:$0xff] %v678
        %v680 = vld [vmem:[%s402 + $0x450] sm:$0xff]
        %681 = vst [vmem:[%s403 + $0x450] sm:$0xff] %v680
        %v682 = vld [vmem:[%s402 + $0x458] sm:$0xff]
        %683 = vst [vmem:[%s403 + $0x458] sm:$0xff] %v682
        %v684 = vld [vmem:[%s402 + $0x460] sm:$0xff]
        %685 = vst [vmem:[%s403 + $0x460] sm:$0xff] %v684
        %v686 = vld [vmem:[%s402 + $0x468] sm:$0xff]
        %687 = vst [vmem:[%s403 + $0x468] sm:$0xff] %v686
        %v688 = vld [vmem:[%s402 + $0x470] sm:$0xff]
        %689 = vst [vmem:[%s403 + $0x470] sm:$0xff] %v688
        %v690 = vld [vmem:[%s402 + $0x478] sm:$0xff]
        %691 = vst [vmem:[%s403 + $0x478] sm:$0xff] %v690
        %v692 = vld [vmem:[%s402 + $0x480] sm:$0xff]
        %693 = vst [vmem:[%s403 + $0x480] sm:$0xff] %v692
        %v694 = vld [vmem:[%s402 + $0x488] sm:$0xff]
        %695 = vst [vmem:[%s403 + $0x488] sm:$0xff] %v694
        %v696 = vld [vmem:[%s402 + $0x490] sm:$0xff]
        %697 = vst [vmem:[%s403 + $0x490] sm:$0xff] %v696
        %v698 = vld [vmem:[%s402 + $0x498] sm:$0xff]
        %699 = vst [vmem:[%s403 + $0x498] sm:$0xff] %v698
        %v700 = vld [vmem:[%s402 + $0x4a0] sm:$0xff]
        %701 = vst [vmem:[%s403 + $0x4a0] sm:$0xff] %v700
        %v702 = vld [vmem:[%s402 + $0x4a8] sm:$0xff]
        %703 = vst [vmem:[%s403 + $0x4a8] sm:$0xff] %v702
        %v704 = vld [vmem:[%s402 + $0x4b0] sm:$0xff]
        %705 = vst [vmem:[%s403 + $0x4b0] sm:$0xff] %v704
        %v706 = vld [vmem:[%s402 + $0x4b8] sm:$0xff]
        %707 = vst [vmem:[%s403 + $0x4b8] sm:$0xff] %v706
        %v708 = vld [vmem:[%s402 + $0x4c0] sm:$0xff]
        %709 = vst [vmem:[%s403 + $0x4c0] sm:$0xff] %v708
        %v710 = vld [vmem:[%s402 + $0x4c8] sm:$0xff]
        %711 = vst [vmem:[%s403 + $0x4c8] sm:$0xff] %v710
        %v712 = vld [vmem:[%s402 + $0x4d0] sm:$0xff]
        %713 = vst [vmem:[%s403 + $0x4d0] sm:$0xff] %v712
        %v714 = vld [vmem:[%s402 + $0x4d8] sm:$0xff]
        %715 = vst [vmem:[%s403 + $0x4d8] sm:$0xff] %v714
        %v716 = vld [vmem:[%s402 + $0x4e0] sm:$0xff]
        %717 = vst [vmem:[%s403 + $0x4e0] sm:$0xff] %v716
        %v718 = vld [vmem:[%s402 + $0x4e8] sm:$0xff]
        %719 = vst [vmem:[%s403 + $0x4e8] sm:$0xff] %v718
        %v720 = vld [vmem:[%s402 + $0x4f0] sm:$0xff]
        %721 = vst [vmem:[%s403 + $0x4f0] sm:$0xff] %v720
        %v722 = vld [vmem:[%s402 + $0x4f8] sm:$0xff]
        %723 = vst [vmem:[%s403 + $0x4f8] sm:$0xff] %v722
        %v724 = vld [vmem:[%s402 + $0x500] sm:$0xff]
        %725 = vst [vmem:[%s403 + $0x500] sm:$0xff] %v724
        %v726 = vld [vmem:[%s402 + $0x508] sm:$0xff]
        %727 = vst [vmem:[%s403 + $0x508] sm:$0xff] %v726
        %v728 = vld [vmem:[%s402 + $0x510] sm:$0xff]
        %729 = vst [vmem:[%s403 + $0x510] sm:$0xff] %v728
        %v730 = vld [vmem:[%s402 + $0x518] sm:$0xff]
        %731 = vst [vmem:[%s403 + $0x518] sm:$0xff] %v730
        %v732 = vld [vmem:[%s402 + $0x520] sm:$0xff]
        %733 = vst [vmem:[%s403 + $0x520] sm:$0xff] %v732
        %v734 = vld [vmem:[%s402 + $0x528] sm:$0xff]
        %735 = vst [vmem:[%s403 + $0x528] sm:$0xff] %v734
        %v736 = vld [vmem:[%s402 + $0x530] sm:$0xff]
        %737 = vst [vmem:[%s403 + $0x530] sm:$0xff] %v736
        %v738 = vld [vmem:[%s402 + $0x538] sm:$0xff]
        %739 = vst [vmem:[%s403 + $0x538] sm:$0xff] %v738
        %v740 = vld [vmem:[%s402 + $0x540] sm:$0xff]
        %741 = vst [vmem:[%s403 + $0x540] sm:$0xff] %v740
        %v742 = vld [vmem:[%s402 + $0x548] sm:$0xff]
        %743 = vst [vmem:[%s403 + $0x548] sm:$0xff] %v742
        %v744 = vld [vmem:[%s402 + $0x550] sm:$0xff]
        %745 = vst [vmem:[%s403 + $0x550] sm:$0xff] %v744
        %v746 = vld [vmem:[%s402 + $0x558] sm:$0xff]
        %747 = vst [vmem:[%s403 + $0x558] sm:$0xff] %v746
        %v748 = vld [vmem:[%s402 + $0x560] sm:$0xff]
        %749 = vst [vmem:[%s403 + $0x560] sm:$0xff] %v748
        %v750 = vld [vmem:[%s402 + $0x568] sm:$0xff]
        %751 = vst [vmem:[%s403 + $0x568] sm:$0xff] %v750
        %v752 = vld [vmem:[%s402 + $0x570] sm:$0xff]
        %753 = vst [vmem:[%s403 + $0x570] sm:$0xff] %v752
        %v754 = vld [vmem:[%s402 + $0x578] sm:$0xff]
        %755 = vst [vmem:[%s403 + $0x578] sm:$0xff] %v754
        %v756 = vld [vmem:[%s402 + $0x580] sm:$0xff]
        %757 = vst [vmem:[%s403 + $0x580] sm:$0xff] %v756
        %v758 = vld [vmem:[%s402 + $0x588] sm:$0xff]
        %759 = vst [vmem:[%s403 + $0x588] sm:$0xff] %v758
        %v760 = vld [vmem:[%s402 + $0x590] sm:$0xff]
        %761 = vst [vmem:[%s403 + $0x590] sm:$0xff] %v760
        %v762 = vld [vmem:[%s402 + $0x598] sm:$0xff]
        %763 = vst [vmem:[%s403 + $0x598] sm:$0xff] %v762
        %v764 = vld [vmem:[%s402 + $0x5a0] sm:$0xff]
        %765 = vst [vmem:[%s403 + $0x5a0] sm:$0xff] %v764
        %v766 = vld [vmem:[%s402 + $0x5a8] sm:$0xff]
        %767 = vst [vmem:[%s403 + $0x5a8] sm:$0xff] %v766
        %v768 = vld [vmem:[%s402 + $0x5b0] sm:$0xff]
        %769 = vst [vmem:[%s403 + $0x5b0] sm:$0xff] %v768
        %v770 = vld [vmem:[%s402 + $0x5b8] sm:$0xff]
        %771 = vst [vmem:[%s403 + $0x5b8] sm:$0xff] %v770
        %v772 = vld [vmem:[%s402 + $0x5c0] sm:$0xff]
        %773 = vst [vmem:[%s403 + $0x5c0] sm:$0xff] %v772
        %v774 = vld [vmem:[%s402 + $0x5c8] sm:$0xff]
        %775 = vst [vmem:[%s403 + $0x5c8] sm:$0xff] %v774
        %v776 = vld [vmem:[%s402 + $0x5d0] sm:$0xff]
        %777 = vst [vmem:[%s403 + $0x5d0] sm:$0xff] %v776
        %v778 = vld [vmem:[%s402 + $0x5d8] sm:$0xff]
        %779 = vst [vmem:[%s403 + $0x5d8] sm:$0xff] %v778
        %v780 = vld [vmem:[%s402 + $0x5e0] sm:$0xff]
        %781 = vst [vmem:[%s403 + $0x5e0] sm:$0xff] %v780
        %v782 = vld [vmem:[%s402 + $0x5e8] sm:$0xff]
        %783 = vst [vmem:[%s403 + $0x5e8] sm:$0xff] %v782
        %v784 = vld [vmem:[%s402 + $0x5f0] sm:$0xff]
        %785 = vst [vmem:[%s403 + $0x5f0] sm:$0xff] %v784
        %v786 = vld [vmem:[%s402 + $0x5f8] sm:$0xff]
        %787 = vst [vmem:[%s403 + $0x5f8] sm:$0xff] %v786
        %v788 = vld [vmem:[%s402 + $0x600] sm:$0xff]
        %789 = vst [vmem:[%s403 + $0x600] sm:$0xff] %v788
        %v790 = vld [vmem:[%s402 + $0x608] sm:$0xff]
        %791 = vst [vmem:[%s403 + $0x608] sm:$0xff] %v790
        %v792 = vld [vmem:[%s402 + $0x610] sm:$0xff]
        %793 = vst [vmem:[%s403 + $0x610] sm:$0xff] %v792
        %v794 = vld [vmem:[%s402 + $0x618] sm:$0xff]
        %795 = vst [vmem:[%s403 + $0x618] sm:$0xff] %v794
        %v796 = vld [vmem:[%s402 + $0x620] sm:$0xff]
        %797 = vst [vmem:[%s403 + $0x620] sm:$0xff] %v796
        %v798 = vld [vmem:[%s402 + $0x628] sm:$0xff]
        %799 = vst [vmem:[%s403 + $0x628] sm:$0xff] %v798
        %v800 = vld [vmem:[%s402 + $0x630] sm:$0xff]
        %801 = vst [vmem:[%s403 + $0x630] sm:$0xff] %v800
        %v802 = vld [vmem:[%s402 + $0x638] sm:$0xff]
        %803 = vst [vmem:[%s403 + $0x638] sm:$0xff] %v802
        %v804 = vld [vmem:[%s402 + $0x640] sm:$0xff]
        %805 = vst [vmem:[%s403 + $0x640] sm:$0xff] %v804
        %v806 = vld [vmem:[%s402 + $0x648] sm:$0xff]
        %807 = vst [vmem:[%s403 + $0x648] sm:$0xff] %v806
        %v808 = vld [vmem:[%s402 + $0x650] sm:$0xff]
        %809 = vst [vmem:[%s403 + $0x650] sm:$0xff] %v808
        %v810 = vld [vmem:[%s402 + $0x658] sm:$0xff]
        %811 = vst [vmem:[%s403 + $0x658] sm:$0xff] %v810
        %v812 = vld [vmem:[%s402 + $0x660] sm:$0xff]
        %813 = vst [vmem:[%s403 + $0x660] sm:$0xff] %v812
        %v814 = vld [vmem:[%s402 + $0x668] sm:$0xff]
        %815 = vst [vmem:[%s403 + $0x668] sm:$0xff] %v814
        %v816 = vld [vmem:[%s402 + $0x670] sm:$0xff]
        %817 = vst [vmem:[%s403 + $0x670] sm:$0xff] %v816
        %v818 = vld [vmem:[%s402 + $0x678] sm:$0xff]
        %819 = vst [vmem:[%s403 + $0x678] sm:$0xff] %v818
        %v820 = vld [vmem:[%s402 + $0x680] sm:$0xff]
        %821 = vst [vmem:[%s403 + $0x680] sm:$0xff] %v820
        %v822 = vld [vmem:[%s402 + $0x688] sm:$0xff]
        %823 = vst [vmem:[%s403 + $0x688] sm:$0xff] %v822
        %v824 = vld [vmem:[%s402 + $0x690] sm:$0xff]
        %825 = vst [vmem:[%s403 + $0x690] sm:$0xff] %v824
        %v826 = vld [vmem:[%s402 + $0x698] sm:$0xff]
        %827 = vst [vmem:[%s403 + $0x698] sm:$0xff] %v826
        %v828 = vld [vmem:[%s402 + $0x6a0] sm:$0xff]
        %829 = vst [vmem:[%s403 + $0x6a0] sm:$0xff] %v828
        %v830 = vld [vmem:[%s402 + $0x6a8] sm:$0xff]
        %831 = vst [vmem:[%s403 + $0x6a8] sm:$0xff] %v830
        %v832 = vld [vmem:[%s402 + $0x6b0] sm:$0xff]
        %833 = vst [vmem:[%s403 + $0x6b0] sm:$0xff] %v832
        %v834 = vld [vmem:[%s402 + $0x6b8] sm:$0xff]
        %835 = vst [vmem:[%s403 + $0x6b8] sm:$0xff] %v834
        %v836 = vld [vmem:[%s402 + $0x6c0] sm:$0xff]
        %837 = vst [vmem:[%s403 + $0x6c0] sm:$0xff] %v836
        %v838 = vld [vmem:[%s402 + $0x6c8] sm:$0xff]
        %839 = vst [vmem:[%s403 + $0x6c8] sm:$0xff] %v838
        %v840 = vld [vmem:[%s402 + $0x6d0] sm:$0xff]
        %841 = vst [vmem:[%s403 + $0x6d0] sm:$0xff] %v840
        %v842 = vld [vmem:[%s402 + $0x6d8] sm:$0xff]
        %843 = vst [vmem:[%s403 + $0x6d8] sm:$0xff] %v842
        %v844 = vld [vmem:[%s402 + $0x6e0] sm:$0xff]
        %845 = vst [vmem:[%s403 + $0x6e0] sm:$0xff] %v844
        %v846 = vld [vmem:[%s402 + $0x6e8] sm:$0xff]
        %847 = vst [vmem:[%s403 + $0x6e8] sm:$0xff] %v846
        %v848 = vld [vmem:[%s402 + $0x6f0] sm:$0xff]
        %849 = vst [vmem:[%s403 + $0x6f0] sm:$0xff] %v848
        %v850 = vld [vmem:[%s402 + $0x6f8] sm:$0xff]
        %851 = vst [vmem:[%s403 + $0x6f8] sm:$0xff] %v850
        %v852 = vld [vmem:[%s402 + $0x700] sm:$0xff]
        %853 = vst [vmem:[%s403 + $0x700] sm:$0xff] %v852
        %v854 = vld [vmem:[%s402 + $0x708] sm:$0xff]
        %855 = vst [vmem:[%s403 + $0x708] sm:$0xff] %v854
        %v856 = vld [vmem:[%s402 + $0x710] sm:$0xff]
        %857 = vst [vmem:[%s403 + $0x710] sm:$0xff] %v856
        %v858 = vld [vmem:[%s402 + $0x718] sm:$0xff]
        %859 = vst [vmem:[%s403 + $0x718] sm:$0xff] %v858
        %v860 = vld [vmem:[%s402 + $0x720] sm:$0xff]
        %861 = vst [vmem:[%s403 + $0x720] sm:$0xff] %v860
        %v862 = vld [vmem:[%s402 + $0x728] sm:$0xff]
        %863 = vst [vmem:[%s403 + $0x728] sm:$0xff] %v862
        %v864 = vld [vmem:[%s402 + $0x730] sm:$0xff]
        %865 = vst [vmem:[%s403 + $0x730] sm:$0xff] %v864
        %v866 = vld [vmem:[%s402 + $0x738] sm:$0xff]
        %867 = vst [vmem:[%s403 + $0x738] sm:$0xff] %v866
        %v868 = vld [vmem:[%s402 + $0x740] sm:$0xff]
        %869 = vst [vmem:[%s403 + $0x740] sm:$0xff] %v868
        %v870 = vld [vmem:[%s402 + $0x748] sm:$0xff]
        %871 = vst [vmem:[%s403 + $0x748] sm:$0xff] %v870
        %v872 = vld [vmem:[%s402 + $0x750] sm:$0xff]
        %873 = vst [vmem:[%s403 + $0x750] sm:$0xff] %v872
        %v874 = vld [vmem:[%s402 + $0x758] sm:$0xff]
        %875 = vst [vmem:[%s403 + $0x758] sm:$0xff] %v874
        %v876 = vld [vmem:[%s402 + $0x760] sm:$0xff]
        %877 = vst [vmem:[%s403 + $0x760] sm:$0xff] %v876
        %v878 = vld [vmem:[%s402 + $0x768] sm:$0xff]
        %879 = vst [vmem:[%s403 + $0x768] sm:$0xff] %v878
        %v880 = vld [vmem:[%s402 + $0x770] sm:$0xff]
        %881 = vst [vmem:[%s403 + $0x770] sm:$0xff] %v880
        %v882 = vld [vmem:[%s402 + $0x778] sm:$0xff]
        %883 = vst [vmem:[%s403 + $0x778] sm:$0xff] %v882
        %v884 = vld [vmem:[%s402 + $0x780] sm:$0xff]
        %885 = vst [vmem:[%s403 + $0x780] sm:$0xff] %v884
        %v886 = vld [vmem:[%s402 + $0x788] sm:$0xff]
        %887 = vst [vmem:[%s403 + $0x788] sm:$0xff] %v886
        %v888 = vld [vmem:[%s402 + $0x790] sm:$0xff]
        %889 = vst [vmem:[%s403 + $0x790] sm:$0xff] %v888
        %v890 = vld [vmem:[%s402 + $0x798] sm:$0xff]
        %891 = vst [vmem:[%s403 + $0x798] sm:$0xff] %v890
        %v892 = vld [vmem:[%s402 + $0x7a0] sm:$0xff]
        %893 = vst [vmem:[%s403 + $0x7a0] sm:$0xff] %v892
        %v894 = vld [vmem:[%s402 + $0x7a8] sm:$0xff]
        %895 = vst [vmem:[%s403 + $0x7a8] sm:$0xff] %v894
        %v896 = vld [vmem:[%s402 + $0x7b0] sm:$0xff]
        %897 = vst [vmem:[%s403 + $0x7b0] sm:$0xff] %v896
        %v898 = vld [vmem:[%s402 + $0x7b8] sm:$0xff]
        %899 = vst [vmem:[%s403 + $0x7b8] sm:$0xff] %v898
        %v900 = vld [vmem:[%s402 + $0x7c0] sm:$0xff]
        %901 = vst [vmem:[%s403 + $0x7c0] sm:$0xff] %v900
        %v902 = vld [vmem:[%s402 + $0x7c8] sm:$0xff]
        %903 = vst [vmem:[%s403 + $0x7c8] sm:$0xff] %v902
        %v904 = vld [vmem:[%s402 + $0x7d0] sm:$0xff]
        %905 = vst [vmem:[%s403 + $0x7d0] sm:$0xff] %v904
        %v906 = vld [vmem:[%s402 + $0x7d8] sm:$0xff]
        %907 = vst [vmem:[%s403 + $0x7d8] sm:$0xff] %v906
        %v908 = vld [vmem:[%s402 + $0x7e0] sm:$0xff]
        %909 = vst [vmem:[%s403 + $0x7e0] sm:$0xff] %v908
        %v910 = vld [vmem:[%s402 + $0x7e8] sm:$0xff]
        %911 = vst [vmem:[%s403 + $0x7e8] sm:$0xff] %v910
        %v912 = vld [vmem:[%s402 + $0x7f0] sm:$0xff]
        %913 = vst [vmem:[%s403 + $0x7f0] sm:$0xff] %v912
        %v914 = vld [vmem:[%s402 + $0x7f8] sm:$0xff]
        %915 = vst [vmem:[%s403 + $0x7f8] sm:$0xff] %v914
        %v916 = vld [vmem:[%s402 + $0x800] sm:$0xff]
        %917 = vst [vmem:[%s403 + $0x800] sm:$0xff] %v916
        %v918 = vld [vmem:[%s402 + $0x808] sm:$0xff]
        %919 = vst [vmem:[%s403 + $0x808] sm:$0xff] %v918
        %v920 = vld [vmem:[%s402 + $0x810] sm:$0xff]
        %921 = vst [vmem:[%s403 + $0x810] sm:$0xff] %v920
        %v922 = vld [vmem:[%s402 + $0x818] sm:$0xff]
        %923 = vst [vmem:[%s403 + $0x818] sm:$0xff] %v922
        %v924 = vld [vmem:[%s402 + $0x820] sm:$0xff]
        %925 = vst [vmem:[%s403 + $0x820] sm:$0xff] %v924
        %v926 = vld [vmem:[%s402 + $0x828] sm:$0xff]
        %927 = vst [vmem:[%s403 + $0x828] sm:$0xff] %v926
        %v928 = vld [vmem:[%s402 + $0x830] sm:$0xff]
        %929 = vst [vmem:[%s403 + $0x830] sm:$0xff] %v928
        %v930 = vld [vmem:[%s402 + $0x838] sm:$0xff]
        %931 = vst [vmem:[%s403 + $0x838] sm:$0xff] %v930
        %v932 = vld [vmem:[%s402 + $0x840] sm:$0xff]
        %933 = vst [vmem:[%s403 + $0x840] sm:$0xff] %v932
        %v934 = vld [vmem:[%s402 + $0x848] sm:$0xff]
        %935 = vst [vmem:[%s403 + $0x848] sm:$0xff] %v934
        %v936 = vld [vmem:[%s402 + $0x850] sm:$0xff]
        %937 = vst [vmem:[%s403 + $0x850] sm:$0xff] %v936
        %v938 = vld [vmem:[%s402 + $0x858] sm:$0xff]
        %939 = vst [vmem:[%s403 + $0x858] sm:$0xff] %v938
        %v940 = vld [vmem:[%s402 + $0x860] sm:$0xff]
        %941 = vst [vmem:[%s403 + $0x860] sm:$0xff] %v940
        %v942 = vld [vmem:[%s402 + $0x868] sm:$0xff]
        %943 = vst [vmem:[%s403 + $0x868] sm:$0xff] %v942
        %v944 = vld [vmem:[%s402 + $0x870] sm:$0xff]
        %945 = vst [vmem:[%s403 + $0x870] sm:$0xff] %v944
        %v946 = vld [vmem:[%s402 + $0x878] sm:$0xff]
        %947 = vst [vmem:[%s403 + $0x878] sm:$0xff] %v946
        %v948 = vld [vmem:[%s402 + $0x880] sm:$0xff]
        %949 = vst [vmem:[%s403 + $0x880] sm:$0xff] %v948
        %v950 = vld [vmem:[%s402 + $0x888] sm:$0xff]
        %951 = vst [vmem:[%s403 + $0x888] sm:$0xff] %v950
        %v952 = vld [vmem:[%s402 + $0x890] sm:$0xff]
        %953 = vst [vmem:[%s403 + $0x890] sm:$0xff] %v952
        %v954 = vld [vmem:[%s402 + $0x898] sm:$0xff]
        %955 = vst [vmem:[%s403 + $0x898] sm:$0xff] %v954
        %v956 = vld [vmem:[%s402 + $0x8a0] sm:$0xff]
        %957 = vst [vmem:[%s403 + $0x8a0] sm:$0xff] %v956
        %v958 = vld [vmem:[%s402 + $0x8a8] sm:$0xff]
        %959 = vst [vmem:[%s403 + $0x8a8] sm:$0xff] %v958
        %v960 = vld [vmem:[%s402 + $0x8b0] sm:$0xff]
        %961 = vst [vmem:[%s403 + $0x8b0] sm:$0xff] %v960
        %v962 = vld [vmem:[%s402 + $0x8b8] sm:$0xff]
        %963 = vst [vmem:[%s403 + $0x8b8] sm:$0xff] %v962
        %v964 = vld [vmem:[%s402 + $0x8c0] sm:$0xff]
        %965 = vst [vmem:[%s403 + $0x8c0] sm:$0xff] %v964
        %v966 = vld [vmem:[%s402 + $0x8c8] sm:$0xff]
        %967 = vst [vmem:[%s403 + $0x8c8] sm:$0xff] %v966
        %v968 = vld [vmem:[%s402 + $0x8d0] sm:$0xff]
        %969 = vst [vmem:[%s403 + $0x8d0] sm:$0xff] %v968
        %v970 = vld [vmem:[%s402 + $0x8d8] sm:$0xff]
        %971 = vst [vmem:[%s403 + $0x8d8] sm:$0xff] %v970
        %v972 = vld [vmem:[%s402 + $0x8e0] sm:$0xff]
        %973 = vst [vmem:[%s403 + $0x8e0] sm:$0xff] %v972
        %v974 = vld [vmem:[%s402 + $0x8e8] sm:$0xff]
        %975 = vst [vmem:[%s403 + $0x8e8] sm:$0xff] %v974
        %v976 = vld [vmem:[%s402 + $0x8f0] sm:$0xff]
        %977 = vst [vmem:[%s403 + $0x8f0] sm:$0xff] %v976
        %v978 = vld [vmem:[%s402 + $0x8f8] sm:$0xff]
        %979 = vst [vmem:[%s403 + $0x8f8] sm:$0xff] %v978
        %v980 = vld [vmem:[%s402 + $0x900] sm:$0xff]
        %981 = vst [vmem:[%s403 + $0x900] sm:$0xff] %v980
        %v982 = vld [vmem:[%s402 + $0x908] sm:$0xff]
        %983 = vst [vmem:[%s403 + $0x908] sm:$0xff] %v982
        %v984 = vld [vmem:[%s402 + $0x910] sm:$0xff]
        %985 = vst [vmem:[%s403 + $0x910] sm:$0xff] %v984
        %v986 = vld [vmem:[%s402 + $0x918] sm:$0xff]
        %987 = vst [vmem:[%s403 + $0x918] sm:$0xff] %v986
        %v988 = vld [vmem:[%s402 + $0x920] sm:$0xff]
        %989 = vst [vmem:[%s403 + $0x920] sm:$0xff] %v988
        %v990 = vld [vmem:[%s402 + $0x928] sm:$0xff]
        %991 = vst [vmem:[%s403 + $0x928] sm:$0xff] %v990
        %v992 = vld [vmem:[%s402 + $0x930] sm:$0xff]
        %993 = vst [vmem:[%s403 + $0x930] sm:$0xff] %v992
        %v994 = vld [vmem:[%s402 + $0x938] sm:$0xff]
        %995 = vst [vmem:[%s403 + $0x938] sm:$0xff] %v994
        %v996 = vld [vmem:[%s402 + $0x940] sm:$0xff]
        %997 = vst [vmem:[%s403 + $0x940] sm:$0xff] %v996
        %v998 = vld [vmem:[%s402 + $0x948] sm:$0xff]
        %999 = vst [vmem:[%s403 + $0x948] sm:$0xff] %v998
        %v1000 = vld [vmem:[%s402 + $0x950] sm:$0xff]
        %1001 = vst [vmem:[%s403 + $0x950] sm:$0xff] %v1000
        %v1002 = vld [vmem:[%s402 + $0x958] sm:$0xff]
        %1003 = vst [vmem:[%s403 + $0x958] sm:$0xff] %v1002
        %v1004 = vld [vmem:[%s402 + $0x960] sm:$0xff]
        %1005 = vst [vmem:[%s403 + $0x960] sm:$0xff] %v1004
        %v1006 = vld [vmem:[%s402 + $0x968] sm:$0xff]
        %1007 = vst [vmem:[%s403 + $0x968] sm:$0xff] %v1006
        %v1008 = vld [vmem:[%s402 + $0x970] sm:$0xff]
        %1009 = vst [vmem:[%s403 + $0x970] sm:$0xff] %v1008
        %v1010 = vld [vmem:[%s402 + $0x978] sm:$0xff]
        %1011 = vst [vmem:[%s403 + $0x978] sm:$0xff] %v1010
        %v1012 = vld [vmem:[%s402 + $0x980] sm:$0xff]
        %1013 = vst [vmem:[%s403 + $0x980] sm:$0xff] %v1012
        %v1014 = vld [vmem:[%s402 + $0x988] sm:$0xff]
        %1015 = vst [vmem:[%s403 + $0x988] sm:$0xff] %v1014
        %v1016 = vld [vmem:[%s402 + $0x990] sm:$0xff]
        %1017 = vst [vmem:[%s403 + $0x990] sm:$0xff] %v1016
        %v1018 = vld [vmem:[%s402 + $0x998] sm:$0xff]
        %1019 = vst [vmem:[%s403 + $0x998] sm:$0xff] %v1018
        %v1020 = vld [vmem:[%s402 + $0x9a0] sm:$0xff]
        %1021 = vst [vmem:[%s403 + $0x9a0] sm:$0xff] %v1020
        %v1022 = vld [vmem:[%s402 + $0x9a8] sm:$0xff]
        %1023 = vst [vmem:[%s403 + $0x9a8] sm:$0xff] %v1022
        %v1024 = vld [vmem:[%s402 + $0x9b0] sm:$0xff]
        %1025 = vst [vmem:[%s403 + $0x9b0] sm:$0xff] %v1024
        %v1026 = vld [vmem:[%s402 + $0x9b8] sm:$0xff]
        %1027 = vst [vmem:[%s403 + $0x9b8] sm:$0xff] %v1026
        %v1028 = vld [vmem:[%s402 + $0x9c0] sm:$0xff]
        %1029 = vst [vmem:[%s403 + $0x9c0] sm:$0xff] %v1028
        %v1030 = vld [vmem:[%s402 + $0x9c8] sm:$0xff]
        %1031 = vst [vmem:[%s403 + $0x9c8] sm:$0xff] %v1030
        %v1032 = vld [vmem:[%s402 + $0x9d0] sm:$0xff]
        %1033 = vst [vmem:[%s403 + $0x9d0] sm:$0xff] %v1032
        %v1034 = vld [vmem:[%s402 + $0x9d8] sm:$0xff]
        %1035 = vst [vmem:[%s403 + $0x9d8] sm:$0xff] %v1034
        %v1036 = vld [vmem:[%s402 + $0x9e0] sm:$0xff]
        %1037 = vst [vmem:[%s403 + $0x9e0] sm:$0xff] %v1036
        %v1038 = vld [vmem:[%s402 + $0x9e8] sm:$0xff]
        %1039 = vst [vmem:[%s403 + $0x9e8] sm:$0xff] %v1038
        %v1040 = vld [vmem:[%s402 + $0x9f0] sm:$0xff]
        %1041 = vst [vmem:[%s403 + $0x9f0] sm:$0xff] %v1040
        %v1042 = vld [vmem:[%s402 + $0x9f8] sm:$0xff]
        %1043 = vst [vmem:[%s403 + $0x9f8] sm:$0xff] %v1042
        %v1044 = vld [vmem:[%s402 + $0xa00] sm:$0xff]
        %1045 = vst [vmem:[%s403 + $0xa00] sm:$0xff] %v1044
        %v1046 = vld [vmem:[%s402 + $0xa08] sm:$0xff]
        %1047 = vst [vmem:[%s403 + $0xa08] sm:$0xff] %v1046
        %v1048 = vld [vmem:[%s402 + $0xa10] sm:$0xff]
        %1049 = vst [vmem:[%s403 + $0xa10] sm:$0xff] %v1048
        %v1050 = vld [vmem:[%s402 + $0xa18] sm:$0xff]
        %1051 = vst [vmem:[%s403 + $0xa18] sm:$0xff] %v1050
        %v1052 = vld [vmem:[%s402 + $0xa20] sm:$0xff]
        %1053 = vst [vmem:[%s403 + $0xa20] sm:$0xff] %v1052
        %v1054 = vld [vmem:[%s402 + $0xa28] sm:$0xff]
        %1055 = vst [vmem:[%s403 + $0xa28] sm:$0xff] %v1054
        %v1056 = vld [vmem:[%s402 + $0xa30] sm:$0xff]
        %1057 = vst [vmem:[%s403 + $0xa30] sm:$0xff] %v1056
        %v1058 = vld [vmem:[%s402 + $0xa38] sm:$0xff]
        %1059 = vst [vmem:[%s403 + $0xa38] sm:$0xff] %v1058
        %v1060 = vld [vmem:[%s402 + $0xa40] sm:$0xff]
        %1061 = vst [vmem:[%s403 + $0xa40] sm:$0xff] %v1060
        %v1062 = vld [vmem:[%s402 + $0xa48] sm:$0xff]
        %1063 = vst [vmem:[%s403 + $0xa48] sm:$0xff] %v1062
        %v1064 = vld [vmem:[%s402 + $0xa50] sm:$0xff]
        %1065 = vst [vmem:[%s403 + $0xa50] sm:$0xff] %v1064
        %v1066 = vld [vmem:[%s402 + $0xa58] sm:$0xff]
        %1067 = vst [vmem:[%s403 + $0xa58] sm:$0xff] %v1066
        %v1068 = vld [vmem:[%s402 + $0xa60] sm:$0xff]
        %1069 = vst [vmem:[%s403 + $0xa60] sm:$0xff] %v1068
        %v1070 = vld [vmem:[%s402 + $0xa68] sm:$0xff]
        %1071 = vst [vmem:[%s403 + $0xa68] sm:$0xff] %v1070
        %v1072 = vld [vmem:[%s402 + $0xa70] sm:$0xff]
        %1073 = vst [vmem:[%s403 + $0xa70] sm:$0xff] %v1072
        %v1074 = vld [vmem:[%s402 + $0xa78] sm:$0xff]
        %1075 = vst [vmem:[%s403 + $0xa78] sm:$0xff] %v1074
        %v1076 = vld [vmem:[%s402 + $0xa80] sm:$0xff]
        %1077 = vst [vmem:[%s403 + $0xa80] sm:$0xff] %v1076
        %v1078 = vld [vmem:[%s402 + $0xa88] sm:$0xff]
        %1079 = vst [vmem:[%s403 + $0xa88] sm:$0xff] %v1078
        %v1080 = vld [vmem:[%s402 + $0xa90] sm:$0xff]
        %1081 = vst [vmem:[%s403 + $0xa90] sm:$0xff] %v1080
        %v1082 = vld [vmem:[%s402 + $0xa98] sm:$0xff]
        %1083 = vst [vmem:[%s403 + $0xa98] sm:$0xff] %v1082
        %v1084 = vld [vmem:[%s402 + $0xaa0] sm:$0xff]
        %1085 = vst [vmem:[%s403 + $0xaa0] sm:$0xff] %v1084
        %v1086 = vld [vmem:[%s402 + $0xaa8] sm:$0xff]
        %1087 = vst [vmem:[%s403 + $0xaa8] sm:$0xff] %v1086
        %v1088 = vld [vmem:[%s402 + $0xab0] sm:$0xff]
        %1089 = vst [vmem:[%s403 + $0xab0] sm:$0xff] %v1088
        %v1090 = vld [vmem:[%s402 + $0xab8] sm:$0xff]
        %1091 = vst [vmem:[%s403 + $0xab8] sm:$0xff] %v1090
        %v1092 = vld [vmem:[%s402 + $0xac0] sm:$0xff]
        %1093 = vst [vmem:[%s403 + $0xac0] sm:$0xff] %v1092
        %v1094 = vld [vmem:[%s402 + $0xac8] sm:$0xff]
        %1095 = vst [vmem:[%s403 + $0xac8] sm:$0xff] %v1094
        %v1096 = vld [vmem:[%s402 + $0xad0] sm:$0xff]
        %1097 = vst [vmem:[%s403 + $0xad0] sm:$0xff] %v1096
        %v1098 = vld [vmem:[%s402 + $0xad8] sm:$0xff]
        %1099 = vst [vmem:[%s403 + $0xad8] sm:$0xff] %v1098
        %v1100 = vld [vmem:[%s402 + $0xae0] sm:$0xff]
        %1101 = vst [vmem:[%s403 + $0xae0] sm:$0xff] %v1100
        %v1102 = vld [vmem:[%s402 + $0xae8] sm:$0xff]
        %1103 = vst [vmem:[%s403 + $0xae8] sm:$0xff] %v1102
        %v1104 = vld [vmem:[%s402 + $0xaf0] sm:$0xff]
        %1105 = vst [vmem:[%s403 + $0xaf0] sm:$0xff] %v1104
        %v1106 = vld [vmem:[%s402 + $0xaf8] sm:$0xff]
        %1107 = vst [vmem:[%s403 + $0xaf8] sm:$0xff] %v1106
      $region103: #{my_gnn_forward.1} parent=97 // loop_footer
        %s401 = sadd.s32 1, %s397
      $region104: #{my_gnn_forward.1} parent=97 // loop_footer_branch
        %396 = sbr.rel target = $region100
      $region105: #{my_gnn_forward.1} parent=97 // loop_exit
        _
    $region98: #{my_gnn_forward.1} parent=82 // pred_fallthru
      _
    %p1108 = pneg %p392
    // Predicated region
    $region106: #{my_gnn_forward.1} parent=82 // pred_check
      _
    $region107: #{my_gnn_forward.1} parent=82 // pred_check_branch
      %1110 = sbr.rel (%p392) target = $region109
    $region108: #{my_gnn_forward.1} parent=82 // pred_region
      %s1111 = sand.u32 2816, 7
    $region109: #{my_gnn_forward.1} parent=82 // pred_fallthru
      _
  $region83: #{my_gnn_forward.1} parent=0 // pred_fallthru
    _
  // Predicated region
  $region84: #{my_gnn_forward.1} parent=0 // pred_check
    %p376 = pneg %p372
  $region85: #{my_gnn_forward.1} parent=0 // pred_check_branch
    %378 = sbr.rel (%p376) target = $region87
  $region86: #{my_gnn_forward.1} parent=0 // pred_region
    %s379 = sshll.u32 1, 2816
    %s380 = ssub.s32 %s379, 1
    loop: start=0, step=1, limit=1
    $region88: #{my_gnn_forward.1} parent=86 // loop_pre_header
      _
    $region89: #{my_gnn_forward.1} parent=86 // loop_header
      %s382 = sphi 0, %s386
      %p383 = scmp.ge.s32.totalorder %s382, 1
      %s387 = sphi %s4, %s4
      %s388 = sphi [#allocation5], [#allocation5]
    $region90: #{my_gnn_forward.1} parent=86 // loop_header_branch
      %385 = sbr.rel (%p383) target = $region94
    $region91: #{my_gnn_forward.1} parent=86 // loop_body
      %v389 = vld [vmem:[%s387] sm:%s380]
      %390 = vst [vmem:[%s388] sm:%s380] %v389
    $region92: #{my_gnn_forward.1} parent=86 // loop_footer
      %s386 = sadd.s32 1, %s382
    $region93: #{my_gnn_forward.1} parent=86 // loop_footer_branch
      %381 = sbr.rel target = $region89
    $region94: #{my_gnn_forward.1} parent=86 // loop_exit
      _
  $region87: #{my_gnn_forward.1} parent=0 // pred_fallthru
    _
  // Predicated region
  $region110: #{my_gnn_forward.1} parent=0 // pred_check
    _
  $region111: #{my_gnn_forward.1} parent=0 // pred_check_branch
    %1114 = sbr.rel (0) target = $region113
  $region112: #{my_gnn_forward.1} parent=0 // pred_region
    %1115 = vsyncadd %s370, 45056
  $region113: #{my_gnn_forward.1} parent=0 // pred_fallthru
    _
  %v1116 = vld [vmem:[%s5] sm:$0x3f]
  %v1117 = vld [vmem:[%s5 + $0x6] sm:$0x1]
  %v1118 = vld [vmem:[%s5 + $0x7] sm:$0x1]
  %v1119 = vld [vmem:[%s5 + $0x8] sm:$0x3]
  %v1120 = vld [vmem:[%s5 + $0xa] sm:$0x1]
  %v1121 = vld [vmem:[%s5 + $0xb] sm:$0x1]
  %v1122 = vld [vmem:[%s5 + $0xc] sm:$0x1]
  %v1123 = vld [vmem:[%s5 + $0xd] sm:$0x1]
  %v1124 = vld [vmem:[%s0] sm:$0xff]
  %v1125 = vld [vmem:[%s0 + $0x8] sm:$0xff]
  %v1126 = vld [vmem:[%s0 + $0x10] sm:$0xff]
  %v1127 = vld [vmem:[%s0 + $0x18] sm:$0xff]
  %v1128 = vld [vmem:[%s0 + $0x20] sm:$0xff]
  %v1129 = vld [vmem:[%s0 + $0x28] sm:$0xff]
  %v1130 = vpack.c.bf16 %v1125, %v1124
  %v1131 = vpack.c.bf16 %v1127, %v1126
  %v1132 = vpack.c.bf16 %v1129, %v1128
  %v1133 = vld [vmem:[%s1] sm:$0xff]
  %v1134 = vld [vmem:[%s1 + $0x8] sm:$0xff]
  %v1135 = vld [vmem:[%s1 + $0x10] sm:$0xff]
  %v1136 = vld [vmem:[%s1 + $0x18] sm:$0xff]
  %v1137 = vld [vmem:[%s1 + $0x20] sm:$0xff]
  %v1138 = vld [vmem:[%s1 + $0x28] sm:$0xff]
  %v1139 = vld [vmem:[%s1 + $0x30] sm:$0xff]
  %v1140 = vld [vmem:[%s1 + $0x38] sm:$0xff]
  %v1141 = vld [vmem:[%s1 + $0x40] sm:$0xff]
  %v1142 = vld [vmem:[%s1 + $0x48] sm:$0xff]
  %v1143 = vld [vmem:[%s1 + $0x50] sm:$0xff]
  %v1144 = vld [vmem:[%s1 + $0x58] sm:$0xff]
  %v1145 = vld [vmem:[%s1 + $0x60] sm:$0xff]
  %v1146 = vld [vmem:[%s1 + $0x68] sm:$0xff]
  %v1147 = vld [vmem:[%s1 + $0x70] sm:$0xff]
  %v1148 = vld [vmem:[%s1 + $0x78] sm:$0xff]
  %v1149 = vld [vmem:[%s1 + $0x80] sm:$0xff]
  %v1150 = vld [vmem:[%s1 + $0x88] sm:$0xff]
  %v1151 = vld [vmem:[%s1 + $0x90] sm:$0xff]
  %v1152 = vld [vmem:[%s1 + $0x98] sm:$0xff]
  %v1153 = vld [vmem:[%s1 + $0xa0] sm:$0xff]
  %v1154 = vld [vmem:[%s1 + $0xa8] sm:$0xff]
  %v1155 = vld [vmem:[%s1 + $0xb0] sm:$0xff]
  %v1156 = vld [vmem:[%s1 + $0xb8] sm:$0xff]
  %v1157 = vld [vmem:[%s1 + $0xc0] sm:$0xff]
  %v1158 = vld [vmem:[%s1 + $0xc8] sm:$0xff]
  %v1159 = vld [vmem:[%s1 + $0xd0] sm:$0xff]
  %v1160 = vld [vmem:[%s1 + $0xd8] sm:$0xff]
  %v1161 = vld [vmem:[%s1 + $0xe0] sm:$0xff]
  %v1162 = vld [vmem:[%s1 + $0xe8] sm:$0xff]
  %v1164 = vlaneseq
  %v1165 = vshrl.u32 %v1164, 7
  %v1166 = vsub.s32 0, %v1165
  %v1167 = vrot.slane %v1116, %v1166
  %v1168 = vlaneseq
  %v1169 = vshrl.u32 %v1168, 7
  %v1170 = vsub.s32 1, %v1169
  %v1171 = vrot.slane %v1116, %v1170
  %v1172 = vlaneseq
  %v1173 = vshrl.u32 %v1172, 7
  %v1174 = vsub.s32 2, %v1173
  %v1175 = vrot.slane %v1116, %v1174
  %v1176 = vlaneseq
  %v1177 = vshrl.u32 %v1176, 7
  %v1178 = vsub.s32 3, %v1177
  %v1179 = vrot.slane %v1116, %v1178
  %v1180 = vlaneseq
  %v1181 = vshrl.u32 %v1180, 7
  %v1182 = vsub.s32 4, %v1181
  %v1183 = vrot.slane %v1116, %v1182
  %v1184 = vlaneseq
  %v1185 = vshrl.u32 %v1184, 7
  %v1186 = vsub.s32 5, %v1185
  %v1187 = vrot.slane %v1116, %v1186
  %v1224 = vunpack.c.l.b16 %v1133
  %v1225 = vunpack.c.h.b16 %v1133
  %v1226 = vunpack.c.l.b16 %v1134
  %v1227 = vunpack.c.h.b16 %v1134
  %v1228 = vunpack.c.l.b16 %v1135
  %v1229 = vunpack.c.h.b16 %v1135
  %v1230 = vunpack.c.l.b16 %v1136
  %v1231 = vunpack.c.h.b16 %v1136
  %v1232 = vunpack.c.l.b16 %v1137
  %v1233 = vunpack.c.h.b16 %v1137
  %v1234 = vunpack.c.l.b16 %v1138
  %v1235 = vunpack.c.h.b16 %v1138
  %v1236 = vunpack.c.l.b16 %v1139
  %v1237 = vunpack.c.h.b16 %v1139
  %v1238 = vunpack.c.l.b16 %v1140
  %v1239 = vunpack.c.h.b16 %v1140
  %v1240 = vunpack.c.l.b16 %v1141
  %v1241 = vunpack.c.h.b16 %v1141
  %v1242 = vunpack.c.l.b16 %v1142
  %v1243 = vunpack.c.h.b16 %v1142
  %v1244 = vunpack.c.l.b16 %v1143
  %v1245 = vunpack.c.h.b16 %v1143
  %v1246 = vunpack.c.l.b16 %v1144
  %v1247 = vunpack.c.h.b16 %v1144
  %v1248 = vunpack.c.l.b16 %v1145
  %v1249 = vunpack.c.h.b16 %v1145
  %v1250 = vunpack.c.l.b16 %v1146
  %v1251 = vunpack.c.h.b16 %v1146
  %v1252 = vunpack.c.l.b16 %v1147
  %v1253 = vunpack.c.h.b16 %v1147
  %v1254 = vunpack.c.l.b16 %v1148
  %v1255 = vunpack.c.h.b16 %v1148
  %v1256 = vunpack.c.l.b16 %v1149
  %v1257 = vunpack.c.h.b16 %v1149
  %v1258 = vunpack.c.l.b16 %v1150
  %v1259 = vunpack.c.h.b16 %v1150
  %v1260 = vunpack.c.l.b16 %v1151
  %v1261 = vunpack.c.h.b16 %v1151
  %v1262 = vunpack.c.l.b16 %v1152
  %v1263 = vunpack.c.h.b16 %v1152
  %v1264 = vunpack.c.l.b16 %v1153
  %v1265 = vunpack.c.h.b16 %v1153
  %v1266 = vunpack.c.l.b16 %v1154
  %v1267 = vunpack.c.h.b16 %v1154
  %v1268 = vunpack.c.l.b16 %v1155
  %v1269 = vunpack.c.h.b16 %v1155
  %v1270 = vunpack.c.l.b16 %v1156
  %v1271 = vunpack.c.h.b16 %v1156
  %v1272 = vunpack.c.l.b16 %v1157
  %v1273 = vunpack.c.h.b16 %v1157
  %v1274 = vunpack.c.l.b16 %v1158
  %v1275 = vunpack.c.h.b16 %v1158
  %v1276 = vunpack.c.l.b16 %v1159
  %v1277 = vunpack.c.h.b16 %v1159
  %v1278 = vunpack.c.l.b16 %v1160
  %v1279 = vunpack.c.h.b16 %v1160
  %v1280 = vunpack.c.l.b16 %v1161
  %v1281 = vunpack.c.h.b16 %v1161
  %v1282 = vunpack.c.l.b16 %v1162
  %v1283 = vunpack.c.h.b16 %v1162
  %v1284 = vpack.c.b16 %v1230, %v1224
  %v1285 = vpack.c.b16 %v1231, %v1225
  %v1286 = vpack.c.b16 %v1232, %v1226
  %v1287 = vpack.c.b16 %v1233, %v1227
  %v1288 = vpack.c.b16 %v1234, %v1228
  %v1289 = vpack.c.b16 %v1235, %v1229
  %v1290 = vpack.c.b16 %v1242, %v1236
  %v1291 = vpack.c.b16 %v1243, %v1237
  %v1292 = vpack.c.b16 %v1244, %v1238
  %v1293 = vpack.c.b16 %v1245, %v1239
  %v1294 = vpack.c.b16 %v1246, %v1240
  %v1295 = vpack.c.b16 %v1247, %v1241
  %v1296 = vpack.c.b16 %v1254, %v1248
  %v1297 = vpack.c.b16 %v1255, %v1249
  %v1298 = vpack.c.b16 %v1256, %v1250
  %v1299 = vpack.c.b16 %v1257, %v1251
  %v1300 = vpack.c.b16 %v1258, %v1252
  %v1301 = vpack.c.b16 %v1259, %v1253
  %v1302 = vpack.c.b16 %v1266, %v1260
  %v1303 = vpack.c.b16 %v1267, %v1261
  %v1304 = vpack.c.b16 %v1268, %v1262
  %v1305 = vpack.c.b16 %v1269, %v1263
  %v1306 = vpack.c.b16 %v1270, %v1264
  %v1307 = vpack.c.b16 %v1271, %v1265
  %v1308 = vpack.c.b16 %v1278, %v1272
  %v1309 = vpack.c.b16 %v1279, %v1273
  %v1310 = vpack.c.b16 %v1280, %v1274
  %v1311 = vpack.c.b16 %v1281, %v1275
  %v1312 = vpack.c.b16 %v1282, %v1276
  %v1313 = vpack.c.b16 %v1283, %v1277
  %vm1344 = vcmask 654336
  %v1346 = vsel %vm1344, %v1130, 0
  %v1349 = vsel %vm1344, %v1131, 0
  %v1352 = vsel %vm1344, %v1132, 0
  %1354 = vmatprep.subr.bf16.mxu0 0
  %1355 = vmatpush1.bf16.msra.mxu0 0
  %1356 = vmatprep.subr.bf16.mxu0 0
  %1357 = vmatpush1.bf16.msra.mxu0 0
  %1358 = vmatprep.subr.bf16.mxu0 0
  %1359 = vmatpush1.bf16.msra.mxu0 0
  %1360 = vmatprep.subr.bf16.mxu0 %v1309
  %1361 = vmatpush1.bf16.msra.mxu0 %v1308
  %1362 = vmatprep.subr.bf16.mxu0 %v1303
  %1363 = vmatpush1.bf16.msra.mxu0 %v1302
  %1364 = vmatprep.subr.bf16.mxu0 %v1297
  %1365 = vmatpush1.bf16.msra.mxu0 %v1296
  %1366 = vmatprep.subr.bf16.mxu0 %v1291
  %1367 = vmatpush1.bf16.msra.mxu0 %v1290
  %1368 = vmatprep.subr.bf16.mxu0 %v1285
  %1369 = vmatpush1.bf16.msra.mxu0 %v1284
  %1370 = vmatprep.subr.bf16.mxu0 0
  %1371 = vmatpush2.bf16.msra.mxu0 0
  %1372 = vmatprep.subr.bf16.mxu0 0
  %1373 = vmatpush2.bf16.msra.mxu0 0
  %1374 = vmatprep.subr.bf16.mxu0 0
  %1375 = vmatpush2.bf16.msra.mxu0 0
  %1376 = vmatprep.subr.bf16.mxu0 0
  %1377 = vmatpush2.bf16.msra.mxu0 0
  %1378 = vmatprep.subr.bf16.mxu0 0
  %1379 = vmatpush2.bf16.msra.mxu0 0
  %1380 = vmatprep.subr.bf16.mxu0 0
  %1381 = vmatpush2.bf16.msra.mxu0 0
  %1382 = vmatprep.subr.bf16.mxu0 0
  %1383 = vmatpush2.bf16.msra.mxu0 0
  %1384 = vmatprep.subr.bf16.mxu0 0
  %1385 = vmatpush2.bf16.msra.mxu0 0
  %1386 = vmatprep.mubr.bf16.mxu0 0
  %1387 = vmatmul.mubr.bf16.gmra.mxu0 %v1346
  %v1388 = vpop.f32.mrf.mxu0
  %v1389 = vadd.f32 %v1167, %v1388
  %v1390 = vpop.f32.mrf.mxu0
  %v1391 = vadd.f32 %v1171, %v1390
  %v1392 = vpop.f32.mrf.mxu0
  %v1393 = vadd.f32 %v1167, %v1392
  %v1394 = vpop.f32.mrf.mxu0
  %v1395 = vadd.f32 %v1171, %v1394
  %1396 = vmatprep.mubr.bf16.mxu0 0
  %1397 = vmatmul.mubr.bf16.gmra.mxu0 %v1349
  %v1398 = vpop.f32.mrf.mxu0
  %v1399 = vadd.f32 %v1167, %v1398
  %v1400 = vpop.f32.mrf.mxu0
  %v1401 = vadd.f32 %v1171, %v1400
  %v1402 = vpop.f32.mrf.mxu0
  %v1403 = vadd.f32 %v1167, %v1402
  %v1404 = vpop.f32.mrf.mxu0
  %v1405 = vadd.f32 %v1171, %v1404
  %1406 = vmatprep.mubr.bf16.mxu0 0
  %1407 = vmatmul.mubr.bf16.gmra.mxu0 %v1352
  %v1408 = vpop.f32.mrf.mxu0
  %v1409 = vadd.f32 %v1167, %v1408
  %v1410 = vpop.f32.mrf.mxu0
  %v1411 = vadd.f32 %v1171, %v1410
  %v1412 = vpop.f32.mrf.mxu0
  %v1413 = vadd.f32 %v1167, %v1412
  %v1414 = vpop.f32.mrf.mxu0
  %v1415 = vadd.f32 %v1171, %v1414
  %1416 = vdwg.mxu0
  %1417 = vmatprep.subr.bf16.mxu0 0
  %1418 = vmatpush1.bf16.msra.mxu0 0
  %1419 = vmatprep.subr.bf16.mxu0 0
  %1420 = vmatpush1.bf16.msra.mxu0 0
  %1421 = vmatprep.subr.bf16.mxu0 0
  %1422 = vmatpush1.bf16.msra.mxu0 0
  %1423 = vmatprep.subr.bf16.mxu0 %v1311
  %1424 = vmatpush1.bf16.msra.mxu0 %v1310
  %1425 = vmatprep.subr.bf16.mxu0 %v1305
  %1426 = vmatpush1.bf16.msra.mxu0 %v1304
  %1427 = vmatprep.subr.bf16.mxu0 %v1299
  %1428 = vmatpush1.bf16.msra.mxu0 %v1298
  %1429 = vmatprep.subr.bf16.mxu0 %v1293
  %1430 = vmatpush1.bf16.msra.mxu0 %v1292
  %1431 = vmatprep.subr.bf16.mxu0 %v1287
  %1432 = vmatpush1.bf16.msra.mxu0 %v1286
  %1433 = vmatprep.subr.bf16.mxu0 0
  %1434 = vmatpush2.bf16.msra.mxu0 0
  %1435 = vmatprep.subr.bf16.mxu0 0
  %1436 = vmatpush2.bf16.msra.mxu0 0
  %1437 = vmatprep.subr.bf16.mxu0 0
  %1438 = vmatpush2.bf16.msra.mxu0 0
  %1439 = vmatprep.subr.bf16.mxu0 0
  %1440 = vmatpush2.bf16.msra.mxu0 0
  %1441 = vmatprep.subr.bf16.mxu0 0
  %1442 = vmatpush2.bf16.msra.mxu0 0
  %1443 = vmatprep.subr.bf16.mxu0 0
  %1444 = vmatpush2.bf16.msra.mxu0 0
  %1445 = vmatprep.subr.bf16.mxu0 0
  %1446 = vmatpush2.bf16.msra.mxu0 0
  %1447 = vmatprep.subr.bf16.mxu0 0
  %1448 = vmatpush2.bf16.msra.mxu0 0
  %1449 = vmatprep.mubr.bf16.mxu0 0
  %1450 = vmatmul.mubr.bf16.gmra.mxu0 %v1346
  %v1451 = vpop.f32.mrf.mxu0
  %v1452 = vadd.f32 %v1175, %v1451
  %v1453 = vpop.f32.mrf.mxu0
  %v1454 = vadd.f32 %v1179, %v1453
  %v1455 = vpop.f32.mrf.mxu0
  %v1456 = vadd.f32 %v1175, %v1455
  %v1457 = vpop.f32.mrf.mxu0
  %v1458 = vadd.f32 %v1179, %v1457
  %1459 = vmatprep.mubr.bf16.mxu0 0
  %1460 = vmatmul.mubr.bf16.gmra.mxu0 %v1349
  %v1461 = vpop.f32.mrf.mxu0
  %v1462 = vadd.f32 %v1175, %v1461
  %v1463 = vpop.f32.mrf.mxu0
  %v1464 = vadd.f32 %v1179, %v1463
  %v1465 = vpop.f32.mrf.mxu0
  %v1466 = vadd.f32 %v1175, %v1465
  %v1467 = vpop.f32.mrf.mxu0
  %v1468 = vadd.f32 %v1179, %v1467
  %1469 = vmatprep.mubr.bf16.mxu0 0
  %1470 = vmatmul.mubr.bf16.gmra.mxu0 %v1352
  %v1471 = vpop.f32.mrf.mxu0
  %v1472 = vadd.f32 %v1175, %v1471
  %v1473 = vpop.f32.mrf.mxu0
  %v1474 = vadd.f32 %v1179, %v1473
  %v1475 = vpop.f32.mrf.mxu0
  %v1476 = vadd.f32 %v1175, %v1475
  %v1477 = vpop.f32.mrf.mxu0
  %v1478 = vadd.f32 %v1179, %v1477
  %1479 = vdwg.mxu0
  %1480 = vmatprep.subr.bf16.mxu0 0
  %1481 = vmatpush1.bf16.msra.mxu0 0
  %1482 = vmatprep.subr.bf16.mxu0 0
  %1483 = vmatpush1.bf16.msra.mxu0 0
  %1484 = vmatprep.subr.bf16.mxu0 0
  %1485 = vmatpush1.bf16.msra.mxu0 0
  %1486 = vmatprep.subr.bf16.mxu0 %v1313
  %1487 = vmatpush1.bf16.msra.mxu0 %v1312
  %1488 = vmatprep.subr.bf16.mxu0 %v1307
  %1489 = vmatpush1.bf16.msra.mxu0 %v1306
  %1490 = vmatprep.subr.bf16.mxu0 %v1301
  %1491 = vmatpush1.bf16.msra.mxu0 %v1300
  %1492 = vmatprep.subr.bf16.mxu0 %v1295
  %1493 = vmatpush1.bf16.msra.mxu0 %v1294
  %1494 = vmatprep.subr.bf16.mxu0 %v1289
  %1495 = vmatpush1.bf16.msra.mxu0 %v1288
  %1496 = vmatprep.subr.bf16.mxu0 0
  %1497 = vmatpush2.bf16.msra.mxu0 0
  %1498 = vmatprep.subr.bf16.mxu0 0
  %1499 = vmatpush2.bf16.msra.mxu0 0
  %1500 = vmatprep.subr.bf16.mxu0 0
  %1501 = vmatpush2.bf16.msra.mxu0 0
  %1502 = vmatprep.subr.bf16.mxu0 0
  %1503 = vmatpush2.bf16.msra.mxu0 0
  %1504 = vmatprep.subr.bf16.mxu0 0
  %1505 = vmatpush2.bf16.msra.mxu0 0
  %1506 = vmatprep.subr.bf16.mxu0 0
  %1507 = vmatpush2.bf16.msra.mxu0 0
  %1508 = vmatprep.subr.bf16.mxu0 0
  %1509 = vmatpush2.bf16.msra.mxu0 0
  %1510 = vmatprep.subr.bf16.mxu0 0
  %1511 = vmatpush2.bf16.msra.mxu0 0
  %1512 = vmatprep.mubr.bf16.mxu0 0
  %1513 = vmatmul.mubr.bf16.gmra.mxu0 %v1346
  %v1514 = vpop.f32.mrf.mxu0
  %v1515 = vadd.f32 %v1183, %v1514
  %v1516 = vpop.f32.mrf.mxu0
  %v1517 = vadd.f32 %v1187, %v1516
  %v1518 = vpop.f32.mrf.mxu0
  %v1519 = vadd.f32 %v1183, %v1518
  %v1520 = vpop.f32.mrf.mxu0
  %v1521 = vadd.f32 %v1187, %v1520
  %1522 = vmatprep.mubr.bf16.mxu0 0
  %1523 = vmatmul.mubr.bf16.gmra.mxu0 %v1349
  %v1524 = vpop.f32.mrf.mxu0
  %v1525 = vadd.f32 %v1183, %v1524
  %v1526 = vpop.f32.mrf.mxu0
  %v1527 = vadd.f32 %v1187, %v1526
  %v1528 = vpop.f32.mrf.mxu0
  %v1529 = vadd.f32 %v1183, %v1528
  %v1530 = vpop.f32.mrf.mxu0
  %v1531 = vadd.f32 %v1187, %v1530
  %1532 = vmatprep.mubr.bf16.mxu0 0
  %1533 = vmatmul.mubr.bf16.gmra.mxu0 %v1352
  %v1534 = vpop.f32.mrf.mxu0
  %v1535 = vadd.f32 %v1183, %v1534
  %v1536 = vpop.f32.mrf.mxu0
  %v1537 = vadd.f32 %v1187, %v1536
  %v1538 = vpop.f32.mrf.mxu0
  %v1539 = vadd.f32 %v1183, %v1538
  %v1540 = vpop.f32.mrf.mxu0
  %v1541 = vadd.f32 %v1187, %v1540
  %1542 = vdwg.mxu0
  %v1543 = vmax.f32 %v1389, 0.0
  %v1544 = vmax.f32 %v1391, 0.0
  %v1545 = vmax.f32 %v1452, 0.0
  %v1546 = vmax.f32 %v1454, 0.0
  %v1547 = vmax.f32 %v1515, 0.0
  %v1548 = vmax.f32 %v1517, 0.0
  %v1549 = vmax.f32 %v1393, 0.0
  %v1550 = vmax.f32 %v1395, 0.0
  %v1551 = vmax.f32 %v1456, 0.0
  %v1552 = vmax.f32 %v1458, 0.0
  %v1553 = vmax.f32 %v1519, 0.0
  %v1554 = vmax.f32 %v1521, 0.0
  %v1555 = vmax.f32 %v1399, 0.0
  %v1556 = vmax.f32 %v1401, 0.0
  %v1557 = vmax.f32 %v1462, 0.0
  %v1558 = vmax.f32 %v1464, 0.0
  %v1559 = vmax.f32 %v1525, 0.0
  %v1560 = vmax.f32 %v1527, 0.0
  %v1561 = vmax.f32 %v1403, 0.0
  %v1562 = vmax.f32 %v1405, 0.0
  %v1563 = vmax.f32 %v1466, 0.0
  %v1564 = vmax.f32 %v1468, 0.0
  %v1565 = vmax.f32 %v1529, 0.0
  %v1566 = vmax.f32 %v1531, 0.0
  %v1567 = vmax.f32 %v1409, 0.0
  %v1568 = vmax.f32 %v1411, 0.0
  %v1569 = vmax.f32 %v1472, 0.0
  %v1570 = vmax.f32 %v1474, 0.0
  %v1571 = vmax.f32 %v1535, 0.0
  %v1572 = vmax.f32 %v1537, 0.0
  %v1573 = vmax.f32 %v1413, 0.0
  %v1574 = vmax.f32 %v1415, 0.0
  %v1575 = vmax.f32 %v1476, 0.0
  %v1576 = vmax.f32 %v1478, 0.0
  %v1577 = vmax.f32 %v1539, 0.0
  %v1578 = vmax.f32 %v1541, 0.0
  %v1579 = vpack.c.bf16 %v1549, %v1543
  %v1580 = vpack.c.bf16 %v1550, %v1544
  %v1581 = vpack.c.bf16 %v1551, %v1545
  %v1582 = vpack.c.bf16 %v1552, %v1546
  %v1583 = vpack.c.bf16 %v1553, %v1547
  %v1584 = vpack.c.bf16 %v1554, %v1548
  %v1585 = vpack.c.bf16 %v1561, %v1555
  %v1586 = vpack.c.bf16 %v1562, %v1556
  %v1587 = vpack.c.bf16 %v1563, %v1557
  %v1588 = vpack.c.bf16 %v1564, %v1558
  %v1589 = vpack.c.bf16 %v1565, %v1559
  %v1590 = vpack.c.bf16 %v1566, %v1560
  %v1591 = vpack.c.bf16 %v1573, %v1567
  %v1592 = vpack.c.bf16 %v1574, %v1568
  %v1593 = vpack.c.bf16 %v1575, %v1569
  %v1594 = vpack.c.bf16 %v1576, %v1570
  %v1595 = vpack.c.bf16 %v1577, %v1571
  %v1596 = vpack.c.bf16 %v1578, %v1572
  %v1615 = vunpack.c.l.b16 %v1579
  %v1616 = vunpack.c.l.b16 %v1580
  %v1617 = vunpack.c.l.b16 %v1581
  %v1618 = vunpack.c.l.b16 %v1582
  %v1619 = vunpack.c.l.b16 %v1583
  %v1620 = vunpack.c.l.b16 %v1584
  %v1621 = vunpack.c.h.b16 %v1579
  %v1622 = vunpack.c.h.b16 %v1580
  %v1623 = vunpack.c.h.b16 %v1581
  %v1624 = vunpack.c.h.b16 %v1582
  %v1625 = vunpack.c.h.b16 %v1583
  %v1626 = vunpack.c.h.b16 %v1584
  %v1627 = vunpack.c.l.b16 %v1585
  %v1628 = vunpack.c.l.b16 %v1586
  %v1629 = vunpack.c.l.b16 %v1587
  %v1630 = vunpack.c.l.b16 %v1588
  %v1631 = vunpack.c.l.b16 %v1589
  %v1632 = vunpack.c.l.b16 %v1590
  %v1633 = vunpack.c.h.b16 %v1585
  %v1634 = vunpack.c.h.b16 %v1586
  %v1635 = vunpack.c.h.b16 %v1587
  %v1636 = vunpack.c.h.b16 %v1588
  %v1637 = vunpack.c.h.b16 %v1589
  %v1638 = vunpack.c.h.b16 %v1590
  %v1639 = vunpack.c.l.b16 %v1591
  %v1640 = vunpack.c.l.b16 %v1592
  %v1641 = vunpack.c.l.b16 %v1593
  %v1642 = vunpack.c.l.b16 %v1594
  %v1643 = vunpack.c.l.b16 %v1595
  %v1644 = vunpack.c.l.b16 %v1596
  %v1645 = vunpack.c.h.b16 %v1591
  %v1646 = vunpack.c.h.b16 %v1592
  %v1647 = vunpack.c.h.b16 %v1593
  %v1648 = vunpack.c.h.b16 %v1594
  %v1649 = vunpack.c.h.b16 %v1595
  %v1650 = vunpack.c.h.b16 %v1596
  %v1651 = vpack.c.b16 %v1616, %v1615
  %v1652 = vpack.c.b16 %v1618, %v1617
  %v1653 = vpack.c.b16 %v1620, %v1619
  %v1654 = vpack.c.b16 %v1622, %v1621
  %v1655 = vpack.c.b16 %v1624, %v1623
  %v1656 = vpack.c.b16 %v1626, %v1625
  %v1657 = vpack.c.b16 %v1628, %v1627
  %v1658 = vpack.c.b16 %v1630, %v1629
  %v1659 = vpack.c.b16 %v1632, %v1631
  %v1660 = vpack.c.b16 %v1634, %v1633
  %v1661 = vpack.c.b16 %v1636, %v1635
  %v1662 = vpack.c.b16 %v1638, %v1637
  %v1663 = vpack.c.b16 %v1640, %v1639
  %v1664 = vpack.c.b16 %v1642, %v1641
  %v1665 = vpack.c.b16 %v1644, %v1643
  %v1666 = vpack.c.b16 %v1646, %v1645
  %v1667 = vpack.c.b16 %v1648, %v1647
  %v1668 = vpack.c.b16 %v1650, %v1649
  %1687 = vst [vmem:[#allocation2] sm:$0xff] %v1651
  %1688 = vst [vmem:[#allocation2 + $0x8] sm:$0xff] %v1652
  %1689 = vst [vmem:[#allocation2 + $0x10] sm:$0xff] %v1653
  %1690 = vst [vmem:[#allocation2 + $0x18] sm:$0xff] %v1654
  %1691 = vst [vmem:[#allocation2 + $0x20] sm:$0xff] %v1655
  %1692 = vst [vmem:[#allocation2 + $0x28] sm:$0xff] %v1656
  %1693 = vst [vmem:[#allocation2 + $0x30] sm:$0xff] %v1657
  %1694 = vst [vmem:[#allocation2 + $0x38] sm:$0xff] %v1658
  %1695 = vst [vmem:[#allocation2 + $0x40] sm:$0xff] %v1659
  %1696 = vst [vmem:[#allocation2 + $0x48] sm:$0xff] %v1660
  %1697 = vst [vmem:[#allocation2 + $0x50] sm:$0xff] %v1661
  %1698 = vst [vmem:[#allocation2 + $0x58] sm:$0xff] %v1662
  %1699 = vst [vmem:[#allocation2 + $0x60] sm:$0xff] %v1663
  %1700 = vst [vmem:[#allocation2 + $0x68] sm:$0xff] %v1664
  %1701 = vst [vmem:[#allocation2 + $0x70] sm:$0xff] %v1665
  %1702 = vst [vmem:[#allocation2 + $0x78] sm:$0xff] %v1666
  %1703 = vst [vmem:[#allocation2 + $0x80] sm:$0xff] %v1667
  %1704 = vst [vmem:[#allocation2 + $0x88] sm:$0xff] %v1668
  %v1705 = vld [vmem:[%s0 + $0x30] sm:$0xff]
  %v1706 = vld [vmem:[%s0 + $0x38] sm:$0xff]
  %v1707 = vld [vmem:[%s0 + $0x40] sm:$0xff]
  %v1708 = vld [vmem:[%s0 + $0x48] sm:$0xff]
  %v1709 = vld [vmem:[%s0 + $0x50] sm:$0xff]
  %v1710 = vld [vmem:[%s0 + $0x58] sm:$0xff]
  %v1711 = vpack.c.bf16 %v1706, %v1705
  %v1712 = vpack.c.bf16 %v1708, %v1707
  %v1713 = vpack.c.bf16 %v1710, %v1709
  %v1714 = vld [vmem:[%s1] sm:$0xff]
  %v1715 = vld [vmem:[%s1 + $0x8] sm:$0xff]
  %v1716 = vld [vmem:[%s1 + $0x10] sm:$0xff]
  %v1717 = vld [vmem:[%s1 + $0x18] sm:$0xff]
  %v1718 = vld [vmem:[%s1 + $0x20] sm:$0xff]
  %v1719 = vld [vmem:[%s1 + $0x28] sm:$0xff]
  %v1720 = vld [vmem:[%s1 + $0x30] sm:$0xff]
  %v1721 = vld [vmem:[%s1 + $0x38] sm:$0xff]
  %v1722 = vld [vmem:[%s1 + $0x40] sm:$0xff]
  %v1723 = vld [vmem:[%s1 + $0x48] sm:$0xff]
  %v1724 = vld [vmem:[%s1 + $0x50] sm:$0xff]
  %v1725 = vld [vmem:[%s1 + $0x58] sm:$0xff]
  %v1726 = vld [vmem:[%s1 + $0x60] sm:$0xff]
  %v1727 = vld [vmem:[%s1 + $0x68] sm:$0xff]
  %v1728 = vld [vmem:[%s1 + $0x70] sm:$0xff]
  %v1729 = vld [vmem:[%s1 + $0x78] sm:$0xff]
  %v1730 = vld [vmem:[%s1 + $0x80] sm:$0xff]
  %v1731 = vld [vmem:[%s1 + $0x88] sm:$0xff]
  %v1732 = vld [vmem:[%s1 + $0x90] sm:$0xff]
  %v1733 = vld [vmem:[%s1 + $0x98] sm:$0xff]
  %v1734 = vld [vmem:[%s1 + $0xa0] sm:$0xff]
  %v1735 = vld [vmem:[%s1 + $0xa8] sm:$0xff]
  %v1736 = vld [vmem:[%s1 + $0xb0] sm:$0xff]
  %v1737 = vld [vmem:[%s1 + $0xb8] sm:$0xff]
  %v1738 = vld [vmem:[%s1 + $0xc0] sm:$0xff]
  %v1739 = vld [vmem:[%s1 + $0xc8] sm:$0xff]
  %v1740 = vld [vmem:[%s1 + $0xd0] sm:$0xff]
  %v1741 = vld [vmem:[%s1 + $0xd8] sm:$0xff]
  %v1742 = vld [vmem:[%s1 + $0xe0] sm:$0xff]
  %v1743 = vld [vmem:[%s1 + $0xe8] sm:$0xff]
  %v1774 = vunpack.c.l.b16 %v1714
  %v1775 = vunpack.c.h.b16 %v1714
  %v1776 = vunpack.c.l.b16 %v1715
  %v1777 = vunpack.c.h.b16 %v1715
  %v1778 = vunpack.c.l.b16 %v1716
  %v1779 = vunpack.c.h.b16 %v1716
  %v1780 = vunpack.c.l.b16 %v1717
  %v1781 = vunpack.c.h.b16 %v1717
  %v1782 = vunpack.c.l.b16 %v1718
  %v1783 = vunpack.c.h.b16 %v1718
  %v1784 = vunpack.c.l.b16 %v1719
  %v1785 = vunpack.c.h.b16 %v1719
  %v1786 = vunpack.c.l.b16 %v1720
  %v1787 = vunpack.c.h.b16 %v1720
  %v1788 = vunpack.c.l.b16 %v1721
  %v1789 = vunpack.c.h.b16 %v1721
  %v1790 = vunpack.c.l.b16 %v1722
  %v1791 = vunpack.c.h.b16 %v1722
  %v1792 = vunpack.c.l.b16 %v1723
  %v1793 = vunpack.c.h.b16 %v1723
  %v1794 = vunpack.c.l.b16 %v1724
  %v1795 = vunpack.c.h.b16 %v1724
  %v1796 = vunpack.c.l.b16 %v1725
  %v1797 = vunpack.c.h.b16 %v1725
  %v1798 = vunpack.c.l.b16 %v1726
  %v1799 = vunpack.c.h.b16 %v1726
  %v1800 = vunpack.c.l.b16 %v1727
  %v1801 = vunpack.c.h.b16 %v1727
  %v1802 = vunpack.c.l.b16 %v1728
  %v1803 = vunpack.c.h.b16 %v1728
  %v1804 = vunpack.c.l.b16 %v1729
  %v1805 = vunpack.c.h.b16 %v1729
  %v1806 = vunpack.c.l.b16 %v1730
  %v1807 = vunpack.c.h.b16 %v1730
  %v1808 = vunpack.c.l.b16 %v1731
  %v1809 = vunpack.c.h.b16 %v1731
  %v1810 = vunpack.c.l.b16 %v1732
  %v1811 = vunpack.c.h.b16 %v1732
  %v1812 = vunpack.c.l.b16 %v1733
  %v1813 = vunpack.c.h.b16 %v1733
  %v1814 = vunpack.c.l.b16 %v1734
  %v1815 = vunpack.c.h.b16 %v1734
  %v1816 = vunpack.c.l.b16 %v1735
  %v1817 = vunpack.c.h.b16 %v1735
  %v1818 = vunpack.c.l.b16 %v1736
  %v1819 = vunpack.c.h.b16 %v1736
  %v1820 = vunpack.c.l.b16 %v1737
  %v1821 = vunpack.c.h.b16 %v1737
  %v1822 = vunpack.c.l.b16 %v1738
  %v1823 = vunpack.c.h.b16 %v1738
  %v1824 = vunpack.c.l.b16 %v1739
  %v1825 = vunpack.c.h.b16 %v1739
  %v1826 = vunpack.c.l.b16 %v1740
  %v1827 = vunpack.c.h.b16 %v1740
  %v1828 = vunpack.c.l.b16 %v1741
  %v1829 = vunpack.c.h.b16 %v1741
  %v1830 = vunpack.c.l.b16 %v1742
  %v1831 = vunpack.c.h.b16 %v1742
  %v1832 = vunpack.c.l.b16 %v1743
  %v1833 = vunpack.c.h.b16 %v1743
  %v1834 = vpack.c.b16 %v1780, %v1774
  %v1835 = vpack.c.b16 %v1781, %v1775
  %v1836 = vpack.c.b16 %v1782, %v1776
  %v1837 = vpack.c.b16 %v1783, %v1777
  %v1838 = vpack.c.b16 %v1784, %v1778
  %v1839 = vpack.c.b16 %v1785, %v1779
  %v1840 = vpack.c.b16 %v1792, %v1786
  %v1841 = vpack.c.b16 %v1793, %v1787
  %v1842 = vpack.c.b16 %v1794, %v1788
  %v1843 = vpack.c.b16 %v1795, %v1789
  %v1844 = vpack.c.b16 %v1796, %v1790
  %v1845 = vpack.c.b16 %v1797, %v1791
  %v1846 = vpack.c.b16 %v1804, %v1798
  %v1847 = vpack.c.b16 %v1805, %v1799
  %v1848 = vpack.c.b16 %v1806, %v1800
  %v1849 = vpack.c.b16 %v1807, %v1801
  %v1850 = vpack.c.b16 %v1808, %v1802
  %v1851 = vpack.c.b16 %v1809, %v1803
  %v1852 = vpack.c.b16 %v1816, %v1810
  %v1853 = vpack.c.b16 %v1817, %v1811
  %v1854 = vpack.c.b16 %v1818, %v1812
  %v1855 = vpack.c.b16 %v1819, %v1813
  %v1856 = vpack.c.b16 %v1820, %v1814
  %v1857 = vpack.c.b16 %v1821, %v1815
  %v1858 = vpack.c.b16 %v1828, %v1822
  %v1859 = vpack.c.b16 %v1829, %v1823
  %v1860 = vpack.c.b16 %v1830, %v1824
  %v1861 = vpack.c.b16 %v1831, %v1825
  %v1862 = vpack.c.b16 %v1832, %v1826
  %v1863 = vpack.c.b16 %v1833, %v1827
  %v1895 = vsel %vm1344, %v1711, 0
  %v1898 = vsel %vm1344, %v1712, 0
  %v1901 = vsel %vm1344, %v1713, 0
  %1903 = vmatprep.subr.bf16.mxu0 0
  %1904 = vmatpush1.bf16.msra.mxu0 0
  %1905 = vmatprep.subr.bf16.mxu0 0
  %1906 = vmatpush1.bf16.msra.mxu0 0
  %1907 = vmatprep.subr.bf16.mxu0 0
  %1908 = vmatpush1.bf16.msra.mxu0 0
  %1909 = vmatprep.subr.bf16.mxu0 %v1859
  %1910 = vmatpush1.bf16.msra.mxu0 %v1858
  %1911 = vmatprep.subr.bf16.mxu0 %v1853
  %1912 = vmatpush1.bf16.msra.mxu0 %v1852
  %1913 = vmatprep.subr.bf16.mxu0 %v1847
  %1914 = vmatpush1.bf16.msra.mxu0 %v1846
  %1915 = vmatprep.subr.bf16.mxu0 %v1841
  %1916 = vmatpush1.bf16.msra.mxu0 %v1840
  %1917 = vmatprep.subr.bf16.mxu0 %v1835
  %1918 = vmatpush1.bf16.msra.mxu0 %v1834
  %1919 = vmatprep.subr.bf16.mxu0 0
  %1920 = vmatpush2.bf16.msra.mxu0 0
  %1921 = vmatprep.subr.bf16.mxu0 0
  %1922 = vmatpush2.bf16.msra.mxu0 0
  %1923 = vmatprep.subr.bf16.mxu0 0
  %1924 = vmatpush2.bf16.msra.mxu0 0
  %1925 = vmatprep.subr.bf16.mxu0 0
  %1926 = vmatpush2.bf16.msra.mxu0 0
  %1927 = vmatprep.subr.bf16.mxu0 0
  %1928 = vmatpush2.bf16.msra.mxu0 0
  %1929 = vmatprep.subr.bf16.mxu0 0
  %1930 = vmatpush2.bf16.msra.mxu0 0
  %1931 = vmatprep.subr.bf16.mxu0 0
  %1932 = vmatpush2.bf16.msra.mxu0 0
  %1933 = vmatprep.subr.bf16.mxu0 0
  %1934 = vmatpush2.bf16.msra.mxu0 0
  %1935 = vmatprep.mubr.bf16.mxu0 0
  %1936 = vmatmul.mubr.bf16.gmra.mxu0 %v1895
  %v1937 = vpop.f32.mrf.mxu0
  %v1938 = vadd.f32 %v1167, %v1937
  %v1939 = vpop.f32.mrf.mxu0
  %v1940 = vadd.f32 %v1171, %v1939
  %v1941 = vpop.f32.mrf.mxu0
  %v1942 = vadd.f32 %v1167, %v1941
  %v1943 = vpop.f32.mrf.mxu0
  %v1944 = vadd.f32 %v1171, %v1943
  %1945 = vmatprep.mubr.bf16.mxu0 0
  %1946 = vmatmul.mubr.bf16.gmra.mxu0 %v1898
  %v1947 = vpop.f32.mrf.mxu0
  %v1948 = vadd.f32 %v1167, %v1947
  %v1949 = vpop.f32.mrf.mxu0
  %v1950 = vadd.f32 %v1171, %v1949
  %v1951 = vpop.f32.mrf.mxu0
  %v1952 = vadd.f32 %v1167, %v1951
  %v1953 = vpop.f32.mrf.mxu0
  %v1954 = vadd.f32 %v1171, %v1953
  %1955 = vmatprep.mubr.bf16.mxu0 0
  %1956 = vmatmul.mubr.bf16.gmra.mxu0 %v1901
  %v1957 = vpop.f32.mrf.mxu0
  %v1958 = vadd.f32 %v1167, %v1957
  %v1959 = vpop.f32.mrf.mxu0
  %v1960 = vadd.f32 %v1171, %v1959
  %v1961 = vpop.f32.mrf.mxu0
  %v1962 = vadd.f32 %v1167, %v1961
  %v1963 = vpop.f32.mrf.mxu0
  %v1964 = vadd.f32 %v1171, %v1963
  %1965 = vdwg.mxu0
  %1966 = vmatprep.subr.bf16.mxu0 0
  %1967 = vmatpush1.bf16.msra.mxu0 0
  %1968 = vmatprep.subr.bf16.mxu0 0
  %1969 = vmatpush1.bf16.msra.mxu0 0
  %1970 = vmatprep.subr.bf16.mxu0 0
  %1971 = vmatpush1.bf16.msra.mxu0 0
  %1972 = vmatprep.subr.bf16.mxu0 %v1861
  %1973 = vmatpush1.bf16.msra.mxu0 %v1860
  %1974 = vmatprep.subr.bf16.mxu0 %v1855
  %1975 = vmatpush1.bf16.msra.mxu0 %v1854
  %1976 = vmatprep.subr.bf16.mxu0 %v1849
  %1977 = vmatpush1.bf16.msra.mxu0 %v1848
  %1978 = vmatprep.subr.bf16.mxu0 %v1843
  %1979 = vmatpush1.bf16.msra.mxu0 %v1842
  %1980 = vmatprep.subr.bf16.mxu0 %v1837
  %1981 = vmatpush1.bf16.msra.mxu0 %v1836
  %1982 = vmatprep.subr.bf16.mxu0 0
  %1983 = vmatpush2.bf16.msra.mxu0 0
  %1984 = vmatprep.subr.bf16.mxu0 0
  %1985 = vmatpush2.bf16.msra.mxu0 0
  %1986 = vmatprep.subr.bf16.mxu0 0
  %1987 = vmatpush2.bf16.msra.mxu0 0
  %1988 = vmatprep.subr.bf16.mxu0 0
  %1989 = vmatpush2.bf16.msra.mxu0 0
  %1990 = vmatprep.subr.bf16.mxu0 0
  %1991 = vmatpush2.bf16.msra.mxu0 0
  %1992 = vmatprep.subr.bf16.mxu0 0
  %1993 = vmatpush2.bf16.msra.mxu0 0
  %1994 = vmatprep.subr.bf16.mxu0 0
  %1995 = vmatpush2.bf16.msra.mxu0 0
  %1996 = vmatprep.subr.bf16.mxu0 0
  %1997 = vmatpush2.bf16.msra.mxu0 0
  %1998 = vmatprep.mubr.bf16.mxu0 0
  %1999 = vmatmul.mubr.bf16.gmra.mxu0 %v1895
  %v2000 = vpop.f32.mrf.mxu0
  %v2001 = vadd.f32 %v1175, %v2000
  %v2002 = vpop.f32.mrf.mxu0
  %v2003 = vadd.f32 %v1179, %v2002
  %v2004 = vpop.f32.mrf.mxu0
  %v2005 = vadd.f32 %v1175, %v2004
  %v2006 = vpop.f32.mrf.mxu0
  %v2007 = vadd.f32 %v1179, %v2006
  %2008 = vmatprep.mubr.bf16.mxu0 0
  %2009 = vmatmul.mubr.bf16.gmra.mxu0 %v1898
  %v2010 = vpop.f32.mrf.mxu0
  %v2011 = vadd.f32 %v1175, %v2010
  %v2012 = vpop.f32.mrf.mxu0
  %v2013 = vadd.f32 %v1179, %v2012
  %v2014 = vpop.f32.mrf.mxu0
  %v2015 = vadd.f32 %v1175, %v2014
  %v2016 = vpop.f32.mrf.mxu0
  %v2017 = vadd.f32 %v1179, %v2016
  %2018 = vmatprep.mubr.bf16.mxu0 0
  %2019 = vmatmul.mubr.bf16.gmra.mxu0 %v1901
  %v2020 = vpop.f32.mrf.mxu0
  %v2021 = vadd.f32 %v1175, %v2020
  %v2022 = vpop.f32.mrf.mxu0
  %v2023 = vadd.f32 %v1179, %v2022
  %v2024 = vpop.f32.mrf.mxu0
  %v2025 = vadd.f32 %v1175, %v2024
  %v2026 = vpop.f32.mrf.mxu0
  %v2027 = vadd.f32 %v1179, %v2026
  %2028 = vdwg.mxu0
  %2029 = vmatprep.subr.bf16.mxu0 0
  %2030 = vmatpush1.bf16.msra.mxu0 0
  %2031 = vmatprep.subr.bf16.mxu0 0
  %2032 = vmatpush1.bf16.msra.mxu0 0
  %2033 = vmatprep.subr.bf16.mxu0 0
  %2034 = vmatpush1.bf16.msra.mxu0 0
  %2035 = vmatprep.subr.bf16.mxu0 %v1863
  %2036 = vmatpush1.bf16.msra.mxu0 %v1862
  %2037 = vmatprep.subr.bf16.mxu0 %v1857
  %2038 = vmatpush1.bf16.msra.mxu0 %v1856
  %2039 = vmatprep.subr.bf16.mxu0 %v1851
  %2040 = vmatpush1.bf16.msra.mxu0 %v1850
  %2041 = vmatprep.subr.bf16.mxu0 %v1845
  %2042 = vmatpush1.bf16.msra.mxu0 %v1844
  %2043 = vmatprep.subr.bf16.mxu0 %v1839
  %2044 = vmatpush1.bf16.msra.mxu0 %v1838
  %2045 = vmatprep.subr.bf16.mxu0 0
  %2046 = vmatpush2.bf16.msra.mxu0 0
  %2047 = vmatprep.subr.bf16.mxu0 0
  %2048 = vmatpush2.bf16.msra.mxu0 0
  %2049 = vmatprep.subr.bf16.mxu0 0
  %2050 = vmatpush2.bf16.msra.mxu0 0
  %2051 = vmatprep.subr.bf16.mxu0 0
  %2052 = vmatpush2.bf16.msra.mxu0 0
  %2053 = vmatprep.subr.bf16.mxu0 0
  %2054 = vmatpush2.bf16.msra.mxu0 0
  %2055 = vmatprep.subr.bf16.mxu0 0
  %2056 = vmatpush2.bf16.msra.mxu0 0
  %2057 = vmatprep.subr.bf16.mxu0 0
  %2058 = vmatpush2.bf16.msra.mxu0 0
  %2059 = vmatprep.subr.bf16.mxu0 0
  %2060 = vmatpush2.bf16.msra.mxu0 0
  %2061 = vmatprep.mubr.bf16.mxu0 0
  %2062 = vmatmul.mubr.bf16.gmra.mxu0 %v1895
  %v2063 = vpop.f32.mrf.mxu0
  %v2064 = vadd.f32 %v1183, %v2063
  %v2065 = vpop.f32.mrf.mxu0
  %v2066 = vadd.f32 %v1187, %v2065
  %v2067 = vpop.f32.mrf.mxu0
  %v2068 = vadd.f32 %v1183, %v2067
  %v2069 = vpop.f32.mrf.mxu0
  %v2070 = vadd.f32 %v1187, %v2069
  %2071 = vmatprep.mubr.bf16.mxu0 0
  %2072 = vmatmul.mubr.bf16.gmra.mxu0 %v1898
  %v2073 = vpop.f32.mrf.mxu0
  %v2074 = vadd.f32 %v1183, %v2073
  %v2075 = vpop.f32.mrf.mxu0
  %v2076 = vadd.f32 %v1187, %v2075
  %v2077 = vpop.f32.mrf.mxu0
  %v2078 = vadd.f32 %v1183, %v2077
  %v2079 = vpop.f32.mrf.mxu0
  %v2080 = vadd.f32 %v1187, %v2079
  %2081 = vmatprep.mubr.bf16.mxu0 0
  %2082 = vmatmul.mubr.bf16.gmra.mxu0 %v1901
  %v2083 = vpop.f32.mrf.mxu0
  %v2084 = vadd.f32 %v1183, %v2083
  %v2085 = vpop.f32.mrf.mxu0
  %v2086 = vadd.f32 %v1187, %v2085
  %v2087 = vpop.f32.mrf.mxu0
  %v2088 = vadd.f32 %v1183, %v2087
  %v2089 = vpop.f32.mrf.mxu0
  %v2090 = vadd.f32 %v1187, %v2089
  %2091 = vdwg.mxu0
  %v2092 = vmax.f32 %v1938, 0.0
  %v2093 = vmax.f32 %v1940, 0.0
  %v2094 = vmax.f32 %v2001, 0.0
  %v2095 = vmax.f32 %v2003, 0.0
  %v2096 = vmax.f32 %v2064, 0.0
  %v2097 = vmax.f32 %v2066, 0.0
  %v2098 = vmax.f32 %v1942, 0.0
  %v2099 = vmax.f32 %v1944, 0.0
  %v2100 = vmax.f32 %v2005, 0.0
  %v2101 = vmax.f32 %v2007, 0.0
  %v2102 = vmax.f32 %v2068, 0.0
  %v2103 = vmax.f32 %v2070, 0.0
  %v2104 = vmax.f32 %v1948, 0.0
  %v2105 = vmax.f32 %v1950, 0.0
  %v2106 = vmax.f32 %v2011, 0.0
  %v2107 = vmax.f32 %v2013, 0.0
  %v2108 = vmax.f32 %v2074, 0.0
  %v2109 = vmax.f32 %v2076, 0.0
  %v2110 = vmax.f32 %v1952, 0.0
  %v2111 = vmax.f32 %v1954, 0.0
  %v2112 = vmax.f32 %v2015, 0.0
  %v2113 = vmax.f32 %v2017, 0.0
  %v2114 = vmax.f32 %v2078, 0.0
  %v2115 = vmax.f32 %v2080, 0.0
  %v2116 = vmax.f32 %v1958, 0.0
  %v2117 = vmax.f32 %v1960, 0.0
  %v2118 = vmax.f32 %v2021, 0.0
  %v2119 = vmax.f32 %v2023, 0.0
  %v2120 = vmax.f32 %v2084, 0.0
  %v2121 = vmax.f32 %v2086, 0.0
  %v2122 = vmax.f32 %v1962, 0.0
  %v2123 = vmax.f32 %v1964, 0.0
  %v2124 = vmax.f32 %v2025, 0.0
  %v2125 = vmax.f32 %v2027, 0.0
  %v2126 = vmax.f32 %v2088, 0.0
  %v2127 = vmax.f32 %v2090, 0.0
  %v2128 = vpack.c.bf16 %v2098, %v2092
  %v2129 = vpack.c.bf16 %v2099, %v2093
  %v2130 = vpack.c.bf16 %v2100, %v2094
  %v2131 = vpack.c.bf16 %v2101, %v2095
  %v2132 = vpack.c.bf16 %v2102, %v2096
  %v2133 = vpack.c.bf16 %v2103, %v2097
  %v2134 = vpack.c.bf16 %v2110, %v2104
  %v2135 = vpack.c.bf16 %v2111, %v2105
  %v2136 = vpack.c.bf16 %v2112, %v2106
  %v2137 = vpack.c.bf16 %v2113, %v2107
  %v2138 = vpack.c.bf16 %v2114, %v2108
  %v2139 = vpack.c.bf16 %v2115, %v2109
  %v2140 = vpack.c.bf16 %v2122, %v2116
  %v2141 = vpack.c.bf16 %v2123, %v2117
  %v2142 = vpack.c.bf16 %v2124, %v2118
  %v2143 = vpack.c.bf16 %v2125, %v2119
  %v2144 = vpack.c.bf16 %v2126, %v2120
  %v2145 = vpack.c.bf16 %v2127, %v2121
  %v2164 = vunpack.c.l.b16 %v2128
  %v2165 = vunpack.c.l.b16 %v2129
  %v2166 = vunpack.c.l.b16 %v2130
  %v2167 = vunpack.c.l.b16 %v2131
  %v2168 = vunpack.c.l.b16 %v2132
  %v2169 = vunpack.c.l.b16 %v2133
  %v2170 = vunpack.c.h.b16 %v2128
  %v2171 = vunpack.c.h.b16 %v2129
  %v2172 = vunpack.c.h.b16 %v2130
  %v2173 = vunpack.c.h.b16 %v2131
  %v2174 = vunpack.c.h.b16 %v2132
  %v2175 = vunpack.c.h.b16 %v2133
  %v2176 = vunpack.c.l.b16 %v2134
  %v2177 = vunpack.c.l.b16 %v2135
  %v2178 = vunpack.c.l.b16 %v2136
  %v2179 = vunpack.c.l.b16 %v2137
  %v2180 = vunpack.c.l.b16 %v2138
  %v2181 = vunpack.c.l.b16 %v2139
  %v2182 = vunpack.c.h.b16 %v2134
  %v2183 = vunpack.c.h.b16 %v2135
  %v2184 = vunpack.c.h.b16 %v2136
  %v2185 = vunpack.c.h.b16 %v2137
  %v2186 = vunpack.c.h.b16 %v2138
  %v2187 = vunpack.c.h.b16 %v2139
  %v2188 = vunpack.c.l.b16 %v2140
  %v2189 = vunpack.c.l.b16 %v2141
  %v2190 = vunpack.c.l.b16 %v2142
  %v2191 = vunpack.c.l.b16 %v2143
  %v2192 = vunpack.c.l.b16 %v2144
  %v2193 = vunpack.c.l.b16 %v2145
  %v2194 = vunpack.c.h.b16 %v2140
  %v2195 = vunpack.c.h.b16 %v2141
  %v2196 = vunpack.c.h.b16 %v2142
  %v2197 = vunpack.c.h.b16 %v2143
  %v2198 = vunpack.c.h.b16 %v2144
  %v2199 = vunpack.c.h.b16 %v2145
  %v2200 = vpack.c.b16 %v2165, %v2164
  %v2201 = vpack.c.b16 %v2167, %v2166
  %v2202 = vpack.c.b16 %v2169, %v2168
  %v2203 = vpack.c.b16 %v2171, %v2170
  %v2204 = vpack.c.b16 %v2173, %v2172
  %v2205 = vpack.c.b16 %v2175, %v2174
  %v2206 = vpack.c.b16 %v2177, %v2176
  %v2207 = vpack.c.b16 %v2179, %v2178
  %v2208 = vpack.c.b16 %v2181, %v2180
  %v2209 = vpack.c.b16 %v2183, %v2182
  %v2210 = vpack.c.b16 %v2185, %v2184
  %v2211 = vpack.c.b16 %v2187, %v2186
  %v2212 = vpack.c.b16 %v2189, %v2188
  %v2213 = vpack.c.b16 %v2191, %v2190
  %v2214 = vpack.c.b16 %v2193, %v2192
  %v2215 = vpack.c.b16 %v2195, %v2194
  %v2216 = vpack.c.b16 %v2197, %v2196
  %v2217 = vpack.c.b16 %v2199, %v2198
  %2236 = vst [vmem:[#allocation2 + $0x90] sm:$0xff] %v2200
  %2237 = vst [vmem:[#allocation2 + $0x98] sm:$0xff] %v2201
  %2238 = vst [vmem:[#allocation2 + $0xa0] sm:$0xff] %v2202
  %2239 = vst [vmem:[#allocation2 + $0xa8] sm:$0xff] %v2203
  %2240 = vst [vmem:[#allocation2 + $0xb0] sm:$0xff] %v2204
  %2241 = vst [vmem:[#allocation2 + $0xb8] sm:$0xff] %v2205
  %2242 = vst [vmem:[#allocation2 + $0xc0] sm:$0xff] %v2206
  %2243 = vst [vmem:[#allocation2 + $0xc8] sm:$0xff] %v2207
  %2244 = vst [vmem:[#allocation2 + $0xd0] sm:$0xff] %v2208
  %2245 = vst [vmem:[#allocation2 + $0xd8] sm:$0xff] %v2209
  %2246 = vst [vmem:[#allocation2 + $0xe0] sm:$0xff] %v2210
  %2247 = vst [vmem:[#allocation2 + $0xe8] sm:$0xff] %v2211
  %2248 = vst [vmem:[#allocation2 + $0xf0] sm:$0xff] %v2212
  %2249 = vst [vmem:[#allocation2 + $0xf8] sm:$0xff] %v2213
  %2250 = vst [vmem:[#allocation2 + $0x100] sm:$0xff] %v2214
  %2251 = vst [vmem:[#allocation2 + $0x108] sm:$0xff] %v2215
  %2252 = vst [vmem:[#allocation2 + $0x110] sm:$0xff] %v2216
  %2253 = vst [vmem:[#allocation2 + $0x118] sm:$0xff] %v2217
  %v2254 = vld [vmem:[%s0 + $0x60] sm:$0xff]
  %v2255 = vld [vmem:[%s0 + $0x68] sm:$0xff]
  %v2256 = vld [vmem:[%s0 + $0x70] sm:$0xff]
  %v2257 = vld [vmem:[%s0 + $0x78] sm:$0xff]
  %v2258 = vld [vmem:[%s0 + $0x80] sm:$0xff]
  %v2259 = vld [vmem:[%s0 + $0x88] sm:$0xff]
  %v2260 = vpack.c.bf16 %v2255, %v2254
  %v2261 = vpack.c.bf16 %v2257, %v2256
  %v2262 = vpack.c.bf16 %v2259, %v2258
  %v2263 = vld [vmem:[%s1] sm:$0xff]
  %v2264 = vld [vmem:[%s1 + $0x8] sm:$0xff]
  %v2265 = vld [vmem:[%s1 + $0x10] sm:$0xff]
  %v2266 = vld [vmem:[%s1 + $0x18] sm:$0xff]
  %v2267 = vld [vmem:[%s1 + $0x20] sm:$0xff]
  %v2268 = vld [vmem:[%s1 + $0x28] sm:$0xff]
  %v2269 = vld [vmem:[%s1 + $0x30] sm:$0xff]
  %v2270 = vld [vmem:[%s1 + $0x38] sm:$0xff]
  %v2271 = vld [vmem:[%s1 + $0x40] sm:$0xff]
  %v2272 = vld [vmem:[%s1 + $0x48] sm:$0xff]
  %v2273 = vld [vmem:[%s1 + $0x50] sm:$0xff]
  %v2274 = vld [vmem:[%s1 + $0x58] sm:$0xff]
  %v2275 = vld [vmem:[%s1 + $0x60] sm:$0xff]
  %v2276 = vld [vmem:[%s1 + $0x68] sm:$0xff]
  %v2277 = vld [vmem:[%s1 + $0x70] sm:$0xff]
  %v2278 = vld [vmem:[%s1 + $0x78] sm:$0xff]
  %v2279 = vld [vmem:[%s1 + $0x80] sm:$0xff]
  %v2280 = vld [vmem:[%s1 + $0x88] sm:$0xff]
  %v2281 = vld [vmem:[%s1 + $0x90] sm:$0xff]
  %v2282 = vld [vmem:[%s1 + $0x98] sm:$0xff]
  %v2283 = vld [vmem:[%s1 + $0xa0] sm:$0xff]
  %v2284 = vld [vmem:[%s1 + $0xa8] sm:$0xff]
  %v2285 = vld [vmem:[%s1 + $0xb0] sm:$0xff]
  %v2286 = vld [vmem:[%s1 + $0xb8] sm:$0xff]
  %v2287 = vld [vmem:[%s1 + $0xc0] sm:$0xff]
  %v2288 = vld [vmem:[%s1 + $0xc8] sm:$0xff]
  %v2289 = vld [vmem:[%s1 + $0xd0] sm:$0xff]
  %v2290 = vld [vmem:[%s1 + $0xd8] sm:$0xff]
  %v2291 = vld [vmem:[%s1 + $0xe0] sm:$0xff]
  %v2292 = vld [vmem:[%s1 + $0xe8] sm:$0xff]
  %v2323 = vunpack.c.l.b16 %v2263
  %v2324 = vunpack.c.h.b16 %v2263
  %v2325 = vunpack.c.l.b16 %v2264
  %v2326 = vunpack.c.h.b16 %v2264
  %v2327 = vunpack.c.l.b16 %v2265
  %v2328 = vunpack.c.h.b16 %v2265
  %v2329 = vunpack.c.l.b16 %v2266
  %v2330 = vunpack.c.h.b16 %v2266
  %v2331 = vunpack.c.l.b16 %v2267
  %v2332 = vunpack.c.h.b16 %v2267
  %v2333 = vunpack.c.l.b16 %v2268
  %v2334 = vunpack.c.h.b16 %v2268
  %v2335 = vunpack.c.l.b16 %v2269
  %v2336 = vunpack.c.h.b16 %v2269
  %v2337 = vunpack.c.l.b16 %v2270
  %v2338 = vunpack.c.h.b16 %v2270
  %v2339 = vunpack.c.l.b16 %v2271
  %v2340 = vunpack.c.h.b16 %v2271
  %v2341 = vunpack.c.l.b16 %v2272
  %v2342 = vunpack.c.h.b16 %v2272
  %v2343 = vunpack.c.l.b16 %v2273
  %v2344 = vunpack.c.h.b16 %v2273
  %v2345 = vunpack.c.l.b16 %v2274
  %v2346 = vunpack.c.h.b16 %v2274
  %v2347 = vunpack.c.l.b16 %v2275
  %v2348 = vunpack.c.h.b16 %v2275
  %v2349 = vunpack.c.l.b16 %v2276
  %v2350 = vunpack.c.h.b16 %v2276
  %v2351 = vunpack.c.l.b16 %v2277
  %v2352 = vunpack.c.h.b16 %v2277
  %v2353 = vunpack.c.l.b16 %v2278
  %v2354 = vunpack.c.h.b16 %v2278
  %v2355 = vunpack.c.l.b16 %v2279
  %v2356 = vunpack.c.h.b16 %v2279
  %v2357 = vunpack.c.l.b16 %v2280
  %v2358 = vunpack.c.h.b16 %v2280
  %v2359 = vunpack.c.l.b16 %v2281
  %v2360 = vunpack.c.h.b16 %v2281
  %v2361 = vunpack.c.l.b16 %v2282
  %v2362 = vunpack.c.h.b16 %v2282
  %v2363 = vunpack.c.l.b16 %v2283
  %v2364 = vunpack.c.h.b16 %v2283
  %v2365 = vunpack.c.l.b16 %v2284
  %v2366 = vunpack.c.h.b16 %v2284
  %v2367 = vunpack.c.l.b16 %v2285
  %v2368 = vunpack.c.h.b16 %v2285
  %v2369 = vunpack.c.l.b16 %v2286
  %v2370 = vunpack.c.h.b16 %v2286
  %v2371 = vunpack.c.l.b16 %v2287
  %v2372 = vunpack.c.h.b16 %v2287
  %v2373 = vunpack.c.l.b16 %v2288
  %v2374 = vunpack.c.h.b16 %v2288
  %v2375 = vunpack.c.l.b16 %v2289
  %v2376 = vunpack.c.h.b16 %v2289
  %v2377 = vunpack.c.l.b16 %v2290
  %v2378 = vunpack.c.h.b16 %v2290
  %v2379 = vunpack.c.l.b16 %v2291
  %v2380 = vunpack.c.h.b16 %v2291
  %v2381 = vunpack.c.l.b16 %v2292
  %v2382 = vunpack.c.h.b16 %v2292
  %v2383 = vpack.c.b16 %v2329, %v2323
  %v2384 = vpack.c.b16 %v2330, %v2324
  %v2385 = vpack.c.b16 %v2331, %v2325
  %v2386 = vpack.c.b16 %v2332, %v2326
  %v2387 = vpack.c.b16 %v2333, %v2327
  %v2388 = vpack.c.b16 %v2334, %v2328
  %v2389 = vpack.c.b16 %v2341, %v2335
  %v2390 = vpack.c.b16 %v2342, %v2336
  %v2391 = vpack.c.b16 %v2343, %v2337
  %v2392 = vpack.c.b16 %v2344, %v2338
  %v2393 = vpack.c.b16 %v2345, %v2339
  %v2394 = vpack.c.b16 %v2346, %v2340
  %v2395 = vpack.c.b16 %v2353, %v2347
  %v2396 = vpack.c.b16 %v2354, %v2348
  %v2397 = vpack.c.b16 %v2355, %v2349
  %v2398 = vpack.c.b16 %v2356, %v2350
  %v2399 = vpack.c.b16 %v2357, %v2351
  %v2400 = vpack.c.b16 %v2358, %v2352
  %v2401 = vpack.c.b16 %v2365, %v2359
  %v2402 = vpack.c.b16 %v2366, %v2360
  %v2403 = vpack.c.b16 %v2367, %v2361
  %v2404 = vpack.c.b16 %v2368, %v2362
  %v2405 = vpack.c.b16 %v2369, %v2363
  %v2406 = vpack.c.b16 %v2370, %v2364
  %v2407 = vpack.c.b16 %v2377, %v2371
  %v2408 = vpack.c.b16 %v2378, %v2372
  %v2409 = vpack.c.b16 %v2379, %v2373
  %v2410 = vpack.c.b16 %v2380, %v2374
  %v2411 = vpack.c.b16 %v2381, %v2375
  %v2412 = vpack.c.b16 %v2382, %v2376
  %v2444 = vsel %vm1344, %v2260, 0
  %v2447 = vsel %vm1344, %v2261, 0
  %v2450 = vsel %vm1344, %v2262, 0
  %2452 = vmatprep.subr.bf16.mxu0 0
  %2453 = vmatpush1.bf16.msra.mxu0 0
  %2454 = vmatprep.subr.bf16.mxu0 0
  %2455 = vmatpush1.bf16.msra.mxu0 0
  %2456 = vmatprep.subr.bf16.mxu0 0
  %2457 = vmatpush1.bf16.msra.mxu0 0
  %2458 = vmatprep.subr.bf16.mxu0 %v2408
  %2459 = vmatpush1.bf16.msra.mxu0 %v2407
  %2460 = vmatprep.subr.bf16.mxu0 %v2402
  %2461 = vmatpush1.bf16.msra.mxu0 %v2401
  %2462 = vmatprep.subr.bf16.mxu0 %v2396
  %2463 = vmatpush1.bf16.msra.mxu0 %v2395
  %2464 = vmatprep.subr.bf16.mxu0 %v2390
  %2465 = vmatpush1.bf16.msra.mxu0 %v2389
  %2466 = vmatprep.subr.bf16.mxu0 %v2384
  %2467 = vmatpush1.bf16.msra.mxu0 %v2383
  %2468 = vmatprep.subr.bf16.mxu0 0
  %2469 = vmatpush2.bf16.msra.mxu0 0
  %2470 = vmatprep.subr.bf16.mxu0 0
  %2471 = vmatpush2.bf16.msra.mxu0 0
  %2472 = vmatprep.subr.bf16.mxu0 0
  %2473 = vmatpush2.bf16.msra.mxu0 0
  %2474 = vmatprep.subr.bf16.mxu0 0
  %2475 = vmatpush2.bf16.msra.mxu0 0
  %2476 = vmatprep.subr.bf16.mxu0 0
  %2477 = vmatpush2.bf16.msra.mxu0 0
  %2478 = vmatprep.subr.bf16.mxu0 0
  %2479 = vmatpush2.bf16.msra.mxu0 0
  %2480 = vmatprep.subr.bf16.mxu0 0
  %2481 = vmatpush2.bf16.msra.mxu0 0
  %2482 = vmatprep.subr.bf16.mxu0 0
  %2483 = vmatpush2.bf16.msra.mxu0 0
  %2484 = vmatprep.mubr.bf16.mxu0 0
  %2485 = vmatmul.mubr.bf16.gmra.mxu0 %v2444
  %v2486 = vpop.f32.mrf.mxu0
  %v2487 = vadd.f32 %v1167, %v2486
  %v2488 = vpop.f32.mrf.mxu0
  %v2489 = vadd.f32 %v1171, %v2488
  %v2490 = vpop.f32.mrf.mxu0
  %v2491 = vadd.f32 %v1167, %v2490
  %v2492 = vpop.f32.mrf.mxu0
  %v2493 = vadd.f32 %v1171, %v2492
  %2494 = vmatprep.mubr.bf16.mxu0 0
  %2495 = vmatmul.mubr.bf16.gmra.mxu0 %v2447
  %v2496 = vpop.f32.mrf.mxu0
  %v2497 = vadd.f32 %v1167, %v2496
  %v2498 = vpop.f32.mrf.mxu0
  %v2499 = vadd.f32 %v1171, %v2498
  %v2500 = vpop.f32.mrf.mxu0
  %v2501 = vadd.f32 %v1167, %v2500
  %v2502 = vpop.f32.mrf.mxu0
  %v2503 = vadd.f32 %v1171, %v2502
  %2504 = vmatprep.mubr.bf16.mxu0 0
  %2505 = vmatmul.mubr.bf16.gmra.mxu0 %v2450
  %v2506 = vpop.f32.mrf.mxu0
  %v2507 = vadd.f32 %v1167, %v2506
  %v2508 = vpop.f32.mrf.mxu0
  %v2509 = vadd.f32 %v1171, %v2508
  %v2510 = vpop.f32.mrf.mxu0
  %v2511 = vadd.f32 %v1167, %v2510
  %v2512 = vpop.f32.mrf.mxu0
  %v2513 = vadd.f32 %v1171, %v2512
  %2514 = vdwg.mxu0
  %2515 = vmatprep.subr.bf16.mxu0 0
  %2516 = vmatpush1.bf16.msra.mxu0 0
  %2517 = vmatprep.subr.bf16.mxu0 0
  %2518 = vmatpush1.bf16.msra.mxu0 0
  %2519 = vmatprep.subr.bf16.mxu0 0
  %2520 = vmatpush1.bf16.msra.mxu0 0
  %2521 = vmatprep.subr.bf16.mxu0 %v2410
  %2522 = vmatpush1.bf16.msra.mxu0 %v2409
  %2523 = vmatprep.subr.bf16.mxu0 %v2404
  %2524 = vmatpush1.bf16.msra.mxu0 %v2403
  %2525 = vmatprep.subr.bf16.mxu0 %v2398
  %2526 = vmatpush1.bf16.msra.mxu0 %v2397
  %2527 = vmatprep.subr.bf16.mxu0 %v2392
  %2528 = vmatpush1.bf16.msra.mxu0 %v2391
  %2529 = vmatprep.subr.bf16.mxu0 %v2386
  %2530 = vmatpush1.bf16.msra.mxu0 %v2385
  %2531 = vmatprep.subr.bf16.mxu0 0
  %2532 = vmatpush2.bf16.msra.mxu0 0
  %2533 = vmatprep.subr.bf16.mxu0 0
  %2534 = vmatpush2.bf16.msra.mxu0 0
  %2535 = vmatprep.subr.bf16.mxu0 0
  %2536 = vmatpush2.bf16.msra.mxu0 0
  %2537 = vmatprep.subr.bf16.mxu0 0
  %2538 = vmatpush2.bf16.msra.mxu0 0
  %2539 = vmatprep.subr.bf16.mxu0 0
  %2540 = vmatpush2.bf16.msra.mxu0 0
  %2541 = vmatprep.subr.bf16.mxu0 0
  %2542 = vmatpush2.bf16.msra.mxu0 0
  %2543 = vmatprep.subr.bf16.mxu0 0
  %2544 = vmatpush2.bf16.msra.mxu0 0
  %2545 = vmatprep.subr.bf16.mxu0 0
  %2546 = vmatpush2.bf16.msra.mxu0 0
  %2547 = vmatprep.mubr.bf16.mxu0 0
  %2548 = vmatmul.mubr.bf16.gmra.mxu0 %v2444
  %v2549 = vpop.f32.mrf.mxu0
  %v2550 = vadd.f32 %v1175, %v2549
  %v2551 = vpop.f32.mrf.mxu0
  %v2552 = vadd.f32 %v1179, %v2551
  %v2553 = vpop.f32.mrf.mxu0
  %v2554 = vadd.f32 %v1175, %v2553
  %v2555 = vpop.f32.mrf.mxu0
  %v2556 = vadd.f32 %v1179, %v2555
  %2557 = vmatprep.mubr.bf16.mxu0 0
  %2558 = vmatmul.mubr.bf16.gmra.mxu0 %v2447
  %v2559 = vpop.f32.mrf.mxu0
  %v2560 = vadd.f32 %v1175, %v2559
  %v2561 = vpop.f32.mrf.mxu0
  %v2562 = vadd.f32 %v1179, %v2561
  %v2563 = vpop.f32.mrf.mxu0
  %v2564 = vadd.f32 %v1175, %v2563
  %v2565 = vpop.f32.mrf.mxu0
  %v2566 = vadd.f32 %v1179, %v2565
  %2567 = vmatprep.mubr.bf16.mxu0 0
  %2568 = vmatmul.mubr.bf16.gmra.mxu0 %v2450
  %v2569 = vpop.f32.mrf.mxu0
  %v2570 = vadd.f32 %v1175, %v2569
  %v2571 = vpop.f32.mrf.mxu0
  %v2572 = vadd.f32 %v1179, %v2571
  %v2573 = vpop.f32.mrf.mxu0
  %v2574 = vadd.f32 %v1175, %v2573
  %v2575 = vpop.f32.mrf.mxu0
  %v2576 = vadd.f32 %v1179, %v2575
  %2577 = vdwg.mxu0
  %2578 = vmatprep.subr.bf16.mxu0 0
  %2579 = vmatpush1.bf16.msra.mxu0 0
  %2580 = vmatprep.subr.bf16.mxu0 0
  %2581 = vmatpush1.bf16.msra.mxu0 0
  %2582 = vmatprep.subr.bf16.mxu0 0
  %2583 = vmatpush1.bf16.msra.mxu0 0
  %2584 = vmatprep.subr.bf16.mxu0 %v2412
  %2585 = vmatpush1.bf16.msra.mxu0 %v2411
  %2586 = vmatprep.subr.bf16.mxu0 %v2406
  %2587 = vmatpush1.bf16.msra.mxu0 %v2405
  %2588 = vmatprep.subr.bf16.mxu0 %v2400
  %2589 = vmatpush1.bf16.msra.mxu0 %v2399
  %2590 = vmatprep.subr.bf16.mxu0 %v2394
  %2591 = vmatpush1.bf16.msra.mxu0 %v2393
  %2592 = vmatprep.subr.bf16.mxu0 %v2388
  %2593 = vmatpush1.bf16.msra.mxu0 %v2387
  %2594 = vmatprep.subr.bf16.mxu0 0
  %2595 = vmatpush2.bf16.msra.mxu0 0
  %2596 = vmatprep.subr.bf16.mxu0 0
  %2597 = vmatpush2.bf16.msra.mxu0 0
  %2598 = vmatprep.subr.bf16.mxu0 0
  %2599 = vmatpush2.bf16.msra.mxu0 0
  %2600 = vmatprep.subr.bf16.mxu0 0
  %2601 = vmatpush2.bf16.msra.mxu0 0
  %2602 = vmatprep.subr.bf16.mxu0 0
  %2603 = vmatpush2.bf16.msra.mxu0 0
  %2604 = vmatprep.subr.bf16.mxu0 0
  %2605 = vmatpush2.bf16.msra.mxu0 0
  %2606 = vmatprep.subr.bf16.mxu0 0
  %2607 = vmatpush2.bf16.msra.mxu0 0
  %2608 = vmatprep.subr.bf16.mxu0 0
  %2609 = vmatpush2.bf16.msra.mxu0 0
  %2610 = vmatprep.mubr.bf16.mxu0 0
  %2611 = vmatmul.mubr.bf16.gmra.mxu0 %v2444
  %v2612 = vpop.f32.mrf.mxu0
  %v2613 = vadd.f32 %v1183, %v2612
  %v2614 = vpop.f32.mrf.mxu0
  %v2615 = vadd.f32 %v1187, %v2614
  %v2616 = vpop.f32.mrf.mxu0
  %v2617 = vadd.f32 %v1183, %v2616
  %v2618 = vpop.f32.mrf.mxu0
  %v2619 = vadd.f32 %v1187, %v2618
  %2620 = vmatprep.mubr.bf16.mxu0 0
  %2621 = vmatmul.mubr.bf16.gmra.mxu0 %v2447
  %v2622 = vpop.f32.mrf.mxu0
  %v2623 = vadd.f32 %v1183, %v2622
  %v2624 = vpop.f32.mrf.mxu0
  %v2625 = vadd.f32 %v1187, %v2624
  %v2626 = vpop.f32.mrf.mxu0
  %v2627 = vadd.f32 %v1183, %v2626
  %v2628 = vpop.f32.mrf.mxu0
  %v2629 = vadd.f32 %v1187, %v2628
  %2630 = vmatprep.mubr.bf16.mxu0 0
  %2631 = vmatmul.mubr.bf16.gmra.mxu0 %v2450
  %v2632 = vpop.f32.mrf.mxu0
  %v2633 = vadd.f32 %v1183, %v2632
  %v2634 = vpop.f32.mrf.mxu0
  %v2635 = vadd.f32 %v1187, %v2634
  %v2636 = vpop.f32.mrf.mxu0
  %v2637 = vadd.f32 %v1183, %v2636
  %v2638 = vpop.f32.mrf.mxu0
  %v2639 = vadd.f32 %v1187, %v2638
  %2640 = vdwg.mxu0
  %v2641 = vmax.f32 %v2487, 0.0
  %v2642 = vmax.f32 %v2489, 0.0
  %v2643 = vmax.f32 %v2550, 0.0
  %v2644 = vmax.f32 %v2552, 0.0
  %v2645 = vmax.f32 %v2613, 0.0
  %v2646 = vmax.f32 %v2615, 0.0
  %v2647 = vmax.f32 %v2491, 0.0
  %v2648 = vmax.f32 %v2493, 0.0
  %v2649 = vmax.f32 %v2554, 0.0
  %v2650 = vmax.f32 %v2556, 0.0
  %v2651 = vmax.f32 %v2617, 0.0
  %v2652 = vmax.f32 %v2619, 0.0
  %v2653 = vmax.f32 %v2497, 0.0
  %v2654 = vmax.f32 %v2499, 0.0
  %v2655 = vmax.f32 %v2560, 0.0
  %v2656 = vmax.f32 %v2562, 0.0
  %v2657 = vmax.f32 %v2623, 0.0
  %v2658 = vmax.f32 %v2625, 0.0
  %v2659 = vmax.f32 %v2501, 0.0
  %v2660 = vmax.f32 %v2503, 0.0
  %v2661 = vmax.f32 %v2564, 0.0
  %v2662 = vmax.f32 %v2566, 0.0
  %v2663 = vmax.f32 %v2627, 0.0
  %v2664 = vmax.f32 %v2629, 0.0
  %v2665 = vmax.f32 %v2507, 0.0
  %v2666 = vmax.f32 %v2509, 0.0
  %v2667 = vmax.f32 %v2570, 0.0
  %v2668 = vmax.f32 %v2572, 0.0
  %v2669 = vmax.f32 %v2633, 0.0
  %v2670 = vmax.f32 %v2635, 0.0
  %v2671 = vmax.f32 %v2511, 0.0
  %v2672 = vmax.f32 %v2513, 0.0
  %v2673 = vmax.f32 %v2574, 0.0
  %v2674 = vmax.f32 %v2576, 0.0
  %v2675 = vmax.f32 %v2637, 0.0
  %v2676 = vmax.f32 %v2639, 0.0
  %v2677 = vpack.c.bf16 %v2647, %v2641
  %v2678 = vpack.c.bf16 %v2648, %v2642
  %v2679 = vpack.c.bf16 %v2649, %v2643
  %v2680 = vpack.c.bf16 %v2650, %v2644
  %v2681 = vpack.c.bf16 %v2651, %v2645
  %v2682 = vpack.c.bf16 %v2652, %v2646
  %v2683 = vpack.c.bf16 %v2659, %v2653
  %v2684 = vpack.c.bf16 %v2660, %v2654
  %v2685 = vpack.c.bf16 %v2661, %v2655
  %v2686 = vpack.c.bf16 %v2662, %v2656
  %v2687 = vpack.c.bf16 %v2663, %v2657
  %v2688 = vpack.c.bf16 %v2664, %v2658
  %v2689 = vpack.c.bf16 %v2671, %v2665
  %v2690 = vpack.c.bf16 %v2672, %v2666
  %v2691 = vpack.c.bf16 %v2673, %v2667
  %v2692 = vpack.c.bf16 %v2674, %v2668
  %v2693 = vpack.c.bf16 %v2675, %v2669
  %v2694 = vpack.c.bf16 %v2676, %v2670
  %v2713 = vunpack.c.l.b16 %v2677
  %v2714 = vunpack.c.l.b16 %v2678
  %v2715 = vunpack.c.l.b16 %v2679
  %v2716 = vunpack.c.l.b16 %v2680
  %v2717 = vunpack.c.l.b16 %v2681
  %v2718 = vunpack.c.l.b16 %v2682
  %v2719 = vunpack.c.h.b16 %v2677
  %v2720 = vunpack.c.h.b16 %v2678
  %v2721 = vunpack.c.h.b16 %v2679
  %v2722 = vunpack.c.h.b16 %v2680
  %v2723 = vunpack.c.h.b16 %v2681
  %v2724 = vunpack.c.h.b16 %v2682
  %v2725 = vunpack.c.l.b16 %v2683
  %v2726 = vunpack.c.l.b16 %v2684
  %v2727 = vunpack.c.l.b16 %v2685
  %v2728 = vunpack.c.l.b16 %v2686
  %v2729 = vunpack.c.l.b16 %v2687
  %v2730 = vunpack.c.l.b16 %v2688
  %v2731 = vunpack.c.h.b16 %v2683
  %v2732 = vunpack.c.h.b16 %v2684
  %v2733 = vunpack.c.h.b16 %v2685
  %v2734 = vunpack.c.h.b16 %v2686
  %v2735 = vunpack.c.h.b16 %v2687
  %v2736 = vunpack.c.h.b16 %v2688
  %v2737 = vunpack.c.l.b16 %v2689
  %v2738 = vunpack.c.l.b16 %v2690
  %v2739 = vunpack.c.l.b16 %v2691
  %v2740 = vunpack.c.l.b16 %v2692
  %v2741 = vunpack.c.l.b16 %v2693
  %v2742 = vunpack.c.l.b16 %v2694
  %v2743 = vunpack.c.h.b16 %v2689
  %v2744 = vunpack.c.h.b16 %v2690
  %v2745 = vunpack.c.h.b16 %v2691
  %v2746 = vunpack.c.h.b16 %v2692
  %v2747 = vunpack.c.h.b16 %v2693
  %v2748 = vunpack.c.h.b16 %v2694
  %v2749 = vpack.c.b16 %v2714, %v2713
  %v2750 = vpack.c.b16 %v2716, %v2715
  %v2751 = vpack.c.b16 %v2718, %v2717
  %v2752 = vpack.c.b16 %v2720, %v2719
  %v2753 = vpack.c.b16 %v2722, %v2721
  %v2754 = vpack.c.b16 %v2724, %v2723
  %v2755 = vpack.c.b16 %v2726, %v2725
  %v2756 = vpack.c.b16 %v2728, %v2727
  %v2757 = vpack.c.b16 %v2730, %v2729
  %v2758 = vpack.c.b16 %v2732, %v2731
  %v2759 = vpack.c.b16 %v2734, %v2733
  %v2760 = vpack.c.b16 %v2736, %v2735
  %v2761 = vpack.c.b16 %v2738, %v2737
  %v2762 = vpack.c.b16 %v2740, %v2739
  %v2763 = vpack.c.b16 %v2742, %v2741
  %v2764 = vpack.c.b16 %v2744, %v2743
  %v2765 = vpack.c.b16 %v2746, %v2745
  %v2766 = vpack.c.b16 %v2748, %v2747
  %2785 = vst [vmem:[#allocation2 + $0x120] sm:$0xff] %v2749
  %2786 = vst [vmem:[#allocation2 + $0x128] sm:$0xff] %v2750
  %2787 = vst [vmem:[#allocation2 + $0x130] sm:$0xff] %v2751
  %2788 = vst [vmem:[#allocation2 + $0x138] sm:$0xff] %v2752
  %2789 = vst [vmem:[#allocation2 + $0x140] sm:$0xff] %v2753
  %2790 = vst [vmem:[#allocation2 + $0x148] sm:$0xff] %v2754
  %2791 = vst [vmem:[#allocation2 + $0x150] sm:$0xff] %v2755
  %2792 = vst [vmem:[#allocation2 + $0x158] sm:$0xff] %v2756
  %2793 = vst [vmem:[#allocation2 + $0x160] sm:$0xff] %v2757
  %2794 = vst [vmem:[#allocation2 + $0x168] sm:$0xff] %v2758
  %2795 = vst [vmem:[#allocation2 + $0x170] sm:$0xff] %v2759
  %2796 = vst [vmem:[#allocation2 + $0x178] sm:$0xff] %v2760
  %2797 = vst [vmem:[#allocation2 + $0x180] sm:$0xff] %v2761
  %2798 = vst [vmem:[#allocation2 + $0x188] sm:$0xff] %v2762
  %2799 = vst [vmem:[#allocation2 + $0x190] sm:$0xff] %v2763
  %2800 = vst [vmem:[#allocation2 + $0x198] sm:$0xff] %v2764
  %2801 = vst [vmem:[#allocation2 + $0x1a0] sm:$0xff] %v2765
  %2802 = vst [vmem:[#allocation2 + $0x1a8] sm:$0xff] %v2766
  %v2803 = vld [vmem:[%s0 + $0x90] sm:$0xff]
  %v2804 = vld [vmem:[%s0 + $0x98] sm:$0xff]
  %v2805 = vld [vmem:[%s0 + $0xa0] sm:$0xff]
  %v2806 = vld [vmem:[%s0 + $0xa8] sm:$0xff]
  %v2807 = vpack.c.bf16 %v2804, %v2803
  %v2808 = vpack.c.bf16 %v2806, %v2805
  %v2809 = vld [vmem:[%s1] sm:$0xff]
  %v2810 = vld [vmem:[%s1 + $0x8] sm:$0xff]
  %v2811 = vld [vmem:[%s1 + $0x10] sm:$0xff]
  %v2812 = vld [vmem:[%s1 + $0x18] sm:$0xff]
  %v2813 = vld [vmem:[%s1 + $0x20] sm:$0xff]
  %v2814 = vld [vmem:[%s1 + $0x28] sm:$0xff]
  %v2815 = vld [vmem:[%s1 + $0x30] sm:$0xff]
  %v2816 = vld [vmem:[%s1 + $0x38] sm:$0xff]
  %v2817 = vld [vmem:[%s1 + $0x40] sm:$0xff]
  %v2818 = vld [vmem:[%s1 + $0x48] sm:$0xff]
  %v2819 = vld [vmem:[%s1 + $0x50] sm:$0xff]
  %v2820 = vld [vmem:[%s1 + $0x58] sm:$0xff]
  %v2821 = vld [vmem:[%s1 + $0x60] sm:$0xff]
  %v2822 = vld [vmem:[%s1 + $0x68] sm:$0xff]
  %v2823 = vld [vmem:[%s1 + $0x70] sm:$0xff]
  %v2824 = vld [vmem:[%s1 + $0x78] sm:$0xff]
  %v2825 = vld [vmem:[%s1 + $0x80] sm:$0xff]
  %v2826 = vld [vmem:[%s1 + $0x88] sm:$0xff]
  %v2827 = vld [vmem:[%s1 + $0x90] sm:$0xff]
  %v2828 = vld [vmem:[%s1 + $0x98] sm:$0xff]
  %v2829 = vld [vmem:[%s1 + $0xa0] sm:$0xff]
  %v2830 = vld [vmem:[%s1 + $0xa8] sm:$0xff]
  %v2831 = vld [vmem:[%s1 + $0xb0] sm:$0xff]
  %v2832 = vld [vmem:[%s1 + $0xb8] sm:$0xff]
  %v2833 = vld [vmem:[%s1 + $0xc0] sm:$0xff]
  %v2834 = vld [vmem:[%s1 + $0xc8] sm:$0xff]
  %v2835 = vld [vmem:[%s1 + $0xd0] sm:$0xff]
  %v2836 = vld [vmem:[%s1 + $0xd8] sm:$0xff]
  %v2837 = vld [vmem:[%s1 + $0xe0] sm:$0xff]
  %v2838 = vld [vmem:[%s1 + $0xe8] sm:$0xff]
  %v2869 = vunpack.c.l.b16 %v2809
  %v2870 = vunpack.c.h.b16 %v2809
  %v2871 = vunpack.c.l.b16 %v2810
  %v2872 = vunpack.c.h.b16 %v2810
  %v2873 = vunpack.c.l.b16 %v2811
  %v2874 = vunpack.c.h.b16 %v2811
  %v2875 = vunpack.c.l.b16 %v2812
  %v2876 = vunpack.c.h.b16 %v2812
  %v2877 = vunpack.c.l.b16 %v2813
  %v2878 = vunpack.c.h.b16 %v2813
  %v2879 = vunpack.c.l.b16 %v2814
  %v2880 = vunpack.c.h.b16 %v2814
  %v2881 = vunpack.c.l.b16 %v2815
  %v2882 = vunpack.c.h.b16 %v2815
  %v2883 = vunpack.c.l.b16 %v2816
  %v2884 = vunpack.c.h.b16 %v2816
  %v2885 = vunpack.c.l.b16 %v2817
  %v2886 = vunpack.c.h.b16 %v2817
  %v2887 = vunpack.c.l.b16 %v2818
  %v2888 = vunpack.c.h.b16 %v2818
  %v2889 = vunpack.c.l.b16 %v2819
  %v2890 = vunpack.c.h.b16 %v2819
  %v2891 = vunpack.c.l.b16 %v2820
  %v2892 = vunpack.c.h.b16 %v2820
  %v2893 = vunpack.c.l.b16 %v2821
  %v2894 = vunpack.c.h.b16 %v2821
  %v2895 = vunpack.c.l.b16 %v2822
  %v2896 = vunpack.c.h.b16 %v2822
  %v2897 = vunpack.c.l.b16 %v2823
  %v2898 = vunpack.c.h.b16 %v2823
  %v2899 = vunpack.c.l.b16 %v2824
  %v2900 = vunpack.c.h.b16 %v2824
  %v2901 = vunpack.c.l.b16 %v2825
  %v2902 = vunpack.c.h.b16 %v2825
  %v2903 = vunpack.c.l.b16 %v2826
  %v2904 = vunpack.c.h.b16 %v2826
  %v2905 = vunpack.c.l.b16 %v2827
  %v2906 = vunpack.c.h.b16 %v2827
  %v2907 = vunpack.c.l.b16 %v2828
  %v2908 = vunpack.c.h.b16 %v2828
  %v2909 = vunpack.c.l.b16 %v2829
  %v2910 = vunpack.c.h.b16 %v2829
  %v2911 = vunpack.c.l.b16 %v2830
  %v2912 = vunpack.c.h.b16 %v2830
  %v2913 = vunpack.c.l.b16 %v2831
  %v2914 = vunpack.c.h.b16 %v2831
  %v2915 = vunpack.c.l.b16 %v2832
  %v2916 = vunpack.c.h.b16 %v2832
  %v2917 = vunpack.c.l.b16 %v2833
  %v2918 = vunpack.c.h.b16 %v2833
  %v2919 = vunpack.c.l.b16 %v2834
  %v2920 = vunpack.c.h.b16 %v2834
  %v2921 = vunpack.c.l.b16 %v2835
  %v2922 = vunpack.c.h.b16 %v2835
  %v2923 = vunpack.c.l.b16 %v2836
  %v2924 = vunpack.c.h.b16 %v2836
  %v2925 = vunpack.c.l.b16 %v2837
  %v2926 = vunpack.c.h.b16 %v2837
  %v2927 = vunpack.c.l.b16 %v2838
  %v2928 = vunpack.c.h.b16 %v2838
  %v2929 = vpack.c.b16 %v2875, %v2869
  %v2930 = vpack.c.b16 %v2876, %v2870
  %v2931 = vpack.c.b16 %v2877, %v2871
  %v2932 = vpack.c.b16 %v2878, %v2872
  %v2933 = vpack.c.b16 %v2879, %v2873
  %v2934 = vpack.c.b16 %v2880, %v2874
  %v2935 = vpack.c.b16 %v2887, %v2881
  %v2936 = vpack.c.b16 %v2888, %v2882
  %v2937 = vpack.c.b16 %v2889, %v2883
  %v2938 = vpack.c.b16 %v2890, %v2884
  %v2939 = vpack.c.b16 %v2891, %v2885
  %v2940 = vpack.c.b16 %v2892, %v2886
  %v2941 = vpack.c.b16 %v2899, %v2893
  %v2942 = vpack.c.b16 %v2900, %v2894
  %v2943 = vpack.c.b16 %v2901, %v2895
  %v2944 = vpack.c.b16 %v2902, %v2896
  %v2945 = vpack.c.b16 %v2903, %v2897
  %v2946 = vpack.c.b16 %v2904, %v2898
  %v2947 = vpack.c.b16 %v2911, %v2905
  %v2948 = vpack.c.b16 %v2912, %v2906
  %v2949 = vpack.c.b16 %v2913, %v2907
  %v2950 = vpack.c.b16 %v2914, %v2908
  %v2951 = vpack.c.b16 %v2915, %v2909
  %v2952 = vpack.c.b16 %v2916, %v2910
  %v2953 = vpack.c.b16 %v2923, %v2917
  %v2954 = vpack.c.b16 %v2924, %v2918
  %v2955 = vpack.c.b16 %v2925, %v2919
  %v2956 = vpack.c.b16 %v2926, %v2920
  %v2957 = vpack.c.b16 %v2927, %v2921
  %v2958 = vpack.c.b16 %v2928, %v2922
  %v2990 = vsel %vm1344, %v2807, 0
  %v2993 = vsel %vm1344, %v2808, 0
  %2995 = vmatprep.subr.bf16.mxu0 0
  %2996 = vmatpush1.bf16.msra.mxu0 0
  %2997 = vmatprep.subr.bf16.mxu0 0
  %2998 = vmatpush1.bf16.msra.mxu0 0
  %2999 = vmatprep.subr.bf16.mxu0 0
  %3000 = vmatpush1.bf16.msra.mxu0 0
  %3001 = vmatprep.subr.bf16.mxu0 %v2954
  %3002 = vmatpush1.bf16.msra.mxu0 %v2953
  %3003 = vmatprep.subr.bf16.mxu0 %v2948
  %3004 = vmatpush1.bf16.msra.mxu0 %v2947
  %3005 = vmatprep.subr.bf16.mxu0 %v2942
  %3006 = vmatpush1.bf16.msra.mxu0 %v2941
  %3007 = vmatprep.subr.bf16.mxu0 %v2936
  %3008 = vmatpush1.bf16.msra.mxu0 %v2935
  %3009 = vmatprep.subr.bf16.mxu0 %v2930
  %3010 = vmatpush1.bf16.msra.mxu0 %v2929
  %3011 = vmatprep.subr.bf16.mxu0 0
  %3012 = vmatpush2.bf16.msra.mxu0 0
  %3013 = vmatprep.subr.bf16.mxu0 0
  %3014 = vmatpush2.bf16.msra.mxu0 0
  %3015 = vmatprep.subr.bf16.mxu0 0
  %3016 = vmatpush2.bf16.msra.mxu0 0
  %3017 = vmatprep.subr.bf16.mxu0 0
  %3018 = vmatpush2.bf16.msra.mxu0 0
  %3019 = vmatprep.subr.bf16.mxu0 0
  %3020 = vmatpush2.bf16.msra.mxu0 0
  %3021 = vmatprep.subr.bf16.mxu0 0
  %3022 = vmatpush2.bf16.msra.mxu0 0
  %3023 = vmatprep.subr.bf16.mxu0 0
  %3024 = vmatpush2.bf16.msra.mxu0 0
  %3025 = vmatprep.subr.bf16.mxu0 0
  %3026 = vmatpush2.bf16.msra.mxu0 0
  %3027 = vmatprep.mubr.bf16.mxu0 0
  %3028 = vmatmul.mubr.bf16.gmra.mxu0 %v2990
  %v3029 = vpop.f32.mrf.mxu0
  %v3030 = vadd.f32 %v1167, %v3029
  %v3031 = vpop.f32.mrf.mxu0
  %v3032 = vadd.f32 %v1171, %v3031
  %v3033 = vpop.f32.mrf.mxu0
  %v3034 = vadd.f32 %v1167, %v3033
  %v3035 = vpop.f32.mrf.mxu0
  %v3036 = vadd.f32 %v1171, %v3035
  %3037 = vmatprep.mubr.bf16.mxu0 0
  %3038 = vmatmul.mubr.bf16.gmra.mxu0 %v2993
  %v3039 = vpop.f32.mrf.mxu0
  %v3040 = vadd.f32 %v1167, %v3039
  %v3041 = vpop.f32.mrf.mxu0
  %v3042 = vadd.f32 %v1171, %v3041
  %v3043 = vpop.f32.mrf.mxu0
  %v3044 = vadd.f32 %v1167, %v3043
  %v3045 = vpop.f32.mrf.mxu0
  %v3046 = vadd.f32 %v1171, %v3045
  %3047 = vdwg.mxu0
  %3048 = vmatprep.subr.bf16.mxu0 0
  %3049 = vmatpush1.bf16.msra.mxu0 0
  %3050 = vmatprep.subr.bf16.mxu0 0
  %3051 = vmatpush1.bf16.msra.mxu0 0
  %3052 = vmatprep.subr.bf16.mxu0 0
  %3053 = vmatpush1.bf16.msra.mxu0 0
  %3054 = vmatprep.subr.bf16.mxu0 %v2956
  %3055 = vmatpush1.bf16.msra.mxu0 %v2955
  %3056 = vmatprep.subr.bf16.mxu0 %v2950
  %3057 = vmatpush1.bf16.msra.mxu0 %v2949
  %3058 = vmatprep.subr.bf16.mxu0 %v2944
  %3059 = vmatpush1.bf16.msra.mxu0 %v2943
  %3060 = vmatprep.subr.bf16.mxu0 %v2938
  %3061 = vmatpush1.bf16.msra.mxu0 %v2937
  %3062 = vmatprep.subr.bf16.mxu0 %v2932
  %3063 = vmatpush1.bf16.msra.mxu0 %v2931
  %3064 = vmatprep.subr.bf16.mxu0 0
  %3065 = vmatpush2.bf16.msra.mxu0 0
  %3066 = vmatprep.subr.bf16.mxu0 0
  %3067 = vmatpush2.bf16.msra.mxu0 0
  %3068 = vmatprep.subr.bf16.mxu0 0
  %3069 = vmatpush2.bf16.msra.mxu0 0
  %3070 = vmatprep.subr.bf16.mxu0 0
  %3071 = vmatpush2.bf16.msra.mxu0 0
  %3072 = vmatprep.subr.bf16.mxu0 0
  %3073 = vmatpush2.bf16.msra.mxu0 0
  %3074 = vmatprep.subr.bf16.mxu0 0
  %3075 = vmatpush2.bf16.msra.mxu0 0
  %3076 = vmatprep.subr.bf16.mxu0 0
  %3077 = vmatpush2.bf16.msra.mxu0 0
  %3078 = vmatprep.subr.bf16.mxu0 0
  %3079 = vmatpush2.bf16.msra.mxu0 0
  %3080 = vmatprep.mubr.bf16.mxu0 0
  %3081 = vmatmul.mubr.bf16.gmra.mxu0 %v2990
  %v3082 = vpop.f32.mrf.mxu0
  %v3083 = vadd.f32 %v1175, %v3082
  %v3084 = vpop.f32.mrf.mxu0
  %v3085 = vadd.f32 %v1179, %v3084
  %v3086 = vpop.f32.mrf.mxu0
  %v3087 = vadd.f32 %v1175, %v3086
  %v3088 = vpop.f32.mrf.mxu0
  %v3089 = vadd.f32 %v1179, %v3088
  %3090 = vmatprep.mubr.bf16.mxu0 0
  %3091 = vmatmul.mubr.bf16.gmra.mxu0 %v2993
  %v3092 = vpop.f32.mrf.mxu0
  %v3093 = vadd.f32 %v1175, %v3092
  %v3094 = vpop.f32.mrf.mxu0
  %v3095 = vadd.f32 %v1179, %v3094
  %v3096 = vpop.f32.mrf.mxu0
  %v3097 = vadd.f32 %v1175, %v3096
  %v3098 = vpop.f32.mrf.mxu0
  %v3099 = vadd.f32 %v1179, %v3098
  %3100 = vdwg.mxu0
  %3101 = vmatprep.subr.bf16.mxu0 0
  %3102 = vmatpush1.bf16.msra.mxu0 0
  %3103 = vmatprep.subr.bf16.mxu0 0
  %3104 = vmatpush1.bf16.msra.mxu0 0
  %3105 = vmatprep.subr.bf16.mxu0 0
  %3106 = vmatpush1.bf16.msra.mxu0 0
  %3107 = vmatprep.subr.bf16.mxu0 %v2958
  %3108 = vmatpush1.bf16.msra.mxu0 %v2957
  %3109 = vmatprep.subr.bf16.mxu0 %v2952
  %3110 = vmatpush1.bf16.msra.mxu0 %v2951
  %3111 = vmatprep.subr.bf16.mxu0 %v2946
  %3112 = vmatpush1.bf16.msra.mxu0 %v2945
  %3113 = vmatprep.subr.bf16.mxu0 %v2940
  %3114 = vmatpush1.bf16.msra.mxu0 %v2939
  %3115 = vmatprep.subr.bf16.mxu0 %v2934
  %3116 = vmatpush1.bf16.msra.mxu0 %v2933
  %3117 = vmatprep.subr.bf16.mxu0 0
  %3118 = vmatpush2.bf16.msra.mxu0 0
  %3119 = vmatprep.subr.bf16.mxu0 0
  %3120 = vmatpush2.bf16.msra.mxu0 0
  %3121 = vmatprep.subr.bf16.mxu0 0
  %3122 = vmatpush2.bf16.msra.mxu0 0
  %3123 = vmatprep.subr.bf16.mxu0 0
  %3124 = vmatpush2.bf16.msra.mxu0 0
  %3125 = vmatprep.subr.bf16.mxu0 0
  %3126 = vmatpush2.bf16.msra.mxu0 0
  %3127 = vmatprep.subr.bf16.mxu0 0
  %3128 = vmatpush2.bf16.msra.mxu0 0
  %3129 = vmatprep.subr.bf16.mxu0 0
  %3130 = vmatpush2.bf16.msra.mxu0 0
  %3131 = vmatprep.subr.bf16.mxu0 0
  %3132 = vmatpush2.bf16.msra.mxu0 0
  %3133 = vmatprep.mubr.bf16.mxu0 0
  %3134 = vmatmul.mubr.bf16.gmra.mxu0 %v2990
  %v3135 = vpop.f32.mrf.mxu0
  %v3136 = vadd.f32 %v1183, %v3135
  %v3137 = vpop.f32.mrf.mxu0
  %v3138 = vadd.f32 %v1187, %v3137
  %v3139 = vpop.f32.mrf.mxu0
  %v3140 = vadd.f32 %v1183, %v3139
  %v3141 = vpop.f32.mrf.mxu0
  %v3142 = vadd.f32 %v1187, %v3141
  %3143 = vmatprep.mubr.bf16.mxu0 0
  %3144 = vmatmul.mubr.bf16.gmra.mxu0 %v2993
  %v3145 = vpop.f32.mrf.mxu0
  %v3146 = vadd.f32 %v1183, %v3145
  %v3147 = vpop.f32.mrf.mxu0
  %v3148 = vadd.f32 %v1187, %v3147
  %v3149 = vpop.f32.mrf.mxu0
  %v3150 = vadd.f32 %v1183, %v3149
  %v3151 = vpop.f32.mrf.mxu0
  %v3152 = vadd.f32 %v1187, %v3151
  %3153 = vdwg.mxu0
  %v3154 = vmax.f32 %v3030, 0.0
  %v3155 = vmax.f32 %v3032, 0.0
  %v3156 = vmax.f32 %v3083, 0.0
  %v3157 = vmax.f32 %v3085, 0.0
  %v3158 = vmax.f32 %v3136, 0.0
  %v3159 = vmax.f32 %v3138, 0.0
  %v3160 = vmax.f32 %v3034, 0.0
  %v3161 = vmax.f32 %v3036, 0.0
  %v3162 = vmax.f32 %v3087, 0.0
  %v3163 = vmax.f32 %v3089, 0.0
  %v3164 = vmax.f32 %v3140, 0.0
  %v3165 = vmax.f32 %v3142, 0.0
  %v3166 = vmax.f32 %v3040, 0.0
  %v3167 = vmax.f32 %v3042, 0.0
  %v3168 = vmax.f32 %v3093, 0.0
  %v3169 = vmax.f32 %v3095, 0.0
  %v3170 = vmax.f32 %v3146, 0.0
  %v3171 = vmax.f32 %v3148, 0.0
  %v3172 = vmax.f32 %v3044, 0.0
  %v3173 = vmax.f32 %v3046, 0.0
  %v3174 = vmax.f32 %v3097, 0.0
  %v3175 = vmax.f32 %v3099, 0.0
  %v3176 = vmax.f32 %v3150, 0.0
  %v3177 = vmax.f32 %v3152, 0.0
  %v3178 = vpack.c.bf16 %v3160, %v3154
  %v3179 = vpack.c.bf16 %v3161, %v3155
  %v3180 = vpack.c.bf16 %v3162, %v3156
  %v3181 = vpack.c.bf16 %v3163, %v3157
  %v3182 = vpack.c.bf16 %v3164, %v3158
  %v3183 = vpack.c.bf16 %v3165, %v3159
  %v3184 = vpack.c.bf16 %v3172, %v3166
  %v3185 = vpack.c.bf16 %v3173, %v3167
  %v3186 = vpack.c.bf16 %v3174, %v3168
  %v3187 = vpack.c.bf16 %v3175, %v3169
  %v3188 = vpack.c.bf16 %v3176, %v3170
  %v3189 = vpack.c.bf16 %v3177, %v3171
  %v3202 = vunpack.c.l.b16 %v3178
  %v3203 = vunpack.c.l.b16 %v3179
  %v3204 = vunpack.c.l.b16 %v3180
  %v3205 = vunpack.c.l.b16 %v3181
  %v3206 = vunpack.c.l.b16 %v3182
  %v3207 = vunpack.c.l.b16 %v3183
  %v3208 = vunpack.c.h.b16 %v3178
  %v3209 = vunpack.c.h.b16 %v3179
  %v3210 = vunpack.c.h.b16 %v3180
  %v3211 = vunpack.c.h.b16 %v3181
  %v3212 = vunpack.c.h.b16 %v3182
  %v3213 = vunpack.c.h.b16 %v3183
  %v3214 = vunpack.c.l.b16 %v3184
  %v3215 = vunpack.c.l.b16 %v3185
  %v3216 = vunpack.c.l.b16 %v3186
  %v3217 = vunpack.c.l.b16 %v3187
  %v3218 = vunpack.c.l.b16 %v3188
  %v3219 = vunpack.c.l.b16 %v3189
  %v3220 = vunpack.c.h.b16 %v3184
  %v3221 = vunpack.c.h.b16 %v3185
  %v3222 = vunpack.c.h.b16 %v3186
  %v3223 = vunpack.c.h.b16 %v3187
  %v3224 = vunpack.c.h.b16 %v3188
  %v3225 = vunpack.c.h.b16 %v3189
  %v3226 = vpack.c.b16 %v3203, %v3202
  %v3227 = vpack.c.b16 %v3205, %v3204
  %v3228 = vpack.c.b16 %v3207, %v3206
  %v3229 = vpack.c.b16 %v3209, %v3208
  %v3230 = vpack.c.b16 %v3211, %v3210
  %v3231 = vpack.c.b16 %v3213, %v3212
  %v3232 = vpack.c.b16 %v3215, %v3214
  %v3233 = vpack.c.b16 %v3217, %v3216
  %v3234 = vpack.c.b16 %v3219, %v3218
  %v3235 = vpack.c.b16 %v3221, %v3220
  %v3236 = vpack.c.b16 %v3223, %v3222
  %v3237 = vpack.c.b16 %v3225, %v3224
  %3250 = vst [vmem:[#allocation2 + $0x1b0] sm:$0xff] %v3226
  %3251 = vst [vmem:[#allocation2 + $0x1b8] sm:$0xff] %v3227
  %3252 = vst [vmem:[#allocation2 + $0x1c0] sm:$0xff] %v3228
  %3253 = vst [vmem:[#allocation2 + $0x1c8] sm:$0xff] %v3229
  %3254 = vst [vmem:[#allocation2 + $0x1d0] sm:$0xff] %v3230
  %3255 = vst [vmem:[#allocation2 + $0x1d8] sm:$0xff] %v3231
  %3256 = vst [vmem:[#allocation2 + $0x1e0] sm:$0xff] %v3232
  %3257 = vst [vmem:[#allocation2 + $0x1e8] sm:$0xff] %v3233
  %3258 = vst [vmem:[#allocation2 + $0x1f0] sm:$0xff] %v3234
  %3259 = vst [vmem:[#allocation2 + $0x1f8] sm:$0xff] %v3235
  %3260 = vst [vmem:[#allocation2 + $0x200] sm:$0xff] %v3236
  %3261 = vst [vmem:[#allocation2 + $0x208] sm:$0xff] %v3237
  %s3262 = smul.u32 4, 3
  %s3263 = smul.u32 %s3262, 96
  %s3264 = smul.u32 %s3263, 1
  %s3265 = sshll.u32 %s3264, 4
  %3266 = dma.done [#allocation6], %s3265
  %v3267 = vld [vmem:[#allocation2] sm:$0xff]
  %v3268 = vld [vmem:[#allocation2 + $0x8] sm:$0xff]
  %v3269 = vld [vmem:[#allocation2 + $0x10] sm:$0xff]
  %v3270 = vld [vmem:[#allocation2 + $0x18] sm:$0xff]
  %v3271 = vld [vmem:[#allocation2 + $0x20] sm:$0xff]
  %v3272 = vld [vmem:[#allocation2 + $0x28] sm:$0xff]
  %v3273 = vld [vmem:[#allocation2 + $0x30] sm:$0xff]
  %v3274 = vld [vmem:[#allocation2 + $0x38] sm:$0xff]
  %v3275 = vld [vmem:[#allocation2 + $0x40] sm:$0xff]
  %v3276 = vld [vmem:[#allocation2 + $0x48] sm:$0xff]
  %v3277 = vld [vmem:[#allocation2 + $0x50] sm:$0xff]
  %v3278 = vld [vmem:[#allocation2 + $0x58] sm:$0xff]
  %v3279 = vld [vmem:[#allocation2 + $0x60] sm:$0xff]
  %v3280 = vld [vmem:[#allocation2 + $0x68] sm:$0xff]
  %v3281 = vld [vmem:[#allocation2 + $0x70] sm:$0xff]
  %v3282 = vld [vmem:[#allocation2 + $0x78] sm:$0xff]
  %v3283 = vld [vmem:[#allocation2 + $0x80] sm:$0xff]
  %v3284 = vld [vmem:[#allocation2 + $0x88] sm:$0xff]
  %v3285 = vld [vmem:[#allocation2 + $0x90] sm:$0xff]
  %v3286 = vld [vmem:[#allocation2 + $0x98] sm:$0xff]
  %v3287 = vld [vmem:[#allocation2 + $0xa0] sm:$0xff]
  %v3288 = vld [vmem:[#allocation2 + $0xa8] sm:$0xff]
  %v3289 = vld [vmem:[#allocation2 + $0xb0] sm:$0xff]
  %v3290 = vld [vmem:[#allocation2 + $0xb8] sm:$0xff]
  %v3291 = vld [vmem:[#allocation2 + $0xc0] sm:$0xff]
  %v3292 = vld [vmem:[#allocation2 + $0xc8] sm:$0xff]
  %v3293 = vld [vmem:[#allocation2 + $0xd0] sm:$0xff]
  %v3294 = vld [vmem:[#allocation2 + $0xd8] sm:$0xff]
  %v3295 = vld [vmem:[#allocation2 + $0xe0] sm:$0xff]
  %v3296 = vld [vmem:[#allocation2 + $0xe8] sm:$0xff]
  %v3297 = vld [vmem:[#allocation2 + $0xf0] sm:$0xff]
  %v3298 = vld [vmem:[#allocation2 + $0xf8] sm:$0xff]
  %v3299 = vld [vmem:[#allocation2 + $0x100] sm:$0xff]
  %v3300 = vld [vmem:[#allocation2 + $0x108] sm:$0xff]
  %v3301 = vld [vmem:[#allocation2 + $0x110] sm:$0xff]
  %v3302 = vld [vmem:[#allocation2 + $0x118] sm:$0xff]
  %v3303 = vld [vmem:[#allocation2 + $0x120] sm:$0xff]
  %v3304 = vld [vmem:[#allocation2 + $0x128] sm:$0xff]
  %v3305 = vld [vmem:[#allocation2 + $0x130] sm:$0xff]
  %v3306 = vld [vmem:[#allocation2 + $0x138] sm:$0xff]
  %v3307 = vld [vmem:[#allocation2 + $0x140] sm:$0xff]
  %v3308 = vld [vmem:[#allocation2 + $0x148] sm:$0xff]
  %v3309 = vld [vmem:[#allocation2 + $0x150] sm:$0xff]
  %v3310 = vld [vmem:[#allocation2 + $0x158] sm:$0xff]
  %v3311 = vld [vmem:[#allocation2 + $0x160] sm:$0xff]
  %v3312 = vld [vmem:[#allocation2 + $0x168] sm:$0xff]
  %v3313 = vld [vmem:[#allocation2 + $0x170] sm:$0xff]
  %v3314 = vld [vmem:[#allocation2 + $0x178] sm:$0xff]
  %v3315 = vld [vmem:[#allocation2 + $0x180] sm:$0xff]
  %v3316 = vld [vmem:[#allocation2 + $0x188] sm:$0xff]
  %v3317 = vld [vmem:[#allocation2 + $0x190] sm:$0xff]
  %v3318 = vld [vmem:[#allocation2 + $0x198] sm:$0xff]
  %v3319 = vld [vmem:[#allocation2 + $0x1a0] sm:$0xff]
  %v3320 = vld [vmem:[#allocation2 + $0x1a8] sm:$0xff]
  %v3321 = vld [vmem:[#allocation4] sm:$0xf]
  %v3322 = vld [vmem:[#allocation4 + $0x4] sm:$0xf]
  %v3323 = vld [vmem:[#allocation4 + $0x8] sm:$0xf]
  %v3324 = vld [vmem:[#allocation4 + $0xc] sm:$0xf]
  %v3325 = vld [vmem:[#allocation4 + $0x10] sm:$0xf]
  %v3326 = vld [vmem:[#allocation4 + $0x14] sm:$0xf]
  %v3327 = vld [vmem:[#allocation4 + $0x18] sm:$0xf]
  %v3328 = vld [vmem:[#allocation4 + $0x1c] sm:$0xf]
  %v3329 = vld [vmem:[#allocation4 + $0x20] sm:$0xf]
  %v3330 = vld [vmem:[#allocation4 + $0x24] sm:$0xf]
  %v3331 = vld [vmem:[#allocation4 + $0x28] sm:$0xf]
  %v3332 = vld [vmem:[#allocation4 + $0x2c] sm:$0xf]
  %v3333 = vld [vmem:[#allocation4 + $0x30] sm:$0xf]
  %v3334 = vld [vmem:[#allocation4 + $0x34] sm:$0xf]
  %v3335 = vld [vmem:[#allocation4 + $0x38] sm:$0xf]
  %v3336 = vld [vmem:[#allocation4 + $0x3c] sm:$0xf]
  %v3337 = vld [vmem:[#allocation4 + $0x40] sm:$0xf]
  %v3338 = vld [vmem:[#allocation4 + $0x44] sm:$0xf]
  %v3339 = vld [vmem:[#allocation4 + $0x48] sm:$0xf]
  %v3340 = vld [vmem:[#allocation4 + $0x4c] sm:$0xf]
  %v3341 = vld [vmem:[#allocation4 + $0x50] sm:$0xf]
  %v3342 = vld [vmem:[#allocation4 + $0x54] sm:$0xf]
  %v3343 = vld [vmem:[#allocation4 + $0x58] sm:$0xf]
  %v3344 = vld [vmem:[#allocation4 + $0x5c] sm:$0xf]
  %v3345 = vld [vmem:[#allocation4 + $0x60] sm:$0xf]
  %v3346 = vld [vmem:[#allocation4 + $0x64] sm:$0xf]
  %v3347 = vld [vmem:[#allocation4 + $0x68] sm:$0xf]
  %v3348 = vld [vmem:[#allocation4 + $0x6c] sm:$0xf]
  %v3349 = vld [vmem:[#allocation4 + $0x70] sm:$0xf]
  %v3350 = vld [vmem:[#allocation4 + $0x74] sm:$0xf]
  %v3351 = vld [vmem:[#allocation4 + $0x78] sm:$0xf]
  %v3352 = vld [vmem:[#allocation4 + $0x7c] sm:$0xf]
  %v3353 = vld [vmem:[#allocation4 + $0x80] sm:$0xf]
  %v3354 = vld [vmem:[#allocation4 + $0x84] sm:$0xf]
  %v3355 = vld [vmem:[#allocation4 + $0x88] sm:$0xf]
  %v3356 = vld [vmem:[#allocation4 + $0x8c] sm:$0xf]
  %v3357 = vld [vmem:[#allocation4 + $0x90] sm:$0xf]
  %v3358 = vld [vmem:[#allocation4 + $0x94] sm:$0xf]
  %v3359 = vld [vmem:[#allocation4 + $0x98] sm:$0xf]
  %v3360 = vld [vmem:[#allocation4 + $0x9c] sm:$0xf]
  %v3361 = vld [vmem:[#allocation4 + $0xa0] sm:$0xf]
  %v3362 = vld [vmem:[#allocation4 + $0xa4] sm:$0xf]
  %v3363 = vld [vmem:[#allocation4 + $0xa8] sm:$0xf]
  %v3364 = vld [vmem:[#allocation4 + $0xac] sm:$0xf]
  %v3365 = vld [vmem:[#allocation4 + $0xb0] sm:$0xf]
  %v3366 = vld [vmem:[#allocation4 + $0xb4] sm:$0xf]
  %v3367 = vld [vmem:[#allocation4 + $0xb8] sm:$0xf]
  %v3368 = vld [vmem:[#allocation4 + $0xbc] sm:$0xf]
  %v3369 = vld [vmem:[#allocation4 + $0xc0] sm:$0xf]
  %v3370 = vld [vmem:[#allocation4 + $0xc4] sm:$0xf]
  %v3371 = vld [vmem:[#allocation4 + $0xc8] sm:$0xf]
  %v3372 = vld [vmem:[#allocation4 + $0xcc] sm:$0xf]
  %v3373 = vld [vmem:[#allocation4 + $0xd0] sm:$0xf]
  %v3374 = vld [vmem:[#allocation4 + $0xd4] sm:$0xf]
  %v3375 = vld [vmem:[#allocation4 + $0xd8] sm:$0xf]
  %v3376 = vld [vmem:[#allocation4 + $0xdc] sm:$0xf]
  %v3377 = vld [vmem:[#allocation4 + $0xe0] sm:$0xf]
  %v3378 = vld [vmem:[#allocation4 + $0xe4] sm:$0xf]
  %v3379 = vld [vmem:[#allocation4 + $0xe8] sm:$0xf]
  %v3380 = vld [vmem:[#allocation4 + $0xec] sm:$0xf]
  %v3381 = vld [vmem:[#allocation4 + $0xf0] sm:$0xf]
  %v3382 = vld [vmem:[#allocation4 + $0xf4] sm:$0xf]
  %v3383 = vld [vmem:[#allocation4 + $0xf8] sm:$0xf]
  %v3384 = vld [vmem:[#allocation4 + $0xfc] sm:$0xf]
  %v3385 = vld [vmem:[#allocation4 + $0x100] sm:$0xf]
  %v3386 = vld [vmem:[#allocation4 + $0x104] sm:$0xf]
  %v3387 = vld [vmem:[#allocation4 + $0x108] sm:$0xf]
  %v3388 = vld [vmem:[#allocation4 + $0x10c] sm:$0xf]
  %v3389 = vld [vmem:[#allocation4 + $0x110] sm:$0xf]
  %v3390 = vld [vmem:[#allocation4 + $0x114] sm:$0xf]
  %v3391 = vld [vmem:[#allocation4 + $0x118] sm:$0xf]
  %v3392 = vld [vmem:[#allocation4 + $0x11c] sm:$0xf]
  %v3393 = vld [vmem:[#allocation4 + $0x120] sm:$0xf]
  %v3394 = vld [vmem:[#allocation4 + $0x124] sm:$0xf]
  %v3395 = vld [vmem:[#allocation4 + $0x128] sm:$0xf]
  %v3396 = vld [vmem:[#allocation4 + $0x12c] sm:$0xf]
  %v3397 = vld [vmem:[#allocation4 + $0x130] sm:$0xf]
  %v3398 = vld [vmem:[#allocation4 + $0x134] sm:$0xf]
  %v3399 = vld [vmem:[#allocation4 + $0x138] sm:$0xf]
  %v3400 = vld [vmem:[#allocation4 + $0x13c] sm:$0xf]
  %v3401 = vld [vmem:[#allocation4 + $0x140] sm:$0xf]
  %v3402 = vld [vmem:[#allocation4 + $0x144] sm:$0xf]
  %v3403 = vld [vmem:[#allocation4 + $0x148] sm:$0xf]
  %v3404 = vld [vmem:[#allocation4 + $0x14c] sm:$0xf]
  %v3405 = vld [vmem:[#allocation4 + $0x150] sm:$0xf]
  %v3406 = vld [vmem:[#allocation4 + $0x154] sm:$0xf]
  %v3407 = vld [vmem:[#allocation4 + $0x158] sm:$0xf]
  %v3408 = vld [vmem:[#allocation4 + $0x15c] sm:$0xf]
  %v3409 = vld [vmem:[#allocation4 + $0x160] sm:$0xf]
  %v3410 = vld [vmem:[#allocation4 + $0x164] sm:$0xf]
  %v3411 = vld [vmem:[#allocation4 + $0x168] sm:$0xf]
  %v3412 = vld [vmem:[#allocation4 + $0x16c] sm:$0xf]
  %v3413 = vld [vmem:[#allocation4 + $0x170] sm:$0xf]
  %v3414 = vld [vmem:[#allocation4 + $0x174] sm:$0xf]
  %v3415 = vld [vmem:[#allocation4 + $0x178] sm:$0xf]
  %v3416 = vld [vmem:[#allocation4 + $0x17c] sm:$0xf]
  %v3417 = vld [vmem:[#allocation2 + $0x1b0] sm:$0xff]
  %v3418 = vld [vmem:[#allocation2 + $0x1b8] sm:$0xff]
  %v3419 = vld [vmem:[#allocation2 + $0x1c0] sm:$0xff]
  %v3420 = vld [vmem:[#allocation2 + $0x1c8] sm:$0xff]
  %v3421 = vld [vmem:[#allocation2 + $0x1d0] sm:$0xff]
  %v3422 = vld [vmem:[#allocation2 + $0x1d8] sm:$0xff]
  %s3423 = scalar_lea.vmem [#allocation4], 384
  %v3424 = vld [vmem:[%s3423] sm:$0xf]
  %v3425 = vld [vmem:[%s3423 + $0x4] sm:$0xf]
  %v3426 = vld [vmem:[%s3423 + $0x8] sm:$0xf]
  %v3427 = vld [vmem:[%s3423 + $0xc] sm:$0xf]
  %v3428 = vld [vmem:[%s3423 + $0x10] sm:$0xf]
  %v3429 = vld [vmem:[%s3423 + $0x14] sm:$0xf]
  %v3430 = vld [vmem:[%s3423 + $0x18] sm:$0xf]
  %v3431 = vld [vmem:[%s3423 + $0x1c] sm:$0xf]
  %v3432 = vld [vmem:[%s3423 + $0x20] sm:$0xf]
  %v3433 = vld [vmem:[%s3423 + $0x24] sm:$0xf]
  %v3434 = vld [vmem:[%s3423 + $0x28] sm:$0xf]
  %v3435 = vld [vmem:[%s3423 + $0x2c] sm:$0xf]
  %v3436 = vld [vmem:[%s3423 + $0x30] sm:$0xf]
  %v3437 = vld [vmem:[%s3423 + $0x34] sm:$0xf]
  %v3438 = vld [vmem:[%s3423 + $0x38] sm:$0xf]
  %v3439 = vld [vmem:[%s3423 + $0x3c] sm:$0xf]
  %v3440 = vld [vmem:[%s3423 + $0x40] sm:$0xf]
  %v3441 = vld [vmem:[%s3423 + $0x44] sm:$0xf]
  %v3442 = vld [vmem:[%s3423 + $0x48] sm:$0xf]
  %v3443 = vld [vmem:[%s3423 + $0x4c] sm:$0xf]
  %v3444 = vld [vmem:[%s3423 + $0x50] sm:$0xf]
  %v3445 = vld [vmem:[%s3423 + $0x54] sm:$0xf]
  %v3446 = vld [vmem:[%s3423 + $0x58] sm:$0xf]
  %v3447 = vld [vmem:[%s3423 + $0x5c] sm:$0xf]
  %v3448 = vld [vmem:[%s3423 + $0x60] sm:$0xf]
  %v3449 = vld [vmem:[%s3423 + $0x64] sm:$0xf]
  %v3450 = vld [vmem:[%s3423 + $0x68] sm:$0xf]
  %v3451 = vld [vmem:[%s3423 + $0x6c] sm:$0xf]
  %v3452 = vld [vmem:[%s3423 + $0x70] sm:$0xf]
  %v3453 = vld [vmem:[%s3423 + $0x74] sm:$0xf]
  %v3454 = vld [vmem:[%s3423 + $0x78] sm:$0xf]
  %v3455 = vld [vmem:[%s3423 + $0x7c] sm:$0xf]
  %v3456 = vld [vmem:[%s3423 + $0x80] sm:$0xf]
  %v3457 = vld [vmem:[%s3423 + $0x84] sm:$0xf]
  %v3458 = vld [vmem:[%s3423 + $0x88] sm:$0xf]
  %v3459 = vld [vmem:[%s3423 + $0x8c] sm:$0xf]
  %v3460 = vld [vmem:[%s3423 + $0x90] sm:$0xf]
  %v3461 = vld [vmem:[%s3423 + $0x94] sm:$0xf]
  %v3462 = vld [vmem:[%s3423 + $0x98] sm:$0xf]
  %v3463 = vld [vmem:[%s3423 + $0x9c] sm:$0xf]
  %v3464 = vld [vmem:[%s3423 + $0xa0] sm:$0xf]
  %v3465 = vld [vmem:[%s3423 + $0xa4] sm:$0xf]
  %v3466 = vld [vmem:[%s3423 + $0xa8] sm:$0xf]
  %v3467 = vld [vmem:[%s3423 + $0xac] sm:$0xf]
  %v3468 = vld [vmem:[%s3423 + $0xb0] sm:$0xf]
  %v3469 = vld [vmem:[%s3423 + $0xb4] sm:$0xf]
  %v3470 = vld [vmem:[%s3423 + $0xb8] sm:$0xf]
  %v3471 = vld [vmem:[%s3423 + $0xbc] sm:$0xf]
  %v3472 = vld [vmem:[%s3423 + $0xc0] sm:$0xf]
  %v3473 = vld [vmem:[%s3423 + $0xc4] sm:$0xf]
  %v3474 = vld [vmem:[%s3423 + $0xc8] sm:$0xf]
  %v3475 = vld [vmem:[%s3423 + $0xcc] sm:$0xf]
  %v3476 = vld [vmem:[%s3423 + $0xd0] sm:$0xf]
  %v3477 = vld [vmem:[%s3423 + $0xd4] sm:$0xf]
  %v3478 = vld [vmem:[%s3423 + $0xd8] sm:$0xf]
  %v3479 = vld [vmem:[%s3423 + $0xdc] sm:$0xf]
  %v3480 = vld [vmem:[%s3423 + $0xe0] sm:$0xf]
  %v3481 = vld [vmem:[%s3423 + $0xe4] sm:$0xf]
  %v3482 = vld [vmem:[%s3423 + $0xe8] sm:$0xf]
  %v3483 = vld [vmem:[%s3423 + $0xec] sm:$0xf]
  %v3484 = vld [vmem:[%s3423 + $0xf0] sm:$0xf]
  %v3485 = vld [vmem:[%s3423 + $0xf4] sm:$0xf]
  %v3486 = vld [vmem:[%s3423 + $0xf8] sm:$0xf]
  %v3487 = vld [vmem:[%s3423 + $0xfc] sm:$0xf]
  %v3488 = vld [vmem:[%s3423 + $0x100] sm:$0xf]
  %v3489 = vld [vmem:[%s3423 + $0x104] sm:$0xf]
  %v3490 = vld [vmem:[%s3423 + $0x108] sm:$0xf]
  %v3491 = vld [vmem:[%s3423 + $0x10c] sm:$0xf]
  %v3492 = vld [vmem:[%s3423 + $0x110] sm:$0xf]
  %v3493 = vld [vmem:[%s3423 + $0x114] sm:$0xf]
  %v3494 = vld [vmem:[%s3423 + $0x118] sm:$0xf]
  %v3495 = vld [vmem:[%s3423 + $0x11c] sm:$0xf]
  %v3496 = vld [vmem:[%s3423 + $0x120] sm:$0xf]
  %v3497 = vld [vmem:[%s3423 + $0x124] sm:$0xf]
  %v3498 = vld [vmem:[%s3423 + $0x128] sm:$0xf]
  %v3499 = vld [vmem:[%s3423 + $0x12c] sm:$0xf]
  %v3500 = vld [vmem:[%s3423 + $0x130] sm:$0xf]
  %v3501 = vld [vmem:[%s3423 + $0x134] sm:$0xf]
  %v3502 = vld [vmem:[%s3423 + $0x138] sm:$0xf]
  %v3503 = vld [vmem:[%s3423 + $0x13c] sm:$0xf]
  %v3504 = vld [vmem:[%s3423 + $0x140] sm:$0xf]
  %v3505 = vld [vmem:[%s3423 + $0x144] sm:$0xf]
  %v3506 = vld [vmem:[%s3423 + $0x148] sm:$0xf]
  %v3507 = vld [vmem:[%s3423 + $0x14c] sm:$0xf]
  %v3508 = vld [vmem:[%s3423 + $0x150] sm:$0xf]
  %v3509 = vld [vmem:[%s3423 + $0x154] sm:$0xf]
  %v3510 = vld [vmem:[%s3423 + $0x158] sm:$0xf]
  %v3511 = vld [vmem:[%s3423 + $0x15c] sm:$0xf]
  %v3512 = vld [vmem:[%s3423 + $0x160] sm:$0xf]
  %v3513 = vld [vmem:[%s3423 + $0x164] sm:$0xf]
  %v3514 = vld [vmem:[%s3423 + $0x168] sm:$0xf]
  %v3515 = vld [vmem:[%s3423 + $0x16c] sm:$0xf]
  %v3516 = vld [vmem:[%s3423 + $0x170] sm:$0xf]
  %v3517 = vld [vmem:[%s3423 + $0x174] sm:$0xf]
  %v3518 = vld [vmem:[%s3423 + $0x178] sm:$0xf]
  %v3519 = vld [vmem:[%s3423 + $0x17c] sm:$0xf]
  %v3574 = vunpack.c.l.b16 %v3273
  %v3575 = vunpack.c.h.b16 %v3273
  %v3576 = vunpack.c.l.b16 %v3274
  %v3577 = vunpack.c.h.b16 %v3274
  %v3578 = vunpack.c.l.b16 %v3275
  %v3579 = vunpack.c.h.b16 %v3275
  %v3580 = vunpack.c.l.b16 %v3276
  %v3581 = vunpack.c.h.b16 %v3276
  %v3582 = vunpack.c.l.b16 %v3277
  %v3583 = vunpack.c.h.b16 %v3277
  %v3584 = vunpack.c.l.b16 %v3278
  %v3585 = vunpack.c.h.b16 %v3278
  %v3586 = vunpack.c.l.b16 %v3279
  %v3587 = vunpack.c.h.b16 %v3279
  %v3588 = vunpack.c.l.b16 %v3280
  %v3589 = vunpack.c.h.b16 %v3280
  %v3590 = vunpack.c.l.b16 %v3281
  %v3591 = vunpack.c.h.b16 %v3281
  %v3592 = vunpack.c.l.b16 %v3282
  %v3593 = vunpack.c.h.b16 %v3282
  %v3594 = vunpack.c.l.b16 %v3283
  %v3595 = vunpack.c.h.b16 %v3283
  %v3596 = vunpack.c.l.b16 %v3284
  %v3597 = vunpack.c.h.b16 %v3284
  %v3598 = vunpack.c.l.b16 %v3285
  %v3599 = vunpack.c.h.b16 %v3285
  %v3600 = vunpack.c.l.b16 %v3286
  %v3601 = vunpack.c.h.b16 %v3286
  %v3602 = vunpack.c.l.b16 %v3287
  %v3603 = vunpack.c.h.b16 %v3287
  %v3604 = vunpack.c.l.b16 %v3288
  %v3605 = vunpack.c.h.b16 %v3288
  %v3606 = vunpack.c.l.b16 %v3289
  %v3607 = vunpack.c.h.b16 %v3289
  %v3608 = vunpack.c.l.b16 %v3290
  %v3609 = vunpack.c.h.b16 %v3290
  %v3610 = vunpack.c.l.b16 %v3291
  %v3611 = vunpack.c.h.b16 %v3291
  %v3612 = vunpack.c.l.b16 %v3292
  %v3613 = vunpack.c.h.b16 %v3292
  %v3614 = vunpack.c.l.b16 %v3293
  %v3615 = vunpack.c.h.b16 %v3293
  %v3616 = vunpack.c.l.b16 %v3294
  %v3617 = vunpack.c.h.b16 %v3294
  %v3618 = vunpack.c.l.b16 %v3295
  %v3619 = vunpack.c.h.b16 %v3295
  %v3620 = vunpack.c.l.b16 %v3296
  %v3621 = vunpack.c.h.b16 %v3296
  %v3622 = vunpack.c.l.b16 %v3297
  %v3623 = vunpack.c.h.b16 %v3297
  %v3624 = vunpack.c.l.b16 %v3298
  %v3625 = vunpack.c.h.b16 %v3298
  %v3626 = vunpack.c.l.b16 %v3299
  %v3627 = vunpack.c.h.b16 %v3299
  %v3628 = vunpack.c.l.b16 %v3300
  %v3629 = vunpack.c.h.b16 %v3300
  %v3630 = vunpack.c.l.b16 %v3301
  %v3631 = vunpack.c.h.b16 %v3301
  %v3632 = vunpack.c.l.b16 %v3302
  %v3633 = vunpack.c.h.b16 %v3302
  %v3634 = vunpack.c.l.b16 %v3303
  %v3635 = vunpack.c.h.b16 %v3303
  %v3636 = vunpack.c.l.b16 %v3304
  %v3637 = vunpack.c.h.b16 %v3304
  %v3638 = vunpack.c.l.b16 %v3305
  %v3639 = vunpack.c.h.b16 %v3305
  %v3640 = vunpack.c.l.b16 %v3306
  %v3641 = vunpack.c.h.b16 %v3306
  %v3642 = vunpack.c.l.b16 %v3307
  %v3643 = vunpack.c.h.b16 %v3307
  %v3644 = vunpack.c.l.b16 %v3308
  %v3645 = vunpack.c.h.b16 %v3308
  %v3646 = vunpack.c.l.b16 %v3309
  %v3647 = vunpack.c.h.b16 %v3309
  %v3648 = vunpack.c.l.b16 %v3310
  %v3649 = vunpack.c.h.b16 %v3310
  %v3650 = vunpack.c.l.b16 %v3311
  %v3651 = vunpack.c.h.b16 %v3311
  %v3652 = vunpack.c.l.b16 %v3312
  %v3653 = vunpack.c.h.b16 %v3312
  %v3654 = vunpack.c.l.b16 %v3313
  %v3655 = vunpack.c.h.b16 %v3313
  %v3656 = vunpack.c.l.b16 %v3314
  %v3657 = vunpack.c.h.b16 %v3314
  %v3658 = vunpack.c.l.b16 %v3315
  %v3659 = vunpack.c.h.b16 %v3315
  %v3660 = vunpack.c.l.b16 %v3316
  %v3661 = vunpack.c.h.b16 %v3316
  %v3662 = vunpack.c.l.b16 %v3317
  %v3663 = vunpack.c.h.b16 %v3317
  %v3664 = vunpack.c.l.b16 %v3318
  %v3665 = vunpack.c.h.b16 %v3318
  %v3666 = vunpack.c.l.b16 %v3319
  %v3667 = vunpack.c.h.b16 %v3319
  %v3668 = vunpack.c.l.b16 %v3320
  %v3669 = vunpack.c.h.b16 %v3320
  %v3670 = vunpack.c.l.b16 %v3417
  %v3671 = vunpack.c.h.b16 %v3417
  %v3672 = vunpack.c.l.b16 %v3418
  %v3673 = vunpack.c.h.b16 %v3418
  %v3674 = vunpack.c.l.b16 %v3419
  %v3675 = vunpack.c.h.b16 %v3419
  %v3676 = vunpack.c.l.b16 %v3420
  %v3677 = vunpack.c.h.b16 %v3420
  %v3678 = vunpack.c.l.b16 %v3421
  %v3679 = vunpack.c.h.b16 %v3421
  %v3680 = vunpack.c.l.b16 %v3422
  %v3681 = vunpack.c.h.b16 %v3422
  %v3682 = vpack.c.b16 %v3580, %v3574
  %v3683 = vpack.c.b16 %v3581, %v3575
  %v3684 = vpack.c.b16 %v3582, %v3576
  %v3685 = vpack.c.b16 %v3583, %v3577
  %v3686 = vpack.c.b16 %v3584, %v3578
  %v3687 = vpack.c.b16 %v3585, %v3579
  %v3688 = vpack.c.b16 %v3592, %v3586
  %v3689 = vpack.c.b16 %v3593, %v3587
  %v3690 = vpack.c.b16 %v3594, %v3588
  %v3691 = vpack.c.b16 %v3595, %v3589
  %v3692 = vpack.c.b16 %v3596, %v3590
  %v3693 = vpack.c.b16 %v3597, %v3591
  %v3694 = vpack.c.b16 %v3604, %v3598
  %v3695 = vpack.c.b16 %v3605, %v3599
  %v3696 = vpack.c.b16 %v3606, %v3600
  %v3697 = vpack.c.b16 %v3607, %v3601
  %v3698 = vpack.c.b16 %v3608, %v3602
  %v3699 = vpack.c.b16 %v3609, %v3603
  %v3700 = vpack.c.b16 %v3616, %v3610
  %v3701 = vpack.c.b16 %v3617, %v3611
  %v3702 = vpack.c.b16 %v3618, %v3612
  %v3703 = vpack.c.b16 %v3619, %v3613
  %v3704 = vpack.c.b16 %v3620, %v3614
  %v3705 = vpack.c.b16 %v3621, %v3615
  %v3706 = vpack.c.b16 %v3628, %v3622
  %v3707 = vpack.c.b16 %v3629, %v3623
  %v3708 = vpack.c.b16 %v3630, %v3624
  %v3709 = vpack.c.b16 %v3631, %v3625
  %v3710 = vpack.c.b16 %v3632, %v3626
  %v3711 = vpack.c.b16 %v3633, %v3627
  %v3712 = vpack.c.b16 %v3640, %v3634
  %v3713 = vpack.c.b16 %v3641, %v3635
  %v3714 = vpack.c.b16 %v3642, %v3636
  %v3715 = vpack.c.b16 %v3643, %v3637
  %v3716 = vpack.c.b16 %v3644, %v3638
  %v3717 = vpack.c.b16 %v3645, %v3639
  %v3718 = vpack.c.b16 %v3652, %v3646
  %v3719 = vpack.c.b16 %v3653, %v3647
  %v3720 = vpack.c.b16 %v3654, %v3648
  %v3721 = vpack.c.b16 %v3655, %v3649
  %v3722 = vpack.c.b16 %v3656, %v3650
  %v3723 = vpack.c.b16 %v3657, %v3651
  %v3724 = vpack.c.b16 %v3664, %v3658
  %v3725 = vpack.c.b16 %v3665, %v3659
  %v3726 = vpack.c.b16 %v3666, %v3660
  %v3727 = vpack.c.b16 %v3667, %v3661
  %v3728 = vpack.c.b16 %v3668, %v3662
  %v3729 = vpack.c.b16 %v3669, %v3663
  %v3730 = vpack.c.b16 %v3676, %v3670
  %v3731 = vpack.c.b16 %v3677, %v3671
  %v3732 = vpack.c.b16 %v3678, %v3672
  %v3733 = vpack.c.b16 %v3679, %v3673
  %v3734 = vpack.c.b16 %v3680, %v3674
  %v3735 = vpack.c.b16 %v3681, %v3675
  %v3886 = vunpack.c.l.b16 %v3424
  %v3887 = vunpack.c.l.b16 %v3425
  %v3888 = vunpack.c.l.b16 %v3426
  %v3889 = vunpack.c.l.b16 %v3427
  %v3890 = vunpack.c.l.b16 %v3428
  %v3891 = vunpack.c.l.b16 %v3429
  %v3892 = vunpack.c.l.b16 %v3430
  %v3893 = vunpack.c.l.b16 %v3431
  %v3894 = vunpack.c.l.b16 %v3432
  %v3895 = vunpack.c.l.b16 %v3433
  %v3896 = vunpack.c.l.b16 %v3434
  %v3897 = vunpack.c.l.b16 %v3435
  %v3898 = vunpack.c.l.b16 %v3436
  %v3899 = vunpack.c.l.b16 %v3437
  %v3900 = vunpack.c.l.b16 %v3438
  %v3901 = vunpack.c.l.b16 %v3439
  %v3902 = vunpack.c.l.b16 %v3440
  %v3903 = vunpack.c.l.b16 %v3441
  %v3904 = vunpack.c.l.b16 %v3442
  %v3905 = vunpack.c.l.b16 %v3443
  %v3906 = vunpack.c.l.b16 %v3444
  %v3907 = vunpack.c.l.b16 %v3445
  %v3908 = vunpack.c.l.b16 %v3446
  %v3909 = vunpack.c.l.b16 %v3447
  %v3910 = vunpack.c.l.b16 %v3448
  %v3911 = vunpack.c.l.b16 %v3449
  %v3912 = vunpack.c.l.b16 %v3450
  %v3913 = vunpack.c.l.b16 %v3451
  %v3914 = vunpack.c.l.b16 %v3452
  %v3915 = vunpack.c.l.b16 %v3453
  %v3916 = vunpack.c.l.b16 %v3454
  %v3917 = vunpack.c.l.b16 %v3455
  %v3918 = vunpack.c.l.b16 %v3456
  %v3919 = vunpack.c.l.b16 %v3457
  %v3920 = vunpack.c.l.b16 %v3458
  %v3921 = vunpack.c.l.b16 %v3459
  %v3922 = vunpack.c.l.b16 %v3460
  %v3923 = vunpack.c.l.b16 %v3461
  %v3924 = vunpack.c.l.b16 %v3462
  %v3925 = vunpack.c.l.b16 %v3463
  %v3926 = vunpack.c.l.b16 %v3464
  %v3927 = vunpack.c.l.b16 %v3465
  %v3928 = vunpack.c.l.b16 %v3466
  %v3929 = vunpack.c.l.b16 %v3467
  %v3930 = vunpack.c.l.b16 %v3468
  %v3931 = vunpack.c.l.b16 %v3469
  %v3932 = vunpack.c.l.b16 %v3470
  %v3933 = vunpack.c.l.b16 %v3471
  %v3934 = vunpack.c.l.b16 %v3472
  %v3935 = vunpack.c.l.b16 %v3473
  %v3936 = vunpack.c.l.b16 %v3474
  %v3937 = vunpack.c.l.b16 %v3475
  %v3938 = vunpack.c.l.b16 %v3476
  %v3939 = vunpack.c.l.b16 %v3477
  %v3940 = vunpack.c.l.b16 %v3478
  %v3941 = vunpack.c.l.b16 %v3479
  %v3942 = vunpack.c.l.b16 %v3480
  %v3943 = vunpack.c.l.b16 %v3481
  %v3944 = vunpack.c.l.b16 %v3482
  %v3945 = vunpack.c.l.b16 %v3483
  %v3946 = vunpack.c.l.b16 %v3484
  %v3947 = vunpack.c.l.b16 %v3485
  %v3948 = vunpack.c.l.b16 %v3486
  %v3949 = vunpack.c.l.b16 %v3487
  %v3950 = vunpack.c.l.b16 %v3488
  %v3951 = vunpack.c.l.b16 %v3489
  %v3952 = vunpack.c.l.b16 %v3490
  %v3953 = vunpack.c.l.b16 %v3491
  %v3954 = vunpack.c.l.b16 %v3492
  %v3955 = vunpack.c.l.b16 %v3493
  %v3956 = vunpack.c.l.b16 %v3494
  %v3957 = vunpack.c.l.b16 %v3495
  %v3958 = vunpack.c.l.b16 %v3496
  %v3959 = vunpack.c.l.b16 %v3497
  %v3960 = vunpack.c.l.b16 %v3498
  %v3961 = vunpack.c.l.b16 %v3499
  %v3962 = vunpack.c.l.b16 %v3500
  %v3963 = vunpack.c.l.b16 %v3501
  %v3964 = vunpack.c.l.b16 %v3502
  %v3965 = vunpack.c.l.b16 %v3503
  %v3966 = vunpack.c.l.b16 %v3504
  %v3967 = vunpack.c.l.b16 %v3505
  %v3968 = vunpack.c.l.b16 %v3506
  %v3969 = vunpack.c.l.b16 %v3507
  %v3970 = vunpack.c.l.b16 %v3508
  %v3971 = vunpack.c.l.b16 %v3509
  %v3972 = vunpack.c.l.b16 %v3510
  %v3973 = vunpack.c.l.b16 %v3511
  %v3974 = vunpack.c.l.b16 %v3512
  %v3975 = vunpack.c.l.b16 %v3513
  %v3976 = vunpack.c.l.b16 %v3514
  %v3977 = vunpack.c.l.b16 %v3515
  %v3978 = vunpack.c.l.b16 %v3516
  %v3979 = vunpack.c.l.b16 %v3517
  %v3980 = vunpack.c.l.b16 %v3518
  %v3981 = vunpack.c.l.b16 %v3519
  %v3982 = vpack.c.b16 %v3887, %v3886
  %v3983 = vpack.c.b16 %v3889, %v3888
  %v3984 = vpack.c.b16 %v3891, %v3890
  %v3985 = vpack.c.b16 %v3893, %v3892
  %v3986 = vpack.c.b16 %v3895, %v3894
  %v3987 = vpack.c.b16 %v3897, %v3896
  %v3988 = vpack.c.b16 %v3899, %v3898
  %v3989 = vpack.c.b16 %v3901, %v3900
  %v3990 = vpack.c.b16 %v3903, %v3902
  %v3991 = vpack.c.b16 %v3905, %v3904
  %v3992 = vpack.c.b16 %v3907, %v3906
  %v3993 = vpack.c.b16 %v3909, %v3908
  %v3994 = vpack.c.b16 %v3911, %v3910
  %v3995 = vpack.c.b16 %v3913, %v3912
  %v3996 = vpack.c.b16 %v3915, %v3914
  %v3997 = vpack.c.b16 %v3917, %v3916
  %v3998 = vpack.c.b16 %v3919, %v3918
  %v3999 = vpack.c.b16 %v3921, %v3920
  %v4000 = vpack.c.b16 %v3923, %v3922
  %v4001 = vpack.c.b16 %v3925, %v3924
  %v4002 = vpack.c.b16 %v3927, %v3926
  %v4003 = vpack.c.b16 %v3929, %v3928
  %v4004 = vpack.c.b16 %v3931, %v3930
  %v4005 = vpack.c.b16 %v3933, %v3932
  %v4006 = vpack.c.b16 %v3935, %v3934
  %v4007 = vpack.c.b16 %v3937, %v3936
  %v4008 = vpack.c.b16 %v3939, %v3938
  %v4009 = vpack.c.b16 %v3941, %v3940
  %v4010 = vpack.c.b16 %v3943, %v3942
  %v4011 = vpack.c.b16 %v3945, %v3944
  %v4012 = vpack.c.b16 %v3947, %v3946
  %v4013 = vpack.c.b16 %v3949, %v3948
  %v4014 = vpack.c.b16 %v3951, %v3950
  %v4015 = vpack.c.b16 %v3953, %v3952
  %v4016 = vpack.c.b16 %v3955, %v3954
  %v4017 = vpack.c.b16 %v3957, %v3956
  %v4018 = vpack.c.b16 %v3959, %v3958
  %v4019 = vpack.c.b16 %v3961, %v3960
  %v4020 = vpack.c.b16 %v3963, %v3962
  %v4021 = vpack.c.b16 %v3965, %v3964
  %v4022 = vpack.c.b16 %v3967, %v3966
  %v4023 = vpack.c.b16 %v3969, %v3968
  %v4024 = vpack.c.b16 %v3971, %v3970
  %v4025 = vpack.c.b16 %v3973, %v3972
  %v4026 = vpack.c.b16 %v3975, %v3974
  %v4027 = vpack.c.b16 %v3977, %v3976
  %v4028 = vpack.c.b16 %v3979, %v3978
  %v4029 = vpack.c.b16 %v3981, %v3980
  %4078 = vmatprep.subr.bf16.mxu0 0
  %4079 = vmatpush1.bf16.msra.mxu0 %v3989
  %4080 = vmatprep.subr.bf16.mxu0 0
  %4081 = vmatpush1.bf16.msra.mxu0 %v3988
  %4082 = vmatprep.subr.bf16.mxu0 0
  %4083 = vmatpush1.bf16.msra.mxu0 %v3987
  %4084 = vmatprep.subr.bf16.mxu0 0
  %4085 = vmatpush1.bf16.msra.mxu0 %v3986
  %4086 = vmatprep.subr.bf16.mxu0 0
  %4087 = vmatpush1.bf16.msra.mxu0 %v3985
  %4088 = vmatprep.subr.bf16.mxu0 0
  %4089 = vmatpush1.bf16.msra.mxu0 %v3984
  %4090 = vmatprep.subr.bf16.mxu0 0
  %4091 = vmatpush1.bf16.msra.mxu0 %v3983
  %4092 = vmatprep.subr.bf16.mxu0 0
  %4093 = vmatpush1.bf16.msra.mxu0 %v3982
  %4094 = vmatprep.subr.bf16.mxu0 0
  %4095 = vmatpush2.bf16.msra.mxu0 %v3997
  %4096 = vmatprep.subr.bf16.mxu0 0
  %4097 = vmatpush2.bf16.msra.mxu0 %v3996
  %4098 = vmatprep.subr.bf16.mxu0 0
  %4099 = vmatpush2.bf16.msra.mxu0 %v3995
  %4100 = vmatprep.subr.bf16.mxu0 0
  %4101 = vmatpush2.bf16.msra.mxu0 %v3994
  %4102 = vmatprep.subr.bf16.mxu0 0
  %4103 = vmatpush2.bf16.msra.mxu0 %v3993
  %4104 = vmatprep.subr.bf16.mxu0 0
  %4105 = vmatpush2.bf16.msra.mxu0 %v3992
  %4106 = vmatprep.subr.bf16.mxu0 0
  %4107 = vmatpush2.bf16.msra.mxu0 %v3991
  %4108 = vmatprep.subr.bf16.mxu0 0
  %4109 = vmatpush2.bf16.msra.mxu0 %v3990
  %4110 = vmatprep.mubr.bf16.mxu0 %v3683
  %4111 = vmatmul.mubr.bf16.gmra.mxu0 %v3682
  %v4112 = vpop.f32.mrf.mxu0
  %v4113 = vadd.f32 0.0, %v4112
  %v4114 = vpop.f32.mrf.mxu0
  %v4115 = vpop.f32.mrf.mxu0
  %v4116 = vadd.f32 0.0, %v4115
  %v4117 = vpop.f32.mrf.mxu0
  %4118 = vmatprep.mubr.bf16.mxu0 %v3689
  %4119 = vmatmul.mubr.bf16.gmra.mxu0 %v3688
  %v4120 = vpop.f32.mrf.mxu0
  %v4121 = vadd.f32 0.0, %v4120
  %v4122 = vpop.f32.mrf.mxu0
  %v4123 = vpop.f32.mrf.mxu0
  %v4124 = vadd.f32 0.0, %v4123
  %v4125 = vpop.f32.mrf.mxu0
  %4126 = vmatprep.mubr.bf16.mxu0 %v3695
  %4127 = vmatmul.mubr.bf16.gmra.mxu0 %v3694
  %v4128 = vpop.f32.mrf.mxu0
  %v4129 = vadd.f32 0.0, %v4128
  %v4130 = vpop.f32.mrf.mxu0
  %v4131 = vpop.f32.mrf.mxu0
  %v4132 = vadd.f32 0.0, %v4131
  %v4133 = vpop.f32.mrf.mxu0
  %4134 = vmatprep.mubr.bf16.mxu0 %v3701
  %4135 = vmatmul.mubr.bf16.gmra.mxu0 %v3700
  %v4136 = vpop.f32.mrf.mxu0
  %v4137 = vadd.f32 0.0, %v4136
  %v4138 = vpop.f32.mrf.mxu0
  %v4139 = vpop.f32.mrf.mxu0
  %v4140 = vadd.f32 0.0, %v4139
  %v4141 = vpop.f32.mrf.mxu0
  %4142 = vmatprep.mubr.bf16.mxu0 %v3707
  %4143 = vmatmul.mubr.bf16.gmra.mxu0 %v3706
  %v4144 = vpop.f32.mrf.mxu0
  %v4145 = vadd.f32 0.0, %v4144
  %v4146 = vpop.f32.mrf.mxu0
  %v4147 = vpop.f32.mrf.mxu0
  %v4148 = vadd.f32 0.0, %v4147
  %v4149 = vpop.f32.mrf.mxu0
  %4150 = vmatprep.mubr.bf16.mxu0 %v3713
  %4151 = vmatmul.mubr.bf16.gmra.mxu0 %v3712
  %v4152 = vpop.f32.mrf.mxu0
  %v4153 = vadd.f32 0.0, %v4152
  %v4154 = vpop.f32.mrf.mxu0
  %v4155 = vpop.f32.mrf.mxu0
  %v4156 = vadd.f32 0.0, %v4155
  %v4157 = vpop.f32.mrf.mxu0
  %4158 = vmatprep.mubr.bf16.mxu0 %v3719
  %4159 = vmatmul.mubr.bf16.gmra.mxu0 %v3718
  %v4160 = vpop.f32.mrf.mxu0
  %v4161 = vadd.f32 0.0, %v4160
  %v4162 = vpop.f32.mrf.mxu0
  %v4163 = vpop.f32.mrf.mxu0
  %v4164 = vadd.f32 0.0, %v4163
  %v4165 = vpop.f32.mrf.mxu0
  %4166 = vmatprep.mubr.bf16.mxu0 %v3725
  %4167 = vmatmul.mubr.bf16.gmra.mxu0 %v3724
  %v4168 = vpop.f32.mrf.mxu0
  %v4169 = vadd.f32 0.0, %v4168
  %v4170 = vpop.f32.mrf.mxu0
  %v4171 = vpop.f32.mrf.mxu0
  %v4172 = vadd.f32 0.0, %v4171
  %v4173 = vpop.f32.mrf.mxu0
  %4174 = vmatprep.mubr.bf16.mxu0 %v3731
  %4175 = vmatmul.mubr.bf16.gmra.mxu0 %v3730
  %v4176 = vpop.f32.mrf.mxu0
  %v4177 = vadd.f32 0.0, %v4176
  %v4178 = vpop.f32.mrf.mxu0
  %v4179 = vpop.f32.mrf.mxu0
  %v4180 = vadd.f32 0.0, %v4179
  %v4181 = vpop.f32.mrf.mxu0
  %4182 = vdwg.mxu0
  %4183 = vmatprep.subr.bf16.mxu0 0
  %4184 = vmatpush1.bf16.msra.mxu0 %v4005
  %4185 = vmatprep.subr.bf16.mxu0 0
  %4186 = vmatpush1.bf16.msra.mxu0 %v4004
  %4187 = vmatprep.subr.bf16.mxu0 0
  %4188 = vmatpush1.bf16.msra.mxu0 %v4003
  %4189 = vmatprep.subr.bf16.mxu0 0
  %4190 = vmatpush1.bf16.msra.mxu0 %v4002
  %4191 = vmatprep.subr.bf16.mxu0 0
  %4192 = vmatpush1.bf16.msra.mxu0 %v4001
  %4193 = vmatprep.subr.bf16.mxu0 0
  %4194 = vmatpush1.bf16.msra.mxu0 %v4000
  %4195 = vmatprep.subr.bf16.mxu0 0
  %4196 = vmatpush1.bf16.msra.mxu0 %v3999
  %4197 = vmatprep.subr.bf16.mxu0 0
  %4198 = vmatpush1.bf16.msra.mxu0 %v3998
  %4199 = vmatprep.subr.bf16.mxu0 0
  %4200 = vmatpush2.bf16.msra.mxu0 %v4013
  %4201 = vmatprep.subr.bf16.mxu0 0
  %4202 = vmatpush2.bf16.msra.mxu0 %v4012
  %4203 = vmatprep.subr.bf16.mxu0 0
  %4204 = vmatpush2.bf16.msra.mxu0 %v4011
  %4205 = vmatprep.subr.bf16.mxu0 0
  %4206 = vmatpush2.bf16.msra.mxu0 %v4010
  %4207 = vmatprep.subr.bf16.mxu0 0
  %4208 = vmatpush2.bf16.msra.mxu0 %v4009
  %4209 = vmatprep.subr.bf16.mxu0 0
  %4210 = vmatpush2.bf16.msra.mxu0 %v4008
  %4211 = vmatprep.subr.bf16.mxu0 0
  %4212 = vmatpush2.bf16.msra.mxu0 %v4007
  %4213 = vmatprep.subr.bf16.mxu0 0
  %4214 = vmatpush2.bf16.msra.mxu0 %v4006
  %4215 = vmatprep.mubr.bf16.mxu0 %v3685
  %4216 = vmatmul.mubr.bf16.gmra.mxu0 %v3684
  %v4217 = vpop.f32.mrf.mxu0
  %v4218 = vadd.f32 %v4113, %v4217
  %v4219 = vpop.f32.mrf.mxu0
  %v4220 = vpop.f32.mrf.mxu0
  %v4221 = vadd.f32 %v4116, %v4220
  %v4222 = vpop.f32.mrf.mxu0
  %4223 = vmatprep.mubr.bf16.mxu0 %v3691
  %4224 = vmatmul.mubr.bf16.gmra.mxu0 %v3690
  %v4225 = vpop.f32.mrf.mxu0
  %v4226 = vadd.f32 %v4121, %v4225
  %v4227 = vpop.f32.mrf.mxu0
  %v4228 = vpop.f32.mrf.mxu0
  %v4229 = vadd.f32 %v4124, %v4228
  %v4230 = vpop.f32.mrf.mxu0
  %4231 = vmatprep.mubr.bf16.mxu0 %v3697
  %4232 = vmatmul.mubr.bf16.gmra.mxu0 %v3696
  %v4233 = vpop.f32.mrf.mxu0
  %v4234 = vadd.f32 %v4129, %v4233
  %v4235 = vpop.f32.mrf.mxu0
  %v4236 = vpop.f32.mrf.mxu0
  %v4237 = vadd.f32 %v4132, %v4236
  %v4238 = vpop.f32.mrf.mxu0
  %4239 = vmatprep.mubr.bf16.mxu0 %v3703
  %4240 = vmatmul.mubr.bf16.gmra.mxu0 %v3702
  %v4241 = vpop.f32.mrf.mxu0
  %v4242 = vadd.f32 %v4137, %v4241
  %v4243 = vpop.f32.mrf.mxu0
  %v4244 = vpop.f32.mrf.mxu0
  %v4245 = vadd.f32 %v4140, %v4244
  %v4246 = vpop.f32.mrf.mxu0
  %4247 = vmatprep.mubr.bf16.mxu0 %v3709
  %4248 = vmatmul.mubr.bf16.gmra.mxu0 %v3708
  %v4249 = vpop.f32.mrf.mxu0
  %v4250 = vadd.f32 %v4145, %v4249
  %v4251 = vpop.f32.mrf.mxu0
  %v4252 = vpop.f32.mrf.mxu0
  %v4253 = vadd.f32 %v4148, %v4252
  %v4254 = vpop.f32.mrf.mxu0
  %4255 = vmatprep.mubr.bf16.mxu0 %v3715
  %4256 = vmatmul.mubr.bf16.gmra.mxu0 %v3714
  %v4257 = vpop.f32.mrf.mxu0
  %v4258 = vadd.f32 %v4153, %v4257
  %v4259 = vpop.f32.mrf.mxu0
  %v4260 = vpop.f32.mrf.mxu0
  %v4261 = vadd.f32 %v4156, %v4260
  %v4262 = vpop.f32.mrf.mxu0
  %4263 = vmatprep.mubr.bf16.mxu0 %v3721
  %4264 = vmatmul.mubr.bf16.gmra.mxu0 %v3720
  %v4265 = vpop.f32.mrf.mxu0
  %v4266 = vadd.f32 %v4161, %v4265
  %v4267 = vpop.f32.mrf.mxu0
  %v4268 = vpop.f32.mrf.mxu0
  %v4269 = vadd.f32 %v4164, %v4268
  %v4270 = vpop.f32.mrf.mxu0
  %4271 = vmatprep.mubr.bf16.mxu0 %v3727
  %4272 = vmatmul.mubr.bf16.gmra.mxu0 %v3726
  %v4273 = vpop.f32.mrf.mxu0
  %v4274 = vadd.f32 %v4169, %v4273
  %v4275 = vpop.f32.mrf.mxu0
  %v4276 = vpop.f32.mrf.mxu0
  %v4277 = vadd.f32 %v4172, %v4276
  %v4278 = vpop.f32.mrf.mxu0
  %4279 = vmatprep.mubr.bf16.mxu0 %v3733
  %4280 = vmatmul.mubr.bf16.gmra.mxu0 %v3732
  %v4281 = vpop.f32.mrf.mxu0
  %v4282 = vadd.f32 %v4177, %v4281
  %v4283 = vpop.f32.mrf.mxu0
  %v4284 = vpop.f32.mrf.mxu0
  %v4285 = vadd.f32 %v4180, %v4284
  %v4286 = vpop.f32.mrf.mxu0
  %4287 = vdwg.mxu0
  %4288 = vmatprep.subr.bf16.mxu0 0
  %4289 = vmatpush1.bf16.msra.mxu0 %v4021
  %4290 = vmatprep.subr.bf16.mxu0 0
  %4291 = vmatpush1.bf16.msra.mxu0 %v4020
  %4292 = vmatprep.subr.bf16.mxu0 0
  %4293 = vmatpush1.bf16.msra.mxu0 %v4019
  %4294 = vmatprep.subr.bf16.mxu0 0
  %4295 = vmatpush1.bf16.msra.mxu0 %v4018
  %4296 = vmatprep.subr.bf16.mxu0 0
  %4297 = vmatpush1.bf16.msra.mxu0 %v4017
  %4298 = vmatprep.subr.bf16.mxu0 0
  %4299 = vmatpush1.bf16.msra.mxu0 %v4016
  %4300 = vmatprep.subr.bf16.mxu0 0
  %4301 = vmatpush1.bf16.msra.mxu0 %v4015
  %4302 = vmatprep.subr.bf16.mxu0 0
  %4303 = vmatpush1.bf16.msra.mxu0 %v4014
  %4304 = vmatprep.subr.bf16.mxu0 0
  %4305 = vmatpush2.bf16.msra.mxu0 %v4029
  %4306 = vmatprep.subr.bf16.mxu0 0
  %4307 = vmatpush2.bf16.msra.mxu0 %v4028
  %4308 = vmatprep.subr.bf16.mxu0 0
  %4309 = vmatpush2.bf16.msra.mxu0 %v4027
  %4310 = vmatprep.subr.bf16.mxu0 0
  %4311 = vmatpush2.bf16.msra.mxu0 %v4026
  %4312 = vmatprep.subr.bf16.mxu0 0
  %4313 = vmatpush2.bf16.msra.mxu0 %v4025
  %4314 = vmatprep.subr.bf16.mxu0 0
  %4315 = vmatpush2.bf16.msra.mxu0 %v4024
  %4316 = vmatprep.subr.bf16.mxu0 0
  %4317 = vmatpush2.bf16.msra.mxu0 %v4023
  %4318 = vmatprep.subr.bf16.mxu0 0
  %4319 = vmatpush2.bf16.msra.mxu0 %v4022
  %4320 = vmatprep.mubr.bf16.mxu0 %v3687
  %4321 = vmatmul.mubr.bf16.gmra.mxu0 %v3686
  %v4322 = vpop.f32.mrf.mxu0
  %v4323 = vadd.f32 %v4218, %v4322
  %v4324 = vpop.f32.mrf.mxu0
  %v4325 = vpop.f32.mrf.mxu0
  %v4326 = vadd.f32 %v4221, %v4325
  %v4327 = vpop.f32.mrf.mxu0
  %4328 = vmatprep.mubr.bf16.mxu0 %v3693
  %4329 = vmatmul.mubr.bf16.gmra.mxu0 %v3692
  %v4330 = vpop.f32.mrf.mxu0
  %v4331 = vadd.f32 %v4226, %v4330
  %v4332 = vpop.f32.mrf.mxu0
  %v4333 = vpop.f32.mrf.mxu0
  %v4334 = vadd.f32 %v4229, %v4333
  %v4335 = vpop.f32.mrf.mxu0
  %4336 = vmatprep.mubr.bf16.mxu0 %v3699
  %4337 = vmatmul.mubr.bf16.gmra.mxu0 %v3698
  %v4338 = vpop.f32.mrf.mxu0
  %v4339 = vadd.f32 %v4234, %v4338
  %v4340 = vpop.f32.mrf.mxu0
  %v4341 = vpop.f32.mrf.mxu0
  %v4342 = vadd.f32 %v4237, %v4341
  %v4343 = vpop.f32.mrf.mxu0
  %4344 = vmatprep.mubr.bf16.mxu0 %v3705
  %4345 = vmatmul.mubr.bf16.gmra.mxu0 %v3704
  %v4346 = vpop.f32.mrf.mxu0
  %v4347 = vadd.f32 %v4242, %v4346
  %v4348 = vpop.f32.mrf.mxu0
  %v4349 = vpop.f32.mrf.mxu0
  %v4350 = vadd.f32 %v4245, %v4349
  %v4351 = vpop.f32.mrf.mxu0
  %4352 = vmatprep.mubr.bf16.mxu0 %v3711
  %4353 = vmatmul.mubr.bf16.gmra.mxu0 %v3710
  %v4354 = vpop.f32.mrf.mxu0
  %v4355 = vadd.f32 %v4250, %v4354
  %v4356 = vpop.f32.mrf.mxu0
  %v4357 = vpop.f32.mrf.mxu0
  %v4358 = vadd.f32 %v4253, %v4357
  %v4359 = vpop.f32.mrf.mxu0
  %4360 = vmatprep.mubr.bf16.mxu0 %v3717
  %4361 = vmatmul.mubr.bf16.gmra.mxu0 %v3716
  %v4362 = vpop.f32.mrf.mxu0
  %v4363 = vadd.f32 %v4258, %v4362
  %v4364 = vpop.f32.mrf.mxu0
  %v4365 = vpop.f32.mrf.mxu0
  %v4366 = vadd.f32 %v4261, %v4365
  %v4367 = vpop.f32.mrf.mxu0
  %4368 = vmatprep.mubr.bf16.mxu0 %v3723
  %4369 = vmatmul.mubr.bf16.gmra.mxu0 %v3722
  %v4370 = vpop.f32.mrf.mxu0
  %v4371 = vadd.f32 %v4266, %v4370
  %v4372 = vpop.f32.mrf.mxu0
  %v4373 = vpop.f32.mrf.mxu0
  %v4374 = vadd.f32 %v4269, %v4373
  %v4375 = vpop.f32.mrf.mxu0
  %4376 = vmatprep.mubr.bf16.mxu0 %v3729
  %4377 = vmatmul.mubr.bf16.gmra.mxu0 %v3728
  %v4378 = vpop.f32.mrf.mxu0
  %v4379 = vadd.f32 %v4274, %v4378
  %v4380 = vpop.f32.mrf.mxu0
  %v4381 = vpop.f32.mrf.mxu0
  %v4382 = vadd.f32 %v4277, %v4381
  %v4383 = vpop.f32.mrf.mxu0
  %4384 = vmatprep.mubr.bf16.mxu0 %v3735
  %4385 = vmatmul.mubr.bf16.gmra.mxu0 %v3734
  %v4386 = vpop.f32.mrf.mxu0
  %v4387 = vadd.f32 %v4282, %v4386
  %v4388 = vpop.f32.mrf.mxu0
  %v4389 = vpop.f32.mrf.mxu0
  %v4390 = vadd.f32 %v4285, %v4389
  %v4391 = vpop.f32.mrf.mxu0
  %4392 = vdwg.mxu0
  %v4399 = vunpack.c.l.b16 %v3267
  %v4400 = vunpack.c.h.b16 %v3267
  %v4401 = vunpack.c.l.b16 %v3268
  %v4402 = vunpack.c.h.b16 %v3268
  %v4403 = vunpack.c.l.b16 %v3269
  %v4404 = vunpack.c.h.b16 %v3269
  %v4405 = vunpack.c.l.b16 %v3270
  %v4406 = vunpack.c.h.b16 %v3270
  %v4407 = vunpack.c.l.b16 %v3271
  %v4408 = vunpack.c.h.b16 %v3271
  %v4409 = vunpack.c.l.b16 %v3272
  %v4410 = vunpack.c.h.b16 %v3272
  %v4411 = vpack.c.b16 %v4405, %v4399
  %v4412 = vpack.c.b16 %v4406, %v4400
  %v4413 = vpack.c.b16 %v4407, %v4401
  %v4414 = vpack.c.b16 %v4408, %v4402
  %v4415 = vpack.c.b16 %v4409, %v4403
  %v4416 = vpack.c.b16 %v4410, %v4404
  %v4519 = vunpack.c.l.b16 %v3321
  %v4520 = vunpack.c.l.b16 %v3322
  %v4521 = vunpack.c.l.b16 %v3323
  %v4522 = vunpack.c.l.b16 %v3324
  %v4523 = vunpack.c.l.b16 %v3325
  %v4524 = vunpack.c.l.b16 %v3326
  %v4525 = vunpack.c.l.b16 %v3327
  %v4526 = vunpack.c.l.b16 %v3328
  %v4527 = vunpack.c.l.b16 %v3329
  %v4528 = vunpack.c.l.b16 %v3330
  %v4529 = vunpack.c.l.b16 %v3331
  %v4530 = vunpack.c.l.b16 %v3332
  %v4531 = vunpack.c.l.b16 %v3333
  %v4532 = vunpack.c.l.b16 %v3334
  %v4533 = vunpack.c.l.b16 %v3335
  %v4534 = vunpack.c.l.b16 %v3336
  %v4535 = vunpack.c.l.b16 %v3337
  %v4536 = vunpack.c.l.b16 %v3338
  %v4537 = vunpack.c.l.b16 %v3339
  %v4538 = vunpack.c.l.b16 %v3340
  %v4539 = vunpack.c.l.b16 %v3341
  %v4540 = vunpack.c.l.b16 %v3342
  %v4541 = vunpack.c.l.b16 %v3343
  %v4542 = vunpack.c.l.b16 %v3344
  %v4543 = vunpack.c.l.b16 %v3345
  %v4544 = vunpack.c.l.b16 %v3346
  %v4545 = vunpack.c.l.b16 %v3347
  %v4546 = vunpack.c.l.b16 %v3348
  %v4547 = vunpack.c.l.b16 %v3349
  %v4548 = vunpack.c.l.b16 %v3350
  %v4549 = vunpack.c.l.b16 %v3351
  %v4550 = vunpack.c.l.b16 %v3352
  %v4551 = vunpack.c.l.b16 %v3353
  %v4552 = vunpack.c.l.b16 %v3354
  %v4553 = vunpack.c.l.b16 %v3355
  %v4554 = vunpack.c.l.b16 %v3356
  %v4555 = vunpack.c.l.b16 %v3357
  %v4556 = vunpack.c.l.b16 %v3358
  %v4557 = vunpack.c.l.b16 %v3359
  %v4558 = vunpack.c.l.b16 %v3360
  %v4559 = vunpack.c.l.b16 %v3361
  %v4560 = vunpack.c.l.b16 %v3362
  %v4561 = vunpack.c.l.b16 %v3363
  %v4562 = vunpack.c.l.b16 %v3364
  %v4563 = vunpack.c.l.b16 %v3365
  %v4564 = vunpack.c.l.b16 %v3366
  %v4565 = vunpack.c.l.b16 %v3367
  %v4566 = vunpack.c.l.b16 %v3368
  %v4567 = vunpack.c.l.b16 %v3369
  %v4568 = vunpack.c.l.b16 %v3370
  %v4569 = vunpack.c.l.b16 %v3371
  %v4570 = vunpack.c.l.b16 %v3372
  %v4571 = vunpack.c.l.b16 %v3373
  %v4572 = vunpack.c.l.b16 %v3374
  %v4573 = vunpack.c.l.b16 %v3375
  %v4574 = vunpack.c.l.b16 %v3376
  %v4575 = vunpack.c.l.b16 %v3377
  %v4576 = vunpack.c.l.b16 %v3378
  %v4577 = vunpack.c.l.b16 %v3379
  %v4578 = vunpack.c.l.b16 %v3380
  %v4579 = vunpack.c.l.b16 %v3381
  %v4580 = vunpack.c.l.b16 %v3382
  %v4581 = vunpack.c.l.b16 %v3383
  %v4582 = vunpack.c.l.b16 %v3384
  %v4583 = vunpack.c.l.b16 %v3385
  %v4584 = vunpack.c.l.b16 %v3386
  %v4585 = vunpack.c.l.b16 %v3387
  %v4586 = vunpack.c.l.b16 %v3388
  %v4587 = vunpack.c.l.b16 %v3389
  %v4588 = vunpack.c.l.b16 %v3390
  %v4589 = vunpack.c.l.b16 %v3391
  %v4590 = vunpack.c.l.b16 %v3392
  %v4591 = vunpack.c.l.b16 %v3393
  %v4592 = vunpack.c.l.b16 %v3394
  %v4593 = vunpack.c.l.b16 %v3395
  %v4594 = vunpack.c.l.b16 %v3396
  %v4595 = vunpack.c.l.b16 %v3397
  %v4596 = vunpack.c.l.b16 %v3398
  %v4597 = vunpack.c.l.b16 %v3399
  %v4598 = vunpack.c.l.b16 %v3400
  %v4599 = vunpack.c.l.b16 %v3401
  %v4600 = vunpack.c.l.b16 %v3402
  %v4601 = vunpack.c.l.b16 %v3403
  %v4602 = vunpack.c.l.b16 %v3404
  %v4603 = vunpack.c.l.b16 %v3405
  %v4604 = vunpack.c.l.b16 %v3406
  %v4605 = vunpack.c.l.b16 %v3407
  %v4606 = vunpack.c.l.b16 %v3408
  %v4607 = vunpack.c.l.b16 %v3409
  %v4608 = vunpack.c.l.b16 %v3410
  %v4609 = vunpack.c.l.b16 %v3411
  %v4610 = vunpack.c.l.b16 %v3412
  %v4611 = vunpack.c.l.b16 %v3413
  %v4612 = vunpack.c.l.b16 %v3414
  %v4613 = vunpack.c.l.b16 %v3415
  %v4614 = vunpack.c.l.b16 %v3416
  %v4615 = vpack.c.b16 %v4520, %v4519
  %v4616 = vpack.c.b16 %v4522, %v4521
  %v4617 = vpack.c.b16 %v4524, %v4523
  %v4618 = vpack.c.b16 %v4526, %v4525
  %v4619 = vpack.c.b16 %v4528, %v4527
  %v4620 = vpack.c.b16 %v4530, %v4529
  %v4621 = vpack.c.b16 %v4532, %v4531
  %v4622 = vpack.c.b16 %v4534, %v4533
  %v4623 = vpack.c.b16 %v4536, %v4535
  %v4624 = vpack.c.b16 %v4538, %v4537
  %v4625 = vpack.c.b16 %v4540, %v4539
  %v4626 = vpack.c.b16 %v4542, %v4541
  %v4627 = vpack.c.b16 %v4544, %v4543
  %v4628 = vpack.c.b16 %v4546, %v4545
  %v4629 = vpack.c.b16 %v4548, %v4547
  %v4630 = vpack.c.b16 %v4550, %v4549
  %v4631 = vpack.c.b16 %v4552, %v4551
  %v4632 = vpack.c.b16 %v4554, %v4553
  %v4633 = vpack.c.b16 %v4556, %v4555
  %v4634 = vpack.c.b16 %v4558, %v4557
  %v4635 = vpack.c.b16 %v4560, %v4559
  %v4636 = vpack.c.b16 %v4562, %v4561
  %v4637 = vpack.c.b16 %v4564, %v4563
  %v4638 = vpack.c.b16 %v4566, %v4565
  %v4639 = vpack.c.b16 %v4568, %v4567
  %v4640 = vpack.c.b16 %v4570, %v4569
  %v4641 = vpack.c.b16 %v4572, %v4571
  %v4642 = vpack.c.b16 %v4574, %v4573
  %v4643 = vpack.c.b16 %v4576, %v4575
  %v4644 = vpack.c.b16 %v4578, %v4577
  %v4645 = vpack.c.b16 %v4580, %v4579
  %v4646 = vpack.c.b16 %v4582, %v4581
  %v4647 = vpack.c.b16 %v4584, %v4583
  %v4648 = vpack.c.b16 %v4586, %v4585
  %v4649 = vpack.c.b16 %v4588, %v4587
  %v4650 = vpack.c.b16 %v4590, %v4589
  %v4651 = vpack.c.b16 %v4592, %v4591
  %v4652 = vpack.c.b16 %v4594, %v4593
  %v4653 = vpack.c.b16 %v4596, %v4595
  %v4654 = vpack.c.b16 %v4598, %v4597
  %v4655 = vpack.c.b16 %v4600, %v4599
  %v4656 = vpack.c.b16 %v4602, %v4601
  %v4657 = vpack.c.b16 %v4604, %v4603
  %v4658 = vpack.c.b16 %v4606, %v4605
  %v4659 = vpack.c.b16 %v4608, %v4607
  %v4660 = vpack.c.b16 %v4610, %v4609
  %v4661 = vpack.c.b16 %v4612, %v4611
  %v4662 = vpack.c.b16 %v4614, %v4613
  %4711 = vmatprep.subr.bf16.mxu0 0
  %4712 = vmatpush1.bf16.msra.mxu0 %v4622
  %4713 = vmatprep.subr.bf16.mxu0 0
  %4714 = vmatpush1.bf16.msra.mxu0 %v4621
  %4715 = vmatprep.subr.bf16.mxu0 0
  %4716 = vmatpush1.bf16.msra.mxu0 %v4620
  %4717 = vmatprep.subr.bf16.mxu0 0
  %4718 = vmatpush1.bf16.msra.mxu0 %v4619
  %4719 = vmatprep.subr.bf16.mxu0 0
  %4720 = vmatpush1.bf16.msra.mxu0 %v4618
  %4721 = vmatprep.subr.bf16.mxu0 0
  %4722 = vmatpush1.bf16.msra.mxu0 %v4617
  %4723 = vmatprep.subr.bf16.mxu0 0
  %4724 = vmatpush1.bf16.msra.mxu0 %v4616
  %4725 = vmatprep.subr.bf16.mxu0 0
  %4726 = vmatpush1.bf16.msra.mxu0 %v4615
  %4727 = vmatprep.subr.bf16.mxu0 0
  %4728 = vmatpush2.bf16.msra.mxu0 %v4630
  %4729 = vmatprep.subr.bf16.mxu0 0
  %4730 = vmatpush2.bf16.msra.mxu0 %v4629
  %4731 = vmatprep.subr.bf16.mxu0 0
  %4732 = vmatpush2.bf16.msra.mxu0 %v4628
  %4733 = vmatprep.subr.bf16.mxu0 0
  %4734 = vmatpush2.bf16.msra.mxu0 %v4627
  %4735 = vmatprep.subr.bf16.mxu0 0
  %4736 = vmatpush2.bf16.msra.mxu0 %v4626
  %4737 = vmatprep.subr.bf16.mxu0 0
  %4738 = vmatpush2.bf16.msra.mxu0 %v4625
  %4739 = vmatprep.subr.bf16.mxu0 0
  %4740 = vmatpush2.bf16.msra.mxu0 %v4624
  %4741 = vmatprep.subr.bf16.mxu0 0
  %4742 = vmatpush2.bf16.msra.mxu0 %v4623
  %4743 = vmatprep.mubr.bf16.mxu0 %v4412
  %4744 = vmatmul.mubr.bf16.gmra.mxu0 %v4411
  %v4745 = vpop.f32.mrf.mxu0
  %v4746 = vadd.f32 %v4323, %v4745
  %v4747 = vpop.f32.mrf.mxu0
  %v4748 = vpop.f32.mrf.mxu0
  %v4749 = vadd.f32 %v4326, %v4748
  %v4750 = vpop.f32.mrf.mxu0
  %4751 = vmatprep.mubr.bf16.mxu0 %v3683
  %4752 = vmatmul.mubr.bf16.gmra.mxu0 %v3682
  %v4753 = vpop.f32.mrf.mxu0
  %v4754 = vadd.f32 %v4331, %v4753
  %v4755 = vpop.f32.mrf.mxu0
  %v4756 = vpop.f32.mrf.mxu0
  %v4757 = vadd.f32 %v4334, %v4756
  %v4758 = vpop.f32.mrf.mxu0
  %4759 = vmatprep.mubr.bf16.mxu0 %v3689
  %4760 = vmatmul.mubr.bf16.gmra.mxu0 %v3688
  %v4761 = vpop.f32.mrf.mxu0
  %v4762 = vadd.f32 %v4339, %v4761
  %v4763 = vpop.f32.mrf.mxu0
  %v4764 = vpop.f32.mrf.mxu0
  %v4765 = vadd.f32 %v4342, %v4764
  %v4766 = vpop.f32.mrf.mxu0
  %4767 = vmatprep.mubr.bf16.mxu0 %v3695
  %4768 = vmatmul.mubr.bf16.gmra.mxu0 %v3694
  %v4769 = vpop.f32.mrf.mxu0
  %v4770 = vadd.f32 %v4347, %v4769
  %v4771 = vpop.f32.mrf.mxu0
  %v4772 = vpop.f32.mrf.mxu0
  %v4773 = vadd.f32 %v4350, %v4772
  %v4774 = vpop.f32.mrf.mxu0
  %4775 = vmatprep.mubr.bf16.mxu0 %v3701
  %4776 = vmatmul.mubr.bf16.gmra.mxu0 %v3700
  %v4777 = vpop.f32.mrf.mxu0
  %v4778 = vadd.f32 %v4355, %v4777
  %v4779 = vpop.f32.mrf.mxu0
  %v4780 = vpop.f32.mrf.mxu0
  %v4781 = vadd.f32 %v4358, %v4780
  %v4782 = vpop.f32.mrf.mxu0
  %4783 = vmatprep.mubr.bf16.mxu0 %v3707
  %4784 = vmatmul.mubr.bf16.gmra.mxu0 %v3706
  %v4785 = vpop.f32.mrf.mxu0
  %v4786 = vadd.f32 %v4363, %v4785
  %v4787 = vpop.f32.mrf.mxu0
  %v4788 = vpop.f32.mrf.mxu0
  %v4789 = vadd.f32 %v4366, %v4788
  %v4790 = vpop.f32.mrf.mxu0
  %4791 = vmatprep.mubr.bf16.mxu0 %v3713
  %4792 = vmatmul.mubr.bf16.gmra.mxu0 %v3712
  %v4793 = vpop.f32.mrf.mxu0
  %v4794 = vadd.f32 %v4371, %v4793
  %v4795 = vpop.f32.mrf.mxu0
  %v4796 = vpop.f32.mrf.mxu0
  %v4797 = vadd.f32 %v4374, %v4796
  %v4798 = vpop.f32.mrf.mxu0
  %4799 = vmatprep.mubr.bf16.mxu0 %v3719
  %4800 = vmatmul.mubr.bf16.gmra.mxu0 %v3718
  %v4801 = vpop.f32.mrf.mxu0
  %v4802 = vadd.f32 %v4379, %v4801
  %v4803 = vpop.f32.mrf.mxu0
  %v4804 = vpop.f32.mrf.mxu0
  %v4805 = vadd.f32 %v4382, %v4804
  %v4806 = vpop.f32.mrf.mxu0
  %4807 = vmatprep.mubr.bf16.mxu0 %v3725
  %4808 = vmatmul.mubr.bf16.gmra.mxu0 %v3724
  %v4809 = vpop.f32.mrf.mxu0
  %v4810 = vadd.f32 %v4387, %v4809
  %v4811 = vpop.f32.mrf.mxu0
  %v4812 = vpop.f32.mrf.mxu0
  %v4813 = vadd.f32 %v4390, %v4812
  %v4814 = vpop.f32.mrf.mxu0
  %4815 = vdwg.mxu0
  %4816 = vmatprep.subr.bf16.mxu0 0
  %4817 = vmatpush1.bf16.msra.mxu0 %v4638
  %4818 = vmatprep.subr.bf16.mxu0 0
  %4819 = vmatpush1.bf16.msra.mxu0 %v4637
  %4820 = vmatprep.subr.bf16.mxu0 0
  %4821 = vmatpush1.bf16.msra.mxu0 %v4636
  %4822 = vmatprep.subr.bf16.mxu0 0
  %4823 = vmatpush1.bf16.msra.mxu0 %v4635
  %4824 = vmatprep.subr.bf16.mxu0 0
  %4825 = vmatpush1.bf16.msra.mxu0 %v4634
  %4826 = vmatprep.subr.bf16.mxu0 0
  %4827 = vmatpush1.bf16.msra.mxu0 %v4633
  %4828 = vmatprep.subr.bf16.mxu0 0
  %4829 = vmatpush1.bf16.msra.mxu0 %v4632
  %4830 = vmatprep.subr.bf16.mxu0 0
  %4831 = vmatpush1.bf16.msra.mxu0 %v4631
  %4832 = vmatprep.subr.bf16.mxu0 0
  %4833 = vmatpush2.bf16.msra.mxu0 %v4646
  %4834 = vmatprep.subr.bf16.mxu0 0
  %4835 = vmatpush2.bf16.msra.mxu0 %v4645
  %4836 = vmatprep.subr.bf16.mxu0 0
  %4837 = vmatpush2.bf16.msra.mxu0 %v4644
  %4838 = vmatprep.subr.bf16.mxu0 0
  %4839 = vmatpush2.bf16.msra.mxu0 %v4643
  %4840 = vmatprep.subr.bf16.mxu0 0
  %4841 = vmatpush2.bf16.msra.mxu0 %v4642
  %4842 = vmatprep.subr.bf16.mxu0 0
  %4843 = vmatpush2.bf16.msra.mxu0 %v4641
  %4844 = vmatprep.subr.bf16.mxu0 0
  %4845 = vmatpush2.bf16.msra.mxu0 %v4640
  %4846 = vmatprep.subr.bf16.mxu0 0
  %4847 = vmatpush2.bf16.msra.mxu0 %v4639
  %4848 = vmatprep.mubr.bf16.mxu0 %v4414
  %4849 = vmatmul.mubr.bf16.gmra.mxu0 %v4413
  %v4850 = vpop.f32.mrf.mxu0
  %v4851 = vadd.f32 %v4746, %v4850
  %v4852 = vpop.f32.mrf.mxu0
  %v4853 = vpop.f32.mrf.mxu0
  %v4854 = vadd.f32 %v4749, %v4853
  %v4855 = vpop.f32.mrf.mxu0
  %4856 = vmatprep.mubr.bf16.mxu0 %v3685
  %4857 = vmatmul.mubr.bf16.gmra.mxu0 %v3684
  %v4858 = vpop.f32.mrf.mxu0
  %v4859 = vadd.f32 %v4754, %v4858
  %v4860 = vpop.f32.mrf.mxu0
  %v4861 = vpop.f32.mrf.mxu0
  %v4862 = vadd.f32 %v4757, %v4861
  %v4863 = vpop.f32.mrf.mxu0
  %4864 = vmatprep.mubr.bf16.mxu0 %v3691
  %4865 = vmatmul.mubr.bf16.gmra.mxu0 %v3690
  %v4866 = vpop.f32.mrf.mxu0
  %v4867 = vadd.f32 %v4762, %v4866
  %v4868 = vpop.f32.mrf.mxu0
  %v4869 = vpop.f32.mrf.mxu0
  %v4870 = vadd.f32 %v4765, %v4869
  %v4871 = vpop.f32.mrf.mxu0
  %4872 = vmatprep.mubr.bf16.mxu0 %v3697
  %4873 = vmatmul.mubr.bf16.gmra.mxu0 %v3696
  %v4874 = vpop.f32.mrf.mxu0
  %v4875 = vadd.f32 %v4770, %v4874
  %v4876 = vpop.f32.mrf.mxu0
  %v4877 = vpop.f32.mrf.mxu0
  %v4878 = vadd.f32 %v4773, %v4877
  %v4879 = vpop.f32.mrf.mxu0
  %4880 = vmatprep.mubr.bf16.mxu0 %v3703
  %4881 = vmatmul.mubr.bf16.gmra.mxu0 %v3702
  %v4882 = vpop.f32.mrf.mxu0
  %v4883 = vadd.f32 %v4778, %v4882
  %v4884 = vpop.f32.mrf.mxu0
  %v4885 = vpop.f32.mrf.mxu0
  %v4886 = vadd.f32 %v4781, %v4885
  %v4887 = vpop.f32.mrf.mxu0
  %4888 = vmatprep.mubr.bf16.mxu0 %v3709
  %4889 = vmatmul.mubr.bf16.gmra.mxu0 %v3708
  %v4890 = vpop.f32.mrf.mxu0
  %v4891 = vadd.f32 %v4786, %v4890
  %v4892 = vpop.f32.mrf.mxu0
  %v4893 = vpop.f32.mrf.mxu0
  %v4894 = vadd.f32 %v4789, %v4893
  %v4895 = vpop.f32.mrf.mxu0
  %4896 = vmatprep.mubr.bf16.mxu0 %v3715
  %4897 = vmatmul.mubr.bf16.gmra.mxu0 %v3714
  %v4898 = vpop.f32.mrf.mxu0
  %v4899 = vadd.f32 %v4794, %v4898
  %v4900 = vpop.f32.mrf.mxu0
  %v4901 = vpop.f32.mrf.mxu0
  %v4902 = vadd.f32 %v4797, %v4901
  %v4903 = vpop.f32.mrf.mxu0
  %4904 = vmatprep.mubr.bf16.mxu0 %v3721
  %4905 = vmatmul.mubr.bf16.gmra.mxu0 %v3720
  %v4906 = vpop.f32.mrf.mxu0
  %v4907 = vadd.f32 %v4802, %v4906
  %v4908 = vpop.f32.mrf.mxu0
  %v4909 = vpop.f32.mrf.mxu0
  %v4910 = vadd.f32 %v4805, %v4909
  %v4911 = vpop.f32.mrf.mxu0
  %4912 = vmatprep.mubr.bf16.mxu0 %v3727
  %4913 = vmatmul.mubr.bf16.gmra.mxu0 %v3726
  %v4914 = vpop.f32.mrf.mxu0
  %v4915 = vadd.f32 %v4810, %v4914
  %v4916 = vpop.f32.mrf.mxu0
  %v4917 = vpop.f32.mrf.mxu0
  %v4918 = vadd.f32 %v4813, %v4917
  %v4919 = vpop.f32.mrf.mxu0
  %4920 = vdwg.mxu0
  %4921 = vmatprep.subr.bf16.mxu0 0
  %4922 = vmatpush1.bf16.msra.mxu0 %v4654
  %4923 = vmatprep.subr.bf16.mxu0 0
  %4924 = vmatpush1.bf16.msra.mxu0 %v4653
  %4925 = vmatprep.subr.bf16.mxu0 0
  %4926 = vmatpush1.bf16.msra.mxu0 %v4652
  %4927 = vmatprep.subr.bf16.mxu0 0
  %4928 = vmatpush1.bf16.msra.mxu0 %v4651
  %4929 = vmatprep.subr.bf16.mxu0 0
  %4930 = vmatpush1.bf16.msra.mxu0 %v4650
  %4931 = vmatprep.subr.bf16.mxu0 0
  %4932 = vmatpush1.bf16.msra.mxu0 %v4649
  %4933 = vmatprep.subr.bf16.mxu0 0
  %4934 = vmatpush1.bf16.msra.mxu0 %v4648
  %4935 = vmatprep.subr.bf16.mxu0 0
  %4936 = vmatpush1.bf16.msra.mxu0 %v4647
  %4937 = vmatprep.subr.bf16.mxu0 0
  %4938 = vmatpush2.bf16.msra.mxu0 %v4662
  %4939 = vmatprep.subr.bf16.mxu0 0
  %4940 = vmatpush2.bf16.msra.mxu0 %v4661
  %4941 = vmatprep.subr.bf16.mxu0 0
  %4942 = vmatpush2.bf16.msra.mxu0 %v4660
  %4943 = vmatprep.subr.bf16.mxu0 0
  %4944 = vmatpush2.bf16.msra.mxu0 %v4659
  %4945 = vmatprep.subr.bf16.mxu0 0
  %4946 = vmatpush2.bf16.msra.mxu0 %v4658
  %4947 = vmatprep.subr.bf16.mxu0 0
  %4948 = vmatpush2.bf16.msra.mxu0 %v4657
  %4949 = vmatprep.subr.bf16.mxu0 0
  %4950 = vmatpush2.bf16.msra.mxu0 %v4656
  %4951 = vmatprep.subr.bf16.mxu0 0
  %4952 = vmatpush2.bf16.msra.mxu0 %v4655
  %4953 = vmatprep.mubr.bf16.mxu0 %v4416
  %4954 = vmatmul.mubr.bf16.gmra.mxu0 %v4415
  %v4955 = vpop.f32.mrf.mxu0
  %v4956 = vadd.f32 %v4851, %v4955
  %v4957 = vpop.f32.mrf.mxu0
  %v4958 = vpop.f32.mrf.mxu0
  %v4959 = vadd.f32 %v4854, %v4958
  %v4960 = vpop.f32.mrf.mxu0
  %4961 = vmatprep.mubr.bf16.mxu0 %v3687
  %4962 = vmatmul.mubr.bf16.gmra.mxu0 %v3686
  %v4963 = vpop.f32.mrf.mxu0
  %v4964 = vadd.f32 %v4859, %v4963
  %v4965 = vpop.f32.mrf.mxu0
  %v4966 = vpop.f32.mrf.mxu0
  %v4967 = vadd.f32 %v4862, %v4966
  %v4968 = vpop.f32.mrf.mxu0
  %4969 = vmatprep.mubr.bf16.mxu0 %v3693
  %4970 = vmatmul.mubr.bf16.gmra.mxu0 %v3692
  %v4971 = vpop.f32.mrf.mxu0
  %v4972 = vadd.f32 %v4867, %v4971
  %v4973 = vpop.f32.mrf.mxu0
  %v4974 = vpop.f32.mrf.mxu0
  %v4975 = vadd.f32 %v4870, %v4974
  %v4976 = vpop.f32.mrf.mxu0
  %4977 = vmatprep.mubr.bf16.mxu0 %v3699
  %4978 = vmatmul.mubr.bf16.gmra.mxu0 %v3698
  %v4979 = vpop.f32.mrf.mxu0
  %v4980 = vadd.f32 %v4875, %v4979
  %v4981 = vpop.f32.mrf.mxu0
  %v4982 = vpop.f32.mrf.mxu0
  %v4983 = vadd.f32 %v4878, %v4982
  %v4984 = vpop.f32.mrf.mxu0
  %4985 = vmatprep.mubr.bf16.mxu0 %v3705
  %4986 = vmatmul.mubr.bf16.gmra.mxu0 %v3704
  %v4987 = vpop.f32.mrf.mxu0
  %v4988 = vadd.f32 %v4883, %v4987
  %v4989 = vpop.f32.mrf.mxu0
  %v4990 = vpop.f32.mrf.mxu0
  %v4991 = vadd.f32 %v4886, %v4990
  %v4992 = vpop.f32.mrf.mxu0
  %4993 = vmatprep.mubr.bf16.mxu0 %v3711
  %4994 = vmatmul.mubr.bf16.gmra.mxu0 %v3710
  %v4995 = vpop.f32.mrf.mxu0
  %v4996 = vadd.f32 %v4891, %v4995
  %v4997 = vpop.f32.mrf.mxu0
  %v4998 = vpop.f32.mrf.mxu0
  %v4999 = vadd.f32 %v4894, %v4998
  %v5000 = vpop.f32.mrf.mxu0
  %5001 = vmatprep.mubr.bf16.mxu0 %v3717
  %5002 = vmatmul.mubr.bf16.gmra.mxu0 %v3716
  %v5003 = vpop.f32.mrf.mxu0
  %v5004 = vadd.f32 %v4899, %v5003
  %v5005 = vpop.f32.mrf.mxu0
  %v5006 = vpop.f32.mrf.mxu0
  %v5007 = vadd.f32 %v4902, %v5006
  %v5008 = vpop.f32.mrf.mxu0
  %5009 = vmatprep.mubr.bf16.mxu0 %v3723
  %5010 = vmatmul.mubr.bf16.gmra.mxu0 %v3722
  %v5011 = vpop.f32.mrf.mxu0
  %v5012 = vadd.f32 %v4907, %v5011
  %v5013 = vpop.f32.mrf.mxu0
  %v5014 = vpop.f32.mrf.mxu0
  %v5015 = vadd.f32 %v4910, %v5014
  %v5016 = vpop.f32.mrf.mxu0
  %5017 = vmatprep.mubr.bf16.mxu0 %v3729
  %5018 = vmatmul.mubr.bf16.gmra.mxu0 %v3728
  %v5019 = vpop.f32.mrf.mxu0
  %v5020 = vadd.f32 %v4915, %v5019
  %v5021 = vpop.f32.mrf.mxu0
  %v5022 = vpop.f32.mrf.mxu0
  %v5023 = vadd.f32 %v4918, %v5022
  %v5024 = vpop.f32.mrf.mxu0
  %5025 = vdwg.mxu0
  %v5026 = vld [vmem:[#allocation2 + $0x60] sm:$0xff]
  %v5027 = vld [vmem:[#allocation2 + $0x68] sm:$0xff]
  %v5028 = vld [vmem:[#allocation2 + $0x70] sm:$0xff]
  %v5029 = vld [vmem:[#allocation2 + $0x78] sm:$0xff]
  %v5030 = vld [vmem:[#allocation2 + $0x80] sm:$0xff]
  %v5031 = vld [vmem:[#allocation2 + $0x88] sm:$0xff]
  %v5032 = vld [vmem:[#allocation2 + $0x90] sm:$0xff]
  %v5033 = vld [vmem:[#allocation2 + $0x98] sm:$0xff]
  %v5034 = vld [vmem:[#allocation2 + $0xa0] sm:$0xff]
  %v5035 = vld [vmem:[#allocation2 + $0xa8] sm:$0xff]
  %v5036 = vld [vmem:[#allocation2 + $0xb0] sm:$0xff]
  %v5037 = vld [vmem:[#allocation2 + $0xb8] sm:$0xff]
  %v5038 = vld [vmem:[#allocation2 + $0xc0] sm:$0xff]
  %v5039 = vld [vmem:[#allocation2 + $0xc8] sm:$0xff]
  %v5040 = vld [vmem:[#allocation2 + $0xd0] sm:$0xff]
  %v5041 = vld [vmem:[#allocation2 + $0xd8] sm:$0xff]
  %v5042 = vld [vmem:[#allocation2 + $0xe0] sm:$0xff]
  %v5043 = vld [vmem:[#allocation2 + $0xe8] sm:$0xff]
  %v5044 = vld [vmem:[#allocation2 + $0xf0] sm:$0xff]
  %v5045 = vld [vmem:[#allocation2 + $0xf8] sm:$0xff]
  %v5046 = vld [vmem:[#allocation2 + $0x100] sm:$0xff]
  %v5047 = vld [vmem:[#allocation2 + $0x108] sm:$0xff]
  %v5048 = vld [vmem:[#allocation2 + $0x110] sm:$0xff]
  %v5049 = vld [vmem:[#allocation2 + $0x118] sm:$0xff]
  %v5050 = vld [vmem:[#allocation2 + $0x120] sm:$0xff]
  %v5051 = vld [vmem:[#allocation2 + $0x128] sm:$0xff]
  %v5052 = vld [vmem:[#allocation2 + $0x130] sm:$0xff]
  %v5053 = vld [vmem:[#allocation2 + $0x138] sm:$0xff]
  %v5054 = vld [vmem:[#allocation2 + $0x140] sm:$0xff]
  %v5055 = vld [vmem:[#allocation2 + $0x148] sm:$0xff]
  %v5056 = vld [vmem:[#allocation2 + $0x150] sm:$0xff]
  %v5057 = vld [vmem:[#allocation2 + $0x158] sm:$0xff]
  %v5058 = vld [vmem:[#allocation2 + $0x160] sm:$0xff]
  %v5059 = vld [vmem:[#allocation2 + $0x168] sm:$0xff]
  %v5060 = vld [vmem:[#allocation2 + $0x170] sm:$0xff]
  %v5061 = vld [vmem:[#allocation2 + $0x178] sm:$0xff]
  %v5062 = vld [vmem:[#allocation2 + $0x180] sm:$0xff]
  %v5063 = vld [vmem:[#allocation2 + $0x188] sm:$0xff]
  %v5064 = vld [vmem:[#allocation2 + $0x190] sm:$0xff]
  %v5065 = vld [vmem:[#allocation2 + $0x198] sm:$0xff]
  %v5066 = vld [vmem:[#allocation2 + $0x1a0] sm:$0xff]
  %v5067 = vld [vmem:[#allocation2 + $0x1a8] sm:$0xff]
  %v5068 = vld [vmem:[#allocation2 + $0x1b0] sm:$0xff]
  %v5069 = vld [vmem:[#allocation2 + $0x1b8] sm:$0xff]
  %v5070 = vld [vmem:[#allocation2 + $0x1c0] sm:$0xff]
  %v5071 = vld [vmem:[#allocation2 + $0x1c8] sm:$0xff]
  %v5072 = vld [vmem:[#allocation2 + $0x1d0] sm:$0xff]
  %v5073 = vld [vmem:[#allocation2 + $0x1d8] sm:$0xff]
  %v5074 = vld [vmem:[#allocation2 + $0x1e0] sm:$0xff]
  %v5075 = vld [vmem:[#allocation2 + $0x1e8] sm:$0xff]
  %v5076 = vld [vmem:[#allocation2 + $0x1f0] sm:$0xff]
  %v5077 = vld [vmem:[#allocation2 + $0x1f8] sm:$0xff]
  %v5078 = vld [vmem:[#allocation2 + $0x200] sm:$0xff]
  %v5079 = vld [vmem:[#allocation2 + $0x208] sm:$0xff]
  %s5080 = scalar_lea.vmem [#allocation4], 768
  %v5081 = vld [vmem:[%s5080] sm:$0xf]
  %v5082 = vld [vmem:[%s5080 + $0x4] sm:$0xf]
  %v5083 = vld [vmem:[%s5080 + $0x8] sm:$0xf]
  %v5084 = vld [vmem:[%s5080 + $0xc] sm:$0xf]
  %v5085 = vld [vmem:[%s5080 + $0x10] sm:$0xf]
  %v5086 = vld [vmem:[%s5080 + $0x14] sm:$0xf]
  %v5087 = vld [vmem:[%s5080 + $0x18] sm:$0xf]
  %v5088 = vld [vmem:[%s5080 + $0x1c] sm:$0xf]
  %v5089 = vld [vmem:[%s5080 + $0x20] sm:$0xf]
  %v5090 = vld [vmem:[%s5080 + $0x24] sm:$0xf]
  %v5091 = vld [vmem:[%s5080 + $0x28] sm:$0xf]
  %v5092 = vld [vmem:[%s5080 + $0x2c] sm:$0xf]
  %v5093 = vld [vmem:[%s5080 + $0x30] sm:$0xf]
  %v5094 = vld [vmem:[%s5080 + $0x34] sm:$0xf]
  %v5095 = vld [vmem:[%s5080 + $0x38] sm:$0xf]
  %v5096 = vld [vmem:[%s5080 + $0x3c] sm:$0xf]
  %v5097 = vld [vmem:[%s5080 + $0x40] sm:$0xf]
  %v5098 = vld [vmem:[%s5080 + $0x44] sm:$0xf]
  %v5099 = vld [vmem:[%s5080 + $0x48] sm:$0xf]
  %v5100 = vld [vmem:[%s5080 + $0x4c] sm:$0xf]
  %v5101 = vld [vmem:[%s5080 + $0x50] sm:$0xf]
  %v5102 = vld [vmem:[%s5080 + $0x54] sm:$0xf]
  %v5103 = vld [vmem:[%s5080 + $0x58] sm:$0xf]
  %v5104 = vld [vmem:[%s5080 + $0x5c] sm:$0xf]
  %v5105 = vld [vmem:[%s5080 + $0x60] sm:$0xf]
  %v5106 = vld [vmem:[%s5080 + $0x64] sm:$0xf]
  %v5107 = vld [vmem:[%s5080 + $0x68] sm:$0xf]
  %v5108 = vld [vmem:[%s5080 + $0x6c] sm:$0xf]
  %v5109 = vld [vmem:[%s5080 + $0x70] sm:$0xf]
  %v5110 = vld [vmem:[%s5080 + $0x74] sm:$0xf]
  %v5111 = vld [vmem:[%s5080 + $0x78] sm:$0xf]
  %v5112 = vld [vmem:[%s5080 + $0x7c] sm:$0xf]
  %v5113 = vld [vmem:[%s5080 + $0x80] sm:$0xf]
  %v5114 = vld [vmem:[%s5080 + $0x84] sm:$0xf]
  %v5115 = vld [vmem:[%s5080 + $0x88] sm:$0xf]
  %v5116 = vld [vmem:[%s5080 + $0x8c] sm:$0xf]
  %v5117 = vld [vmem:[%s5080 + $0x90] sm:$0xf]
  %v5118 = vld [vmem:[%s5080 + $0x94] sm:$0xf]
  %v5119 = vld [vmem:[%s5080 + $0x98] sm:$0xf]
  %v5120 = vld [vmem:[%s5080 + $0x9c] sm:$0xf]
  %v5121 = vld [vmem:[%s5080 + $0xa0] sm:$0xf]
  %v5122 = vld [vmem:[%s5080 + $0xa4] sm:$0xf]
  %v5123 = vld [vmem:[%s5080 + $0xa8] sm:$0xf]
  %v5124 = vld [vmem:[%s5080 + $0xac] sm:$0xf]
  %v5125 = vld [vmem:[%s5080 + $0xb0] sm:$0xf]
  %v5126 = vld [vmem:[%s5080 + $0xb4] sm:$0xf]
  %v5127 = vld [vmem:[%s5080 + $0xb8] sm:$0xf]
  %v5128 = vld [vmem:[%s5080 + $0xbc] sm:$0xf]
  %v5129 = vld [vmem:[%s5080 + $0xc0] sm:$0xf]
  %v5130 = vld [vmem:[%s5080 + $0xc4] sm:$0xf]
  %v5131 = vld [vmem:[%s5080 + $0xc8] sm:$0xf]
  %v5132 = vld [vmem:[%s5080 + $0xcc] sm:$0xf]
  %v5133 = vld [vmem:[%s5080 + $0xd0] sm:$0xf]
  %v5134 = vld [vmem:[%s5080 + $0xd4] sm:$0xf]
  %v5135 = vld [vmem:[%s5080 + $0xd8] sm:$0xf]
  %v5136 = vld [vmem:[%s5080 + $0xdc] sm:$0xf]
  %v5137 = vld [vmem:[%s5080 + $0xe0] sm:$0xf]
  %v5138 = vld [vmem:[%s5080 + $0xe4] sm:$0xf]
  %v5139 = vld [vmem:[%s5080 + $0xe8] sm:$0xf]
  %v5140 = vld [vmem:[%s5080 + $0xec] sm:$0xf]
  %v5141 = vld [vmem:[%s5080 + $0xf0] sm:$0xf]
  %v5142 = vld [vmem:[%s5080 + $0xf4] sm:$0xf]
  %v5143 = vld [vmem:[%s5080 + $0xf8] sm:$0xf]
  %v5144 = vld [vmem:[%s5080 + $0xfc] sm:$0xf]
  %v5145 = vld [vmem:[%s5080 + $0x100] sm:$0xf]
  %v5146 = vld [vmem:[%s5080 + $0x104] sm:$0xf]
  %v5147 = vld [vmem:[%s5080 + $0x108] sm:$0xf]
  %v5148 = vld [vmem:[%s5080 + $0x10c] sm:$0xf]
  %v5149 = vld [vmem:[%s5080 + $0x110] sm:$0xf]
  %v5150 = vld [vmem:[%s5080 + $0x114] sm:$0xf]
  %v5151 = vld [vmem:[%s5080 + $0x118] sm:$0xf]
  %v5152 = vld [vmem:[%s5080 + $0x11c] sm:$0xf]
  %v5153 = vld [vmem:[%s5080 + $0x120] sm:$0xf]
  %v5154 = vld [vmem:[%s5080 + $0x124] sm:$0xf]
  %v5155 = vld [vmem:[%s5080 + $0x128] sm:$0xf]
  %v5156 = vld [vmem:[%s5080 + $0x12c] sm:$0xf]
  %v5157 = vld [vmem:[%s5080 + $0x130] sm:$0xf]
  %v5158 = vld [vmem:[%s5080 + $0x134] sm:$0xf]
  %v5159 = vld [vmem:[%s5080 + $0x138] sm:$0xf]
  %v5160 = vld [vmem:[%s5080 + $0x13c] sm:$0xf]
  %v5161 = vld [vmem:[%s5080 + $0x140] sm:$0xf]
  %v5162 = vld [vmem:[%s5080 + $0x144] sm:$0xf]
  %v5163 = vld [vmem:[%s5080 + $0x148] sm:$0xf]
  %v5164 = vld [vmem:[%s5080 + $0x14c] sm:$0xf]
  %v5165 = vld [vmem:[%s5080 + $0x150] sm:$0xf]
  %v5166 = vld [vmem:[%s5080 + $0x154] sm:$0xf]
  %v5167 = vld [vmem:[%s5080 + $0x158] sm:$0xf]
  %v5168 = vld [vmem:[%s5080 + $0x15c] sm:$0xf]
  %v5169 = vld [vmem:[%s5080 + $0x160] sm:$0xf]
  %v5170 = vld [vmem:[%s5080 + $0x164] sm:$0xf]
  %v5171 = vld [vmem:[%s5080 + $0x168] sm:$0xf]
  %v5172 = vld [vmem:[%s5080 + $0x16c] sm:$0xf]
  %v5173 = vld [vmem:[%s5080 + $0x170] sm:$0xf]
  %v5174 = vld [vmem:[%s5080 + $0x174] sm:$0xf]
  %v5175 = vld [vmem:[%s5080 + $0x178] sm:$0xf]
  %v5176 = vld [vmem:[%s5080 + $0x17c] sm:$0xf]
  %v5231 = vunpack.c.l.b16 %v5026
  %v5232 = vunpack.c.h.b16 %v5026
  %v5233 = vunpack.c.l.b16 %v5027
  %v5234 = vunpack.c.h.b16 %v5027
  %v5235 = vunpack.c.l.b16 %v5028
  %v5236 = vunpack.c.h.b16 %v5028
  %v5237 = vunpack.c.l.b16 %v5029
  %v5238 = vunpack.c.h.b16 %v5029
  %v5239 = vunpack.c.l.b16 %v5030
  %v5240 = vunpack.c.h.b16 %v5030
  %v5241 = vunpack.c.l.b16 %v5031
  %v5242 = vunpack.c.h.b16 %v5031
  %v5243 = vunpack.c.l.b16 %v5032
  %v5244 = vunpack.c.h.b16 %v5032
  %v5245 = vunpack.c.l.b16 %v5033
  %v5246 = vunpack.c.h.b16 %v5033
  %v5247 = vunpack.c.l.b16 %v5034
  %v5248 = vunpack.c.h.b16 %v5034
  %v5249 = vunpack.c.l.b16 %v5035
  %v5250 = vunpack.c.h.b16 %v5035
  %v5251 = vunpack.c.l.b16 %v5036
  %v5252 = vunpack.c.h.b16 %v5036
  %v5253 = vunpack.c.l.b16 %v5037
  %v5254 = vunpack.c.h.b16 %v5037
  %v5255 = vunpack.c.l.b16 %v5038
  %v5256 = vunpack.c.h.b16 %v5038
  %v5257 = vunpack.c.l.b16 %v5039
  %v5258 = vunpack.c.h.b16 %v5039
  %v5259 = vunpack.c.l.b16 %v5040
  %v5260 = vunpack.c.h.b16 %v5040
  %v5261 = vunpack.c.l.b16 %v5041
  %v5262 = vunpack.c.h.b16 %v5041
  %v5263 = vunpack.c.l.b16 %v5042
  %v5264 = vunpack.c.h.b16 %v5042
  %v5265 = vunpack.c.l.b16 %v5043
  %v5266 = vunpack.c.h.b16 %v5043
  %v5267 = vunpack.c.l.b16 %v5044
  %v5268 = vunpack.c.h.b16 %v5044
  %v5269 = vunpack.c.l.b16 %v5045
  %v5270 = vunpack.c.h.b16 %v5045
  %v5271 = vunpack.c.l.b16 %v5046
  %v5272 = vunpack.c.h.b16 %v5046
  %v5273 = vunpack.c.l.b16 %v5047
  %v5274 = vunpack.c.h.b16 %v5047
  %v5275 = vunpack.c.l.b16 %v5048
  %v5276 = vunpack.c.h.b16 %v5048
  %v5277 = vunpack.c.l.b16 %v5049
  %v5278 = vunpack.c.h.b16 %v5049
  %v5279 = vunpack.c.l.b16 %v5050
  %v5280 = vunpack.c.h.b16 %v5050
  %v5281 = vunpack.c.l.b16 %v5051
  %v5282 = vunpack.c.h.b16 %v5051
  %v5283 = vunpack.c.l.b16 %v5052
  %v5284 = vunpack.c.h.b16 %v5052
  %v5285 = vunpack.c.l.b16 %v5053
  %v5286 = vunpack.c.h.b16 %v5053
  %v5287 = vunpack.c.l.b16 %v5054
  %v5288 = vunpack.c.h.b16 %v5054
  %v5289 = vunpack.c.l.b16 %v5055
  %v5290 = vunpack.c.h.b16 %v5055
  %v5291 = vunpack.c.l.b16 %v5056
  %v5292 = vunpack.c.h.b16 %v5056
  %v5293 = vunpack.c.l.b16 %v5057
  %v5294 = vunpack.c.h.b16 %v5057
  %v5295 = vunpack.c.l.b16 %v5058
  %v5296 = vunpack.c.h.b16 %v5058
  %v5297 = vunpack.c.l.b16 %v5059
  %v5298 = vunpack.c.h.b16 %v5059
  %v5299 = vunpack.c.l.b16 %v5060
  %v5300 = vunpack.c.h.b16 %v5060
  %v5301 = vunpack.c.l.b16 %v5061
  %v5302 = vunpack.c.h.b16 %v5061
  %v5303 = vunpack.c.l.b16 %v5062
  %v5304 = vunpack.c.h.b16 %v5062
  %v5305 = vunpack.c.l.b16 %v5063
  %v5306 = vunpack.c.h.b16 %v5063
  %v5307 = vunpack.c.l.b16 %v5064
  %v5308 = vunpack.c.h.b16 %v5064
  %v5309 = vunpack.c.l.b16 %v5065
  %v5310 = vunpack.c.h.b16 %v5065
  %v5311 = vunpack.c.l.b16 %v5066
  %v5312 = vunpack.c.h.b16 %v5066
  %v5313 = vunpack.c.l.b16 %v5067
  %v5314 = vunpack.c.h.b16 %v5067
  %v5315 = vunpack.c.l.b16 %v5068
  %v5316 = vunpack.c.h.b16 %v5068
  %v5317 = vunpack.c.l.b16 %v5069
  %v5318 = vunpack.c.h.b16 %v5069
  %v5319 = vunpack.c.l.b16 %v5070
  %v5320 = vunpack.c.h.b16 %v5070
  %v5321 = vunpack.c.l.b16 %v5071
  %v5322 = vunpack.c.h.b16 %v5071
  %v5323 = vunpack.c.l.b16 %v5072
  %v5324 = vunpack.c.h.b16 %v5072
  %v5325 = vunpack.c.l.b16 %v5073
  %v5326 = vunpack.c.h.b16 %v5073
  %v5327 = vunpack.c.l.b16 %v5074
  %v5328 = vunpack.c.h.b16 %v5074
  %v5329 = vunpack.c.l.b16 %v5075
  %v5330 = vunpack.c.h.b16 %v5075
  %v5331 = vunpack.c.l.b16 %v5076
  %v5332 = vunpack.c.h.b16 %v5076
  %v5333 = vunpack.c.l.b16 %v5077
  %v5334 = vunpack.c.h.b16 %v5077
  %v5335 = vunpack.c.l.b16 %v5078
  %v5336 = vunpack.c.h.b16 %v5078
  %v5337 = vunpack.c.l.b16 %v5079
  %v5338 = vunpack.c.h.b16 %v5079
  %v5339 = vpack.c.b16 %v5237, %v5231
  %v5340 = vpack.c.b16 %v5238, %v5232
  %v5341 = vpack.c.b16 %v5239, %v5233
  %v5342 = vpack.c.b16 %v5240, %v5234
  %v5343 = vpack.c.b16 %v5241, %v5235
  %v5344 = vpack.c.b16 %v5242, %v5236
  %v5345 = vpack.c.b16 %v5249, %v5243
  %v5346 = vpack.c.b16 %v5250, %v5244
  %v5347 = vpack.c.b16 %v5251, %v5245
  %v5348 = vpack.c.b16 %v5252, %v5246
  %v5349 = vpack.c.b16 %v5253, %v5247
  %v5350 = vpack.c.b16 %v5254, %v5248
  %v5351 = vpack.c.b16 %v5261, %v5255
  %v5352 = vpack.c.b16 %v5262, %v5256
  %v5353 = vpack.c.b16 %v5263, %v5257
  %v5354 = vpack.c.b16 %v5264, %v5258
  %v5355 = vpack.c.b16 %v5265, %v5259
  %v5356 = vpack.c.b16 %v5266, %v5260
  %v5357 = vpack.c.b16 %v5273, %v5267
  %v5358 = vpack.c.b16 %v5274, %v5268
  %v5359 = vpack.c.b16 %v5275, %v5269
  %v5360 = vpack.c.b16 %v5276, %v5270
  %v5361 = vpack.c.b16 %v5277, %v5271
  %v5362 = vpack.c.b16 %v5278, %v5272
  %v5363 = vpack.c.b16 %v5285, %v5279
  %v5364 = vpack.c.b16 %v5286, %v5280
  %v5365 = vpack.c.b16 %v5287, %v5281
  %v5366 = vpack.c.b16 %v5288, %v5282
  %v5367 = vpack.c.b16 %v5289, %v5283
  %v5368 = vpack.c.b16 %v5290, %v5284
  %v5369 = vpack.c.b16 %v5297, %v5291
  %v5370 = vpack.c.b16 %v5298, %v5292
  %v5371 = vpack.c.b16 %v5299, %v5293
  %v5372 = vpack.c.b16 %v5300, %v5294
  %v5373 = vpack.c.b16 %v5301, %v5295
  %v5374 = vpack.c.b16 %v5302, %v5296
  %v5375 = vpack.c.b16 %v5309, %v5303
  %v5376 = vpack.c.b16 %v5310, %v5304
  %v5377 = vpack.c.b16 %v5311, %v5305
  %v5378 = vpack.c.b16 %v5312, %v5306
  %v5379 = vpack.c.b16 %v5313, %v5307
  %v5380 = vpack.c.b16 %v5314, %v5308
  %v5381 = vpack.c.b16 %v5321, %v5315
  %v5382 = vpack.c.b16 %v5322, %v5316
  %v5383 = vpack.c.b16 %v5323, %v5317
  %v5384 = vpack.c.b16 %v5324, %v5318
  %v5385 = vpack.c.b16 %v5325, %v5319
  %v5386 = vpack.c.b16 %v5326, %v5320
  %v5387 = vpack.c.b16 %v5333, %v5327
  %v5388 = vpack.c.b16 %v5334, %v5328
  %v5389 = vpack.c.b16 %v5335, %v5329
  %v5390 = vpack.c.b16 %v5336, %v5330
  %v5391 = vpack.c.b16 %v5337, %v5331
  %v5392 = vpack.c.b16 %v5338, %v5332
  %v5543 = vunpack.c.l.b16 %v5081
  %v5544 = vunpack.c.l.b16 %v5082
  %v5545 = vunpack.c.l.b16 %v5083
  %v5546 = vunpack.c.l.b16 %v5084
  %v5547 = vunpack.c.l.b16 %v5085
  %v5548 = vunpack.c.l.b16 %v5086
  %v5549 = vunpack.c.l.b16 %v5087
  %v5550 = vunpack.c.l.b16 %v5088
  %v5551 = vunpack.c.l.b16 %v5089
  %v5552 = vunpack.c.l.b16 %v5090
  %v5553 = vunpack.c.l.b16 %v5091
  %v5554 = vunpack.c.l.b16 %v5092
  %v5555 = vunpack.c.l.b16 %v5093
  %v5556 = vunpack.c.l.b16 %v5094
  %v5557 = vunpack.c.l.b16 %v5095
  %v5558 = vunpack.c.l.b16 %v5096
  %v5559 = vunpack.c.l.b16 %v5097
  %v5560 = vunpack.c.l.b16 %v5098
  %v5561 = vunpack.c.l.b16 %v5099
  %v5562 = vunpack.c.l.b16 %v5100
  %v5563 = vunpack.c.l.b16 %v5101
  %v5564 = vunpack.c.l.b16 %v5102
  %v5565 = vunpack.c.l.b16 %v5103
  %v5566 = vunpack.c.l.b16 %v5104
  %v5567 = vunpack.c.l.b16 %v5105
  %v5568 = vunpack.c.l.b16 %v5106
  %v5569 = vunpack.c.l.b16 %v5107
  %v5570 = vunpack.c.l.b16 %v5108
  %v5571 = vunpack.c.l.b16 %v5109
  %v5572 = vunpack.c.l.b16 %v5110
  %v5573 = vunpack.c.l.b16 %v5111
  %v5574 = vunpack.c.l.b16 %v5112
  %v5575 = vunpack.c.l.b16 %v5113
  %v5576 = vunpack.c.l.b16 %v5114
  %v5577 = vunpack.c.l.b16 %v5115
  %v5578 = vunpack.c.l.b16 %v5116
  %v5579 = vunpack.c.l.b16 %v5117
  %v5580 = vunpack.c.l.b16 %v5118
  %v5581 = vunpack.c.l.b16 %v5119
  %v5582 = vunpack.c.l.b16 %v5120
  %v5583 = vunpack.c.l.b16 %v5121
  %v5584 = vunpack.c.l.b16 %v5122
  %v5585 = vunpack.c.l.b16 %v5123
  %v5586 = vunpack.c.l.b16 %v5124
  %v5587 = vunpack.c.l.b16 %v5125
  %v5588 = vunpack.c.l.b16 %v5126
  %v5589 = vunpack.c.l.b16 %v5127
  %v5590 = vunpack.c.l.b16 %v5128
  %v5591 = vunpack.c.l.b16 %v5129
  %v5592 = vunpack.c.l.b16 %v5130
  %v5593 = vunpack.c.l.b16 %v5131
  %v5594 = vunpack.c.l.b16 %v5132
  %v5595 = vunpack.c.l.b16 %v5133
  %v5596 = vunpack.c.l.b16 %v5134
  %v5597 = vunpack.c.l.b16 %v5135
  %v5598 = vunpack.c.l.b16 %v5136
  %v5599 = vunpack.c.l.b16 %v5137
  %v5600 = vunpack.c.l.b16 %v5138
  %v5601 = vunpack.c.l.b16 %v5139
  %v5602 = vunpack.c.l.b16 %v5140
  %v5603 = vunpack.c.l.b16 %v5141
  %v5604 = vunpack.c.l.b16 %v5142
  %v5605 = vunpack.c.l.b16 %v5143
  %v5606 = vunpack.c.l.b16 %v5144
  %v5607 = vunpack.c.l.b16 %v5145
  %v5608 = vunpack.c.l.b16 %v5146
  %v5609 = vunpack.c.l.b16 %v5147
  %v5610 = vunpack.c.l.b16 %v5148
  %v5611 = vunpack.c.l.b16 %v5149
  %v5612 = vunpack.c.l.b16 %v5150
  %v5613 = vunpack.c.l.b16 %v5151
  %v5614 = vunpack.c.l.b16 %v5152
  %v5615 = vunpack.c.l.b16 %v5153
  %v5616 = vunpack.c.l.b16 %v5154
  %v5617 = vunpack.c.l.b16 %v5155
  %v5618 = vunpack.c.l.b16 %v5156
  %v5619 = vunpack.c.l.b16 %v5157
  %v5620 = vunpack.c.l.b16 %v5158
  %v5621 = vunpack.c.l.b16 %v5159
  %v5622 = vunpack.c.l.b16 %v5160
  %v5623 = vunpack.c.l.b16 %v5161
  %v5624 = vunpack.c.l.b16 %v5162
  %v5625 = vunpack.c.l.b16 %v5163
  %v5626 = vunpack.c.l.b16 %v5164
  %v5627 = vunpack.c.l.b16 %v5165
  %v5628 = vunpack.c.l.b16 %v5166
  %v5629 = vunpack.c.l.b16 %v5167
  %v5630 = vunpack.c.l.b16 %v5168
  %v5631 = vunpack.c.l.b16 %v5169
  %v5632 = vunpack.c.l.b16 %v5170
  %v5633 = vunpack.c.l.b16 %v5171
  %v5634 = vunpack.c.l.b16 %v5172
  %v5635 = vunpack.c.l.b16 %v5173
  %v5636 = vunpack.c.l.b16 %v5174
  %v5637 = vunpack.c.l.b16 %v5175
  %v5638 = vunpack.c.l.b16 %v5176
  %v5639 = vpack.c.b16 %v5544, %v5543
  %v5640 = vpack.c.b16 %v5546, %v5545
  %v5641 = vpack.c.b16 %v5548, %v5547
  %v5642 = vpack.c.b16 %v5550, %v5549
  %v5643 = vpack.c.b16 %v5552, %v5551
  %v5644 = vpack.c.b16 %v5554, %v5553
  %v5645 = vpack.c.b16 %v5556, %v5555
  %v5646 = vpack.c.b16 %v5558, %v5557
  %v5647 = vpack.c.b16 %v5560, %v5559
  %v5648 = vpack.c.b16 %v5562, %v5561
  %v5649 = vpack.c.b16 %v5564, %v5563
  %v5650 = vpack.c.b16 %v5566, %v5565
  %v5651 = vpack.c.b16 %v5568, %v5567
  %v5652 = vpack.c.b16 %v5570, %v5569
  %v5653 = vpack.c.b16 %v5572, %v5571
  %v5654 = vpack.c.b16 %v5574, %v5573
  %v5655 = vpack.c.b16 %v5576, %v5575
  %v5656 = vpack.c.b16 %v5578, %v5577
  %v5657 = vpack.c.b16 %v5580, %v5579
  %v5658 = vpack.c.b16 %v5582, %v5581
  %v5659 = vpack.c.b16 %v5584, %v5583
  %v5660 = vpack.c.b16 %v5586, %v5585
  %v5661 = vpack.c.b16 %v5588, %v5587
  %v5662 = vpack.c.b16 %v5590, %v5589
  %v5663 = vpack.c.b16 %v5592, %v5591
  %v5664 = vpack.c.b16 %v5594, %v5593
  %v5665 = vpack.c.b16 %v5596, %v5595
  %v5666 = vpack.c.b16 %v5598, %v5597
  %v5667 = vpack.c.b16 %v5600, %v5599
  %v5668 = vpack.c.b16 %v5602, %v5601
  %v5669 = vpack.c.b16 %v5604, %v5603
  %v5670 = vpack.c.b16 %v5606, %v5605
  %v5671 = vpack.c.b16 %v5608, %v5607
  %v5672 = vpack.c.b16 %v5610, %v5609
  %v5673 = vpack.c.b16 %v5612, %v5611
  %v5674 = vpack.c.b16 %v5614, %v5613
  %v5675 = vpack.c.b16 %v5616, %v5615
  %v5676 = vpack.c.b16 %v5618, %v5617
  %v5677 = vpack.c.b16 %v5620, %v5619
  %v5678 = vpack.c.b16 %v5622, %v5621
  %v5679 = vpack.c.b16 %v5624, %v5623
  %v5680 = vpack.c.b16 %v5626, %v5625
  %v5681 = vpack.c.b16 %v5628, %v5627
  %v5682 = vpack.c.b16 %v5630, %v5629
  %v5683 = vpack.c.b16 %v5632, %v5631
  %v5684 = vpack.c.b16 %v5634, %v5633
  %v5685 = vpack.c.b16 %v5636, %v5635
  %v5686 = vpack.c.b16 %v5638, %v5637
  %5735 = vmatprep.subr.bf16.mxu0 0
  %5736 = vmatpush1.bf16.msra.mxu0 %v5646
  %5737 = vmatprep.subr.bf16.mxu0 0
  %5738 = vmatpush1.bf16.msra.mxu0 %v5645
  %5739 = vmatprep.subr.bf16.mxu0 0
  %5740 = vmatpush1.bf16.msra.mxu0 %v5644
  %5741 = vmatprep.subr.bf16.mxu0 0
  %5742 = vmatpush1.bf16.msra.mxu0 %v5643
  %5743 = vmatprep.subr.bf16.mxu0 0
  %5744 = vmatpush1.bf16.msra.mxu0 %v5642
  %5745 = vmatprep.subr.bf16.mxu0 0
  %5746 = vmatpush1.bf16.msra.mxu0 %v5641
  %5747 = vmatprep.subr.bf16.mxu0 0
  %5748 = vmatpush1.bf16.msra.mxu0 %v5640
  %5749 = vmatprep.subr.bf16.mxu0 0
  %5750 = vmatpush1.bf16.msra.mxu0 %v5639
  %5751 = vmatprep.subr.bf16.mxu0 0
  %5752 = vmatpush2.bf16.msra.mxu0 %v5654
  %5753 = vmatprep.subr.bf16.mxu0 0
  %5754 = vmatpush2.bf16.msra.mxu0 %v5653
  %5755 = vmatprep.subr.bf16.mxu0 0
  %5756 = vmatpush2.bf16.msra.mxu0 %v5652
  %5757 = vmatprep.subr.bf16.mxu0 0
  %5758 = vmatpush2.bf16.msra.mxu0 %v5651
  %5759 = vmatprep.subr.bf16.mxu0 0
  %5760 = vmatpush2.bf16.msra.mxu0 %v5650
  %5761 = vmatprep.subr.bf16.mxu0 0
  %5762 = vmatpush2.bf16.msra.mxu0 %v5649
  %5763 = vmatprep.subr.bf16.mxu0 0
  %5764 = vmatpush2.bf16.msra.mxu0 %v5648
  %5765 = vmatprep.subr.bf16.mxu0 0
  %5766 = vmatpush2.bf16.msra.mxu0 %v5647
  %5767 = vmatprep.mubr.bf16.mxu0 %v5340
  %5768 = vmatmul.mubr.bf16.gmra.mxu0 %v5339
  %v5769 = vpop.f32.mrf.mxu0
  %v5770 = vadd.f32 0.0, %v5769
  %v5771 = vpop.f32.mrf.mxu0
  %v5772 = vpop.f32.mrf.mxu0
  %v5773 = vadd.f32 0.0, %v5772
  %v5774 = vpop.f32.mrf.mxu0
  %5775 = vmatprep.mubr.bf16.mxu0 %v5346
  %5776 = vmatmul.mubr.bf16.gmra.mxu0 %v5345
  %v5777 = vpop.f32.mrf.mxu0
  %v5778 = vadd.f32 0.0, %v5777
  %v5779 = vpop.f32.mrf.mxu0
  %v5780 = vpop.f32.mrf.mxu0
  %v5781 = vadd.f32 0.0, %v5780
  %v5782 = vpop.f32.mrf.mxu0
  %5783 = vmatprep.mubr.bf16.mxu0 %v5352
  %5784 = vmatmul.mubr.bf16.gmra.mxu0 %v5351
  %v5785 = vpop.f32.mrf.mxu0
  %v5786 = vadd.f32 0.0, %v5785
  %v5787 = vpop.f32.mrf.mxu0
  %v5788 = vpop.f32.mrf.mxu0
  %v5789 = vadd.f32 0.0, %v5788
  %v5790 = vpop.f32.mrf.mxu0
  %5791 = vmatprep.mubr.bf16.mxu0 %v5358
  %5792 = vmatmul.mubr.bf16.gmra.mxu0 %v5357
  %v5793 = vpop.f32.mrf.mxu0
  %v5794 = vadd.f32 0.0, %v5793
  %v5795 = vpop.f32.mrf.mxu0
  %v5796 = vpop.f32.mrf.mxu0
  %v5797 = vadd.f32 0.0, %v5796
  %v5798 = vpop.f32.mrf.mxu0
  %5799 = vmatprep.mubr.bf16.mxu0 %v5364
  %5800 = vmatmul.mubr.bf16.gmra.mxu0 %v5363
  %v5801 = vpop.f32.mrf.mxu0
  %v5802 = vadd.f32 0.0, %v5801
  %v5803 = vpop.f32.mrf.mxu0
  %v5804 = vpop.f32.mrf.mxu0
  %v5805 = vadd.f32 0.0, %v5804
  %v5806 = vpop.f32.mrf.mxu0
  %5807 = vmatprep.mubr.bf16.mxu0 %v5370
  %5808 = vmatmul.mubr.bf16.gmra.mxu0 %v5369
  %v5809 = vpop.f32.mrf.mxu0
  %v5810 = vadd.f32 0.0, %v5809
  %v5811 = vpop.f32.mrf.mxu0
  %v5812 = vpop.f32.mrf.mxu0
  %v5813 = vadd.f32 0.0, %v5812
  %v5814 = vpop.f32.mrf.mxu0
  %5815 = vmatprep.mubr.bf16.mxu0 %v5376
  %5816 = vmatmul.mubr.bf16.gmra.mxu0 %v5375
  %v5817 = vpop.f32.mrf.mxu0
  %v5818 = vadd.f32 0.0, %v5817
  %v5819 = vpop.f32.mrf.mxu0
  %v5820 = vpop.f32.mrf.mxu0
  %v5821 = vadd.f32 0.0, %v5820
  %v5822 = vpop.f32.mrf.mxu0
  %5823 = vmatprep.mubr.bf16.mxu0 %v5382
  %5824 = vmatmul.mubr.bf16.gmra.mxu0 %v5381
  %v5825 = vpop.f32.mrf.mxu0
  %v5826 = vadd.f32 0.0, %v5825
  %v5827 = vpop.f32.mrf.mxu0
  %v5828 = vpop.f32.mrf.mxu0
  %v5829 = vadd.f32 0.0, %v5828
  %v5830 = vpop.f32.mrf.mxu0
  %5831 = vmatprep.mubr.bf16.mxu0 %v5388
  %5832 = vmatmul.mubr.bf16.gmra.mxu0 %v5387
  %v5833 = vpop.f32.mrf.mxu0
  %v5834 = vadd.f32 0.0, %v5833
  %v5835 = vpop.f32.mrf.mxu0
  %v5836 = vpop.f32.mrf.mxu0
  %v5837 = vadd.f32 0.0, %v5836
  %v5838 = vpop.f32.mrf.mxu0
  %5839 = vdwg.mxu0
  %5840 = vmatprep.subr.bf16.mxu0 0
  %5841 = vmatpush1.bf16.msra.mxu0 %v5662
  %5842 = vmatprep.subr.bf16.mxu0 0
  %5843 = vmatpush1.bf16.msra.mxu0 %v5661
  %5844 = vmatprep.subr.bf16.mxu0 0
  %5845 = vmatpush1.bf16.msra.mxu0 %v5660
  %5846 = vmatprep.subr.bf16.mxu0 0
  %5847 = vmatpush1.bf16.msra.mxu0 %v5659
  %5848 = vmatprep.subr.bf16.mxu0 0
  %5849 = vmatpush1.bf16.msra.mxu0 %v5658
  %5850 = vmatprep.subr.bf16.mxu0 0
  %5851 = vmatpush1.bf16.msra.mxu0 %v5657
  %5852 = vmatprep.subr.bf16.mxu0 0
  %5853 = vmatpush1.bf16.msra.mxu0 %v5656
  %5854 = vmatprep.subr.bf16.mxu0 0
  %5855 = vmatpush1.bf16.msra.mxu0 %v5655
  %5856 = vmatprep.subr.bf16.mxu0 0
  %5857 = vmatpush2.bf16.msra.mxu0 %v5670
  %5858 = vmatprep.subr.bf16.mxu0 0
  %5859 = vmatpush2.bf16.msra.mxu0 %v5669
  %5860 = vmatprep.subr.bf16.mxu0 0
  %5861 = vmatpush2.bf16.msra.mxu0 %v5668
  %5862 = vmatprep.subr.bf16.mxu0 0
  %5863 = vmatpush2.bf16.msra.mxu0 %v5667
  %5864 = vmatprep.subr.bf16.mxu0 0
  %5865 = vmatpush2.bf16.msra.mxu0 %v5666
  %5866 = vmatprep.subr.bf16.mxu0 0
  %5867 = vmatpush2.bf16.msra.mxu0 %v5665
  %5868 = vmatprep.subr.bf16.mxu0 0
  %5869 = vmatpush2.bf16.msra.mxu0 %v5664
  %5870 = vmatprep.subr.bf16.mxu0 0
  %5871 = vmatpush2.bf16.msra.mxu0 %v5663
  %5872 = vmatprep.mubr.bf16.mxu0 %v5342
  %5873 = vmatmul.mubr.bf16.gmra.mxu0 %v5341
  %v5874 = vpop.f32.mrf.mxu0
  %v5875 = vadd.f32 %v5770, %v5874
  %v5876 = vpop.f32.mrf.mxu0
  %v5877 = vpop.f32.mrf.mxu0
  %v5878 = vadd.f32 %v5773, %v5877
  %v5879 = vpop.f32.mrf.mxu0
  %5880 = vmatprep.mubr.bf16.mxu0 %v5348
  %5881 = vmatmul.mubr.bf16.gmra.mxu0 %v5347
  %v5882 = vpop.f32.mrf.mxu0
  %v5883 = vadd.f32 %v5778, %v5882
  %v5884 = vpop.f32.mrf.mxu0
  %v5885 = vpop.f32.mrf.mxu0
  %v5886 = vadd.f32 %v5781, %v5885
  %v5887 = vpop.f32.mrf.mxu0
  %5888 = vmatprep.mubr.bf16.mxu0 %v5354
  %5889 = vmatmul.mubr.bf16.gmra.mxu0 %v5353
  %v5890 = vpop.f32.mrf.mxu0
  %v5891 = vadd.f32 %v5786, %v5890
  %v5892 = vpop.f32.mrf.mxu0
  %v5893 = vpop.f32.mrf.mxu0
  %v5894 = vadd.f32 %v5789, %v5893
  %v5895 = vpop.f32.mrf.mxu0
  %5896 = vmatprep.mubr.bf16.mxu0 %v5360
  %5897 = vmatmul.mubr.bf16.gmra.mxu0 %v5359
  %v5898 = vpop.f32.mrf.mxu0
  %v5899 = vadd.f32 %v5794, %v5898
  %v5900 = vpop.f32.mrf.mxu0
  %v5901 = vpop.f32.mrf.mxu0
  %v5902 = vadd.f32 %v5797, %v5901
  %v5903 = vpop.f32.mrf.mxu0
  %5904 = vmatprep.mubr.bf16.mxu0 %v5366
  %5905 = vmatmul.mubr.bf16.gmra.mxu0 %v5365
  %v5906 = vpop.f32.mrf.mxu0
  %v5907 = vadd.f32 %v5802, %v5906
  %v5908 = vpop.f32.mrf.mxu0
  %v5909 = vpop.f32.mrf.mxu0
  %v5910 = vadd.f32 %v5805, %v5909
  %v5911 = vpop.f32.mrf.mxu0
  %5912 = vmatprep.mubr.bf16.mxu0 %v5372
  %5913 = vmatmul.mubr.bf16.gmra.mxu0 %v5371
  %v5914 = vpop.f32.mrf.mxu0
  %v5915 = vadd.f32 %v5810, %v5914
  %v5916 = vpop.f32.mrf.mxu0
  %v5917 = vpop.f32.mrf.mxu0
  %v5918 = vadd.f32 %v5813, %v5917
  %v5919 = vpop.f32.mrf.mxu0
  %5920 = vmatprep.mubr.bf16.mxu0 %v5378
  %5921 = vmatmul.mubr.bf16.gmra.mxu0 %v5377
  %v5922 = vpop.f32.mrf.mxu0
  %v5923 = vadd.f32 %v5818, %v5922
  %v5924 = vpop.f32.mrf.mxu0
  %v5925 = vpop.f32.mrf.mxu0
  %v5926 = vadd.f32 %v5821, %v5925
  %v5927 = vpop.f32.mrf.mxu0
  %5928 = vmatprep.mubr.bf16.mxu0 %v5384
  %5929 = vmatmul.mubr.bf16.gmra.mxu0 %v5383
  %v5930 = vpop.f32.mrf.mxu0
  %v5931 = vadd.f32 %v5826, %v5930
  %v5932 = vpop.f32.mrf.mxu0
  %v5933 = vpop.f32.mrf.mxu0
  %v5934 = vadd.f32 %v5829, %v5933
  %v5935 = vpop.f32.mrf.mxu0
  %5936 = vmatprep.mubr.bf16.mxu0 %v5390
  %5937 = vmatmul.mubr.bf16.gmra.mxu0 %v5389
  %v5938 = vpop.f32.mrf.mxu0
  %v5939 = vadd.f32 %v5834, %v5938
  %v5940 = vpop.f32.mrf.mxu0
  %v5941 = vpop.f32.mrf.mxu0
  %v5942 = vadd.f32 %v5837, %v5941
  %v5943 = vpop.f32.mrf.mxu0
  %5944 = vdwg.mxu0
  %5945 = vmatprep.subr.bf16.mxu0 0
  %5946 = vmatpush1.bf16.msra.mxu0 %v5678
  %5947 = vmatprep.subr.bf16.mxu0 0
  %5948 = vmatpush1.bf16.msra.mxu0 %v5677
  %5949 = vmatprep.subr.bf16.mxu0 0
  %5950 = vmatpush1.bf16.msra.mxu0 %v5676
  %5951 = vmatprep.subr.bf16.mxu0 0
  %5952 = vmatpush1.bf16.msra.mxu0 %v5675
  %5953 = vmatprep.subr.bf16.mxu0 0
  %5954 = vmatpush1.bf16.msra.mxu0 %v5674
  %5955 = vmatprep.subr.bf16.mxu0 0
  %5956 = vmatpush1.bf16.msra.mxu0 %v5673
  %5957 = vmatprep.subr.bf16.mxu0 0
  %5958 = vmatpush1.bf16.msra.mxu0 %v5672
  %5959 = vmatprep.subr.bf16.mxu0 0
  %5960 = vmatpush1.bf16.msra.mxu0 %v5671
  %5961 = vmatprep.subr.bf16.mxu0 0
  %5962 = vmatpush2.bf16.msra.mxu0 %v5686
  %5963 = vmatprep.subr.bf16.mxu0 0
  %5964 = vmatpush2.bf16.msra.mxu0 %v5685
  %5965 = vmatprep.subr.bf16.mxu0 0
  %5966 = vmatpush2.bf16.msra.mxu0 %v5684
  %5967 = vmatprep.subr.bf16.mxu0 0
  %5968 = vmatpush2.bf16.msra.mxu0 %v5683
  %5969 = vmatprep.subr.bf16.mxu0 0
  %5970 = vmatpush2.bf16.msra.mxu0 %v5682
  %5971 = vmatprep.subr.bf16.mxu0 0
  %5972 = vmatpush2.bf16.msra.mxu0 %v5681
  %5973 = vmatprep.subr.bf16.mxu0 0
  %5974 = vmatpush2.bf16.msra.mxu0 %v5680
  %5975 = vmatprep.subr.bf16.mxu0 0
  %5976 = vmatpush2.bf16.msra.mxu0 %v5679
  %5977 = vmatprep.mubr.bf16.mxu0 %v5344
  %5978 = vmatmul.mubr.bf16.gmra.mxu0 %v5343
  %v5979 = vpop.f32.mrf.mxu0
  %v5980 = vadd.f32 %v5875, %v5979
  %v5981 = vpop.f32.mrf.mxu0
  %v5982 = vpop.f32.mrf.mxu0
  %v5983 = vadd.f32 %v5878, %v5982
  %v5984 = vpop.f32.mrf.mxu0
  %5985 = vmatprep.mubr.bf16.mxu0 %v5350
  %5986 = vmatmul.mubr.bf16.gmra.mxu0 %v5349
  %v5987 = vpop.f32.mrf.mxu0
  %v5988 = vadd.f32 %v5883, %v5987
  %v5989 = vpop.f32.mrf.mxu0
  %v5990 = vpop.f32.mrf.mxu0
  %v5991 = vadd.f32 %v5886, %v5990
  %v5992 = vpop.f32.mrf.mxu0
  %5993 = vmatprep.mubr.bf16.mxu0 %v5356
  %5994 = vmatmul.mubr.bf16.gmra.mxu0 %v5355
  %v5995 = vpop.f32.mrf.mxu0
  %v5996 = vadd.f32 %v5891, %v5995
  %v5997 = vpop.f32.mrf.mxu0
  %v5998 = vpop.f32.mrf.mxu0
  %v5999 = vadd.f32 %v5894, %v5998
  %v6000 = vpop.f32.mrf.mxu0
  %6001 = vmatprep.mubr.bf16.mxu0 %v5362
  %6002 = vmatmul.mubr.bf16.gmra.mxu0 %v5361
  %v6003 = vpop.f32.mrf.mxu0
  %v6004 = vadd.f32 %v5899, %v6003
  %v6005 = vpop.f32.mrf.mxu0
  %v6006 = vpop.f32.mrf.mxu0
  %v6007 = vadd.f32 %v5902, %v6006
  %v6008 = vpop.f32.mrf.mxu0
  %6009 = vmatprep.mubr.bf16.mxu0 %v5368
  %6010 = vmatmul.mubr.bf16.gmra.mxu0 %v5367
  %v6011 = vpop.f32.mrf.mxu0
  %v6012 = vadd.f32 %v5907, %v6011
  %v6013 = vpop.f32.mrf.mxu0
  %v6014 = vpop.f32.mrf.mxu0
  %v6015 = vadd.f32 %v5910, %v6014
  %v6016 = vpop.f32.mrf.mxu0
  %6017 = vmatprep.mubr.bf16.mxu0 %v5374
  %6018 = vmatmul.mubr.bf16.gmra.mxu0 %v5373
  %v6019 = vpop.f32.mrf.mxu0
  %v6020 = vadd.f32 %v5915, %v6019
  %v6021 = vpop.f32.mrf.mxu0
  %v6022 = vpop.f32.mrf.mxu0
  %v6023 = vadd.f32 %v5918, %v6022
  %v6024 = vpop.f32.mrf.mxu0
  %6025 = vmatprep.mubr.bf16.mxu0 %v5380
  %6026 = vmatmul.mubr.bf16.gmra.mxu0 %v5379
  %v6027 = vpop.f32.mrf.mxu0
  %v6028 = vadd.f32 %v5923, %v6027
  %v6029 = vpop.f32.mrf.mxu0
  %v6030 = vpop.f32.mrf.mxu0
  %v6031 = vadd.f32 %v5926, %v6030
  %v6032 = vpop.f32.mrf.mxu0
  %6033 = vmatprep.mubr.bf16.mxu0 %v5386
  %6034 = vmatmul.mubr.bf16.gmra.mxu0 %v5385
  %v6035 = vpop.f32.mrf.mxu0
  %v6036 = vadd.f32 %v5931, %v6035
  %v6037 = vpop.f32.mrf.mxu0
  %v6038 = vpop.f32.mrf.mxu0
  %v6039 = vadd.f32 %v5934, %v6038
  %v6040 = vpop.f32.mrf.mxu0
  %6041 = vmatprep.mubr.bf16.mxu0 %v5392
  %6042 = vmatmul.mubr.bf16.gmra.mxu0 %v5391
  %v6043 = vpop.f32.mrf.mxu0
  %v6044 = vadd.f32 %v5939, %v6043
  %v6045 = vpop.f32.mrf.mxu0
  %v6046 = vpop.f32.mrf.mxu0
  %v6047 = vadd.f32 %v5942, %v6046
  %v6048 = vpop.f32.mrf.mxu0
  %6049 = vdwg.mxu0
  %v6050 = vadd.f32 %v4956, %v5980
  %v6051 = vadd.f32 %v4959, %v5983
  %v6052 = vadd.f32 %v4964, %v5988
  %v6053 = vadd.f32 %v4967, %v5991
  %v6054 = vadd.f32 %v4972, %v5996
  %v6055 = vadd.f32 %v4975, %v5999
  %v6056 = vadd.f32 %v4980, %v6004
  %v6057 = vadd.f32 %v4983, %v6007
  %v6058 = vadd.f32 %v4988, %v6012
  %v6059 = vadd.f32 %v4991, %v6015
  %v6060 = vadd.f32 %v4996, %v6020
  %v6061 = vadd.f32 %v4999, %v6023
  %v6062 = vadd.f32 %v5004, %v6028
  %v6063 = vadd.f32 %v5007, %v6031
  %v6064 = vadd.f32 %v5012, %v6036
  %v6065 = vadd.f32 %v5015, %v6039
  %v6066 = vadd.f32 %v5020, %v6044
  %v6067 = vadd.f32 %v5023, %v6047
  %v6069 = vlaneseq
  %v6070 = vshrl.u32 %v6069, 7
  %v6071 = vsub.s32 0, %v6070
  %v6072 = vrot.slane %v1117, %v6071
  %v6074 = vadd.f32 %v6050, %v6072
  %v6075 = vadd.f32 %v6051, %v6072
  %v6076 = vadd.f32 %v6052, %v6072
  %v6077 = vadd.f32 %v6053, %v6072
  %v6078 = vadd.f32 %v6054, %v6072
  %v6079 = vadd.f32 %v6055, %v6072
  %v6080 = vadd.f32 %v6056, %v6072
  %v6081 = vadd.f32 %v6057, %v6072
  %v6082 = vadd.f32 %v6058, %v6072
  %v6083 = vadd.f32 %v6059, %v6072
  %v6084 = vadd.f32 %v6060, %v6072
  %v6085 = vadd.f32 %v6061, %v6072
  %v6086 = vadd.f32 %v6062, %v6072
  %v6087 = vadd.f32 %v6063, %v6072
  %v6088 = vadd.f32 %v6064, %v6072
  %v6089 = vadd.f32 %v6065, %v6072
  %v6090 = vadd.f32 %v6066, %v6072
  %v6091 = vadd.f32 %v6067, %v6072
  %v6092 = vmax.f32 %v6074, 0.0
  %v6093 = vmax.f32 %v6075, 0.0
  %v6094 = vmax.f32 %v6076, 0.0
  %v6095 = vmax.f32 %v6077, 0.0
  %v6096 = vmax.f32 %v6078, 0.0
  %v6097 = vmax.f32 %v6079, 0.0
  %v6098 = vmax.f32 %v6080, 0.0
  %v6099 = vmax.f32 %v6081, 0.0
  %v6100 = vmax.f32 %v6082, 0.0
  %v6101 = vmax.f32 %v6083, 0.0
  %v6102 = vmax.f32 %v6084, 0.0
  %v6103 = vmax.f32 %v6085, 0.0
  %v6104 = vmax.f32 %v6086, 0.0
  %v6105 = vmax.f32 %v6087, 0.0
  %v6106 = vmax.f32 %v6088, 0.0
  %v6107 = vmax.f32 %v6089, 0.0
  %v6108 = vmax.f32 %v6090, 0.0
  %v6109 = vmax.f32 %v6091, 0.0
  %v6110 = vpack.c.bf16 %v6093, %v6092
  %v6111 = vpack.c.bf16 %v6095, %v6094
  %v6112 = vpack.c.bf16 %v6097, %v6096
  %v6113 = vpack.c.bf16 %v6099, %v6098
  %v6114 = vpack.c.bf16 %v6101, %v6100
  %v6115 = vpack.c.bf16 %v6103, %v6102
  %v6116 = vpack.c.bf16 %v6105, %v6104
  %v6117 = vpack.c.bf16 %v6107, %v6106
  %v6118 = vpack.c.bf16 %v6109, %v6108
  %v6119 = vld [vmem:[%s3] sm:$0xff]
  %v6120 = vld [vmem:[%s3 + $0x8] sm:$0xff]
  %v6121 = vld [vmem:[%s3 + $0x10] sm:$0xff]
  %v6122 = vld [vmem:[%s3 + $0x18] sm:$0xff]
  %v6123 = vld [vmem:[%s3 + $0x20] sm:$0xff]
  %v6124 = vld [vmem:[%s3 + $0x28] sm:$0xff]
  %v6125 = vld [vmem:[%s3 + $0x30] sm:$0xff]
  %v6126 = vld [vmem:[%s3 + $0x38] sm:$0xff]
  %v6127 = vld [vmem:[%s3 + $0x40] sm:$0xff]
  %v6128 = vld [vmem:[%s3 + $0x48] sm:$0xff]
  %v6129 = vld [vmem:[%s3 + $0x50] sm:$0xff]
  %v6141 = vunpack.c.l.b16 %v6119
  %v6142 = vunpack.c.h.b16 %v6119
  %v6143 = vunpack.c.l.b16 %v6120
  %v6144 = vunpack.c.h.b16 %v6120
  %v6145 = vunpack.c.l.b16 %v6121
  %v6146 = vunpack.c.h.b16 %v6121
  %v6147 = vunpack.c.l.b16 %v6122
  %v6148 = vunpack.c.h.b16 %v6122
  %v6149 = vunpack.c.l.b16 %v6123
  %v6150 = vunpack.c.h.b16 %v6123
  %v6151 = vunpack.c.l.b16 %v6124
  %v6152 = vunpack.c.h.b16 %v6124
  %v6153 = vunpack.c.l.b16 %v6125
  %v6154 = vunpack.c.h.b16 %v6125
  %v6155 = vunpack.c.l.b16 %v6126
  %v6156 = vunpack.c.h.b16 %v6126
  %v6157 = vunpack.c.l.b16 %v6127
  %v6158 = vunpack.c.h.b16 %v6127
  %v6159 = vunpack.c.l.b16 %v6128
  %v6160 = vunpack.c.h.b16 %v6128
  %v6161 = vunpack.c.l.b16 %v6129
  %v6162 = vunpack.c.h.b16 %v6129
  %v6163 = vpack.c.b16 %v6143, %v6141
  %v6164 = vpack.c.b16 %v6144, %v6142
  %v6165 = vpack.c.b16 %v6147, %v6145
  %v6166 = vpack.c.b16 %v6148, %v6146
  %v6167 = vpack.c.b16 %v6151, %v6149
  %v6168 = vpack.c.b16 %v6152, %v6150
  %v6169 = vpack.c.b16 %v6155, %v6153
  %v6170 = vpack.c.b16 %v6156, %v6154
  %v6171 = vpack.c.b16 %v6159, %v6157
  %v6172 = vpack.c.b16 %v6160, %v6158
  %v6173 = vpack.c.b16 %v6161, %v6161
  %v6174 = vpack.c.b16 %v6162, %v6162
  %vm6181 = vcmask 130048
  %v6183 = vsel %vm6181, %v6164, 0
  %v6186 = vsel %vm6181, %v6166, 0
  %v6189 = vsel %vm6181, %v6168, 0
  %v6192 = vsel %vm6181, %v6170, 0
  %v6195 = vsel %vm6181, %v6172, 0
  %v6198 = vsel %vm6181, %v6174, 0
  %6200 = vmatprep.subr.bf16.mxu0 0
  %6201 = vmatpush1.bf16.msra.mxu0 %v6117
  %6202 = vmatprep.subr.bf16.mxu0 0
  %6203 = vmatpush1.bf16.msra.mxu0 %v6116
  %6204 = vmatprep.subr.bf16.mxu0 0
  %6205 = vmatpush1.bf16.msra.mxu0 %v6115
  %6206 = vmatprep.subr.bf16.mxu0 0
  %6207 = vmatpush1.bf16.msra.mxu0 %v6114
  %6208 = vmatprep.subr.bf16.mxu0 0
  %6209 = vmatpush1.bf16.msra.mxu0 %v6113
  %6210 = vmatprep.subr.bf16.mxu0 0
  %6211 = vmatpush1.bf16.msra.mxu0 %v6112
  %6212 = vmatprep.subr.bf16.mxu0 0
  %6213 = vmatpush1.bf16.msra.mxu0 %v6111
  %6214 = vmatprep.subr.bf16.mxu0 0
  %6215 = vmatpush1.bf16.msra.mxu0 %v6110
  %6216 = vmatprep.subr.bf16.mxu0 0
  %6217 = vmatpush2.bf16.msra.mxu0 0
  %6218 = vmatprep.subr.bf16.mxu0 0
  %6219 = vmatpush2.bf16.msra.mxu0 0
  %6220 = vmatprep.subr.bf16.mxu0 0
  %6221 = vmatpush2.bf16.msra.mxu0 0
  %6222 = vmatprep.subr.bf16.mxu0 0
  %6223 = vmatpush2.bf16.msra.mxu0 0
  %6224 = vmatprep.subr.bf16.mxu0 0
  %6225 = vmatpush2.bf16.msra.mxu0 0
  %6226 = vmatprep.subr.bf16.mxu0 0
  %6227 = vmatpush2.bf16.msra.mxu0 0
  %6228 = vmatprep.subr.bf16.mxu0 0
  %6229 = vmatpush2.bf16.msra.mxu0 0
  %6230 = vmatprep.subr.bf16.mxu0 0
  %6231 = vmatpush2.bf16.msra.mxu0 %v6118
  %6232 = vmatprep.mubr.bf16.mxu0 %v6183
  %6233 = vmatmul.mubr.bf16.gmra.mxu0 %v6163
  %v6234 = vpop.f32.mrf.mxu0
  %v6235 = vadd.f32 0.0, %v6234
  %v6236 = vpop.f32.mrf.mxu0
  %v6237 = vpop.f32.mrf.mxu0
  %v6238 = vadd.f32 0.0, %v6237
  %v6239 = vpop.f32.mrf.mxu0
  %6240 = vmatprep.mubr.bf16.mxu0 %v6186
  %6241 = vmatmul.mubr.bf16.gmra.mxu0 %v6165
  %v6242 = vpop.f32.mrf.mxu0
  %v6243 = vadd.f32 0.0, %v6242
  %v6244 = vpop.f32.mrf.mxu0
  %v6245 = vpop.f32.mrf.mxu0
  %v6246 = vadd.f32 0.0, %v6245
  %v6247 = vpop.f32.mrf.mxu0
  %6248 = vmatprep.mubr.bf16.mxu0 %v6189
  %6249 = vmatmul.mubr.bf16.gmra.mxu0 %v6167
  %v6250 = vpop.f32.mrf.mxu0
  %v6251 = vadd.f32 0.0, %v6250
  %v6252 = vpop.f32.mrf.mxu0
  %v6253 = vpop.f32.mrf.mxu0
  %v6254 = vadd.f32 0.0, %v6253
  %v6255 = vpop.f32.mrf.mxu0
  %6256 = vmatprep.mubr.bf16.mxu0 %v6192
  %6257 = vmatmul.mubr.bf16.gmra.mxu0 %v6169
  %v6258 = vpop.f32.mrf.mxu0
  %v6259 = vadd.f32 0.0, %v6258
  %v6260 = vpop.f32.mrf.mxu0
  %v6261 = vpop.f32.mrf.mxu0
  %v6262 = vadd.f32 0.0, %v6261
  %v6263 = vpop.f32.mrf.mxu0
  %6264 = vmatprep.mubr.bf16.mxu0 %v6195
  %6265 = vmatmul.mubr.bf16.gmra.mxu0 %v6171
  %v6266 = vpop.f32.mrf.mxu0
  %v6267 = vadd.f32 0.0, %v6266
  %v6268 = vpop.f32.mrf.mxu0
  %v6269 = vpop.f32.mrf.mxu0
  %v6270 = vadd.f32 0.0, %v6269
  %v6271 = vpop.f32.mrf.mxu0
  %6272 = vmatprep.mubr.bf16.mxu0 %v6198
  %6273 = vmatmul.mubr.bf16.gmra.mxu0 %v6173
  %v6274 = vpop.f32.mrf.mxu0
  %v6275 = vadd.f32 0.0, %v6274
  %v6276 = vpop.f32.mrf.mxu0
  %v6277 = vpop.f32.mrf.mxu0
  %v6278 = vpop.f32.mrf.mxu0
  %6279 = vdwg.mxu0
  %v6280 = vpack.c.bf16 %v6235, %v6235
  %6281 = vst [vmem:[#allocation3] sm:$0xf] %v6280
  %v6282 = vpack.c.bf16 %v6238, %v6238
  %6283 = vst [vmem:[#allocation3 + $0x4] sm:$0xf] %v6282
  %v6284 = vpack.c.bf16 %v6243, %v6243
  %6285 = vst [vmem:[#allocation3 + $0x8] sm:$0xf] %v6284
  %v6286 = vpack.c.bf16 %v6246, %v6246
  %6287 = vst [vmem:[#allocation3 + $0xc] sm:$0xf] %v6286
  %v6288 = vpack.c.bf16 %v6251, %v6251
  %6289 = vst [vmem:[#allocation3 + $0x10] sm:$0xf] %v6288
  %v6290 = vpack.c.bf16 %v6254, %v6254
  %6291 = vst [vmem:[#allocation3 + $0x14] sm:$0xf] %v6290
  %v6292 = vpack.c.bf16 %v6259, %v6259
  %6293 = vst [vmem:[#allocation3 + $0x18] sm:$0xf] %v6292
  %v6294 = vpack.c.bf16 %v6262, %v6262
  %6295 = vst [vmem:[#allocation3 + $0x1c] sm:$0xf] %v6294
  %v6296 = vpack.c.bf16 %v6267, %v6267
  %6297 = vst [vmem:[#allocation3 + $0x20] sm:$0xf] %v6296
  %v6298 = vpack.c.bf16 %v6270, %v6270
  %6299 = vst [vmem:[#allocation3 + $0x24] sm:$0xf] %v6298
  %v6300 = vpack.c.bf16 %v6275, %v6275
  %6301 = vst [vmem:[#allocation3 + $0x28] sm:$0xf] %v6300
  %v6302 = vld [vmem:[%s6] sm:$0xff]
  %v6303 = vld [vmem:[%s6 + $0x8] sm:$0xff]
  %v6304 = vpack.c.bf16 %v6303, %v6302
  %v6305 = vld [vmem:[%s7] sm:$0xff]
  %v6306 = vld [vmem:[%s7 + $0x8] sm:$0xff]
  %v6307 = vpack.c.bf16 %v6306, %v6305
  %v6308 = vld [vmem:[%s8] sm:$0xff]
  %v6309 = vld [vmem:[%s8 + $0x8] sm:$0xff]
  %v6312 = vunpack.c.l.b16 %v6308
  %v6313 = vunpack.c.h.b16 %v6308
  %v6314 = vunpack.c.l.b16 %v6309
  %v6315 = vunpack.c.h.b16 %v6309
  %v6316 = vpack.c.b16 %v6312, %v6312
  %v6317 = vpack.c.b16 %v6313, %v6313
  %v6318 = vpack.c.b16 %v6314, %v6314
  %v6319 = vpack.c.b16 %v6315, %v6315
  %vm6320 = vcmask 64512
  %v6322 = vsel %vm6320, %v6307, 0
  %vm6324 = vcmask 1043456
  %v6326 = vsel %vm6324, %v6316, 0
  %v6329 = vsel %vm6324, %v6317, 0
  %v6332 = vsel %vm6324, %v6318, 0
  %v6335 = vsel %vm6324, %v6319, 0
  %6337 = vmatprep.subr.bf16.mxu0 0
  %6338 = vmatpush1.bf16.msra.mxu0 0
  %6339 = vmatprep.subr.bf16.mxu0 0
  %6340 = vmatpush1.bf16.msra.mxu0 0
  %6341 = vmatprep.subr.bf16.mxu0 0
  %6342 = vmatpush1.bf16.msra.mxu0 0
  %6343 = vmatprep.subr.bf16.mxu0 0
  %6344 = vmatpush1.bf16.msra.mxu0 0
  %6345 = vmatprep.subr.bf16.mxu0 0
  %6346 = vmatpush1.bf16.msra.mxu0 0
  %6347 = vmatprep.subr.bf16.mxu0 0
  %6348 = vmatpush1.bf16.msra.mxu0 0
  %6349 = vmatprep.subr.bf16.mxu0 0
  %6350 = vmatpush1.bf16.msra.mxu0 0
  %6351 = vmatprep.subr.bf16.mxu0 %v6329
  %6352 = vmatpush1.bf16.msra.mxu0 %v6326
  %6353 = vmatprep.subr.bf16.mxu0 0
  %6354 = vmatpush2.bf16.msra.mxu0 0
  %6355 = vmatprep.subr.bf16.mxu0 0
  %6356 = vmatpush2.bf16.msra.mxu0 0
  %6357 = vmatprep.subr.bf16.mxu0 0
  %6358 = vmatpush2.bf16.msra.mxu0 0
  %6359 = vmatprep.subr.bf16.mxu0 0
  %6360 = vmatpush2.bf16.msra.mxu0 0
  %6361 = vmatprep.subr.bf16.mxu0 0
  %6362 = vmatpush2.bf16.msra.mxu0 0
  %6363 = vmatprep.subr.bf16.mxu0 0
  %6364 = vmatpush2.bf16.msra.mxu0 0
  %6365 = vmatprep.subr.bf16.mxu0 0
  %6366 = vmatpush2.bf16.msra.mxu0 0
  %6367 = vmatprep.subr.bf16.mxu0 0
  %6368 = vmatpush2.bf16.msra.mxu0 0
  %6369 = vmatprep.mubr.bf16.mxu0 0
  %6370 = vmatmul.mubr.bf16.gmra.mxu0 %v6322
  %v6371 = vpop.f32.mrf.mxu0
  %v6372 = vadd.f32 0.0, %v6371
  %v6373 = vpop.f32.mrf.mxu0
  %v6374 = vadd.f32 0.0, %v6373
  %v6375 = vpop.f32.mrf.mxu0
  %v6376 = vadd.f32 0.0, %v6375
  %v6377 = vpop.f32.mrf.mxu0
  %v6378 = vadd.f32 0.0, %v6377
  %6379 = vdwg.mxu0
  %6380 = vmatprep.subr.bf16.mxu0 0
  %6381 = vmatpush1.bf16.msra.mxu0 0
  %6382 = vmatprep.subr.bf16.mxu0 0
  %6383 = vmatpush1.bf16.msra.mxu0 0
  %6384 = vmatprep.subr.bf16.mxu0 0
  %6385 = vmatpush1.bf16.msra.mxu0 0
  %6386 = vmatprep.subr.bf16.mxu0 0
  %6387 = vmatpush1.bf16.msra.mxu0 0
  %6388 = vmatprep.subr.bf16.mxu0 0
  %6389 = vmatpush1.bf16.msra.mxu0 0
  %6390 = vmatprep.subr.bf16.mxu0 0
  %6391 = vmatpush1.bf16.msra.mxu0 0
  %6392 = vmatprep.subr.bf16.mxu0 0
  %6393 = vmatpush1.bf16.msra.mxu0 0
  %6394 = vmatprep.subr.bf16.mxu0 %v6335
  %6395 = vmatpush1.bf16.msra.mxu0 %v6332
  %6396 = vmatprep.subr.bf16.mxu0 0
  %6397 = vmatpush2.bf16.msra.mxu0 0
  %6398 = vmatprep.subr.bf16.mxu0 0
  %6399 = vmatpush2.bf16.msra.mxu0 0
  %6400 = vmatprep.subr.bf16.mxu0 0
  %6401 = vmatpush2.bf16.msra.mxu0 0
  %6402 = vmatprep.subr.bf16.mxu0 0
  %6403 = vmatpush2.bf16.msra.mxu0 0
  %6404 = vmatprep.subr.bf16.mxu0 0
  %6405 = vmatpush2.bf16.msra.mxu0 0
  %6406 = vmatprep.subr.bf16.mxu0 0
  %6407 = vmatpush2.bf16.msra.mxu0 0
  %6408 = vmatprep.subr.bf16.mxu0 0
  %6409 = vmatpush2.bf16.msra.mxu0 0
  %6410 = vmatprep.subr.bf16.mxu0 0
  %6411 = vmatpush2.bf16.msra.mxu0 0
  %6412 = vmatprep.mubr.bf16.mxu0 0
  %6413 = vmatmul.mubr.bf16.gmra.mxu0 %v6322
  %v6414 = vpop.f32.mrf.mxu0
  %v6415 = vadd.f32 0.0, %v6414
  %v6416 = vpop.f32.mrf.mxu0
  %v6417 = vadd.f32 0.0, %v6416
  %v6418 = vpop.f32.mrf.mxu0
  %v6419 = vadd.f32 0.0, %v6418
  %v6420 = vpop.f32.mrf.mxu0
  %v6421 = vadd.f32 0.0, %v6420
  %6422 = vdwg.mxu0
  %v6423 = vpack.c.bf16 %v6376, %v6372
  %v6424 = vpack.c.bf16 %v6378, %v6374
  %v6426 = vsel %vm6181, %v6304, 0
  %6428 = vmatprep.subr.bf16.mxu0 0
  %6429 = vmatpush1.bf16.msra.mxu0 0
  %6430 = vmatprep.subr.bf16.mxu0 0
  %6431 = vmatpush1.bf16.msra.mxu0 0
  %6432 = vmatprep.subr.bf16.mxu0 0
  %6433 = vmatpush1.bf16.msra.mxu0 0
  %6434 = vmatprep.subr.bf16.mxu0 0
  %6435 = vmatpush1.bf16.msra.mxu0 0
  %6436 = vmatprep.subr.bf16.mxu0 0
  %6437 = vmatpush1.bf16.msra.mxu0 0
  %6438 = vmatprep.subr.bf16.mxu0 0
  %6439 = vmatpush1.bf16.msra.mxu0 0
  %6440 = vmatprep.subr.bf16.mxu0 0
  %6441 = vmatpush1.bf16.msra.mxu0 0
  %6442 = vmatprep.subr.bf16.mxu0 %v6424
  %6443 = vmatpush1.bf16.msra.mxu0 %v6423
  %6444 = vmatprep.subr.bf16.mxu0 0
  %6445 = vmatpush2.bf16.msra.mxu0 0
  %6446 = vmatprep.subr.bf16.mxu0 0
  %6447 = vmatpush2.bf16.msra.mxu0 0
  %6448 = vmatprep.subr.bf16.mxu0 0
  %6449 = vmatpush2.bf16.msra.mxu0 0
  %6450 = vmatprep.subr.bf16.mxu0 0
  %6451 = vmatpush2.bf16.msra.mxu0 0
  %6452 = vmatprep.subr.bf16.mxu0 0
  %6453 = vmatpush2.bf16.msra.mxu0 0
  %6454 = vmatprep.subr.bf16.mxu0 0
  %6455 = vmatpush2.bf16.msra.mxu0 0
  %6456 = vmatprep.subr.bf16.mxu0 0
  %6457 = vmatpush2.bf16.msra.mxu0 0
  %6458 = vmatprep.subr.bf16.mxu0 0
  %6459 = vmatpush2.bf16.msra.mxu0 0
  %6460 = vmatprep.mubr.bf16.mxu0 0
  %6461 = vmatmul.mubr.bf16.gmra.mxu0 %v6426
  %v6462 = vpop.f32.mrf.mxu0
  %v6463 = vadd.f32 %v6415, %v6462
  %v6464 = vpop.f32.mrf.mxu0
  %v6465 = vadd.f32 %v6417, %v6464
  %v6466 = vpop.f32.mrf.mxu0
  %v6467 = vadd.f32 %v6419, %v6466
  %v6468 = vpop.f32.mrf.mxu0
  %v6469 = vadd.f32 %v6421, %v6468
  %6470 = vdwg.mxu0
  %v6472 = vlaneseq
  %v6473 = vshrl.u32 %v6472, 7
  %v6474 = vsub.s32 0, %v6473
  %v6475 = vrot.slane %v1119, %v6474
  %v6476 = vlaneseq
  %v6477 = vshrl.u32 %v6476, 7
  %v6478 = vsub.s32 1, %v6477
  %v6479 = vrot.slane %v1119, %v6478
  %v6482 = vadd.f32 %v6463, %v6475
  %v6483 = vadd.f32 %v6465, %v6479
  %v6484 = vadd.f32 %v6467, %v6475
  %v6485 = vadd.f32 %v6469, %v6479
  %v6486 = vmax.f32 %v6482, 0.0
  %v6487 = vmax.f32 %v6483, 0.0
  %v6488 = vmax.f32 %v6484, 0.0
  %v6489 = vmax.f32 %v6485, 0.0
  %v6490 = vpack.c.bf16 %v6488, %v6486
  %v6491 = vpack.c.bf16 %v6489, %v6487
  %v6492 = vld [vmem:[%s9] sm:$0xff]
  %v6493 = vld [vmem:[%s9 + $0x8] sm:$0xff]
  %v6494 = vld [vmem:[%s9 + $0x10] sm:$0xff]
  %v6495 = vld [vmem:[%s9 + $0x18] sm:$0xff]
  %v6496 = vld [vmem:[%s9 + $0x20] sm:$0xff]
  %v6497 = vld [vmem:[%s9 + $0x28] sm:$0xff]
  %v6498 = vld [vmem:[%s9 + $0x30] sm:$0xff]
  %v6499 = vld [vmem:[%s9 + $0x38] sm:$0xff]
  %v6500 = vld [vmem:[%s9 + $0x40] sm:$0xff]
  %v6501 = vld [vmem:[%s9 + $0x48] sm:$0xff]
  %v6502 = vld [vmem:[%s9 + $0x50] sm:$0xff]
  %v6503 = vld [vmem:[%s9 + $0x58] sm:$0xff]
  %v6504 = vld [vmem:[%s9 + $0x60] sm:$0xff]
  %v6505 = vld [vmem:[%s9 + $0x68] sm:$0xff]
  %v6506 = vld [vmem:[%s9 + $0x70] sm:$0xff]
  %v6507 = vld [vmem:[%s9 + $0x78] sm:$0xff]
  %v6508 = vld [vmem:[%s9 + $0x80] sm:$0xff]
  %v6509 = vld [vmem:[%s9 + $0x88] sm:$0xff]
  %v6510 = vld [vmem:[%s9 + $0x90] sm:$0xff]
  %v6511 = vld [vmem:[%s9 + $0x98] sm:$0xff]
  %v6512 = vld [vmem:[%s9 + $0xa0] sm:$0xff]
  %v6513 = vld [vmem:[%s9 + $0xa8] sm:$0xff]
  %v6514 = vld [vmem:[%s9 + $0xb0] sm:$0xff]
  %v6515 = vld [vmem:[%s9 + $0xb8] sm:$0xff]
  %v6516 = vld [vmem:[%s9 + $0xc0] sm:$0xff]
  %v6517 = vld [vmem:[%s9 + $0xc8] sm:$0xff]
  %v6518 = vld [vmem:[%s9 + $0xd0] sm:$0xff]
  %v6519 = vld [vmem:[%s9 + $0xd8] sm:$0xff]
  %v6520 = vld [vmem:[%s9 + $0xe0] sm:$0xff]
  %v6521 = vld [vmem:[%s9 + $0xe8] sm:$0xff]
  %v6522 = vld [vmem:[%s9 + $0xf0] sm:$0xff]
  %v6523 = vld [vmem:[%s9 + $0xf8] sm:$0xff]
  %v6556 = vunpack.c.l.b16 %v6492
  %v6557 = vunpack.c.h.b16 %v6492
  %v6558 = vunpack.c.l.b16 %v6493
  %v6559 = vunpack.c.h.b16 %v6493
  %v6560 = vunpack.c.l.b16 %v6494
  %v6561 = vunpack.c.h.b16 %v6494
  %v6562 = vunpack.c.l.b16 %v6495
  %v6563 = vunpack.c.h.b16 %v6495
  %v6564 = vunpack.c.l.b16 %v6496
  %v6565 = vunpack.c.h.b16 %v6496
  %v6566 = vunpack.c.l.b16 %v6497
  %v6567 = vunpack.c.h.b16 %v6497
  %v6568 = vunpack.c.l.b16 %v6498
  %v6569 = vunpack.c.h.b16 %v6498
  %v6570 = vunpack.c.l.b16 %v6499
  %v6571 = vunpack.c.h.b16 %v6499
  %v6572 = vunpack.c.l.b16 %v6500
  %v6573 = vunpack.c.h.b16 %v6500
  %v6574 = vunpack.c.l.b16 %v6501
  %v6575 = vunpack.c.h.b16 %v6501
  %v6576 = vunpack.c.l.b16 %v6502
  %v6577 = vunpack.c.h.b16 %v6502
  %v6578 = vunpack.c.l.b16 %v6503
  %v6579 = vunpack.c.h.b16 %v6503
  %v6580 = vunpack.c.l.b16 %v6504
  %v6581 = vunpack.c.h.b16 %v6504
  %v6582 = vunpack.c.l.b16 %v6505
  %v6583 = vunpack.c.h.b16 %v6505
  %v6584 = vunpack.c.l.b16 %v6506
  %v6585 = vunpack.c.h.b16 %v6506
  %v6586 = vunpack.c.l.b16 %v6507
  %v6587 = vunpack.c.h.b16 %v6507
  %v6588 = vunpack.c.l.b16 %v6508
  %v6589 = vunpack.c.h.b16 %v6508
  %v6590 = vunpack.c.l.b16 %v6509
  %v6591 = vunpack.c.h.b16 %v6509
  %v6592 = vunpack.c.l.b16 %v6510
  %v6593 = vunpack.c.h.b16 %v6510
  %v6594 = vunpack.c.l.b16 %v6511
  %v6595 = vunpack.c.h.b16 %v6511
  %v6596 = vunpack.c.l.b16 %v6512
  %v6597 = vunpack.c.h.b16 %v6512
  %v6598 = vunpack.c.l.b16 %v6513
  %v6599 = vunpack.c.h.b16 %v6513
  %v6600 = vunpack.c.l.b16 %v6514
  %v6601 = vunpack.c.h.b16 %v6514
  %v6602 = vunpack.c.l.b16 %v6515
  %v6603 = vunpack.c.h.b16 %v6515
  %v6604 = vunpack.c.l.b16 %v6516
  %v6605 = vunpack.c.h.b16 %v6516
  %v6606 = vunpack.c.l.b16 %v6517
  %v6607 = vunpack.c.h.b16 %v6517
  %v6608 = vunpack.c.l.b16 %v6518
  %v6609 = vunpack.c.h.b16 %v6518
  %v6610 = vunpack.c.l.b16 %v6519
  %v6611 = vunpack.c.h.b16 %v6519
  %v6612 = vunpack.c.l.b16 %v6520
  %v6613 = vunpack.c.h.b16 %v6520
  %v6614 = vunpack.c.l.b16 %v6521
  %v6615 = vunpack.c.h.b16 %v6521
  %v6616 = vunpack.c.l.b16 %v6522
  %v6617 = vunpack.c.h.b16 %v6522
  %v6618 = vunpack.c.l.b16 %v6523
  %v6619 = vunpack.c.h.b16 %v6523
  %v6620 = vpack.c.b16 %v6558, %v6556
  %v6621 = vpack.c.b16 %v6559, %v6557
  %v6622 = vpack.c.b16 %v6562, %v6560
  %v6623 = vpack.c.b16 %v6563, %v6561
  %v6624 = vpack.c.b16 %v6566, %v6564
  %v6625 = vpack.c.b16 %v6567, %v6565
  %v6626 = vpack.c.b16 %v6570, %v6568
  %v6627 = vpack.c.b16 %v6571, %v6569
  %v6628 = vpack.c.b16 %v6574, %v6572
  %v6629 = vpack.c.b16 %v6575, %v6573
  %v6630 = vpack.c.b16 %v6578, %v6576
  %v6631 = vpack.c.b16 %v6579, %v6577
  %v6632 = vpack.c.b16 %v6582, %v6580
  %v6633 = vpack.c.b16 %v6583, %v6581
  %v6634 = vpack.c.b16 %v6586, %v6584
  %v6635 = vpack.c.b16 %v6587, %v6585
  %v6636 = vpack.c.b16 %v6590, %v6588
  %v6637 = vpack.c.b16 %v6591, %v6589
  %v6638 = vpack.c.b16 %v6594, %v6592
  %v6639 = vpack.c.b16 %v6595, %v6593
  %v6640 = vpack.c.b16 %v6598, %v6596
  %v6641 = vpack.c.b16 %v6599, %v6597
  %v6642 = vpack.c.b16 %v6602, %v6600
  %v6643 = vpack.c.b16 %v6603, %v6601
  %v6644 = vpack.c.b16 %v6606, %v6604
  %v6645 = vpack.c.b16 %v6607, %v6605
  %v6646 = vpack.c.b16 %v6610, %v6608
  %v6647 = vpack.c.b16 %v6611, %v6609
  %v6648 = vpack.c.b16 %v6614, %v6612
  %v6649 = vpack.c.b16 %v6615, %v6613
  %v6650 = vpack.c.b16 %v6618, %v6616
  %v6651 = vpack.c.b16 %v6619, %v6617
  %6684 = vmatprep.subr.bf16.mxu0 %v6635
  %6685 = vmatpush1.bf16.msra.mxu0 %v6634
  %6686 = vmatprep.subr.bf16.mxu0 %v6633
  %6687 = vmatpush1.bf16.msra.mxu0 %v6632
  %6688 = vmatprep.subr.bf16.mxu0 %v6631
  %6689 = vmatpush1.bf16.msra.mxu0 %v6630
  %6690 = vmatprep.subr.bf16.mxu0 %v6629
  %6691 = vmatpush1.bf16.msra.mxu0 %v6628
  %6692 = vmatprep.subr.bf16.mxu0 %v6627
  %6693 = vmatpush1.bf16.msra.mxu0 %v6626
  %6694 = vmatprep.subr.bf16.mxu0 %v6625
  %6695 = vmatpush1.bf16.msra.mxu0 %v6624
  %6696 = vmatprep.subr.bf16.mxu0 %v6623
  %6697 = vmatpush1.bf16.msra.mxu0 %v6622
  %6698 = vmatprep.subr.bf16.mxu0 %v6621
  %6699 = vmatpush1.bf16.msra.mxu0 %v6620
  %6700 = vmatprep.subr.bf16.mxu0 %v6651
  %6701 = vmatpush2.bf16.msra.mxu0 %v6650
  %6702 = vmatprep.subr.bf16.mxu0 %v6649
  %6703 = vmatpush2.bf16.msra.mxu0 %v6648
  %6704 = vmatprep.subr.bf16.mxu0 %v6647
  %6705 = vmatpush2.bf16.msra.mxu0 %v6646
  %6706 = vmatprep.subr.bf16.mxu0 %v6645
  %6707 = vmatpush2.bf16.msra.mxu0 %v6644
  %6708 = vmatprep.subr.bf16.mxu0 %v6643
  %6709 = vmatpush2.bf16.msra.mxu0 %v6642
  %6710 = vmatprep.subr.bf16.mxu0 %v6641
  %6711 = vmatpush2.bf16.msra.mxu0 %v6640
  %6712 = vmatprep.subr.bf16.mxu0 %v6639
  %6713 = vmatpush2.bf16.msra.mxu0 %v6638
  %6714 = vmatprep.subr.bf16.mxu0 %v6637
  %6715 = vmatpush2.bf16.msra.mxu0 %v6636
  %6716 = vmatprep.mubr.bf16.mxu0 %v6491
  %6717 = vmatmul.mubr.bf16.gmra.mxu0 %v6490
  %v6718 = vpop.f32.mrf.mxu0
  %v6719 = vadd.f32 0.0, %v6718
  %v6720 = vpop.f32.mrf.mxu0
  %v6721 = vadd.f32 0.0, %v6720
  %v6722 = vpop.f32.mrf.mxu0
  %v6723 = vadd.f32 0.0, %v6722
  %v6724 = vpop.f32.mrf.mxu0
  %v6725 = vadd.f32 0.0, %v6724
  %6726 = vdwg.mxu0
  %v6727 = vpack.c.bf16 %v6723, %v6719
  %6728 = vmatprep.subr.bf16.mxu0 0
  %6729 = vmatpush1.bf16.msra.mxu0 0
  %6730 = vmatprep.subr.bf16.mxu0 0
  %6731 = vmatpush1.bf16.msra.mxu0 0
  %6732 = vmatprep.subr.bf16.mxu0 0
  %6733 = vmatpush1.bf16.msra.mxu0 0
  %6734 = vmatprep.subr.bf16.mxu0 0
  %6735 = vmatpush1.bf16.msra.mxu0 0
  %6736 = vmatprep.subr.bf16.mxu0 0
  %6737 = vmatpush1.bf16.msra.mxu0 0
  %6738 = vmatprep.subr.bf16.mxu0 0
  %6739 = vmatpush1.bf16.msra.mxu0 0
  %6740 = vmatprep.subr.bf16.mxu0 0
  %6741 = vmatpush1.bf16.msra.mxu0 0
  %6742 = vmatprep.subr.bf16.mxu0 0
  %6743 = vmatpush1.bf16.msra.mxu0 %v6727
  %6744 = vmatprep.subr.bf16.mxu0 0
  %6745 = vmatpush2.bf16.msra.mxu0 0
  %6746 = vmatprep.subr.bf16.mxu0 0
  %6747 = vmatpush2.bf16.msra.mxu0 0
  %6748 = vmatprep.subr.bf16.mxu0 0
  %6749 = vmatpush2.bf16.msra.mxu0 0
  %6750 = vmatprep.subr.bf16.mxu0 0
  %6751 = vmatpush2.bf16.msra.mxu0 0
  %6752 = vmatprep.subr.bf16.mxu0 0
  %6753 = vmatpush2.bf16.msra.mxu0 0
  %6754 = vmatprep.subr.bf16.mxu0 0
  %6755 = vmatpush2.bf16.msra.mxu0 0
  %6756 = vmatprep.subr.bf16.mxu0 0
  %6757 = vmatpush2.bf16.msra.mxu0 0
  %6758 = vmatprep.subr.bf16.mxu0 0
  %6759 = vmatpush2.bf16.msra.mxu0 0
  %6760 = vmatprep.mubr.bf16.mxu0 0
  %6761 = vmatmul.mubr.bf16.gmra.mxu0 %v6426
  %v6762 = vpop.f32.mrf.mxu0
  %v6763 = vadd.f32 %v6721, %v6762
  %v6764 = vpop.f32.mrf.mxu0
  %v6765 = vpop.f32.mrf.mxu0
  %v6766 = vadd.f32 %v6725, %v6765
  %v6767 = vpop.f32.mrf.mxu0
  %6768 = vdwg.mxu0
  %v6770 = vlaneseq
  %v6771 = vshrl.u32 %v6770, 7
  %v6772 = vsub.s32 0, %v6771
  %v6773 = vrot.slane %v1120, %v6772
  %v6775 = vadd.f32 %v6763, %v6773
  %v6776 = vadd.f32 %v6766, %v6773
  %v6777 = vmax.f32 %v6775, 0.0
  %v6778 = vmax.f32 %v6776, 0.0
  %v6779 = vpack.c.bf16 %v6778, %v6777
  %6780 = vmatprep.subr.bf16.mxu0 0
  %6781 = vmatpush1.bf16.msra.mxu0 0
  %6782 = vmatprep.subr.bf16.mxu0 0
  %6783 = vmatpush1.bf16.msra.mxu0 0
  %6784 = vmatprep.subr.bf16.mxu0 0
  %6785 = vmatpush1.bf16.msra.mxu0 0
  %6786 = vmatprep.subr.bf16.mxu0 0
  %6787 = vmatpush1.bf16.msra.mxu0 0
  %6788 = vmatprep.subr.bf16.mxu0 0
  %6789 = vmatpush1.bf16.msra.mxu0 0
  %6790 = vmatprep.subr.bf16.mxu0 0
  %6791 = vmatpush1.bf16.msra.mxu0 0
  %6792 = vmatprep.subr.bf16.mxu0 0
  %6793 = vmatpush1.bf16.msra.mxu0 0
  %6794 = vmatprep.subr.bf16.mxu0 0
  %6795 = vmatpush1.bf16.msra.mxu0 %v6779
  %6796 = vmatprep.subr.bf16.mxu0 0
  %6797 = vmatpush2.bf16.msra.mxu0 0
  %6798 = vmatprep.subr.bf16.mxu0 0
  %6799 = vmatpush2.bf16.msra.mxu0 0
  %6800 = vmatprep.subr.bf16.mxu0 0
  %6801 = vmatpush2.bf16.msra.mxu0 0
  %6802 = vmatprep.subr.bf16.mxu0 0
  %6803 = vmatpush2.bf16.msra.mxu0 0
  %6804 = vmatprep.subr.bf16.mxu0 0
  %6805 = vmatpush2.bf16.msra.mxu0 0
  %6806 = vmatprep.subr.bf16.mxu0 0
  %6807 = vmatpush2.bf16.msra.mxu0 0
  %6808 = vmatprep.subr.bf16.mxu0 0
  %6809 = vmatpush2.bf16.msra.mxu0 0
  %6810 = vmatprep.subr.bf16.mxu0 0
  %6811 = vmatpush2.bf16.msra.mxu0 0
  %6812 = vmatprep.mubr.bf16.mxu0 0
  %6813 = vmatmul.mubr.bf16.gmra.mxu0 %v6426
  %v6814 = vpop.f32.mrf.mxu0
  %v6815 = vadd.f32 0.0, %v6814
  %v6816 = vpop.f32.mrf.mxu0
  %v6817 = vpop.f32.mrf.mxu0
  %v6818 = vadd.f32 0.0, %v6817
  %v6819 = vpop.f32.mrf.mxu0
  %6820 = vdwg.mxu0
  %v6821 = vpack.c.bf16 %v6818, %v6815
  %v6822 = vld [vmem:[%s10] sm:$0xf]
  %v6823 = vld [vmem:[%s10 + $0x4] sm:$0xf]
  %v6824 = vld [vmem:[%s10 + $0x8] sm:$0xf]
  %v6825 = vld [vmem:[%s10 + $0xc] sm:$0xf]
  %v6826 = vld [vmem:[%s10 + $0x10] sm:$0xf]
  %v6827 = vld [vmem:[%s10 + $0x14] sm:$0xf]
  %v6828 = vld [vmem:[%s10 + $0x18] sm:$0xf]
  %v6829 = vld [vmem:[%s10 + $0x1c] sm:$0xf]
  %v6830 = vld [vmem:[%s10 + $0x20] sm:$0xf]
  %v6831 = vld [vmem:[%s10 + $0x24] sm:$0xf]
  %v6832 = vld [vmem:[%s10 + $0x28] sm:$0xf]
  %v6833 = vld [vmem:[%s10 + $0x2c] sm:$0xf]
  %v6834 = vld [vmem:[%s10 + $0x30] sm:$0xf]
  %v6835 = vld [vmem:[%s10 + $0x34] sm:$0xf]
  %v6836 = vld [vmem:[%s10 + $0x38] sm:$0xf]
  %v6837 = vld [vmem:[%s10 + $0x3c] sm:$0xf]
  %v6838 = vld [vmem:[%s10 + $0x40] sm:$0xf]
  %v6839 = vld [vmem:[%s10 + $0x44] sm:$0xf]
  %v6840 = vld [vmem:[%s10 + $0x48] sm:$0xf]
  %v6841 = vld [vmem:[%s10 + $0x4c] sm:$0xf]
  %v6842 = vld [vmem:[%s10 + $0x50] sm:$0xf]
  %v6843 = vld [vmem:[%s10 + $0x54] sm:$0xf]
  %v6844 = vld [vmem:[%s10 + $0x58] sm:$0xf]
  %v6845 = vld [vmem:[%s10 + $0x5c] sm:$0xf]
  %v6846 = vld [vmem:[%s10 + $0x60] sm:$0xf]
  %v6847 = vld [vmem:[%s10 + $0x64] sm:$0xf]
  %v6848 = vld [vmem:[%s10 + $0x68] sm:$0xf]
  %v6849 = vld [vmem:[%s10 + $0x6c] sm:$0xf]
  %v6850 = vld [vmem:[%s10 + $0x70] sm:$0xf]
  %v6851 = vld [vmem:[%s10 + $0x74] sm:$0xf]
  %v6852 = vld [vmem:[%s10 + $0x78] sm:$0xf]
  %v6853 = vld [vmem:[%s10 + $0x7c] sm:$0xf]
  %v6855 = vlaneseq
  %v6856 = vshrl.u32 %v6855, 7
  %v6857 = vsub.s32 0, %v6856
  %v6858 = vrot.slane %v1121, %v6857
  %v6892 = vunpack.c.l.b16 %v6822
  %v6893 = vunpack.c.l.b16 %v6823
  %v6894 = vunpack.c.l.b16 %v6824
  %v6895 = vunpack.c.l.b16 %v6825
  %v6896 = vunpack.c.l.b16 %v6826
  %v6897 = vunpack.c.l.b16 %v6827
  %v6898 = vunpack.c.l.b16 %v6828
  %v6899 = vunpack.c.l.b16 %v6829
  %v6900 = vunpack.c.l.b16 %v6830
  %v6901 = vunpack.c.l.b16 %v6831
  %v6902 = vunpack.c.l.b16 %v6832
  %v6903 = vunpack.c.l.b16 %v6833
  %v6904 = vunpack.c.l.b16 %v6834
  %v6905 = vunpack.c.l.b16 %v6835
  %v6906 = vunpack.c.l.b16 %v6836
  %v6907 = vunpack.c.l.b16 %v6837
  %v6908 = vunpack.c.l.b16 %v6838
  %v6909 = vunpack.c.l.b16 %v6839
  %v6910 = vunpack.c.l.b16 %v6840
  %v6911 = vunpack.c.l.b16 %v6841
  %v6912 = vunpack.c.l.b16 %v6842
  %v6913 = vunpack.c.l.b16 %v6843
  %v6914 = vunpack.c.l.b16 %v6844
  %v6915 = vunpack.c.l.b16 %v6845
  %v6916 = vunpack.c.l.b16 %v6846
  %v6917 = vunpack.c.l.b16 %v6847
  %v6918 = vunpack.c.l.b16 %v6848
  %v6919 = vunpack.c.l.b16 %v6849
  %v6920 = vunpack.c.l.b16 %v6850
  %v6921 = vunpack.c.l.b16 %v6851
  %v6922 = vunpack.c.l.b16 %v6852
  %v6923 = vunpack.c.l.b16 %v6853
  %v6924 = vpack.c.b16 %v6893, %v6892
  %v6925 = vpack.c.b16 %v6895, %v6894
  %v6926 = vpack.c.b16 %v6897, %v6896
  %v6927 = vpack.c.b16 %v6899, %v6898
  %v6928 = vpack.c.b16 %v6901, %v6900
  %v6929 = vpack.c.b16 %v6903, %v6902
  %v6930 = vpack.c.b16 %v6905, %v6904
  %v6931 = vpack.c.b16 %v6907, %v6906
  %v6932 = vpack.c.b16 %v6909, %v6908
  %v6933 = vpack.c.b16 %v6911, %v6910
  %v6934 = vpack.c.b16 %v6913, %v6912
  %v6935 = vpack.c.b16 %v6915, %v6914
  %v6936 = vpack.c.b16 %v6917, %v6916
  %v6937 = vpack.c.b16 %v6919, %v6918
  %v6938 = vpack.c.b16 %v6921, %v6920
  %v6939 = vpack.c.b16 %v6923, %v6922
  %6956 = vmatprep.subr.bf16.mxu0 0
  %6957 = vmatpush1.bf16.msra.mxu0 %v6931
  %6958 = vmatprep.subr.bf16.mxu0 0
  %6959 = vmatpush1.bf16.msra.mxu0 %v6930
  %6960 = vmatprep.subr.bf16.mxu0 0
  %6961 = vmatpush1.bf16.msra.mxu0 %v6929
  %6962 = vmatprep.subr.bf16.mxu0 0
  %6963 = vmatpush1.bf16.msra.mxu0 %v6928
  %6964 = vmatprep.subr.bf16.mxu0 0
  %6965 = vmatpush1.bf16.msra.mxu0 %v6927
  %6966 = vmatprep.subr.bf16.mxu0 0
  %6967 = vmatpush1.bf16.msra.mxu0 %v6926
  %6968 = vmatprep.subr.bf16.mxu0 0
  %6969 = vmatpush1.bf16.msra.mxu0 %v6925
  %6970 = vmatprep.subr.bf16.mxu0 0
  %6971 = vmatpush1.bf16.msra.mxu0 %v6924
  %6972 = vmatprep.subr.bf16.mxu0 0
  %6973 = vmatpush2.bf16.msra.mxu0 %v6939
  %6974 = vmatprep.subr.bf16.mxu0 0
  %6975 = vmatpush2.bf16.msra.mxu0 %v6938
  %6976 = vmatprep.subr.bf16.mxu0 0
  %6977 = vmatpush2.bf16.msra.mxu0 %v6937
  %6978 = vmatprep.subr.bf16.mxu0 0
  %6979 = vmatpush2.bf16.msra.mxu0 %v6936
  %6980 = vmatprep.subr.bf16.mxu0 0
  %6981 = vmatpush2.bf16.msra.mxu0 %v6935
  %6982 = vmatprep.subr.bf16.mxu0 0
  %6983 = vmatpush2.bf16.msra.mxu0 %v6934
  %6984 = vmatprep.subr.bf16.mxu0 0
  %6985 = vmatpush2.bf16.msra.mxu0 %v6933
  %6986 = vmatprep.subr.bf16.mxu0 0
  %6987 = vmatpush2.bf16.msra.mxu0 %v6932
  %6988 = vmatprep.mubr.bf16.mxu0 %v6779
  %6989 = vmatmul.mubr.bf16.gmra.mxu0 %v6821
  %v6990 = vpop.f32.mrf.mxu0
  %v6991 = vadd.f32 %v6858, %v6990
  %v6992 = vpop.f32.mrf.mxu0
  %v6993 = vpop.f32.mrf.mxu0
  %v6994 = vadd.f32 %v6858, %v6993
  %v6995 = vpop.f32.mrf.mxu0
  %6996 = vdwg.mxu0
  %s6997 = smul.u32 4, 176
  %s6998 = smul.u32 %s6997, 4
  %s6999 = sshll.u32 %s6998, 4
  %7000 = dma.done %s370, %s6999
  %v7001 = vld [vmem:[#allocation3] sm:$0xff]
  %v7002 = vld [vmem:[#allocation3 + $0x8] sm:$0xff]
  %v7003 = vld [vmem:[#allocation3 + $0x10] sm:$0xff]
  %v7004 = vld [vmem:[#allocation3 + $0x18] sm:$0xff]
  %v7005 = vld [vmem:[#allocation3 + $0x20] sm:$0xff]
  %v7006 = vld [vmem:[#allocation3 + $0x28] sm:$0xf]
  %v7007 = vld [vmem:[#allocation5] sm:$0xff]
  %v7008 = vld [vmem:[#allocation5 + $0x8] sm:$0xff]
  %v7009 = vld [vmem:[#allocation5 + $0x10] sm:$0xff]
  %v7010 = vld [vmem:[#allocation5 + $0x18] sm:$0xff]
  %v7011 = vld [vmem:[#allocation5 + $0x20] sm:$0xff]
  %v7012 = vld [vmem:[#allocation5 + $0x28] sm:$0xff]
  %v7013 = vld [vmem:[#allocation5 + $0x30] sm:$0xff]
  %v7014 = vld [vmem:[#allocation5 + $0x38] sm:$0xff]
  %v7015 = vld [vmem:[#allocation5 + $0x40] sm:$0xff]
  %v7016 = vld [vmem:[#allocation5 + $0x48] sm:$0xff]
  %v7017 = vld [vmem:[#allocation5 + $0x50] sm:$0xff]
  %v7018 = vld [vmem:[#allocation5 + $0x58] sm:$0xff]
  %v7019 = vld [vmem:[#allocation5 + $0x60] sm:$0xff]
  %v7020 = vld [vmem:[#allocation5 + $0x68] sm:$0xff]
  %v7021 = vld [vmem:[#allocation5 + $0x70] sm:$0xff]
  %v7022 = vld [vmem:[#allocation5 + $0x78] sm:$0xff]
  %v7023 = vld [vmem:[#allocation5 + $0x80] sm:$0xff]
  %v7024 = vld [vmem:[#allocation5 + $0x88] sm:$0xff]
  %v7025 = vld [vmem:[#allocation5 + $0x90] sm:$0xff]
  %v7026 = vld [vmem:[#allocation5 + $0x98] sm:$0xff]
  %v7027 = vld [vmem:[#allocation5 + $0xa0] sm:$0xff]
  %v7028 = vld [vmem:[#allocation5 + $0xa8] sm:$0xff]
  %v7029 = vld [vmem:[#allocation5 + $0xb0] sm:$0xff]
  %v7030 = vld [vmem:[#allocation5 + $0xb8] sm:$0xff]
  %v7031 = vld [vmem:[#allocation5 + $0xc0] sm:$0xff]
  %v7032 = vld [vmem:[#allocation5 + $0xc8] sm:$0xff]
  %v7033 = vld [vmem:[#allocation5 + $0xd0] sm:$0xff]
  %v7034 = vld [vmem:[#allocation5 + $0xd8] sm:$0xff]
  %v7035 = vld [vmem:[#allocation5 + $0xe0] sm:$0xff]
  %v7036 = vld [vmem:[#allocation5 + $0xe8] sm:$0xff]
  %v7037 = vld [vmem:[#allocation5 + $0xf0] sm:$0xff]
  %v7038 = vld [vmem:[#allocation5 + $0xf8] sm:$0xff]
  %v7039 = vld [vmem:[#allocation5 + $0x100] sm:$0xff]
  %v7040 = vld [vmem:[#allocation5 + $0x108] sm:$0xff]
  %v7041 = vld [vmem:[#allocation5 + $0x110] sm:$0xff]
  %v7042 = vld [vmem:[#allocation5 + $0x118] sm:$0xff]
  %v7043 = vld [vmem:[#allocation5 + $0x120] sm:$0xff]
  %v7044 = vld [vmem:[#allocation5 + $0x128] sm:$0xff]
  %v7045 = vld [vmem:[#allocation5 + $0x130] sm:$0xff]
  %v7046 = vld [vmem:[#allocation5 + $0x138] sm:$0xff]
  %v7047 = vld [vmem:[#allocation5 + $0x140] sm:$0xff]
  %v7048 = vld [vmem:[#allocation5 + $0x148] sm:$0xff]
  %v7049 = vld [vmem:[#allocation5 + $0x150] sm:$0xff]
  %v7050 = vld [vmem:[#allocation5 + $0x158] sm:$0xff]
  %v7051 = vld [vmem:[#allocation5 + $0x160] sm:$0xff]
  %v7052 = vld [vmem:[#allocation5 + $0x168] sm:$0xff]
  %v7053 = vld [vmem:[#allocation5 + $0x170] sm:$0xff]
  %v7054 = vld [vmem:[#allocation5 + $0x178] sm:$0xff]
  %v7055 = vld [vmem:[#allocation5 + $0x180] sm:$0xff]
  %v7056 = vld [vmem:[#allocation5 + $0x188] sm:$0xff]
  %v7057 = vld [vmem:[#allocation5 + $0x190] sm:$0xff]
  %v7058 = vld [vmem:[#allocation5 + $0x198] sm:$0xff]
  %v7059 = vld [vmem:[#allocation5 + $0x1a0] sm:$0xff]
  %v7060 = vld [vmem:[#allocation5 + $0x1a8] sm:$0xff]
  %v7061 = vld [vmem:[#allocation5 + $0x1b0] sm:$0xff]
  %v7062 = vld [vmem:[#allocation5 + $0x1b8] sm:$0xff]
  %v7063 = vld [vmem:[#allocation5 + $0x1c0] sm:$0xff]
  %v7064 = vld [vmem:[#allocation5 + $0x1c8] sm:$0xff]
  %v7065 = vld [vmem:[#allocation5 + $0x1d0] sm:$0xff]
  %v7066 = vld [vmem:[#allocation5 + $0x1d8] sm:$0xff]
  %v7067 = vld [vmem:[#allocation5 + $0x1e0] sm:$0xff]
  %v7068 = vld [vmem:[#allocation5 + $0x1e8] sm:$0xff]
  %v7069 = vld [vmem:[#allocation5 + $0x1f0] sm:$0xff]
  %v7070 = vld [vmem:[#allocation5 + $0x1f8] sm:$0xff]
  %v7071 = vld [vmem:[#allocation5 + $0x200] sm:$0xff]
  %v7072 = vld [vmem:[#allocation5 + $0x208] sm:$0xff]
  %v7073 = vld [vmem:[#allocation5 + $0x210] sm:$0xff]
  %v7074 = vld [vmem:[#allocation5 + $0x218] sm:$0xff]
  %v7075 = vld [vmem:[#allocation5 + $0x220] sm:$0xff]
  %v7076 = vld [vmem:[#allocation5 + $0x228] sm:$0xff]
  %v7077 = vld [vmem:[#allocation5 + $0x230] sm:$0xff]
  %v7078 = vld [vmem:[#allocation5 + $0x238] sm:$0xff]
  %v7079 = vld [vmem:[#allocation5 + $0x240] sm:$0xff]
  %v7080 = vld [vmem:[#allocation5 + $0x248] sm:$0xff]
  %v7081 = vld [vmem:[#allocation5 + $0x250] sm:$0xff]
  %v7082 = vld [vmem:[#allocation5 + $0x258] sm:$0xff]
  %v7083 = vld [vmem:[#allocation5 + $0x260] sm:$0xff]
  %v7084 = vld [vmem:[#allocation5 + $0x268] sm:$0xff]
  %v7085 = vld [vmem:[#allocation5 + $0x270] sm:$0xff]
  %v7086 = vld [vmem:[#allocation5 + $0x278] sm:$0xff]
  %v7087 = vld [vmem:[#allocation5 + $0x280] sm:$0xff]
  %v7088 = vld [vmem:[#allocation5 + $0x288] sm:$0xff]
  %v7089 = vld [vmem:[#allocation5 + $0x290] sm:$0xff]
  %v7090 = vld [vmem:[#allocation5 + $0x298] sm:$0xff]
  %v7091 = vld [vmem:[#allocation5 + $0x2a0] sm:$0xff]
  %v7092 = vld [vmem:[#allocation5 + $0x2a8] sm:$0xff]
  %v7093 = vld [vmem:[#allocation5 + $0x2b0] sm:$0xff]
  %v7094 = vld [vmem:[#allocation5 + $0x2b8] sm:$0xff]
  %v7095 = vld [vmem:[#allocation5 + $0x2c0] sm:$0xff]
  %v7096 = vld [vmem:[#allocation5 + $0x2c8] sm:$0xff]
  %v7097 = vld [vmem:[#allocation5 + $0x2d0] sm:$0xff]
  %v7098 = vld [vmem:[#allocation5 + $0x2d8] sm:$0xff]
  %v7099 = vld [vmem:[#allocation5 + $0x2e0] sm:$0xff]
  %v7100 = vld [vmem:[#allocation5 + $0x2e8] sm:$0xff]
  %v7101 = vld [vmem:[#allocation5 + $0x2f0] sm:$0xff]
  %v7102 = vld [vmem:[#allocation5 + $0x2f8] sm:$0xff]
  %v7103 = vld [vmem:[#allocation5 + $0x300] sm:$0xff]
  %v7104 = vld [vmem:[#allocation5 + $0x308] sm:$0xff]
  %v7105 = vld [vmem:[#allocation5 + $0x310] sm:$0xff]
  %v7106 = vld [vmem:[#allocation5 + $0x318] sm:$0xff]
  %v7107 = vld [vmem:[#allocation5 + $0x320] sm:$0xff]
  %v7108 = vld [vmem:[#allocation5 + $0x328] sm:$0xff]
  %v7109 = vld [vmem:[#allocation5 + $0x330] sm:$0xff]
  %v7110 = vld [vmem:[#allocation5 + $0x338] sm:$0xff]
  %v7111 = vld [vmem:[#allocation5 + $0x340] sm:$0xff]
  %v7112 = vld [vmem:[#allocation5 + $0x348] sm:$0xff]
  %v7113 = vld [vmem:[#allocation5 + $0x350] sm:$0xff]
  %v7114 = vld [vmem:[#allocation5 + $0x358] sm:$0xff]
  %v7115 = vld [vmem:[#allocation5 + $0x360] sm:$0xff]
  %v7116 = vld [vmem:[#allocation5 + $0x368] sm:$0xff]
  %v7117 = vld [vmem:[#allocation5 + $0x370] sm:$0xff]
  %v7118 = vld [vmem:[#allocation5 + $0x378] sm:$0xff]
  %v7119 = vld [vmem:[#allocation5 + $0x380] sm:$0xff]
  %v7120 = vld [vmem:[#allocation5 + $0x388] sm:$0xff]
  %v7121 = vld [vmem:[#allocation5 + $0x390] sm:$0xff]
  %v7122 = vld [vmem:[#allocation5 + $0x398] sm:$0xff]
  %v7123 = vld [vmem:[#allocation5 + $0x3a0] sm:$0xff]
  %v7124 = vld [vmem:[#allocation5 + $0x3a8] sm:$0xff]
  %v7125 = vld [vmem:[#allocation5 + $0x3b0] sm:$0xff]
  %v7126 = vld [vmem:[#allocation5 + $0x3b8] sm:$0xff]
  %v7127 = vld [vmem:[#allocation5 + $0x3c0] sm:$0xff]
  %v7128 = vld [vmem:[#allocation5 + $0x3c8] sm:$0xff]
  %v7129 = vld [vmem:[#allocation5 + $0x3d0] sm:$0xff]
  %v7130 = vld [vmem:[#allocation5 + $0x3d8] sm:$0xff]
  %v7131 = vld [vmem:[#allocation5 + $0x3e0] sm:$0xff]
  %v7132 = vld [vmem:[#allocation5 + $0x3e8] sm:$0xff]
  %v7133 = vld [vmem:[#allocation5 + $0x3f0] sm:$0xff]
  %v7134 = vld [vmem:[#allocation5 + $0x3f8] sm:$0xff]
  %v7135 = vld [vmem:[#allocation5 + $0x400] sm:$0xff]
  %v7136 = vld [vmem:[#allocation5 + $0x408] sm:$0xff]
  %v7137 = vld [vmem:[#allocation5 + $0x410] sm:$0xff]
  %v7138 = vld [vmem:[#allocation5 + $0x418] sm:$0xff]
  %v7139 = vld [vmem:[#allocation5 + $0x420] sm:$0xff]
  %v7140 = vld [vmem:[#allocation5 + $0x428] sm:$0xff]
  %v7141 = vld [vmem:[#allocation5 + $0x430] sm:$0xff]
  %v7142 = vld [vmem:[#allocation5 + $0x438] sm:$0xff]
  %v7143 = vld [vmem:[#allocation5 + $0x440] sm:$0xff]
  %v7144 = vld [vmem:[#allocation5 + $0x448] sm:$0xff]
  %v7145 = vld [vmem:[#allocation5 + $0x450] sm:$0xff]
  %v7146 = vld [vmem:[#allocation5 + $0x458] sm:$0xff]
  %v7147 = vld [vmem:[#allocation5 + $0x460] sm:$0xff]
  %v7148 = vld [vmem:[#allocation5 + $0x468] sm:$0xff]
  %v7149 = vld [vmem:[#allocation5 + $0x470] sm:$0xff]
  %v7150 = vld [vmem:[#allocation5 + $0x478] sm:$0xff]
  %v7151 = vld [vmem:[#allocation5 + $0x480] sm:$0xff]
  %v7152 = vld [vmem:[#allocation5 + $0x488] sm:$0xff]
  %v7153 = vld [vmem:[#allocation5 + $0x490] sm:$0xff]
  %v7154 = vld [vmem:[#allocation5 + $0x498] sm:$0xff]
  %v7155 = vld [vmem:[#allocation5 + $0x4a0] sm:$0xff]
  %v7156 = vld [vmem:[#allocation5 + $0x4a8] sm:$0xff]
  %v7157 = vld [vmem:[#allocation5 + $0x4b0] sm:$0xff]
  %v7158 = vld [vmem:[#allocation5 + $0x4b8] sm:$0xff]
  %v7159 = vld [vmem:[#allocation5 + $0x4c0] sm:$0xff]
  %v7160 = vld [vmem:[#allocation5 + $0x4c8] sm:$0xff]
  %v7161 = vld [vmem:[#allocation5 + $0x4d0] sm:$0xff]
  %v7162 = vld [vmem:[#allocation5 + $0x4d8] sm:$0xff]
  %v7163 = vld [vmem:[#allocation5 + $0x4e0] sm:$0xff]
  %v7164 = vld [vmem:[#allocation5 + $0x4e8] sm:$0xff]
  %v7165 = vld [vmem:[#allocation5 + $0x4f0] sm:$0xff]
  %v7166 = vld [vmem:[#allocation5 + $0x4f8] sm:$0xff]
  %v7167 = vld [vmem:[#allocation5 + $0x500] sm:$0xff]
  %v7168 = vld [vmem:[#allocation5 + $0x508] sm:$0xff]
  %v7169 = vld [vmem:[#allocation5 + $0x510] sm:$0xff]
  %v7170 = vld [vmem:[#allocation5 + $0x518] sm:$0xff]
  %v7171 = vld [vmem:[#allocation5 + $0x520] sm:$0xff]
  %v7172 = vld [vmem:[#allocation5 + $0x528] sm:$0xff]
  %v7173 = vld [vmem:[#allocation5 + $0x530] sm:$0xff]
  %v7174 = vld [vmem:[#allocation5 + $0x538] sm:$0xff]
  %v7175 = vld [vmem:[#allocation5 + $0x540] sm:$0xff]
  %v7176 = vld [vmem:[#allocation5 + $0x548] sm:$0xff]
  %v7177 = vld [vmem:[#allocation5 + $0x550] sm:$0xff]
  %v7178 = vld [vmem:[#allocation5 + $0x558] sm:$0xff]
  %v7179 = vld [vmem:[#allocation5 + $0x560] sm:$0xff]
  %v7180 = vld [vmem:[#allocation5 + $0x568] sm:$0xff]
  %v7181 = vld [vmem:[#allocation5 + $0x570] sm:$0xff]
  %v7182 = vld [vmem:[#allocation5 + $0x578] sm:$0xff]
  %v7183 = vld [vmem:[#allocation5 + $0x580] sm:$0xff]
  %v7184 = vld [vmem:[#allocation5 + $0x588] sm:$0xff]
  %v7185 = vld [vmem:[#allocation5 + $0x590] sm:$0xff]
  %v7186 = vld [vmem:[#allocation5 + $0x598] sm:$0xff]
  %v7187 = vld [vmem:[#allocation5 + $0x5a0] sm:$0xff]
  %v7188 = vld [vmem:[#allocation5 + $0x5a8] sm:$0xff]
  %v7189 = vld [vmem:[#allocation5 + $0x5b0] sm:$0xff]
  %v7190 = vld [vmem:[#allocation5 + $0x5b8] sm:$0xff]
  %v7191 = vld [vmem:[#allocation5 + $0x5c0] sm:$0xff]
  %v7192 = vld [vmem:[#allocation5 + $0x5c8] sm:$0xff]
  %v7193 = vld [vmem:[#allocation5 + $0x5d0] sm:$0xff]
  %v7194 = vld [vmem:[#allocation5 + $0x5d8] sm:$0xff]
  %v7195 = vld [vmem:[#allocation5 + $0x5e0] sm:$0xff]
  %v7196 = vld [vmem:[#allocation5 + $0x5e8] sm:$0xff]
  %v7197 = vld [vmem:[#allocation5 + $0x5f0] sm:$0xff]
  %v7198 = vld [vmem:[#allocation5 + $0x5f8] sm:$0xff]
  %v7199 = vld [vmem:[#allocation5 + $0x600] sm:$0xff]
  %v7200 = vld [vmem:[#allocation5 + $0x608] sm:$0xff]
  %v7201 = vld [vmem:[#allocation5 + $0x610] sm:$0xff]
  %v7202 = vld [vmem:[#allocation5 + $0x618] sm:$0xff]
  %v7203 = vld [vmem:[#allocation5 + $0x620] sm:$0xff]
  %v7204 = vld [vmem:[#allocation5 + $0x628] sm:$0xff]
  %v7205 = vld [vmem:[#allocation5 + $0x630] sm:$0xff]
  %v7206 = vld [vmem:[#allocation5 + $0x638] sm:$0xff]
  %v7207 = vld [vmem:[#allocation5 + $0x640] sm:$0xff]
  %v7208 = vld [vmem:[#allocation5 + $0x648] sm:$0xff]
  %v7209 = vld [vmem:[#allocation5 + $0x650] sm:$0xff]
  %v7210 = vld [vmem:[#allocation5 + $0x658] sm:$0xff]
  %v7211 = vld [vmem:[#allocation5 + $0x660] sm:$0xff]
  %v7212 = vld [vmem:[#allocation5 + $0x668] sm:$0xff]
  %v7213 = vld [vmem:[#allocation5 + $0x670] sm:$0xff]
  %v7214 = vld [vmem:[#allocation5 + $0x678] sm:$0xff]
  %v7215 = vld [vmem:[#allocation5 + $0x680] sm:$0xff]
  %v7216 = vld [vmem:[#allocation5 + $0x688] sm:$0xff]
  %v7217 = vld [vmem:[#allocation5 + $0x690] sm:$0xff]
  %v7218 = vld [vmem:[#allocation5 + $0x698] sm:$0xff]
  %v7219 = vld [vmem:[#allocation5 + $0x6a0] sm:$0xff]
  %v7220 = vld [vmem:[#allocation5 + $0x6a8] sm:$0xff]
  %v7221 = vld [vmem:[#allocation5 + $0x6b0] sm:$0xff]
  %v7222 = vld [vmem:[#allocation5 + $0x6b8] sm:$0xff]
  %v7223 = vld [vmem:[#allocation5 + $0x6c0] sm:$0xff]
  %v7224 = vld [vmem:[#allocation5 + $0x6c8] sm:$0xff]
  %v7225 = vld [vmem:[#allocation5 + $0x6d0] sm:$0xff]
  %v7226 = vld [vmem:[#allocation5 + $0x6d8] sm:$0xff]
  %v7227 = vld [vmem:[#allocation5 + $0x6e0] sm:$0xff]
  %v7228 = vld [vmem:[#allocation5 + $0x6e8] sm:$0xff]
  %v7229 = vld [vmem:[#allocation5 + $0x6f0] sm:$0xff]
  %v7230 = vld [vmem:[#allocation5 + $0x6f8] sm:$0xff]
  %v7231 = vld [vmem:[#allocation5 + $0x700] sm:$0xff]
  %v7232 = vld [vmem:[#allocation5 + $0x708] sm:$0xff]
  %v7233 = vld [vmem:[#allocation5 + $0x710] sm:$0xff]
  %v7234 = vld [vmem:[#allocation5 + $0x718] sm:$0xff]
  %v7235 = vld [vmem:[#allocation5 + $0x720] sm:$0xff]
  %v7236 = vld [vmem:[#allocation5 + $0x728] sm:$0xff]
  %v7237 = vld [vmem:[#allocation5 + $0x730] sm:$0xff]
  %v7238 = vld [vmem:[#allocation5 + $0x738] sm:$0xff]
  %v7239 = vld [vmem:[#allocation5 + $0x740] sm:$0xff]
  %v7240 = vld [vmem:[#allocation5 + $0x748] sm:$0xff]
  %v7241 = vld [vmem:[#allocation5 + $0x750] sm:$0xff]
  %v7242 = vld [vmem:[#allocation5 + $0x758] sm:$0xff]
  %v7243 = vld [vmem:[#allocation5 + $0x760] sm:$0xff]
  %v7244 = vld [vmem:[#allocation5 + $0x768] sm:$0xff]
  %v7245 = vld [vmem:[#allocation5 + $0x770] sm:$0xff]
  %v7246 = vld [vmem:[#allocation5 + $0x778] sm:$0xff]
  %v7247 = vld [vmem:[#allocation5 + $0x780] sm:$0xff]
  %v7248 = vld [vmem:[#allocation5 + $0x788] sm:$0xff]
  %v7249 = vld [vmem:[#allocation5 + $0x790] sm:$0xff]
  %v7250 = vld [vmem:[#allocation5 + $0x798] sm:$0xff]
  %v7251 = vld [vmem:[#allocation5 + $0x7a0] sm:$0xff]
  %v7252 = vld [vmem:[#allocation5 + $0x7a8] sm:$0xff]
  %v7253 = vld [vmem:[#allocation5 + $0x7b0] sm:$0xff]
  %v7254 = vld [vmem:[#allocation5 + $0x7b8] sm:$0xff]
  %v7255 = vld [vmem:[#allocation5 + $0x7c0] sm:$0xff]
  %v7256 = vld [vmem:[#allocation5 + $0x7c8] sm:$0xff]
  %v7257 = vld [vmem:[#allocation5 + $0x7d0] sm:$0xff]
  %v7258 = vld [vmem:[#allocation5 + $0x7d8] sm:$0xff]
  %v7259 = vld [vmem:[#allocation5 + $0x7e0] sm:$0xff]
  %v7260 = vld [vmem:[#allocation5 + $0x7e8] sm:$0xff]
  %v7261 = vld [vmem:[#allocation5 + $0x7f0] sm:$0xff]
  %v7262 = vld [vmem:[#allocation5 + $0x7f8] sm:$0xff]
  %v7263 = vld [vmem:[#allocation5 + $0x800] sm:$0xff]
  %v7264 = vld [vmem:[#allocation5 + $0x808] sm:$0xff]
  %v7265 = vld [vmem:[#allocation5 + $0x810] sm:$0xff]
  %v7266 = vld [vmem:[#allocation5 + $0x818] sm:$0xff]
  %v7267 = vld [vmem:[#allocation5 + $0x820] sm:$0xff]
  %v7268 = vld [vmem:[#allocation5 + $0x828] sm:$0xff]
  %v7269 = vld [vmem:[#allocation5 + $0x830] sm:$0xff]
  %v7270 = vld [vmem:[#allocation5 + $0x838] sm:$0xff]
  %v7271 = vld [vmem:[#allocation5 + $0x840] sm:$0xff]
  %v7272 = vld [vmem:[#allocation5 + $0x848] sm:$0xff]
  %v7273 = vld [vmem:[#allocation5 + $0x850] sm:$0xff]
  %v7274 = vld [vmem:[#allocation5 + $0x858] sm:$0xff]
  %v7275 = vld [vmem:[#allocation5 + $0x860] sm:$0xff]
  %v7276 = vld [vmem:[#allocation5 + $0x868] sm:$0xff]
  %v7277 = vld [vmem:[#allocation5 + $0x870] sm:$0xff]
  %v7278 = vld [vmem:[#allocation5 + $0x878] sm:$0xff]
  %v7279 = vld [vmem:[#allocation5 + $0x880] sm:$0xff]
  %v7280 = vld [vmem:[#allocation5 + $0x888] sm:$0xff]
  %v7281 = vld [vmem:[#allocation5 + $0x890] sm:$0xff]
  %v7282 = vld [vmem:[#allocation5 + $0x898] sm:$0xff]
  %v7283 = vld [vmem:[#allocation5 + $0x8a0] sm:$0xff]
  %v7284 = vld [vmem:[#allocation5 + $0x8a8] sm:$0xff]
  %v7285 = vld [vmem:[#allocation5 + $0x8b0] sm:$0xff]
  %v7286 = vld [vmem:[#allocation5 + $0x8b8] sm:$0xff]
  %v7287 = vld [vmem:[#allocation5 + $0x8c0] sm:$0xff]
  %v7288 = vld [vmem:[#allocation5 + $0x8c8] sm:$0xff]
  %v7289 = vld [vmem:[#allocation5 + $0x8d0] sm:$0xff]
  %v7290 = vld [vmem:[#allocation5 + $0x8d8] sm:$0xff]
  %v7291 = vld [vmem:[#allocation5 + $0x8e0] sm:$0xff]
  %v7292 = vld [vmem:[#allocation5 + $0x8e8] sm:$0xff]
  %v7293 = vld [vmem:[#allocation5 + $0x8f0] sm:$0xff]
  %v7294 = vld [vmem:[#allocation5 + $0x8f8] sm:$0xff]
  %v7295 = vld [vmem:[#allocation5 + $0x900] sm:$0xff]
  %v7296 = vld [vmem:[#allocation5 + $0x908] sm:$0xff]
  %v7297 = vld [vmem:[#allocation5 + $0x910] sm:$0xff]
  %v7298 = vld [vmem:[#allocation5 + $0x918] sm:$0xff]
  %v7299 = vld [vmem:[#allocation5 + $0x920] sm:$0xff]
  %v7300 = vld [vmem:[#allocation5 + $0x928] sm:$0xff]
  %v7301 = vld [vmem:[#allocation5 + $0x930] sm:$0xff]
  %v7302 = vld [vmem:[#allocation5 + $0x938] sm:$0xff]
  %v7303 = vld [vmem:[#allocation5 + $0x940] sm:$0xff]
  %v7304 = vld [vmem:[#allocation5 + $0x948] sm:$0xff]
  %v7305 = vld [vmem:[#allocation5 + $0x950] sm:$0xff]
  %v7306 = vld [vmem:[#allocation5 + $0x958] sm:$0xff]
  %v7307 = vld [vmem:[#allocation5 + $0x960] sm:$0xff]
  %v7308 = vld [vmem:[#allocation5 + $0x968] sm:$0xff]
  %v7309 = vld [vmem:[#allocation5 + $0x970] sm:$0xff]
  %v7310 = vld [vmem:[#allocation5 + $0x978] sm:$0xff]
  %v7311 = vld [vmem:[#allocation5 + $0x980] sm:$0xff]
  %v7312 = vld [vmem:[#allocation5 + $0x988] sm:$0xff]
  %v7313 = vld [vmem:[#allocation5 + $0x990] sm:$0xff]
  %v7314 = vld [vmem:[#allocation5 + $0x998] sm:$0xff]
  %v7315 = vld [vmem:[#allocation5 + $0x9a0] sm:$0xff]
  %v7316 = vld [vmem:[#allocation5 + $0x9a8] sm:$0xff]
  %v7317 = vld [vmem:[#allocation5 + $0x9b0] sm:$0xff]
  %v7318 = vld [vmem:[#allocation5 + $0x9b8] sm:$0xff]
  %v7319 = vld [vmem:[#allocation5 + $0x9c0] sm:$0xff]
  %v7320 = vld [vmem:[#allocation5 + $0x9c8] sm:$0xff]
  %v7321 = vld [vmem:[#allocation5 + $0x9d0] sm:$0xff]
  %v7322 = vld [vmem:[#allocation5 + $0x9d8] sm:$0xff]
  %v7323 = vld [vmem:[#allocation5 + $0x9e0] sm:$0xff]
  %v7324 = vld [vmem:[#allocation5 + $0x9e8] sm:$0xff]
  %v7325 = vld [vmem:[#allocation5 + $0x9f0] sm:$0xff]
  %v7326 = vld [vmem:[#allocation5 + $0x9f8] sm:$0xff]
  %v7327 = vld [vmem:[#allocation5 + $0xa00] sm:$0xff]
  %v7328 = vld [vmem:[#allocation5 + $0xa08] sm:$0xff]
  %v7329 = vld [vmem:[#allocation5 + $0xa10] sm:$0xff]
  %v7330 = vld [vmem:[#allocation5 + $0xa18] sm:$0xff]
  %v7331 = vld [vmem:[#allocation5 + $0xa20] sm:$0xff]
  %v7332 = vld [vmem:[#allocation5 + $0xa28] sm:$0xff]
  %v7333 = vld [vmem:[#allocation5 + $0xa30] sm:$0xff]
  %v7334 = vld [vmem:[#allocation5 + $0xa38] sm:$0xff]
  %v7335 = vld [vmem:[#allocation5 + $0xa40] sm:$0xff]
  %v7336 = vld [vmem:[#allocation5 + $0xa48] sm:$0xff]
  %v7337 = vld [vmem:[#allocation5 + $0xa50] sm:$0xff]
  %v7338 = vld [vmem:[#allocation5 + $0xa58] sm:$0xff]
  %v7339 = vld [vmem:[#allocation5 + $0xa60] sm:$0xff]
  %v7340 = vld [vmem:[#allocation5 + $0xa68] sm:$0xff]
  %v7341 = vld [vmem:[#allocation5 + $0xa70] sm:$0xff]
  %v7342 = vld [vmem:[#allocation5 + $0xa78] sm:$0xff]
  %v7343 = vld [vmem:[#allocation5 + $0xa80] sm:$0xff]
  %v7344 = vld [vmem:[#allocation5 + $0xa88] sm:$0xff]
  %v7345 = vld [vmem:[#allocation5 + $0xa90] sm:$0xff]
  %v7346 = vld [vmem:[#allocation5 + $0xa98] sm:$0xff]
  %v7347 = vld [vmem:[#allocation5 + $0xaa0] sm:$0xff]
  %v7348 = vld [vmem:[#allocation5 + $0xaa8] sm:$0xff]
  %v7349 = vld [vmem:[#allocation5 + $0xab0] sm:$0xff]
  %v7350 = vld [vmem:[#allocation5 + $0xab8] sm:$0xff]
  %v7351 = vld [vmem:[#allocation5 + $0xac0] sm:$0xff]
  %v7352 = vld [vmem:[#allocation5 + $0xac8] sm:$0xff]
  %v7353 = vld [vmem:[#allocation5 + $0xad0] sm:$0xff]
  %v7354 = vld [vmem:[#allocation5 + $0xad8] sm:$0xff]
  %v7355 = vld [vmem:[#allocation5 + $0xae0] sm:$0xff]
  %v7356 = vld [vmem:[#allocation5 + $0xae8] sm:$0xff]
  %v7357 = vld [vmem:[#allocation5 + $0xaf0] sm:$0xff]
  %v7358 = vld [vmem:[#allocation5 + $0xaf8] sm:$0xff]
  %v7365 = vunpack.c.l.b16 %v7001
  %v7366 = vunpack.c.h.b16 %v7001
  %v7367 = vunpack.c.l.b16 %v7002
  %v7368 = vunpack.c.h.b16 %v7002
  %v7369 = vunpack.c.l.b16 %v7003
  %v7370 = vunpack.c.h.b16 %v7003
  %v7371 = vunpack.c.l.b16 %v7004
  %v7372 = vunpack.c.h.b16 %v7004
  %v7373 = vunpack.c.l.b16 %v7005
  %v7374 = vunpack.c.h.b16 %v7005
  %v7375 = vunpack.c.l.b16 %v7006
  %v7376 = vpack.c.b16 %v7365, %v7365
  %v7377 = vpack.c.b16 %v7366, %v7366
  %v7378 = vpack.c.b16 %v7367, %v7367
  %v7379 = vpack.c.b16 %v7368, %v7368
  %v7380 = vpack.c.b16 %v7369, %v7369
  %v7381 = vpack.c.b16 %v7370, %v7370
  %v7382 = vpack.c.b16 %v7371, %v7371
  %v7383 = vpack.c.b16 %v7372, %v7372
  %v7384 = vpack.c.b16 %v7373, %v7373
  %v7385 = vpack.c.b16 %v7374, %v7374
  %v7386 = vpack.c.b16 %v7375, %v7375
  %v7750 = vunpack.c.l.b16 %v7007
  %v7751 = vunpack.c.h.b16 %v7007
  %v7752 = vunpack.c.l.b16 %v7008
  %v7753 = vunpack.c.h.b16 %v7008
  %v7754 = vunpack.c.l.b16 %v7009
  %v7755 = vunpack.c.h.b16 %v7009
  %v7756 = vunpack.c.l.b16 %v7010
  %v7757 = vunpack.c.h.b16 %v7010
  %v7758 = vunpack.c.l.b16 %v7011
  %v7759 = vunpack.c.h.b16 %v7011
  %v7760 = vunpack.c.l.b16 %v7012
  %v7761 = vunpack.c.h.b16 %v7012
  %v7762 = vunpack.c.l.b16 %v7013
  %v7763 = vunpack.c.h.b16 %v7013
  %v7764 = vunpack.c.l.b16 %v7014
  %v7765 = vunpack.c.h.b16 %v7014
  %v7766 = vunpack.c.l.b16 %v7015
  %v7767 = vunpack.c.h.b16 %v7015
  %v7768 = vunpack.c.l.b16 %v7016
  %v7769 = vunpack.c.h.b16 %v7016
  %v7770 = vunpack.c.l.b16 %v7017
  %v7771 = vunpack.c.h.b16 %v7017
  %v7772 = vunpack.c.l.b16 %v7018
  %v7773 = vunpack.c.h.b16 %v7018
  %v7774 = vunpack.c.l.b16 %v7019
  %v7775 = vunpack.c.h.b16 %v7019
  %v7776 = vunpack.c.l.b16 %v7020
  %v7777 = vunpack.c.h.b16 %v7020
  %v7778 = vunpack.c.l.b16 %v7021
  %v7779 = vunpack.c.h.b16 %v7021
  %v7780 = vunpack.c.l.b16 %v7022
  %v7781 = vunpack.c.h.b16 %v7022
  %v7782 = vunpack.c.l.b16 %v7023
  %v7783 = vunpack.c.h.b16 %v7023
  %v7784 = vunpack.c.l.b16 %v7024
  %v7785 = vunpack.c.h.b16 %v7024
  %v7786 = vunpack.c.l.b16 %v7025
  %v7787 = vunpack.c.h.b16 %v7025
  %v7788 = vunpack.c.l.b16 %v7026
  %v7789 = vunpack.c.h.b16 %v7026
  %v7790 = vunpack.c.l.b16 %v7027
  %v7791 = vunpack.c.h.b16 %v7027
  %v7792 = vunpack.c.l.b16 %v7028
  %v7793 = vunpack.c.h.b16 %v7028
  %v7794 = vunpack.c.l.b16 %v7029
  %v7795 = vunpack.c.h.b16 %v7029
  %v7796 = vunpack.c.l.b16 %v7030
  %v7797 = vunpack.c.h.b16 %v7030
  %v7798 = vunpack.c.l.b16 %v7031
  %v7799 = vunpack.c.h.b16 %v7031
  %v7800 = vunpack.c.l.b16 %v7032
  %v7801 = vunpack.c.h.b16 %v7032
  %v7802 = vunpack.c.l.b16 %v7033
  %v7803 = vunpack.c.h.b16 %v7033
  %v7804 = vunpack.c.l.b16 %v7034
  %v7805 = vunpack.c.h.b16 %v7034
  %v7806 = vunpack.c.l.b16 %v7035
  %v7807 = vunpack.c.h.b16 %v7035
  %v7808 = vunpack.c.l.b16 %v7036
  %v7809 = vunpack.c.h.b16 %v7036
  %v7810 = vunpack.c.l.b16 %v7037
  %v7811 = vunpack.c.h.b16 %v7037
  %v7812 = vunpack.c.l.b16 %v7038
  %v7813 = vunpack.c.h.b16 %v7038
  %v7814 = vunpack.c.l.b16 %v7039
  %v7815 = vunpack.c.h.b16 %v7039
  %v7816 = vunpack.c.l.b16 %v7040
  %v7817 = vunpack.c.h.b16 %v7040
  %v7818 = vunpack.c.l.b16 %v7041
  %v7819 = vunpack.c.h.b16 %v7041
  %v7820 = vunpack.c.l.b16 %v7042
  %v7821 = vunpack.c.h.b16 %v7042
  %v7822 = vunpack.c.l.b16 %v7043
  %v7823 = vunpack.c.h.b16 %v7043
  %v7824 = vunpack.c.l.b16 %v7044
  %v7825 = vunpack.c.h.b16 %v7044
  %v7826 = vunpack.c.l.b16 %v7045
  %v7827 = vunpack.c.h.b16 %v7045
  %v7828 = vunpack.c.l.b16 %v7046
  %v7829 = vunpack.c.h.b16 %v7046
  %v7830 = vunpack.c.l.b16 %v7047
  %v7831 = vunpack.c.h.b16 %v7047
  %v7832 = vunpack.c.l.b16 %v7048
  %v7833 = vunpack.c.h.b16 %v7048
  %v7834 = vunpack.c.l.b16 %v7049
  %v7835 = vunpack.c.h.b16 %v7049
  %v7836 = vunpack.c.l.b16 %v7050
  %v7837 = vunpack.c.h.b16 %v7050
  %v7838 = vunpack.c.l.b16 %v7051
  %v7839 = vunpack.c.h.b16 %v7051
  %v7840 = vunpack.c.l.b16 %v7052
  %v7841 = vunpack.c.h.b16 %v7052
  %v7842 = vunpack.c.l.b16 %v7053
  %v7843 = vunpack.c.h.b16 %v7053
  %v7844 = vunpack.c.l.b16 %v7054
  %v7845 = vunpack.c.h.b16 %v7054
  %v7846 = vunpack.c.l.b16 %v7055
  %v7847 = vunpack.c.h.b16 %v7055
  %v7848 = vunpack.c.l.b16 %v7056
  %v7849 = vunpack.c.h.b16 %v7056
  %v7850 = vunpack.c.l.b16 %v7057
  %v7851 = vunpack.c.h.b16 %v7057
  %v7852 = vunpack.c.l.b16 %v7058
  %v7853 = vunpack.c.h.b16 %v7058
  %v7854 = vunpack.c.l.b16 %v7059
  %v7855 = vunpack.c.h.b16 %v7059
  %v7856 = vunpack.c.l.b16 %v7060
  %v7857 = vunpack.c.h.b16 %v7060
  %v7858 = vunpack.c.l.b16 %v7061
  %v7859 = vunpack.c.h.b16 %v7061
  %v7860 = vunpack.c.l.b16 %v7062
  %v7861 = vunpack.c.h.b16 %v7062
  %v7862 = vunpack.c.l.b16 %v7063
  %v7863 = vunpack.c.h.b16 %v7063
  %v7864 = vunpack.c.l.b16 %v7064
  %v7865 = vunpack.c.h.b16 %v7064
  %v7866 = vunpack.c.l.b16 %v7065
  %v7867 = vunpack.c.h.b16 %v7065
  %v7868 = vunpack.c.l.b16 %v7066
  %v7869 = vunpack.c.h.b16 %v7066
  %v7870 = vunpack.c.l.b16 %v7067
  %v7871 = vunpack.c.h.b16 %v7067
  %v7872 = vunpack.c.l.b16 %v7068
  %v7873 = vunpack.c.h.b16 %v7068
  %v7874 = vunpack.c.l.b16 %v7069
  %v7875 = vunpack.c.h.b16 %v7069
  %v7876 = vunpack.c.l.b16 %v7070
  %v7877 = vunpack.c.h.b16 %v7070
  %v7878 = vunpack.c.l.b16 %v7071
  %v7879 = vunpack.c.h.b16 %v7071
  %v7880 = vunpack.c.l.b16 %v7072
  %v7881 = vunpack.c.h.b16 %v7072
  %v7882 = vunpack.c.l.b16 %v7073
  %v7883 = vunpack.c.h.b16 %v7073
  %v7884 = vunpack.c.l.b16 %v7074
  %v7885 = vunpack.c.h.b16 %v7074
  %v7886 = vunpack.c.l.b16 %v7075
  %v7887 = vunpack.c.h.b16 %v7075
  %v7888 = vunpack.c.l.b16 %v7076
  %v7889 = vunpack.c.h.b16 %v7076
  %v7890 = vunpack.c.l.b16 %v7077
  %v7891 = vunpack.c.h.b16 %v7077
  %v7892 = vunpack.c.l.b16 %v7078
  %v7893 = vunpack.c.h.b16 %v7078
  %v7894 = vunpack.c.l.b16 %v7079
  %v7895 = vunpack.c.h.b16 %v7079
  %v7896 = vunpack.c.l.b16 %v7080
  %v7897 = vunpack.c.h.b16 %v7080
  %v7898 = vunpack.c.l.b16 %v7081
  %v7899 = vunpack.c.h.b16 %v7081
  %v7900 = vunpack.c.l.b16 %v7082
  %v7901 = vunpack.c.h.b16 %v7082
  %v7902 = vunpack.c.l.b16 %v7083
  %v7903 = vunpack.c.h.b16 %v7083
  %v7904 = vunpack.c.l.b16 %v7084
  %v7905 = vunpack.c.h.b16 %v7084
  %v7906 = vunpack.c.l.b16 %v7085
  %v7907 = vunpack.c.h.b16 %v7085
  %v7908 = vunpack.c.l.b16 %v7086
  %v7909 = vunpack.c.h.b16 %v7086
  %v7910 = vunpack.c.l.b16 %v7087
  %v7911 = vunpack.c.h.b16 %v7087
  %v7912 = vunpack.c.l.b16 %v7088
  %v7913 = vunpack.c.h.b16 %v7088
  %v7914 = vunpack.c.l.b16 %v7089
  %v7915 = vunpack.c.h.b16 %v7089
  %v7916 = vunpack.c.l.b16 %v7090
  %v7917 = vunpack.c.h.b16 %v7090
  %v7918 = vunpack.c.l.b16 %v7091
  %v7919 = vunpack.c.h.b16 %v7091
  %v7920 = vunpack.c.l.b16 %v7092
  %v7921 = vunpack.c.h.b16 %v7092
  %v7922 = vunpack.c.l.b16 %v7093
  %v7923 = vunpack.c.h.b16 %v7093
  %v7924 = vunpack.c.l.b16 %v7094
  %v7925 = vunpack.c.h.b16 %v7094
  %v7926 = vunpack.c.l.b16 %v7095
  %v7927 = vunpack.c.h.b16 %v7095
  %v7928 = vunpack.c.l.b16 %v7096
  %v7929 = vunpack.c.h.b16 %v7096
  %v7930 = vunpack.c.l.b16 %v7097
  %v7931 = vunpack.c.h.b16 %v7097
  %v7932 = vunpack.c.l.b16 %v7098
  %v7933 = vunpack.c.h.b16 %v7098
  %v7934 = vunpack.c.l.b16 %v7099
  %v7935 = vunpack.c.h.b16 %v7099
  %v7936 = vunpack.c.l.b16 %v7100
  %v7937 = vunpack.c.h.b16 %v7100
  %v7938 = vunpack.c.l.b16 %v7101
  %v7939 = vunpack.c.h.b16 %v7101
  %v7940 = vunpack.c.l.b16 %v7102
  %v7941 = vunpack.c.h.b16 %v7102
  %v7942 = vunpack.c.l.b16 %v7103
  %v7943 = vunpack.c.h.b16 %v7103
  %v7944 = vunpack.c.l.b16 %v7104
  %v7945 = vunpack.c.h.b16 %v7104
  %v7946 = vunpack.c.l.b16 %v7105
  %v7947 = vunpack.c.h.b16 %v7105
  %v7948 = vunpack.c.l.b16 %v7106
  %v7949 = vunpack.c.h.b16 %v7106
  %v7950 = vunpack.c.l.b16 %v7107
  %v7951 = vunpack.c.h.b16 %v7107
  %v7952 = vunpack.c.l.b16 %v7108
  %v7953 = vunpack.c.h.b16 %v7108
  %v7954 = vunpack.c.l.b16 %v7109
  %v7955 = vunpack.c.h.b16 %v7109
  %v7956 = vunpack.c.l.b16 %v7110
  %v7957 = vunpack.c.h.b16 %v7110
  %v7958 = vunpack.c.l.b16 %v7111
  %v7959 = vunpack.c.h.b16 %v7111
  %v7960 = vunpack.c.l.b16 %v7112
  %v7961 = vunpack.c.h.b16 %v7112
  %v7962 = vunpack.c.l.b16 %v7113
  %v7963 = vunpack.c.h.b16 %v7113
  %v7964 = vunpack.c.l.b16 %v7114
  %v7965 = vunpack.c.h.b16 %v7114
  %v7966 = vunpack.c.l.b16 %v7115
  %v7967 = vunpack.c.h.b16 %v7115
  %v7968 = vunpack.c.l.b16 %v7116
  %v7969 = vunpack.c.h.b16 %v7116
  %v7970 = vunpack.c.l.b16 %v7117
  %v7971 = vunpack.c.h.b16 %v7117
  %v7972 = vunpack.c.l.b16 %v7118
  %v7973 = vunpack.c.h.b16 %v7118
  %v7974 = vunpack.c.l.b16 %v7119
  %v7975 = vunpack.c.h.b16 %v7119
  %v7976 = vunpack.c.l.b16 %v7120
  %v7977 = vunpack.c.h.b16 %v7120
  %v7978 = vunpack.c.l.b16 %v7121
  %v7979 = vunpack.c.h.b16 %v7121
  %v7980 = vunpack.c.l.b16 %v7122
  %v7981 = vunpack.c.h.b16 %v7122
  %v7982 = vunpack.c.l.b16 %v7123
  %v7983 = vunpack.c.h.b16 %v7123
  %v7984 = vunpack.c.l.b16 %v7124
  %v7985 = vunpack.c.h.b16 %v7124
  %v7986 = vunpack.c.l.b16 %v7125
  %v7987 = vunpack.c.h.b16 %v7125
  %v7988 = vunpack.c.l.b16 %v7126
  %v7989 = vunpack.c.h.b16 %v7126
  %v7990 = vunpack.c.l.b16 %v7127
  %v7991 = vunpack.c.h.b16 %v7127
  %v7992 = vunpack.c.l.b16 %v7128
  %v7993 = vunpack.c.h.b16 %v7128
  %v7994 = vunpack.c.l.b16 %v7129
  %v7995 = vunpack.c.h.b16 %v7129
  %v7996 = vunpack.c.l.b16 %v7130
  %v7997 = vunpack.c.h.b16 %v7130
  %v7998 = vunpack.c.l.b16 %v7131
  %v7999 = vunpack.c.h.b16 %v7131
  %v8000 = vunpack.c.l.b16 %v7132
  %v8001 = vunpack.c.h.b16 %v7132
  %v8002 = vunpack.c.l.b16 %v7133
  %v8003 = vunpack.c.h.b16 %v7133
  %v8004 = vunpack.c.l.b16 %v7134
  %v8005 = vunpack.c.h.b16 %v7134
  %v8006 = vunpack.c.l.b16 %v7135
  %v8007 = vunpack.c.h.b16 %v7135
  %v8008 = vunpack.c.l.b16 %v7136
  %v8009 = vunpack.c.h.b16 %v7136
  %v8010 = vunpack.c.l.b16 %v7137
  %v8011 = vunpack.c.h.b16 %v7137
  %v8012 = vunpack.c.l.b16 %v7138
  %v8013 = vunpack.c.h.b16 %v7138
  %v8014 = vunpack.c.l.b16 %v7139
  %v8015 = vunpack.c.h.b16 %v7139
  %v8016 = vunpack.c.l.b16 %v7140
  %v8017 = vunpack.c.h.b16 %v7140
  %v8018 = vunpack.c.l.b16 %v7141
  %v8019 = vunpack.c.h.b16 %v7141
  %v8020 = vunpack.c.l.b16 %v7142
  %v8021 = vunpack.c.h.b16 %v7142
  %v8022 = vunpack.c.l.b16 %v7143
  %v8023 = vunpack.c.h.b16 %v7143
  %v8024 = vunpack.c.l.b16 %v7144
  %v8025 = vunpack.c.h.b16 %v7144
  %v8026 = vunpack.c.l.b16 %v7145
  %v8027 = vunpack.c.h.b16 %v7145
  %v8028 = vunpack.c.l.b16 %v7146
  %v8029 = vunpack.c.h.b16 %v7146
  %v8030 = vunpack.c.l.b16 %v7147
  %v8031 = vunpack.c.h.b16 %v7147
  %v8032 = vunpack.c.l.b16 %v7148
  %v8033 = vunpack.c.h.b16 %v7148
  %v8034 = vunpack.c.l.b16 %v7149
  %v8035 = vunpack.c.h.b16 %v7149
  %v8036 = vunpack.c.l.b16 %v7150
  %v8037 = vunpack.c.h.b16 %v7150
  %v8038 = vunpack.c.l.b16 %v7151
  %v8039 = vunpack.c.h.b16 %v7151
  %v8040 = vunpack.c.l.b16 %v7152
  %v8041 = vunpack.c.h.b16 %v7152
  %v8042 = vunpack.c.l.b16 %v7153
  %v8043 = vunpack.c.h.b16 %v7153
  %v8044 = vunpack.c.l.b16 %v7154
  %v8045 = vunpack.c.h.b16 %v7154
  %v8046 = vunpack.c.l.b16 %v7155
  %v8047 = vunpack.c.h.b16 %v7155
  %v8048 = vunpack.c.l.b16 %v7156
  %v8049 = vunpack.c.h.b16 %v7156
  %v8050 = vunpack.c.l.b16 %v7157
  %v8051 = vunpack.c.h.b16 %v7157
  %v8052 = vunpack.c.l.b16 %v7158
  %v8053 = vunpack.c.h.b16 %v7158
  %v8054 = vunpack.c.l.b16 %v7159
  %v8055 = vunpack.c.h.b16 %v7159
  %v8056 = vunpack.c.l.b16 %v7160
  %v8057 = vunpack.c.h.b16 %v7160
  %v8058 = vunpack.c.l.b16 %v7161
  %v8059 = vunpack.c.h.b16 %v7161
  %v8060 = vunpack.c.l.b16 %v7162
  %v8061 = vunpack.c.h.b16 %v7162
  %v8062 = vunpack.c.l.b16 %v7163
  %v8063 = vunpack.c.h.b16 %v7163
  %v8064 = vunpack.c.l.b16 %v7164
  %v8065 = vunpack.c.h.b16 %v7164
  %v8066 = vunpack.c.l.b16 %v7165
  %v8067 = vunpack.c.h.b16 %v7165
  %v8068 = vunpack.c.l.b16 %v7166
  %v8069 = vunpack.c.h.b16 %v7166
  %v8070 = vunpack.c.l.b16 %v7167
  %v8071 = vunpack.c.h.b16 %v7167
  %v8072 = vunpack.c.l.b16 %v7168
  %v8073 = vunpack.c.h.b16 %v7168
  %v8074 = vunpack.c.l.b16 %v7169
  %v8075 = vunpack.c.h.b16 %v7169
  %v8076 = vunpack.c.l.b16 %v7170
  %v8077 = vunpack.c.h.b16 %v7170
  %v8078 = vunpack.c.l.b16 %v7171
  %v8079 = vunpack.c.h.b16 %v7171
  %v8080 = vunpack.c.l.b16 %v7172
  %v8081 = vunpack.c.h.b16 %v7172
  %v8082 = vunpack.c.l.b16 %v7173
  %v8083 = vunpack.c.h.b16 %v7173
  %v8084 = vunpack.c.l.b16 %v7174
  %v8085 = vunpack.c.h.b16 %v7174
  %v8086 = vunpack.c.l.b16 %v7175
  %v8087 = vunpack.c.h.b16 %v7175
  %v8088 = vunpack.c.l.b16 %v7176
  %v8089 = vunpack.c.h.b16 %v7176
  %v8090 = vunpack.c.l.b16 %v7177
  %v8091 = vunpack.c.h.b16 %v7177
  %v8092 = vunpack.c.l.b16 %v7178
  %v8093 = vunpack.c.h.b16 %v7178
  %v8094 = vunpack.c.l.b16 %v7179
  %v8095 = vunpack.c.h.b16 %v7179
  %v8096 = vunpack.c.l.b16 %v7180
  %v8097 = vunpack.c.h.b16 %v7180
  %v8098 = vunpack.c.l.b16 %v7181
  %v8099 = vunpack.c.h.b16 %v7181
  %v8100 = vunpack.c.l.b16 %v7182
  %v8101 = vunpack.c.h.b16 %v7182
  %v8102 = vunpack.c.l.b16 %v7183
  %v8103 = vunpack.c.h.b16 %v7183
  %v8104 = vunpack.c.l.b16 %v7184
  %v8105 = vunpack.c.h.b16 %v7184
  %v8106 = vunpack.c.l.b16 %v7185
  %v8107 = vunpack.c.h.b16 %v7185
  %v8108 = vunpack.c.l.b16 %v7186
  %v8109 = vunpack.c.h.b16 %v7186
  %v8110 = vunpack.c.l.b16 %v7187
  %v8111 = vunpack.c.h.b16 %v7187
  %v8112 = vunpack.c.l.b16 %v7188
  %v8113 = vunpack.c.h.b16 %v7188
  %v8114 = vunpack.c.l.b16 %v7189
  %v8115 = vunpack.c.h.b16 %v7189
  %v8116 = vunpack.c.l.b16 %v7190
  %v8117 = vunpack.c.h.b16 %v7190
  %v8118 = vunpack.c.l.b16 %v7191
  %v8119 = vunpack.c.h.b16 %v7191
  %v8120 = vunpack.c.l.b16 %v7192
  %v8121 = vunpack.c.h.b16 %v7192
  %v8122 = vunpack.c.l.b16 %v7193
  %v8123 = vunpack.c.h.b16 %v7193
  %v8124 = vunpack.c.l.b16 %v7194
  %v8125 = vunpack.c.h.b16 %v7194
  %v8126 = vunpack.c.l.b16 %v7195
  %v8127 = vunpack.c.h.b16 %v7195
  %v8128 = vunpack.c.l.b16 %v7196
  %v8129 = vunpack.c.h.b16 %v7196
  %v8130 = vunpack.c.l.b16 %v7197
  %v8131 = vunpack.c.h.b16 %v7197
  %v8132 = vunpack.c.l.b16 %v7198
  %v8133 = vunpack.c.h.b16 %v7198
  %v8134 = vunpack.c.l.b16 %v7199
  %v8135 = vunpack.c.h.b16 %v7199
  %v8136 = vunpack.c.l.b16 %v7200
  %v8137 = vunpack.c.h.b16 %v7200
  %v8138 = vunpack.c.l.b16 %v7201
  %v8139 = vunpack.c.h.b16 %v7201
  %v8140 = vunpack.c.l.b16 %v7202
  %v8141 = vunpack.c.h.b16 %v7202
  %v8142 = vunpack.c.l.b16 %v7203
  %v8143 = vunpack.c.h.b16 %v7203
  %v8144 = vunpack.c.l.b16 %v7204
  %v8145 = vunpack.c.h.b16 %v7204
  %v8146 = vunpack.c.l.b16 %v7205
  %v8147 = vunpack.c.h.b16 %v7205
  %v8148 = vunpack.c.l.b16 %v7206
  %v8149 = vunpack.c.h.b16 %v7206
  %v8150 = vunpack.c.l.b16 %v7207
  %v8151 = vunpack.c.h.b16 %v7207
  %v8152 = vunpack.c.l.b16 %v7208
  %v8153 = vunpack.c.h.b16 %v7208
  %v8154 = vunpack.c.l.b16 %v7209
  %v8155 = vunpack.c.h.b16 %v7209
  %v8156 = vunpack.c.l.b16 %v7210
  %v8157 = vunpack.c.h.b16 %v7210
  %v8158 = vunpack.c.l.b16 %v7211
  %v8159 = vunpack.c.h.b16 %v7211
  %v8160 = vunpack.c.l.b16 %v7212
  %v8161 = vunpack.c.h.b16 %v7212
  %v8162 = vunpack.c.l.b16 %v7213
  %v8163 = vunpack.c.h.b16 %v7213
  %v8164 = vunpack.c.l.b16 %v7214
  %v8165 = vunpack.c.h.b16 %v7214
  %v8166 = vunpack.c.l.b16 %v7215
  %v8167 = vunpack.c.h.b16 %v7215
  %v8168 = vunpack.c.l.b16 %v7216
  %v8169 = vunpack.c.h.b16 %v7216
  %v8170 = vunpack.c.l.b16 %v7217
  %v8171 = vunpack.c.h.b16 %v7217
  %v8172 = vunpack.c.l.b16 %v7218
  %v8173 = vunpack.c.h.b16 %v7218
  %v8174 = vunpack.c.l.b16 %v7219
  %v8175 = vunpack.c.h.b16 %v7219
  %v8176 = vunpack.c.l.b16 %v7220
  %v8177 = vunpack.c.h.b16 %v7220
  %v8178 = vunpack.c.l.b16 %v7221
  %v8179 = vunpack.c.h.b16 %v7221
  %v8180 = vunpack.c.l.b16 %v7222
  %v8181 = vunpack.c.h.b16 %v7222
  %v8182 = vunpack.c.l.b16 %v7223
  %v8183 = vunpack.c.h.b16 %v7223
  %v8184 = vunpack.c.l.b16 %v7224
  %v8185 = vunpack.c.h.b16 %v7224
  %v8186 = vunpack.c.l.b16 %v7225
  %v8187 = vunpack.c.h.b16 %v7225
  %v8188 = vunpack.c.l.b16 %v7226
  %v8189 = vunpack.c.h.b16 %v7226
  %v8190 = vunpack.c.l.b16 %v7227
  %v8191 = vunpack.c.h.b16 %v7227
  %v8192 = vunpack.c.l.b16 %v7228
  %v8193 = vunpack.c.h.b16 %v7228
  %v8194 = vunpack.c.l.b16 %v7229
  %v8195 = vunpack.c.h.b16 %v7229
  %v8196 = vunpack.c.l.b16 %v7230
  %v8197 = vunpack.c.h.b16 %v7230
  %v8198 = vunpack.c.l.b16 %v7231
  %v8199 = vunpack.c.h.b16 %v7231
  %v8200 = vunpack.c.l.b16 %v7232
  %v8201 = vunpack.c.h.b16 %v7232
  %v8202 = vunpack.c.l.b16 %v7233
  %v8203 = vunpack.c.h.b16 %v7233
  %v8204 = vunpack.c.l.b16 %v7234
  %v8205 = vunpack.c.h.b16 %v7234
  %v8206 = vunpack.c.l.b16 %v7235
  %v8207 = vunpack.c.h.b16 %v7235
  %v8208 = vunpack.c.l.b16 %v7236
  %v8209 = vunpack.c.h.b16 %v7236
  %v8210 = vunpack.c.l.b16 %v7237
  %v8211 = vunpack.c.h.b16 %v7237
  %v8212 = vunpack.c.l.b16 %v7238
  %v8213 = vunpack.c.h.b16 %v7238
  %v8214 = vunpack.c.l.b16 %v7239
  %v8215 = vunpack.c.h.b16 %v7239
  %v8216 = vunpack.c.l.b16 %v7240
  %v8217 = vunpack.c.h.b16 %v7240
  %v8218 = vunpack.c.l.b16 %v7241
  %v8219 = vunpack.c.h.b16 %v7241
  %v8220 = vunpack.c.l.b16 %v7242
  %v8221 = vunpack.c.h.b16 %v7242
  %v8222 = vunpack.c.l.b16 %v7243
  %v8223 = vunpack.c.h.b16 %v7243
  %v8224 = vunpack.c.l.b16 %v7244
  %v8225 = vunpack.c.h.b16 %v7244
  %v8226 = vunpack.c.l.b16 %v7245
  %v8227 = vunpack.c.h.b16 %v7245
  %v8228 = vunpack.c.l.b16 %v7246
  %v8229 = vunpack.c.h.b16 %v7246
  %v8230 = vunpack.c.l.b16 %v7247
  %v8231 = vunpack.c.h.b16 %v7247
  %v8232 = vunpack.c.l.b16 %v7248
  %v8233 = vunpack.c.h.b16 %v7248
  %v8234 = vunpack.c.l.b16 %v7249
  %v8235 = vunpack.c.h.b16 %v7249
  %v8236 = vunpack.c.l.b16 %v7250
  %v8237 = vunpack.c.h.b16 %v7250
  %v8238 = vunpack.c.l.b16 %v7251
  %v8239 = vunpack.c.h.b16 %v7251
  %v8240 = vunpack.c.l.b16 %v7252
  %v8241 = vunpack.c.h.b16 %v7252
  %v8242 = vunpack.c.l.b16 %v7253
  %v8243 = vunpack.c.h.b16 %v7253
  %v8244 = vunpack.c.l.b16 %v7254
  %v8245 = vunpack.c.h.b16 %v7254
  %v8246 = vunpack.c.l.b16 %v7255
  %v8247 = vunpack.c.h.b16 %v7255
  %v8248 = vunpack.c.l.b16 %v7256
  %v8249 = vunpack.c.h.b16 %v7256
  %v8250 = vunpack.c.l.b16 %v7257
  %v8251 = vunpack.c.h.b16 %v7257
  %v8252 = vunpack.c.l.b16 %v7258
  %v8253 = vunpack.c.h.b16 %v7258
  %v8254 = vunpack.c.l.b16 %v7259
  %v8255 = vunpack.c.h.b16 %v7259
  %v8256 = vunpack.c.l.b16 %v7260
  %v8257 = vunpack.c.h.b16 %v7260
  %v8258 = vunpack.c.l.b16 %v7261
  %v8259 = vunpack.c.h.b16 %v7261
  %v8260 = vunpack.c.l.b16 %v7262
  %v8261 = vunpack.c.h.b16 %v7262
  %v8262 = vunpack.c.l.b16 %v7263
  %v8263 = vunpack.c.h.b16 %v7263
  %v8264 = vunpack.c.l.b16 %v7264
  %v8265 = vunpack.c.h.b16 %v7264
  %v8266 = vunpack.c.l.b16 %v7265
  %v8267 = vunpack.c.h.b16 %v7265
  %v8268 = vunpack.c.l.b16 %v7266
  %v8269 = vunpack.c.h.b16 %v7266
  %v8270 = vunpack.c.l.b16 %v7267
  %v8271 = vunpack.c.h.b16 %v7267
  %v8272 = vunpack.c.l.b16 %v7268
  %v8273 = vunpack.c.h.b16 %v7268
  %v8274 = vunpack.c.l.b16 %v7269
  %v8275 = vunpack.c.h.b16 %v7269
  %v8276 = vunpack.c.l.b16 %v7270
  %v8277 = vunpack.c.h.b16 %v7270
  %v8278 = vunpack.c.l.b16 %v7271
  %v8279 = vunpack.c.h.b16 %v7271
  %v8280 = vunpack.c.l.b16 %v7272
  %v8281 = vunpack.c.h.b16 %v7272
  %v8282 = vunpack.c.l.b16 %v7273
  %v8283 = vunpack.c.h.b16 %v7273
  %v8284 = vunpack.c.l.b16 %v7274
  %v8285 = vunpack.c.h.b16 %v7274
  %v8286 = vunpack.c.l.b16 %v7275
  %v8287 = vunpack.c.h.b16 %v7275
  %v8288 = vunpack.c.l.b16 %v7276
  %v8289 = vunpack.c.h.b16 %v7276
  %v8290 = vunpack.c.l.b16 %v7277
  %v8291 = vunpack.c.h.b16 %v7277
  %v8292 = vunpack.c.l.b16 %v7278
  %v8293 = vunpack.c.h.b16 %v7278
  %v8294 = vunpack.c.l.b16 %v7279
  %v8295 = vunpack.c.h.b16 %v7279
  %v8296 = vunpack.c.l.b16 %v7280
  %v8297 = vunpack.c.h.b16 %v7280
  %v8298 = vunpack.c.l.b16 %v7281
  %v8299 = vunpack.c.h.b16 %v7281
  %v8300 = vunpack.c.l.b16 %v7282
  %v8301 = vunpack.c.h.b16 %v7282
  %v8302 = vunpack.c.l.b16 %v7283
  %v8303 = vunpack.c.h.b16 %v7283
  %v8304 = vunpack.c.l.b16 %v7284
  %v8305 = vunpack.c.h.b16 %v7284
  %v8306 = vunpack.c.l.b16 %v7285
  %v8307 = vunpack.c.h.b16 %v7285
  %v8308 = vunpack.c.l.b16 %v7286
  %v8309 = vunpack.c.h.b16 %v7286
  %v8310 = vunpack.c.l.b16 %v7287
  %v8311 = vunpack.c.h.b16 %v7287
  %v8312 = vunpack.c.l.b16 %v7288
  %v8313 = vunpack.c.h.b16 %v7288
  %v8314 = vunpack.c.l.b16 %v7289
  %v8315 = vunpack.c.h.b16 %v7289
  %v8316 = vunpack.c.l.b16 %v7290
  %v8317 = vunpack.c.h.b16 %v7290
  %v8318 = vunpack.c.l.b16 %v7291
  %v8319 = vunpack.c.h.b16 %v7291
  %v8320 = vunpack.c.l.b16 %v7292
  %v8321 = vunpack.c.h.b16 %v7292
  %v8322 = vunpack.c.l.b16 %v7293
  %v8323 = vunpack.c.h.b16 %v7293
  %v8324 = vunpack.c.l.b16 %v7294
  %v8325 = vunpack.c.h.b16 %v7294
  %v8326 = vunpack.c.l.b16 %v7295
  %v8327 = vunpack.c.h.b16 %v7295
  %v8328 = vunpack.c.l.b16 %v7296
  %v8329 = vunpack.c.h.b16 %v7296
  %v8330 = vunpack.c.l.b16 %v7297
  %v8331 = vunpack.c.h.b16 %v7297
  %v8332 = vunpack.c.l.b16 %v7298
  %v8333 = vunpack.c.h.b16 %v7298
  %v8334 = vunpack.c.l.b16 %v7299
  %v8335 = vunpack.c.h.b16 %v7299
  %v8336 = vunpack.c.l.b16 %v7300
  %v8337 = vunpack.c.h.b16 %v7300
  %v8338 = vunpack.c.l.b16 %v7301
  %v8339 = vunpack.c.h.b16 %v7301
  %v8340 = vunpack.c.l.b16 %v7302
  %v8341 = vunpack.c.h.b16 %v7302
  %v8342 = vunpack.c.l.b16 %v7303
  %v8343 = vunpack.c.h.b16 %v7303
  %v8344 = vunpack.c.l.b16 %v7304
  %v8345 = vunpack.c.h.b16 %v7304
  %v8346 = vunpack.c.l.b16 %v7305
  %v8347 = vunpack.c.h.b16 %v7305
  %v8348 = vunpack.c.l.b16 %v7306
  %v8349 = vunpack.c.h.b16 %v7306
  %v8350 = vunpack.c.l.b16 %v7307
  %v8351 = vunpack.c.h.b16 %v7307
  %v8352 = vunpack.c.l.b16 %v7308
  %v8353 = vunpack.c.h.b16 %v7308
  %v8354 = vunpack.c.l.b16 %v7309
  %v8355 = vunpack.c.h.b16 %v7309
  %v8356 = vunpack.c.l.b16 %v7310
  %v8357 = vunpack.c.h.b16 %v7310
  %v8358 = vunpack.c.l.b16 %v7311
  %v8359 = vunpack.c.h.b16 %v7311
  %v8360 = vunpack.c.l.b16 %v7312
  %v8361 = vunpack.c.h.b16 %v7312
  %v8362 = vunpack.c.l.b16 %v7313
  %v8363 = vunpack.c.h.b16 %v7313
  %v8364 = vunpack.c.l.b16 %v7314
  %v8365 = vunpack.c.h.b16 %v7314
  %v8366 = vunpack.c.l.b16 %v7315
  %v8367 = vunpack.c.h.b16 %v7315
  %v8368 = vunpack.c.l.b16 %v7316
  %v8369 = vunpack.c.h.b16 %v7316
  %v8370 = vunpack.c.l.b16 %v7317
  %v8371 = vunpack.c.h.b16 %v7317
  %v8372 = vunpack.c.l.b16 %v7318
  %v8373 = vunpack.c.h.b16 %v7318
  %v8374 = vunpack.c.l.b16 %v7319
  %v8375 = vunpack.c.h.b16 %v7319
  %v8376 = vunpack.c.l.b16 %v7320
  %v8377 = vunpack.c.h.b16 %v7320
  %v8378 = vunpack.c.l.b16 %v7321
  %v8379 = vunpack.c.h.b16 %v7321
  %v8380 = vunpack.c.l.b16 %v7322
  %v8381 = vunpack.c.h.b16 %v7322
  %v8382 = vunpack.c.l.b16 %v7323
  %v8383 = vunpack.c.h.b16 %v7323
  %v8384 = vunpack.c.l.b16 %v7324
  %v8385 = vunpack.c.h.b16 %v7324
  %v8386 = vunpack.c.l.b16 %v7325
  %v8387 = vunpack.c.h.b16 %v7325
  %v8388 = vunpack.c.l.b16 %v7326
  %v8389 = vunpack.c.h.b16 %v7326
  %v8390 = vunpack.c.l.b16 %v7327
  %v8391 = vunpack.c.h.b16 %v7327
  %v8392 = vunpack.c.l.b16 %v7328
  %v8393 = vunpack.c.h.b16 %v7328
  %v8394 = vunpack.c.l.b16 %v7329
  %v8395 = vunpack.c.h.b16 %v7329
  %v8396 = vunpack.c.l.b16 %v7330
  %v8397 = vunpack.c.h.b16 %v7330
  %v8398 = vunpack.c.l.b16 %v7331
  %v8399 = vunpack.c.h.b16 %v7331
  %v8400 = vunpack.c.l.b16 %v7332
  %v8401 = vunpack.c.h.b16 %v7332
  %v8402 = vunpack.c.l.b16 %v7333
  %v8403 = vunpack.c.h.b16 %v7333
  %v8404 = vunpack.c.l.b16 %v7334
  %v8405 = vunpack.c.h.b16 %v7334
  %v8406 = vunpack.c.l.b16 %v7335
  %v8407 = vunpack.c.h.b16 %v7335
  %v8408 = vunpack.c.l.b16 %v7336
  %v8409 = vunpack.c.h.b16 %v7336
  %v8410 = vunpack.c.l.b16 %v7337
  %v8411 = vunpack.c.h.b16 %v7337
  %v8412 = vunpack.c.l.b16 %v7338
  %v8413 = vunpack.c.h.b16 %v7338
  %v8414 = vunpack.c.l.b16 %v7339
  %v8415 = vunpack.c.h.b16 %v7339
  %v8416 = vunpack.c.l.b16 %v7340
  %v8417 = vunpack.c.h.b16 %v7340
  %v8418 = vunpack.c.l.b16 %v7341
  %v8419 = vunpack.c.h.b16 %v7341
  %v8420 = vunpack.c.l.b16 %v7342
  %v8421 = vunpack.c.h.b16 %v7342
  %v8422 = vunpack.c.l.b16 %v7343
  %v8423 = vunpack.c.h.b16 %v7343
  %v8424 = vunpack.c.l.b16 %v7344
  %v8425 = vunpack.c.h.b16 %v7344
  %v8426 = vunpack.c.l.b16 %v7345
  %v8427 = vunpack.c.h.b16 %v7345
  %v8428 = vunpack.c.l.b16 %v7346
  %v8429 = vunpack.c.h.b16 %v7346
  %v8430 = vunpack.c.l.b16 %v7347
  %v8431 = vunpack.c.h.b16 %v7347
  %v8432 = vunpack.c.l.b16 %v7348
  %v8433 = vunpack.c.h.b16 %v7348
  %v8434 = vunpack.c.l.b16 %v7349
  %v8435 = vunpack.c.h.b16 %v7349
  %v8436 = vunpack.c.l.b16 %v7350
  %v8437 = vunpack.c.h.b16 %v7350
  %v8438 = vunpack.c.l.b16 %v7351
  %v8439 = vunpack.c.h.b16 %v7351
  %v8440 = vunpack.c.l.b16 %v7352
  %v8441 = vunpack.c.h.b16 %v7352
  %v8442 = vunpack.c.l.b16 %v7353
  %v8443 = vunpack.c.h.b16 %v7353
  %v8444 = vunpack.c.l.b16 %v7354
  %v8445 = vunpack.c.h.b16 %v7354
  %v8446 = vunpack.c.l.b16 %v7355
  %v8447 = vunpack.c.h.b16 %v7355
  %v8448 = vunpack.c.l.b16 %v7356
  %v8449 = vunpack.c.h.b16 %v7356
  %v8450 = vunpack.c.l.b16 %v7357
  %v8451 = vunpack.c.h.b16 %v7357
  %v8452 = vunpack.c.l.b16 %v7358
  %v8453 = vunpack.c.h.b16 %v7358
  %v8454 = vpack.c.b16 %v7754, %v7750
  %v8455 = vpack.c.b16 %v7755, %v7751
  %v8456 = vpack.c.b16 %v7756, %v7752
  %v8457 = vpack.c.b16 %v7757, %v7753
  %v8458 = vpack.c.b16 %v7762, %v7758
  %v8459 = vpack.c.b16 %v7763, %v7759
  %v8460 = vpack.c.b16 %v7764, %v7760
  %v8461 = vpack.c.b16 %v7765, %v7761
  %v8462 = vpack.c.b16 %v7770, %v7766
  %v8463 = vpack.c.b16 %v7771, %v7767
  %v8464 = vpack.c.b16 %v7772, %v7768
  %v8465 = vpack.c.b16 %v7773, %v7769
  %v8466 = vpack.c.b16 %v7778, %v7774
  %v8467 = vpack.c.b16 %v7779, %v7775
  %v8468 = vpack.c.b16 %v7780, %v7776
  %v8469 = vpack.c.b16 %v7781, %v7777
  %v8470 = vpack.c.b16 %v7786, %v7782
  %v8471 = vpack.c.b16 %v7787, %v7783
  %v8472 = vpack.c.b16 %v7788, %v7784
  %v8473 = vpack.c.b16 %v7789, %v7785
  %v8474 = vpack.c.b16 %v7794, %v7790
  %v8475 = vpack.c.b16 %v7795, %v7791
  %v8476 = vpack.c.b16 %v7796, %v7792
  %v8477 = vpack.c.b16 %v7797, %v7793
  %v8478 = vpack.c.b16 %v7802, %v7798
  %v8479 = vpack.c.b16 %v7803, %v7799
  %v8480 = vpack.c.b16 %v7804, %v7800
  %v8481 = vpack.c.b16 %v7805, %v7801
  %v8482 = vpack.c.b16 %v7810, %v7806
  %v8483 = vpack.c.b16 %v7811, %v7807
  %v8484 = vpack.c.b16 %v7812, %v7808
  %v8485 = vpack.c.b16 %v7813, %v7809
  %v8486 = vpack.c.b16 %v7818, %v7814
  %v8487 = vpack.c.b16 %v7819, %v7815
  %v8488 = vpack.c.b16 %v7820, %v7816
  %v8489 = vpack.c.b16 %v7821, %v7817
  %v8490 = vpack.c.b16 %v7826, %v7822
  %v8491 = vpack.c.b16 %v7827, %v7823
  %v8492 = vpack.c.b16 %v7828, %v7824
  %v8493 = vpack.c.b16 %v7829, %v7825
  %v8494 = vpack.c.b16 %v7834, %v7830
  %v8495 = vpack.c.b16 %v7835, %v7831
  %v8496 = vpack.c.b16 %v7836, %v7832
  %v8497 = vpack.c.b16 %v7837, %v7833
  %v8498 = vpack.c.b16 %v7842, %v7838
  %v8499 = vpack.c.b16 %v7843, %v7839
  %v8500 = vpack.c.b16 %v7844, %v7840
  %v8501 = vpack.c.b16 %v7845, %v7841
  %v8502 = vpack.c.b16 %v7850, %v7846
  %v8503 = vpack.c.b16 %v7851, %v7847
  %v8504 = vpack.c.b16 %v7852, %v7848
  %v8505 = vpack.c.b16 %v7853, %v7849
  %v8506 = vpack.c.b16 %v7858, %v7854
  %v8507 = vpack.c.b16 %v7859, %v7855
  %v8508 = vpack.c.b16 %v7860, %v7856
  %v8509 = vpack.c.b16 %v7861, %v7857
  %v8510 = vpack.c.b16 %v7866, %v7862
  %v8511 = vpack.c.b16 %v7867, %v7863
  %v8512 = vpack.c.b16 %v7868, %v7864
  %v8513 = vpack.c.b16 %v7869, %v7865
  %v8514 = vpack.c.b16 %v7874, %v7870
  %v8515 = vpack.c.b16 %v7875, %v7871
  %v8516 = vpack.c.b16 %v7876, %v7872
  %v8517 = vpack.c.b16 %v7877, %v7873
  %v8518 = vpack.c.b16 %v7882, %v7878
  %v8519 = vpack.c.b16 %v7883, %v7879
  %v8520 = vpack.c.b16 %v7884, %v7880
  %v8521 = vpack.c.b16 %v7885, %v7881
  %v8522 = vpack.c.b16 %v7890, %v7886
  %v8523 = vpack.c.b16 %v7891, %v7887
  %v8524 = vpack.c.b16 %v7892, %v7888
  %v8525 = vpack.c.b16 %v7893, %v7889
  %v8526 = vpack.c.b16 %v7898, %v7894
  %v8527 = vpack.c.b16 %v7899, %v7895
  %v8528 = vpack.c.b16 %v7900, %v7896
  %v8529 = vpack.c.b16 %v7901, %v7897
  %v8530 = vpack.c.b16 %v7906, %v7902
  %v8531 = vpack.c.b16 %v7907, %v7903
  %v8532 = vpack.c.b16 %v7908, %v7904
  %v8533 = vpack.c.b16 %v7909, %v7905
  %v8534 = vpack.c.b16 %v7914, %v7910
  %v8535 = vpack.c.b16 %v7915, %v7911
  %v8536 = vpack.c.b16 %v7916, %v7912
  %v8537 = vpack.c.b16 %v7917, %v7913
  %v8538 = vpack.c.b16 %v7922, %v7918
  %v8539 = vpack.c.b16 %v7923, %v7919
  %v8540 = vpack.c.b16 %v7924, %v7920
  %v8541 = vpack.c.b16 %v7925, %v7921
  %v8542 = vpack.c.b16 %v7930, %v7926
  %v8543 = vpack.c.b16 %v7931, %v7927
  %v8544 = vpack.c.b16 %v7932, %v7928
  %v8545 = vpack.c.b16 %v7933, %v7929
  %v8546 = vpack.c.b16 %v7938, %v7934
  %v8547 = vpack.c.b16 %v7939, %v7935
  %v8548 = vpack.c.b16 %v7940, %v7936
  %v8549 = vpack.c.b16 %v7941, %v7937
  %v8550 = vpack.c.b16 %v7946, %v7942
  %v8551 = vpack.c.b16 %v7947, %v7943
  %v8552 = vpack.c.b16 %v7948, %v7944
  %v8553 = vpack.c.b16 %v7949, %v7945
  %v8554 = vpack.c.b16 %v7954, %v7950
  %v8555 = vpack.c.b16 %v7955, %v7951
  %v8556 = vpack.c.b16 %v7956, %v7952
  %v8557 = vpack.c.b16 %v7957, %v7953
  %v8558 = vpack.c.b16 %v7962, %v7958
  %v8559 = vpack.c.b16 %v7963, %v7959
  %v8560 = vpack.c.b16 %v7964, %v7960
  %v8561 = vpack.c.b16 %v7965, %v7961
  %v8562 = vpack.c.b16 %v7970, %v7966
  %v8563 = vpack.c.b16 %v7971, %v7967
  %v8564 = vpack.c.b16 %v7972, %v7968
  %v8565 = vpack.c.b16 %v7973, %v7969
  %v8566 = vpack.c.b16 %v7978, %v7974
  %v8567 = vpack.c.b16 %v7979, %v7975
  %v8568 = vpack.c.b16 %v7980, %v7976
  %v8569 = vpack.c.b16 %v7981, %v7977
  %v8570 = vpack.c.b16 %v7986, %v7982
  %v8571 = vpack.c.b16 %v7987, %v7983
  %v8572 = vpack.c.b16 %v7988, %v7984
  %v8573 = vpack.c.b16 %v7989, %v7985
  %v8574 = vpack.c.b16 %v7994, %v7990
  %v8575 = vpack.c.b16 %v7995, %v7991
  %v8576 = vpack.c.b16 %v7996, %v7992
  %v8577 = vpack.c.b16 %v7997, %v7993
  %v8578 = vpack.c.b16 %v8002, %v7998
  %v8579 = vpack.c.b16 %v8003, %v7999
  %v8580 = vpack.c.b16 %v8004, %v8000
  %v8581 = vpack.c.b16 %v8005, %v8001
  %v8582 = vpack.c.b16 %v8010, %v8006
  %v8583 = vpack.c.b16 %v8011, %v8007
  %v8584 = vpack.c.b16 %v8012, %v8008
  %v8585 = vpack.c.b16 %v8013, %v8009
  %v8586 = vpack.c.b16 %v8018, %v8014
  %v8587 = vpack.c.b16 %v8019, %v8015
  %v8588 = vpack.c.b16 %v8020, %v8016
  %v8589 = vpack.c.b16 %v8021, %v8017
  %v8590 = vpack.c.b16 %v8026, %v8022
  %v8591 = vpack.c.b16 %v8027, %v8023
  %v8592 = vpack.c.b16 %v8028, %v8024
  %v8593 = vpack.c.b16 %v8029, %v8025
  %v8594 = vpack.c.b16 %v8034, %v8030
  %v8595 = vpack.c.b16 %v8035, %v8031
  %v8596 = vpack.c.b16 %v8036, %v8032
  %v8597 = vpack.c.b16 %v8037, %v8033
  %v8598 = vpack.c.b16 %v8042, %v8038
  %v8599 = vpack.c.b16 %v8043, %v8039
  %v8600 = vpack.c.b16 %v8044, %v8040
  %v8601 = vpack.c.b16 %v8045, %v8041
  %v8602 = vpack.c.b16 %v8050, %v8046
  %v8603 = vpack.c.b16 %v8051, %v8047
  %v8604 = vpack.c.b16 %v8052, %v8048
  %v8605 = vpack.c.b16 %v8053, %v8049
  %v8606 = vpack.c.b16 %v8058, %v8054
  %v8607 = vpack.c.b16 %v8059, %v8055
  %v8608 = vpack.c.b16 %v8060, %v8056
  %v8609 = vpack.c.b16 %v8061, %v8057
  %v8610 = vpack.c.b16 %v8066, %v8062
  %v8611 = vpack.c.b16 %v8067, %v8063
  %v8612 = vpack.c.b16 %v8068, %v8064
  %v8613 = vpack.c.b16 %v8069, %v8065
  %v8614 = vpack.c.b16 %v8074, %v8070
  %v8615 = vpack.c.b16 %v8075, %v8071
  %v8616 = vpack.c.b16 %v8076, %v8072
  %v8617 = vpack.c.b16 %v8077, %v8073
  %v8618 = vpack.c.b16 %v8082, %v8078
  %v8619 = vpack.c.b16 %v8083, %v8079
  %v8620 = vpack.c.b16 %v8084, %v8080
  %v8621 = vpack.c.b16 %v8085, %v8081
  %v8622 = vpack.c.b16 %v8090, %v8086
  %v8623 = vpack.c.b16 %v8091, %v8087
  %v8624 = vpack.c.b16 %v8092, %v8088
  %v8625 = vpack.c.b16 %v8093, %v8089
  %v8626 = vpack.c.b16 %v8098, %v8094
  %v8627 = vpack.c.b16 %v8099, %v8095
  %v8628 = vpack.c.b16 %v8100, %v8096
  %v8629 = vpack.c.b16 %v8101, %v8097
  %v8630 = vpack.c.b16 %v8106, %v8102
  %v8631 = vpack.c.b16 %v8107, %v8103
  %v8632 = vpack.c.b16 %v8108, %v8104
  %v8633 = vpack.c.b16 %v8109, %v8105
  %v8634 = vpack.c.b16 %v8114, %v8110
  %v8635 = vpack.c.b16 %v8115, %v8111
  %v8636 = vpack.c.b16 %v8116, %v8112
  %v8637 = vpack.c.b16 %v8117, %v8113
  %v8638 = vpack.c.b16 %v8122, %v8118
  %v8639 = vpack.c.b16 %v8123, %v8119
  %v8640 = vpack.c.b16 %v8124, %v8120
  %v8641 = vpack.c.b16 %v8125, %v8121
  %v8642 = vpack.c.b16 %v8130, %v8126
  %v8643 = vpack.c.b16 %v8131, %v8127
  %v8644 = vpack.c.b16 %v8132, %v8128
  %v8645 = vpack.c.b16 %v8133, %v8129
  %v8646 = vpack.c.b16 %v8138, %v8134
  %v8647 = vpack.c.b16 %v8139, %v8135
  %v8648 = vpack.c.b16 %v8140, %v8136
  %v8649 = vpack.c.b16 %v8141, %v8137
  %v8650 = vpack.c.b16 %v8146, %v8142
  %v8651 = vpack.c.b16 %v8147, %v8143
  %v8652 = vpack.c.b16 %v8148, %v8144
  %v8653 = vpack.c.b16 %v8149, %v8145
  %v8654 = vpack.c.b16 %v8154, %v8150
  %v8655 = vpack.c.b16 %v8155, %v8151
  %v8656 = vpack.c.b16 %v8156, %v8152
  %v8657 = vpack.c.b16 %v8157, %v8153
  %v8658 = vpack.c.b16 %v8162, %v8158
  %v8659 = vpack.c.b16 %v8163, %v8159
  %v8660 = vpack.c.b16 %v8164, %v8160
  %v8661 = vpack.c.b16 %v8165, %v8161
  %v8662 = vpack.c.b16 %v8170, %v8166
  %v8663 = vpack.c.b16 %v8171, %v8167
  %v8664 = vpack.c.b16 %v8172, %v8168
  %v8665 = vpack.c.b16 %v8173, %v8169
  %v8666 = vpack.c.b16 %v8178, %v8174
  %v8667 = vpack.c.b16 %v8179, %v8175
  %v8668 = vpack.c.b16 %v8180, %v8176
  %v8669 = vpack.c.b16 %v8181, %v8177
  %v8670 = vpack.c.b16 %v8186, %v8182
  %v8671 = vpack.c.b16 %v8187, %v8183
  %v8672 = vpack.c.b16 %v8188, %v8184
  %v8673 = vpack.c.b16 %v8189, %v8185
  %v8674 = vpack.c.b16 %v8194, %v8190
  %v8675 = vpack.c.b16 %v8195, %v8191
  %v8676 = vpack.c.b16 %v8196, %v8192
  %v8677 = vpack.c.b16 %v8197, %v8193
  %v8678 = vpack.c.b16 %v8202, %v8198
  %v8679 = vpack.c.b16 %v8203, %v8199
  %v8680 = vpack.c.b16 %v8204, %v8200
  %v8681 = vpack.c.b16 %v8205, %v8201
  %v8682 = vpack.c.b16 %v8210, %v8206
  %v8683 = vpack.c.b16 %v8211, %v8207
  %v8684 = vpack.c.b16 %v8212, %v8208
  %v8685 = vpack.c.b16 %v8213, %v8209
  %v8686 = vpack.c.b16 %v8218, %v8214
  %v8687 = vpack.c.b16 %v8219, %v8215
  %v8688 = vpack.c.b16 %v8220, %v8216
  %v8689 = vpack.c.b16 %v8221, %v8217
  %v8690 = vpack.c.b16 %v8226, %v8222
  %v8691 = vpack.c.b16 %v8227, %v8223
  %v8692 = vpack.c.b16 %v8228, %v8224
  %v8693 = vpack.c.b16 %v8229, %v8225
  %v8694 = vpack.c.b16 %v8234, %v8230
  %v8695 = vpack.c.b16 %v8235, %v8231
  %v8696 = vpack.c.b16 %v8236, %v8232
  %v8697 = vpack.c.b16 %v8237, %v8233
  %v8698 = vpack.c.b16 %v8242, %v8238
  %v8699 = vpack.c.b16 %v8243, %v8239
  %v8700 = vpack.c.b16 %v8244, %v8240
  %v8701 = vpack.c.b16 %v8245, %v8241
  %v8702 = vpack.c.b16 %v8250, %v8246
  %v8703 = vpack.c.b16 %v8251, %v8247
  %v8704 = vpack.c.b16 %v8252, %v8248
  %v8705 = vpack.c.b16 %v8253, %v8249
  %v8706 = vpack.c.b16 %v8258, %v8254
  %v8707 = vpack.c.b16 %v8259, %v8255
  %v8708 = vpack.c.b16 %v8260, %v8256
  %v8709 = vpack.c.b16 %v8261, %v8257
  %v8710 = vpack.c.b16 %v8266, %v8262
  %v8711 = vpack.c.b16 %v8267, %v8263
  %v8712 = vpack.c.b16 %v8268, %v8264
  %v8713 = vpack.c.b16 %v8269, %v8265
  %v8714 = vpack.c.b16 %v8274, %v8270
  %v8715 = vpack.c.b16 %v8275, %v8271
  %v8716 = vpack.c.b16 %v8276, %v8272
  %v8717 = vpack.c.b16 %v8277, %v8273
  %v8718 = vpack.c.b16 %v8282, %v8278
  %v8719 = vpack.c.b16 %v8283, %v8279
  %v8720 = vpack.c.b16 %v8284, %v8280
  %v8721 = vpack.c.b16 %v8285, %v8281
  %v8722 = vpack.c.b16 %v8290, %v8286
  %v8723 = vpack.c.b16 %v8291, %v8287
  %v8724 = vpack.c.b16 %v8292, %v8288
  %v8725 = vpack.c.b16 %v8293, %v8289
  %v8726 = vpack.c.b16 %v8298, %v8294
  %v8727 = vpack.c.b16 %v8299, %v8295
  %v8728 = vpack.c.b16 %v8300, %v8296
  %v8729 = vpack.c.b16 %v8301, %v8297
  %v8730 = vpack.c.b16 %v8306, %v8302
  %v8731 = vpack.c.b16 %v8307, %v8303
  %v8732 = vpack.c.b16 %v8308, %v8304
  %v8733 = vpack.c.b16 %v8309, %v8305
  %v8734 = vpack.c.b16 %v8314, %v8310
  %v8735 = vpack.c.b16 %v8315, %v8311
  %v8736 = vpack.c.b16 %v8316, %v8312
  %v8737 = vpack.c.b16 %v8317, %v8313
  %v8738 = vpack.c.b16 %v8322, %v8318
  %v8739 = vpack.c.b16 %v8323, %v8319
  %v8740 = vpack.c.b16 %v8324, %v8320
  %v8741 = vpack.c.b16 %v8325, %v8321
  %v8742 = vpack.c.b16 %v8330, %v8326
  %v8743 = vpack.c.b16 %v8331, %v8327
  %v8744 = vpack.c.b16 %v8332, %v8328
  %v8745 = vpack.c.b16 %v8333, %v8329
  %v8746 = vpack.c.b16 %v8338, %v8334
  %v8747 = vpack.c.b16 %v8339, %v8335
  %v8748 = vpack.c.b16 %v8340, %v8336
  %v8749 = vpack.c.b16 %v8341, %v8337
  %v8750 = vpack.c.b16 %v8346, %v8342
  %v8751 = vpack.c.b16 %v8347, %v8343
  %v8752 = vpack.c.b16 %v8348, %v8344
  %v8753 = vpack.c.b16 %v8349, %v8345
  %v8754 = vpack.c.b16 %v8354, %v8350
  %v8755 = vpack.c.b16 %v8355, %v8351
  %v8756 = vpack.c.b16 %v8356, %v8352
  %v8757 = vpack.c.b16 %v8357, %v8353
  %v8758 = vpack.c.b16 %v8362, %v8358
  %v8759 = vpack.c.b16 %v8363, %v8359
  %v8760 = vpack.c.b16 %v8364, %v8360
  %v8761 = vpack.c.b16 %v8365, %v8361
  %v8762 = vpack.c.b16 %v8370, %v8366
  %v8763 = vpack.c.b16 %v8371, %v8367
  %v8764 = vpack.c.b16 %v8372, %v8368
  %v8765 = vpack.c.b16 %v8373, %v8369
  %v8766 = vpack.c.b16 %v8378, %v8374
  %v8767 = vpack.c.b16 %v8379, %v8375
  %v8768 = vpack.c.b16 %v8380, %v8376
  %v8769 = vpack.c.b16 %v8381, %v8377
  %v8770 = vpack.c.b16 %v8386, %v8382
  %v8771 = vpack.c.b16 %v8387, %v8383
  %v8772 = vpack.c.b16 %v8388, %v8384
  %v8773 = vpack.c.b16 %v8389, %v8385
  %v8774 = vpack.c.b16 %v8394, %v8390
  %v8775 = vpack.c.b16 %v8395, %v8391
  %v8776 = vpack.c.b16 %v8396, %v8392
  %v8777 = vpack.c.b16 %v8397, %v8393
  %v8778 = vpack.c.b16 %v8402, %v8398
  %v8779 = vpack.c.b16 %v8403, %v8399
  %v8780 = vpack.c.b16 %v8404, %v8400
  %v8781 = vpack.c.b16 %v8405, %v8401
  %v8782 = vpack.c.b16 %v8410, %v8406
  %v8783 = vpack.c.b16 %v8411, %v8407
  %v8784 = vpack.c.b16 %v8412, %v8408
  %v8785 = vpack.c.b16 %v8413, %v8409
  %v8786 = vpack.c.b16 %v8418, %v8414
  %v8787 = vpack.c.b16 %v8419, %v8415
  %v8788 = vpack.c.b16 %v8420, %v8416
  %v8789 = vpack.c.b16 %v8421, %v8417
  %v8790 = vpack.c.b16 %v8426, %v8422
  %v8791 = vpack.c.b16 %v8427, %v8423
  %v8792 = vpack.c.b16 %v8428, %v8424
  %v8793 = vpack.c.b16 %v8429, %v8425
  %v8794 = vpack.c.b16 %v8434, %v8430
  %v8795 = vpack.c.b16 %v8435, %v8431
  %v8796 = vpack.c.b16 %v8436, %v8432
  %v8797 = vpack.c.b16 %v8437, %v8433
  %v8798 = vpack.c.b16 %v8442, %v8438
  %v8799 = vpack.c.b16 %v8443, %v8439
  %v8800 = vpack.c.b16 %v8444, %v8440
  %v8801 = vpack.c.b16 %v8445, %v8441
  %v8802 = vpack.c.b16 %v8450, %v8446
  %v8803 = vpack.c.b16 %v8451, %v8447
  %v8804 = vpack.c.b16 %v8452, %v8448
  %v8805 = vpack.c.b16 %v8453, %v8449
  %9158 = vmatprep.subr.bf16.mxu0 %v8483
  %9159 = vmatpush1.bf16.msra.mxu0 %v8482
  %9160 = vmatprep.subr.bf16.mxu0 %v8479
  %9161 = vmatpush1.bf16.msra.mxu0 %v8478
  %9162 = vmatprep.subr.bf16.mxu0 %v8475
  %9163 = vmatpush1.bf16.msra.mxu0 %v8474
  %9164 = vmatprep.subr.bf16.mxu0 %v8471
  %9165 = vmatpush1.bf16.msra.mxu0 %v8470
  %9166 = vmatprep.subr.bf16.mxu0 %v8467
  %9167 = vmatpush1.bf16.msra.mxu0 %v8466
  %9168 = vmatprep.subr.bf16.mxu0 %v8463
  %9169 = vmatpush1.bf16.msra.mxu0 %v8462
  %9170 = vmatprep.subr.bf16.mxu0 %v8459
  %9171 = vmatpush1.bf16.msra.mxu0 %v8458
  %9172 = vmatprep.subr.bf16.mxu0 %v8455
  %9173 = vmatpush1.bf16.msra.mxu0 %v8454
  %9174 = vmatprep.subr.bf16.mxu0 %v8515
  %9175 = vmatpush2.bf16.msra.mxu0 %v8514
  %9176 = vmatprep.subr.bf16.mxu0 %v8511
  %9177 = vmatpush2.bf16.msra.mxu0 %v8510
  %9178 = vmatprep.subr.bf16.mxu0 %v8507
  %9179 = vmatpush2.bf16.msra.mxu0 %v8506
  %9180 = vmatprep.subr.bf16.mxu0 %v8503
  %9181 = vmatpush2.bf16.msra.mxu0 %v8502
  %9182 = vmatprep.subr.bf16.mxu0 %v8499
  %9183 = vmatpush2.bf16.msra.mxu0 %v8498
  %9184 = vmatprep.subr.bf16.mxu0 %v8495
  %9185 = vmatpush2.bf16.msra.mxu0 %v8494
  %9186 = vmatprep.subr.bf16.mxu0 %v8491
  %9187 = vmatpush2.bf16.msra.mxu0 %v8490
  %9188 = vmatprep.subr.bf16.mxu0 %v8487
  %9189 = vmatpush2.bf16.msra.mxu0 %v8486
  %9190 = vmatprep.mubr.bf16.mxu0 %v7377
  %9191 = vmatmul.mubr.bf16.gmra.mxu0 %v7376
  %v9192 = vpop.f32.mrf.mxu0
  %v9193 = vadd.f32 0.0, %v9192
  %v9194 = vpop.f32.mrf.mxu0
  %v9195 = vadd.f32 0.0, %v9194
  %v9196 = vpop.f32.mrf.mxu0
  %v9197 = vpop.f32.mrf.mxu0
  %9198 = vdwg.mxu0
  %9199 = vmatprep.subr.bf16.mxu0 %v8547
  %9200 = vmatpush1.bf16.msra.mxu0 %v8546
  %9201 = vmatprep.subr.bf16.mxu0 %v8543
  %9202 = vmatpush1.bf16.msra.mxu0 %v8542
  %9203 = vmatprep.subr.bf16.mxu0 %v8539
  %9204 = vmatpush1.bf16.msra.mxu0 %v8538
  %9205 = vmatprep.subr.bf16.mxu0 %v8535
  %9206 = vmatpush1.bf16.msra.mxu0 %v8534
  %9207 = vmatprep.subr.bf16.mxu0 %v8531
  %9208 = vmatpush1.bf16.msra.mxu0 %v8530
  %9209 = vmatprep.subr.bf16.mxu0 %v8527
  %9210 = vmatpush1.bf16.msra.mxu0 %v8526
  %9211 = vmatprep.subr.bf16.mxu0 %v8523
  %9212 = vmatpush1.bf16.msra.mxu0 %v8522
  %9213 = vmatprep.subr.bf16.mxu0 %v8519
  %9214 = vmatpush1.bf16.msra.mxu0 %v8518
  %9215 = vmatprep.subr.bf16.mxu0 %v8579
  %9216 = vmatpush2.bf16.msra.mxu0 %v8578
  %9217 = vmatprep.subr.bf16.mxu0 %v8575
  %9218 = vmatpush2.bf16.msra.mxu0 %v8574
  %9219 = vmatprep.subr.bf16.mxu0 %v8571
  %9220 = vmatpush2.bf16.msra.mxu0 %v8570
  %9221 = vmatprep.subr.bf16.mxu0 %v8567
  %9222 = vmatpush2.bf16.msra.mxu0 %v8566
  %9223 = vmatprep.subr.bf16.mxu0 %v8563
  %9224 = vmatpush2.bf16.msra.mxu0 %v8562
  %9225 = vmatprep.subr.bf16.mxu0 %v8559
  %9226 = vmatpush2.bf16.msra.mxu0 %v8558
  %9227 = vmatprep.subr.bf16.mxu0 %v8555
  %9228 = vmatpush2.bf16.msra.mxu0 %v8554
  %9229 = vmatprep.subr.bf16.mxu0 %v8551
  %9230 = vmatpush2.bf16.msra.mxu0 %v8550
  %9231 = vmatprep.mubr.bf16.mxu0 %v7379
  %9232 = vmatmul.mubr.bf16.gmra.mxu0 %v7378
  %v9233 = vpop.f32.mrf.mxu0
  %v9234 = vadd.f32 %v9193, %v9233
  %v9235 = vpop.f32.mrf.mxu0
  %v9236 = vadd.f32 %v9195, %v9235
  %v9237 = vpop.f32.mrf.mxu0
  %v9238 = vpop.f32.mrf.mxu0
  %9239 = vdwg.mxu0
  %9240 = vmatprep.subr.bf16.mxu0 %v8611
  %9241 = vmatpush1.bf16.msra.mxu0 %v8610
  %9242 = vmatprep.subr.bf16.mxu0 %v8607
  %9243 = vmatpush1.bf16.msra.mxu0 %v8606
  %9244 = vmatprep.subr.bf16.mxu0 %v8603
  %9245 = vmatpush1.bf16.msra.mxu0 %v8602
  %9246 = vmatprep.subr.bf16.mxu0 %v8599
  %9247 = vmatpush1.bf16.msra.mxu0 %v8598
  %9248 = vmatprep.subr.bf16.mxu0 %v8595
  %9249 = vmatpush1.bf16.msra.mxu0 %v8594
  %9250 = vmatprep.subr.bf16.mxu0 %v8591
  %9251 = vmatpush1.bf16.msra.mxu0 %v8590
  %9252 = vmatprep.subr.bf16.mxu0 %v8587
  %9253 = vmatpush1.bf16.msra.mxu0 %v8586
  %9254 = vmatprep.subr.bf16.mxu0 %v8583
  %9255 = vmatpush1.bf16.msra.mxu0 %v8582
  %9256 = vmatprep.subr.bf16.mxu0 %v8643
  %9257 = vmatpush2.bf16.msra.mxu0 %v8642
  %9258 = vmatprep.subr.bf16.mxu0 %v8639
  %9259 = vmatpush2.bf16.msra.mxu0 %v8638
  %9260 = vmatprep.subr.bf16.mxu0 %v8635
  %9261 = vmatpush2.bf16.msra.mxu0 %v8634
  %9262 = vmatprep.subr.bf16.mxu0 %v8631
  %9263 = vmatpush2.bf16.msra.mxu0 %v8630
  %9264 = vmatprep.subr.bf16.mxu0 %v8627
  %9265 = vmatpush2.bf16.msra.mxu0 %v8626
  %9266 = vmatprep.subr.bf16.mxu0 %v8623
  %9267 = vmatpush2.bf16.msra.mxu0 %v8622
  %9268 = vmatprep.subr.bf16.mxu0 %v8619
  %9269 = vmatpush2.bf16.msra.mxu0 %v8618
  %9270 = vmatprep.subr.bf16.mxu0 %v8615
  %9271 = vmatpush2.bf16.msra.mxu0 %v8614
  %9272 = vmatprep.mubr.bf16.mxu0 %v7381
  %9273 = vmatmul.mubr.bf16.gmra.mxu0 %v7380
  %v9274 = vpop.f32.mrf.mxu0
  %v9275 = vadd.f32 %v9234, %v9274
  %v9276 = vpop.f32.mrf.mxu0
  %v9277 = vadd.f32 %v9236, %v9276
  %v9278 = vpop.f32.mrf.mxu0
  %v9279 = vpop.f32.mrf.mxu0
  %9280 = vdwg.mxu0
  %9281 = vmatprep.subr.bf16.mxu0 %v8675
  %9282 = vmatpush1.bf16.msra.mxu0 %v8674
  %9283 = vmatprep.subr.bf16.mxu0 %v8671
  %9284 = vmatpush1.bf16.msra.mxu0 %v8670
  %9285 = vmatprep.subr.bf16.mxu0 %v8667
  %9286 = vmatpush1.bf16.msra.mxu0 %v8666
  %9287 = vmatprep.subr.bf16.mxu0 %v8663
  %9288 = vmatpush1.bf16.msra.mxu0 %v8662
  %9289 = vmatprep.subr.bf16.mxu0 %v8659
  %9290 = vmatpush1.bf16.msra.mxu0 %v8658
  %9291 = vmatprep.subr.bf16.mxu0 %v8655
  %9292 = vmatpush1.bf16.msra.mxu0 %v8654
  %9293 = vmatprep.subr.bf16.mxu0 %v8651
  %9294 = vmatpush1.bf16.msra.mxu0 %v8650
  %9295 = vmatprep.subr.bf16.mxu0 %v8647
  %9296 = vmatpush1.bf16.msra.mxu0 %v8646
  %9297 = vmatprep.subr.bf16.mxu0 %v8707
  %9298 = vmatpush2.bf16.msra.mxu0 %v8706
  %9299 = vmatprep.subr.bf16.mxu0 %v8703
  %9300 = vmatpush2.bf16.msra.mxu0 %v8702
  %9301 = vmatprep.subr.bf16.mxu0 %v8699
  %9302 = vmatpush2.bf16.msra.mxu0 %v8698
  %9303 = vmatprep.subr.bf16.mxu0 %v8695
  %9304 = vmatpush2.bf16.msra.mxu0 %v8694
  %9305 = vmatprep.subr.bf16.mxu0 %v8691
  %9306 = vmatpush2.bf16.msra.mxu0 %v8690
  %9307 = vmatprep.subr.bf16.mxu0 %v8687
  %9308 = vmatpush2.bf16.msra.mxu0 %v8686
  %9309 = vmatprep.subr.bf16.mxu0 %v8683
  %9310 = vmatpush2.bf16.msra.mxu0 %v8682
  %9311 = vmatprep.subr.bf16.mxu0 %v8679
  %9312 = vmatpush2.bf16.msra.mxu0 %v8678
  %9313 = vmatprep.mubr.bf16.mxu0 %v7383
  %9314 = vmatmul.mubr.bf16.gmra.mxu0 %v7382
  %v9315 = vpop.f32.mrf.mxu0
  %v9316 = vadd.f32 %v9275, %v9315
  %v9317 = vpop.f32.mrf.mxu0
  %v9318 = vadd.f32 %v9277, %v9317
  %v9319 = vpop.f32.mrf.mxu0
  %v9320 = vpop.f32.mrf.mxu0
  %9321 = vdwg.mxu0
  %9322 = vmatprep.subr.bf16.mxu0 %v8739
  %9323 = vmatpush1.bf16.msra.mxu0 %v8738
  %9324 = vmatprep.subr.bf16.mxu0 %v8735
  %9325 = vmatpush1.bf16.msra.mxu0 %v8734
  %9326 = vmatprep.subr.bf16.mxu0 %v8731
  %9327 = vmatpush1.bf16.msra.mxu0 %v8730
  %9328 = vmatprep.subr.bf16.mxu0 %v8727
  %9329 = vmatpush1.bf16.msra.mxu0 %v8726
  %9330 = vmatprep.subr.bf16.mxu0 %v8723
  %9331 = vmatpush1.bf16.msra.mxu0 %v8722
  %9332 = vmatprep.subr.bf16.mxu0 %v8719
  %9333 = vmatpush1.bf16.msra.mxu0 %v8718
  %9334 = vmatprep.subr.bf16.mxu0 %v8715
  %9335 = vmatpush1.bf16.msra.mxu0 %v8714
  %9336 = vmatprep.subr.bf16.mxu0 %v8711
  %9337 = vmatpush1.bf16.msra.mxu0 %v8710
  %9338 = vmatprep.subr.bf16.mxu0 %v8771
  %9339 = vmatpush2.bf16.msra.mxu0 %v8770
  %9340 = vmatprep.subr.bf16.mxu0 %v8767
  %9341 = vmatpush2.bf16.msra.mxu0 %v8766
  %9342 = vmatprep.subr.bf16.mxu0 %v8763
  %9343 = vmatpush2.bf16.msra.mxu0 %v8762
  %9344 = vmatprep.subr.bf16.mxu0 %v8759
  %9345 = vmatpush2.bf16.msra.mxu0 %v8758
  %9346 = vmatprep.subr.bf16.mxu0 %v8755
  %9347 = vmatpush2.bf16.msra.mxu0 %v8754
  %9348 = vmatprep.subr.bf16.mxu0 %v8751
  %9349 = vmatpush2.bf16.msra.mxu0 %v8750
  %9350 = vmatprep.subr.bf16.mxu0 %v8747
  %9351 = vmatpush2.bf16.msra.mxu0 %v8746
  %9352 = vmatprep.subr.bf16.mxu0 %v8743
  %9353 = vmatpush2.bf16.msra.mxu0 %v8742
  %9354 = vmatprep.mubr.bf16.mxu0 %v7385
  %9355 = vmatmul.mubr.bf16.gmra.mxu0 %v7384
  %v9356 = vpop.f32.mrf.mxu0
  %v9357 = vadd.f32 %v9316, %v9356
  %v9358 = vpop.f32.mrf.mxu0
  %v9359 = vadd.f32 %v9318, %v9358
  %v9360 = vpop.f32.mrf.mxu0
  %v9361 = vpop.f32.mrf.mxu0
  %9362 = vdwg.mxu0
  %9363 = vmatprep.subr.bf16.mxu0 %v8803
  %9364 = vmatpush1.bf16.msra.mxu0 %v8802
  %9365 = vmatprep.subr.bf16.mxu0 %v8799
  %9366 = vmatpush1.bf16.msra.mxu0 %v8798
  %9367 = vmatprep.subr.bf16.mxu0 %v8795
  %9368 = vmatpush1.bf16.msra.mxu0 %v8794
  %9369 = vmatprep.subr.bf16.mxu0 %v8791
  %9370 = vmatpush1.bf16.msra.mxu0 %v8790
  %9371 = vmatprep.subr.bf16.mxu0 %v8787
  %9372 = vmatpush1.bf16.msra.mxu0 %v8786
  %9373 = vmatprep.subr.bf16.mxu0 %v8783
  %9374 = vmatpush1.bf16.msra.mxu0 %v8782
  %9375 = vmatprep.subr.bf16.mxu0 %v8779
  %9376 = vmatpush1.bf16.msra.mxu0 %v8778
  %9377 = vmatprep.subr.bf16.mxu0 %v8775
  %9378 = vmatpush1.bf16.msra.mxu0 %v8774
  %9379 = vmatprep.subr.bf16.mxu0 0
  %9380 = vmatpush2.bf16.msra.mxu0 0
  %9381 = vmatprep.subr.bf16.mxu0 0
  %9382 = vmatpush2.bf16.msra.mxu0 0
  %9383 = vmatprep.subr.bf16.mxu0 0
  %9384 = vmatpush2.bf16.msra.mxu0 0
  %9385 = vmatprep.subr.bf16.mxu0 0
  %9386 = vmatpush2.bf16.msra.mxu0 0
  %9387 = vmatprep.subr.bf16.mxu0 0
  %9388 = vmatpush2.bf16.msra.mxu0 0
  %9389 = vmatprep.subr.bf16.mxu0 0
  %9390 = vmatpush2.bf16.msra.mxu0 0
  %9391 = vmatprep.subr.bf16.mxu0 0
  %9392 = vmatpush2.bf16.msra.mxu0 0
  %9393 = vmatprep.subr.bf16.mxu0 0
  %9394 = vmatpush2.bf16.msra.mxu0 0
  %9395 = vmatprep.mubr.bf16.mxu0 0
  %9396 = vmatmul.mubr.bf16.gmra.mxu0 %v7386
  %v9397 = vpop.f32.mrf.mxu0
  %v9398 = vadd.f32 %v9357, %v9397
  %v9399 = vpop.f32.mrf.mxu0
  %v9400 = vadd.f32 %v9359, %v9399
  %v9401 = vpop.f32.mrf.mxu0
  %v9402 = vpop.f32.mrf.mxu0
  %9403 = vdwg.mxu0
  %9404 = vmatprep.subr.bf16.mxu0 %v8485
  %9405 = vmatpush1.bf16.msra.mxu0 %v8484
  %9406 = vmatprep.subr.bf16.mxu0 %v8481
  %9407 = vmatpush1.bf16.msra.mxu0 %v8480
  %9408 = vmatprep.subr.bf16.mxu0 %v8477
  %9409 = vmatpush1.bf16.msra.mxu0 %v8476
  %9410 = vmatprep.subr.bf16.mxu0 %v8473
  %9411 = vmatpush1.bf16.msra.mxu0 %v8472
  %9412 = vmatprep.subr.bf16.mxu0 %v8469
  %9413 = vmatpush1.bf16.msra.mxu0 %v8468
  %9414 = vmatprep.subr.bf16.mxu0 %v8465
  %9415 = vmatpush1.bf16.msra.mxu0 %v8464
  %9416 = vmatprep.subr.bf16.mxu0 %v8461
  %9417 = vmatpush1.bf16.msra.mxu0 %v8460
  %9418 = vmatprep.subr.bf16.mxu0 %v8457
  %9419 = vmatpush1.bf16.msra.mxu0 %v8456
  %9420 = vmatprep.subr.bf16.mxu0 %v8517
  %9421 = vmatpush2.bf16.msra.mxu0 %v8516
  %9422 = vmatprep.subr.bf16.mxu0 %v8513
  %9423 = vmatpush2.bf16.msra.mxu0 %v8512
  %9424 = vmatprep.subr.bf16.mxu0 %v8509
  %9425 = vmatpush2.bf16.msra.mxu0 %v8508
  %9426 = vmatprep.subr.bf16.mxu0 %v8505
  %9427 = vmatpush2.bf16.msra.mxu0 %v8504
  %9428 = vmatprep.subr.bf16.mxu0 %v8501
  %9429 = vmatpush2.bf16.msra.mxu0 %v8500
  %9430 = vmatprep.subr.bf16.mxu0 %v8497
  %9431 = vmatpush2.bf16.msra.mxu0 %v8496
  %9432 = vmatprep.subr.bf16.mxu0 %v8493
  %9433 = vmatpush2.bf16.msra.mxu0 %v8492
  %9434 = vmatprep.subr.bf16.mxu0 %v8489
  %9435 = vmatpush2.bf16.msra.mxu0 %v8488
  %9436 = vmatprep.mubr.bf16.mxu0 %v7377
  %9437 = vmatmul.mubr.bf16.gmra.mxu0 %v7376
  %v9438 = vpop.f32.mrf.mxu0
  %v9439 = vadd.f32 0.0, %v9438
  %v9440 = vpop.f32.mrf.mxu0
  %v9441 = vadd.f32 0.0, %v9440
  %v9442 = vpop.f32.mrf.mxu0
  %v9443 = vpop.f32.mrf.mxu0
  %9444 = vdwg.mxu0
  %9445 = vmatprep.subr.bf16.mxu0 %v8549
  %9446 = vmatpush1.bf16.msra.mxu0 %v8548
  %9447 = vmatprep.subr.bf16.mxu0 %v8545
  %9448 = vmatpush1.bf16.msra.mxu0 %v8544
  %9449 = vmatprep.subr.bf16.mxu0 %v8541
  %9450 = vmatpush1.bf16.msra.mxu0 %v8540
  %9451 = vmatprep.subr.bf16.mxu0 %v8537
  %9452 = vmatpush1.bf16.msra.mxu0 %v8536
  %9453 = vmatprep.subr.bf16.mxu0 %v8533
  %9454 = vmatpush1.bf16.msra.mxu0 %v8532
  %9455 = vmatprep.subr.bf16.mxu0 %v8529
  %9456 = vmatpush1.bf16.msra.mxu0 %v8528
  %9457 = vmatprep.subr.bf16.mxu0 %v8525
  %9458 = vmatpush1.bf16.msra.mxu0 %v8524
  %9459 = vmatprep.subr.bf16.mxu0 %v8521
  %9460 = vmatpush1.bf16.msra.mxu0 %v8520
  %9461 = vmatprep.subr.bf16.mxu0 %v8581
  %9462 = vmatpush2.bf16.msra.mxu0 %v8580
  %9463 = vmatprep.subr.bf16.mxu0 %v8577
  %9464 = vmatpush2.bf16.msra.mxu0 %v8576
  %9465 = vmatprep.subr.bf16.mxu0 %v8573
  %9466 = vmatpush2.bf16.msra.mxu0 %v8572
  %9467 = vmatprep.subr.bf16.mxu0 %v8569
  %9468 = vmatpush2.bf16.msra.mxu0 %v8568
  %9469 = vmatprep.subr.bf16.mxu0 %v8565
  %9470 = vmatpush2.bf16.msra.mxu0 %v8564
  %9471 = vmatprep.subr.bf16.mxu0 %v8561
  %9472 = vmatpush2.bf16.msra.mxu0 %v8560
  %9473 = vmatprep.subr.bf16.mxu0 %v8557
  %9474 = vmatpush2.bf16.msra.mxu0 %v8556
  %9475 = vmatprep.subr.bf16.mxu0 %v8553
  %9476 = vmatpush2.bf16.msra.mxu0 %v8552
  %9477 = vmatprep.mubr.bf16.mxu0 %v7379
  %9478 = vmatmul.mubr.bf16.gmra.mxu0 %v7378
  %v9479 = vpop.f32.mrf.mxu0
  %v9480 = vadd.f32 %v9439, %v9479
  %v9481 = vpop.f32.mrf.mxu0
  %v9482 = vadd.f32 %v9441, %v9481
  %v9483 = vpop.f32.mrf.mxu0
  %v9484 = vpop.f32.mrf.mxu0
  %9485 = vdwg.mxu0
  %9486 = vmatprep.subr.bf16.mxu0 %v8613
  %9487 = vmatpush1.bf16.msra.mxu0 %v8612
  %9488 = vmatprep.subr.bf16.mxu0 %v8609
  %9489 = vmatpush1.bf16.msra.mxu0 %v8608
  %9490 = vmatprep.subr.bf16.mxu0 %v8605
  %9491 = vmatpush1.bf16.msra.mxu0 %v8604
  %9492 = vmatprep.subr.bf16.mxu0 %v8601
  %9493 = vmatpush1.bf16.msra.mxu0 %v8600
  %9494 = vmatprep.subr.bf16.mxu0 %v8597
  %9495 = vmatpush1.bf16.msra.mxu0 %v8596
  %9496 = vmatprep.subr.bf16.mxu0 %v8593
  %9497 = vmatpush1.bf16.msra.mxu0 %v8592
  %9498 = vmatprep.subr.bf16.mxu0 %v8589
  %9499 = vmatpush1.bf16.msra.mxu0 %v8588
  %9500 = vmatprep.subr.bf16.mxu0 %v8585
  %9501 = vmatpush1.bf16.msra.mxu0 %v8584
  %9502 = vmatprep.subr.bf16.mxu0 %v8645
  %9503 = vmatpush2.bf16.msra.mxu0 %v8644
  %9504 = vmatprep.subr.bf16.mxu0 %v8641
  %9505 = vmatpush2.bf16.msra.mxu0 %v8640
  %9506 = vmatprep.subr.bf16.mxu0 %v8637
  %9507 = vmatpush2.bf16.msra.mxu0 %v8636
  %9508 = vmatprep.subr.bf16.mxu0 %v8633
  %9509 = vmatpush2.bf16.msra.mxu0 %v8632
  %9510 = vmatprep.subr.bf16.mxu0 %v8629
  %9511 = vmatpush2.bf16.msra.mxu0 %v8628
  %9512 = vmatprep.subr.bf16.mxu0 %v8625
  %9513 = vmatpush2.bf16.msra.mxu0 %v8624
  %9514 = vmatprep.subr.bf16.mxu0 %v8621
  %9515 = vmatpush2.bf16.msra.mxu0 %v8620
  %9516 = vmatprep.subr.bf16.mxu0 %v8617
  %9517 = vmatpush2.bf16.msra.mxu0 %v8616
  %9518 = vmatprep.mubr.bf16.mxu0 %v7381
  %9519 = vmatmul.mubr.bf16.gmra.mxu0 %v7380
  %v9520 = vpop.f32.mrf.mxu0
  %v9521 = vadd.f32 %v9480, %v9520
  %v9522 = vpop.f32.mrf.mxu0
  %v9523 = vadd.f32 %v9482, %v9522
  %v9524 = vpop.f32.mrf.mxu0
  %v9525 = vpop.f32.mrf.mxu0
  %9526 = vdwg.mxu0
  %9527 = vmatprep.subr.bf16.mxu0 %v8677
  %9528 = vmatpush1.bf16.msra.mxu0 %v8676
  %9529 = vmatprep.subr.bf16.mxu0 %v8673
  %9530 = vmatpush1.bf16.msra.mxu0 %v8672
  %9531 = vmatprep.subr.bf16.mxu0 %v8669
  %9532 = vmatpush1.bf16.msra.mxu0 %v8668
  %9533 = vmatprep.subr.bf16.mxu0 %v8665
  %9534 = vmatpush1.bf16.msra.mxu0 %v8664
  %9535 = vmatprep.subr.bf16.mxu0 %v8661
  %9536 = vmatpush1.bf16.msra.mxu0 %v8660
  %9537 = vmatprep.subr.bf16.mxu0 %v8657
  %9538 = vmatpush1.bf16.msra.mxu0 %v8656
  %9539 = vmatprep.subr.bf16.mxu0 %v8653
  %9540 = vmatpush1.bf16.msra.mxu0 %v8652
  %9541 = vmatprep.subr.bf16.mxu0 %v8649
  %9542 = vmatpush1.bf16.msra.mxu0 %v8648
  %9543 = vmatprep.subr.bf16.mxu0 %v8709
  %9544 = vmatpush2.bf16.msra.mxu0 %v8708
  %9545 = vmatprep.subr.bf16.mxu0 %v8705
  %9546 = vmatpush2.bf16.msra.mxu0 %v8704
  %9547 = vmatprep.subr.bf16.mxu0 %v8701
  %9548 = vmatpush2.bf16.msra.mxu0 %v8700
  %9549 = vmatprep.subr.bf16.mxu0 %v8697
  %9550 = vmatpush2.bf16.msra.mxu0 %v8696
  %9551 = vmatprep.subr.bf16.mxu0 %v8693
  %9552 = vmatpush2.bf16.msra.mxu0 %v8692
  %9553 = vmatprep.subr.bf16.mxu0 %v8689
  %9554 = vmatpush2.bf16.msra.mxu0 %v8688
  %9555 = vmatprep.subr.bf16.mxu0 %v8685
  %9556 = vmatpush2.bf16.msra.mxu0 %v8684
  %9557 = vmatprep.subr.bf16.mxu0 %v8681
  %9558 = vmatpush2.bf16.msra.mxu0 %v8680
  %9559 = vmatprep.mubr.bf16.mxu0 %v7383
  %9560 = vmatmul.mubr.bf16.gmra.mxu0 %v7382
  %v9561 = vpop.f32.mrf.mxu0
  %v9562 = vadd.f32 %v9521, %v9561
  %v9563 = vpop.f32.mrf.mxu0
  %v9564 = vadd.f32 %v9523, %v9563
  %v9565 = vpop.f32.mrf.mxu0
  %v9566 = vpop.f32.mrf.mxu0
  %9567 = vdwg.mxu0
  %9568 = vmatprep.subr.bf16.mxu0 %v8741
  %9569 = vmatpush1.bf16.msra.mxu0 %v8740
  %9570 = vmatprep.subr.bf16.mxu0 %v8737
  %9571 = vmatpush1.bf16.msra.mxu0 %v8736
  %9572 = vmatprep.subr.bf16.mxu0 %v8733
  %9573 = vmatpush1.bf16.msra.mxu0 %v8732
  %9574 = vmatprep.subr.bf16.mxu0 %v8729
  %9575 = vmatpush1.bf16.msra.mxu0 %v8728
  %9576 = vmatprep.subr.bf16.mxu0 %v8725
  %9577 = vmatpush1.bf16.msra.mxu0 %v8724
  %9578 = vmatprep.subr.bf16.mxu0 %v8721
  %9579 = vmatpush1.bf16.msra.mxu0 %v8720
  %9580 = vmatprep.subr.bf16.mxu0 %v8717
  %9581 = vmatpush1.bf16.msra.mxu0 %v8716
  %9582 = vmatprep.subr.bf16.mxu0 %v8713
  %9583 = vmatpush1.bf16.msra.mxu0 %v8712
  %9584 = vmatprep.subr.bf16.mxu0 %v8773
  %9585 = vmatpush2.bf16.msra.mxu0 %v8772
  %9586 = vmatprep.subr.bf16.mxu0 %v8769
  %9587 = vmatpush2.bf16.msra.mxu0 %v8768
  %9588 = vmatprep.subr.bf16.mxu0 %v8765
  %9589 = vmatpush2.bf16.msra.mxu0 %v8764
  %9590 = vmatprep.subr.bf16.mxu0 %v8761
  %9591 = vmatpush2.bf16.msra.mxu0 %v8760
  %9592 = vmatprep.subr.bf16.mxu0 %v8757
  %9593 = vmatpush2.bf16.msra.mxu0 %v8756
  %9594 = vmatprep.subr.bf16.mxu0 %v8753
  %9595 = vmatpush2.bf16.msra.mxu0 %v8752
  %9596 = vmatprep.subr.bf16.mxu0 %v8749
  %9597 = vmatpush2.bf16.msra.mxu0 %v8748
  %9598 = vmatprep.subr.bf16.mxu0 %v8745
  %9599 = vmatpush2.bf16.msra.mxu0 %v8744
  %9600 = vmatprep.mubr.bf16.mxu0 %v7385
  %9601 = vmatmul.mubr.bf16.gmra.mxu0 %v7384
  %v9602 = vpop.f32.mrf.mxu0
  %v9603 = vadd.f32 %v9562, %v9602
  %v9604 = vpop.f32.mrf.mxu0
  %v9605 = vadd.f32 %v9564, %v9604
  %v9606 = vpop.f32.mrf.mxu0
  %v9607 = vpop.f32.mrf.mxu0
  %9608 = vdwg.mxu0
  %9609 = vmatprep.subr.bf16.mxu0 %v8805
  %9610 = vmatpush1.bf16.msra.mxu0 %v8804
  %9611 = vmatprep.subr.bf16.mxu0 %v8801
  %9612 = vmatpush1.bf16.msra.mxu0 %v8800
  %9613 = vmatprep.subr.bf16.mxu0 %v8797
  %9614 = vmatpush1.bf16.msra.mxu0 %v8796
  %9615 = vmatprep.subr.bf16.mxu0 %v8793
  %9616 = vmatpush1.bf16.msra.mxu0 %v8792
  %9617 = vmatprep.subr.bf16.mxu0 %v8789
  %9618 = vmatpush1.bf16.msra.mxu0 %v8788
  %9619 = vmatprep.subr.bf16.mxu0 %v8785
  %9620 = vmatpush1.bf16.msra.mxu0 %v8784
  %9621 = vmatprep.subr.bf16.mxu0 %v8781
  %9622 = vmatpush1.bf16.msra.mxu0 %v8780
  %9623 = vmatprep.subr.bf16.mxu0 %v8777
  %9624 = vmatpush1.bf16.msra.mxu0 %v8776
  %9625 = vmatprep.subr.bf16.mxu0 0
  %9626 = vmatpush2.bf16.msra.mxu0 0
  %9627 = vmatprep.subr.bf16.mxu0 0
  %9628 = vmatpush2.bf16.msra.mxu0 0
  %9629 = vmatprep.subr.bf16.mxu0 0
  %9630 = vmatpush2.bf16.msra.mxu0 0
  %9631 = vmatprep.subr.bf16.mxu0 0
  %9632 = vmatpush2.bf16.msra.mxu0 0
  %9633 = vmatprep.subr.bf16.mxu0 0
  %9634 = vmatpush2.bf16.msra.mxu0 0
  %9635 = vmatprep.subr.bf16.mxu0 0
  %9636 = vmatpush2.bf16.msra.mxu0 0
  %9637 = vmatprep.subr.bf16.mxu0 0
  %9638 = vmatpush2.bf16.msra.mxu0 0
  %9639 = vmatprep.subr.bf16.mxu0 0
  %9640 = vmatpush2.bf16.msra.mxu0 0
  %9641 = vmatprep.mubr.bf16.mxu0 0
  %9642 = vmatmul.mubr.bf16.gmra.mxu0 %v7386
  %v9643 = vpop.f32.mrf.mxu0
  %v9644 = vadd.f32 %v9603, %v9643
  %v9645 = vpop.f32.mrf.mxu0
  %v9646 = vadd.f32 %v9605, %v9645
  %v9647 = vpop.f32.mrf.mxu0
  %v9648 = vpop.f32.mrf.mxu0
  %9649 = vdwg.mxu0
  %v9651 = vrot.slane %v9398, 1
  %9652 = vrot.lane.b32.xlu0 %v9651, 64
  %v9653 = vpop.permute.xlu0 %9652
  %v9655 = vadd.f32 %v9398, %v9653
  %v9657 = vrot.slane %v9400, 2
  %v9659 = vadd.f32 %v9655, %v9657
  %v9660 = vrot.slane %v9400, 3
  %9661 = vrot.lane.b32.xlu0 %v9660, 64
  %v9662 = vpop.permute.xlu0 %9661
  %v9664 = vadd.f32 %v9659, %v9662
  %v9666 = vrot.slane %v9644, 4
  %v9668 = vadd.f32 %v9664, %v9666
  %v9669 = vrot.slane %v9644, 5
  %9670 = vrot.lane.b32.xlu0 %v9669, 64
  %v9671 = vpop.permute.xlu0 %9670
  %v9673 = vadd.f32 %v9668, %v9671
  %v9675 = vrot.slane %v9646, 6
  %v9677 = vadd.f32 %v9673, %v9675
  %v9678 = vrot.slane %v9646, 7
  %9679 = vrot.lane.b32.xlu0 %v9678, 64
  %v9680 = vpop.permute.xlu0 %9679
  %v9682 = vadd.f32 %v9677, %v9680
  %v9683 = vadd.f32 %v9682, %v1118
  %vm9684 = vcmask 523264
  %v9685 = vsel %vm9684, %v6991, inf
  %v9686 = vsel %vm9684, %v6994, inf
  %v9687 = vmin.f32 %v9685, %v9686
  %9688 = vmin.xlane.f32.xlu0 %v9687
  %v9689 = vpop.xlane.xlu0 %9688
  %v9690 = vrot.slane %v9689, 4
  %v9691 = vmin.f32 %v9689, %v9690
  %v9692 = vrot.slane %v9691, 2
  %v9693 = vmin.f32 %v9691, %v9692
  %v9694 = vrot.slane %v9693, 1
  %v9695 = vmin.f32 %v9693, %v9694
  %s9696 = vtos %v9695
  %v9697 = vstv %s9696
  %v9698 = vsel %vm9684, %v6991, -inf
  %v9699 = vsel %vm9684, %v6994, -inf
  %v9700 = vmax.f32 %v9698, %v9699
  %9701 = vmax.xlane.f32.xlu0 %v9700
  %v9702 = vpop.xlane.xlu0 %9701
  %v9703 = vrot.slane %v9702, 4
  %v9704 = vmax.f32 %v9702, %v9703
  %v9705 = vrot.slane %v9704, 2
  %v9706 = vmax.f32 %v9704, %v9705
  %v9707 = vrot.slane %v9706, 1
  %v9708 = vmax.f32 %v9706, %v9707
  %s9709 = vtos %v9708
  %v9710 = vstv %s9709
  %v9711 = vsub.f32 %v6991, %v9697
  %v9712 = vsub.f32 %v6994, %v9697
  %v9713 = vsub.f32 %v9710, %v9697
  %v9714 = vrcp.pop %v9713
  %v9715 = vmul.f32 %v9711, %v9714
  %v9716 = vmul.f32 %v9712, %v9714
  %v9717 = vmul.f32 %v9715, 0.35
  %v9718 = vmul.f32 %v9716, 0.35
  %vm9719 = vcmask 516096
  %v9720 = vsel %vm9719, %v9683, inf
  %9721 = vmin.xlane.f32.xlu0 %v9720
  %v9722 = vpop.xlane.xlu0 %9721
  %v9723 = vrot.slane %v9722, 4
  %v9724 = vmin.f32 %v9722, %v9723
  %v9725 = vrot.slane %v9724, 2
  %v9726 = vmin.f32 %v9724, %v9725
  %v9727 = vrot.slane %v9726, 1
  %v9728 = vmin.f32 %v9726, %v9727
  %s9729 = vtos %v9728
  %v9730 = vstv %s9729
  %v9731 = vsel %vm9719, %v9683, -inf
  %9732 = vmax.xlane.f32.xlu0 %v9731
  %v9733 = vpop.xlane.xlu0 %9732
  %v9734 = vrot.slane %v9733, 4
  %v9735 = vmax.f32 %v9733, %v9734
  %v9736 = vrot.slane %v9735, 2
  %v9737 = vmax.f32 %v9735, %v9736
  %v9738 = vrot.slane %v9737, 1
  %v9739 = vmax.f32 %v9737, %v9738
  %s9740 = vtos %v9739
  %v9741 = vstv %s9740
  %v9742 = vsub.f32 %v9683, %v9730
  %v9743 = vsub.f32 %v9741, %v9730
  %v9744 = vrcp.pop %v9743
  %v9745 = vmul.f32 %v9742, %v9744
  %v9746 = vmul.f32 %v9745, 0.65
  %v9747 = vlaneseq
  %v9748 = vshrl.u32 %v9747, 7
  %v9749 = vsub.s32 0, %v9748
  %v9750 = vrot.slane %v9746, %v9749
  %v9751 = vadd.f32 %v9717, %v9750
  %v9752 = vadd.f32 %v9718, %v9750
  %v9753 = vpack.c.bf16 %v9752, %v9751
  %v9754 = vld [vmem:[%s11] sm:$0xf]
  %v9755 = vld [vmem:[%s11 + $0x4] sm:$0xf]
  %v9756 = vld [vmem:[%s11 + $0x8] sm:$0xf]
  %v9757 = vld [vmem:[%s11 + $0xc] sm:$0xf]
  %v9758 = vld [vmem:[%s11 + $0x10] sm:$0xf]
  %v9759 = vld [vmem:[%s11 + $0x14] sm:$0xf]
  %v9760 = vld [vmem:[%s11 + $0x18] sm:$0xf]
  %v9761 = vld [vmem:[%s11 + $0x1c] sm:$0xf]
  %v9763 = vlaneseq
  %v9764 = vshrl.u32 %v9763, 7
  %v9765 = vsub.s32 0, %v9764
  %v9766 = vrot.slane %v1122, %v9765
  %v9776 = vunpack.c.l.b16 %v9754
  %v9777 = vunpack.c.l.b16 %v9755
  %v9778 = vunpack.c.l.b16 %v9756
  %v9779 = vunpack.c.l.b16 %v9757
  %v9780 = vunpack.c.l.b16 %v9758
  %v9781 = vunpack.c.l.b16 %v9759
  %v9782 = vunpack.c.l.b16 %v9760
  %v9783 = vunpack.c.l.b16 %v9761
  %v9784 = vpack.c.b16 %v9777, %v9776
  %v9785 = vpack.c.b16 %v9779, %v9778
  %v9786 = vpack.c.b16 %v9781, %v9780
  %v9787 = vpack.c.b16 %v9783, %v9782
  %v9793 = vsel %vm9684, %v9753, 0
  %9795 = vmatprep.subr.bf16.mxu0 0
  %9796 = vmatpush1.bf16.msra.mxu0 0
  %9797 = vmatprep.subr.bf16.mxu0 0
  %9798 = vmatpush1.bf16.msra.mxu0 0
  %9799 = vmatprep.subr.bf16.mxu0 0
  %9800 = vmatpush1.bf16.msra.mxu0 0
  %9801 = vmatprep.subr.bf16.mxu0 0
  %9802 = vmatpush1.bf16.msra.mxu0 0
  %9803 = vmatprep.subr.bf16.mxu0 0
  %9804 = vmatpush1.bf16.msra.mxu0 %v9787
  %9805 = vmatprep.subr.bf16.mxu0 0
  %9806 = vmatpush1.bf16.msra.mxu0 %v9786
  %9807 = vmatprep.subr.bf16.mxu0 0
  %9808 = vmatpush1.bf16.msra.mxu0 %v9785
  %9809 = vmatprep.subr.bf16.mxu0 0
  %9810 = vmatpush1.bf16.msra.mxu0 %v9784
  %9811 = vmatprep.subr.bf16.mxu0 0
  %9812 = vmatpush2.bf16.msra.mxu0 0
  %9813 = vmatprep.subr.bf16.mxu0 0
  %9814 = vmatpush2.bf16.msra.mxu0 0
  %9815 = vmatprep.subr.bf16.mxu0 0
  %9816 = vmatpush2.bf16.msra.mxu0 0
  %9817 = vmatprep.subr.bf16.mxu0 0
  %9818 = vmatpush2.bf16.msra.mxu0 0
  %9819 = vmatprep.subr.bf16.mxu0 0
  %9820 = vmatpush2.bf16.msra.mxu0 0
  %9821 = vmatprep.subr.bf16.mxu0 0
  %9822 = vmatpush2.bf16.msra.mxu0 0
  %9823 = vmatprep.subr.bf16.mxu0 0
  %9824 = vmatpush2.bf16.msra.mxu0 0
  %9825 = vmatprep.subr.bf16.mxu0 0
  %9826 = vmatpush2.bf16.msra.mxu0 0
  %9827 = vmatprep.mubr.bf16.mxu0 0
  %9828 = vmatmul.mubr.bf16.gmra.mxu0 %v9793
  %v9829 = vpop.f32.mrf.mxu0
  %v9830 = vadd.f32 %v9766, %v9829
  %v9831 = vpop.f32.mrf.mxu0
  %v9832 = vpop.f32.mrf.mxu0
  %v9833 = vadd.f32 %v9766, %v9832
  %v9834 = vpop.f32.mrf.mxu0
  %9835 = vdwg.mxu0
  %v9836 = vmax.f32 %v9830, 0.0
  %v9837 = vmax.f32 %v9833, 0.0
  %v9838 = vpack.c.bf16 %v9837, %v9836
  %v9839 = vld [vmem:[%s12] sm:$0xf]
  %v9840 = vld [vmem:[%s12 + $0x4] sm:$0xf]
  %v9841 = vld [vmem:[%s12 + $0x8] sm:$0xf]
  %v9842 = vld [vmem:[%s12 + $0xc] sm:$0xf]
  %v9843 = vld [vmem:[%s12 + $0x10] sm:$0xf]
  %v9844 = vld [vmem:[%s12 + $0x14] sm:$0xf]
  %v9845 = vld [vmem:[%s12 + $0x18] sm:$0xf]
  %v9846 = vld [vmem:[%s12 + $0x1c] sm:$0xf]
  %v9848 = vlaneseq
  %v9849 = vshrl.u32 %v9848, 7
  %v9850 = vsub.s32 0, %v9849
  %v9851 = vrot.slane %v1123, %v9850
  %v9861 = vunpack.c.l.b16 %v9839
  %v9862 = vunpack.c.l.b16 %v9840
  %v9863 = vunpack.c.l.b16 %v9841
  %v9864 = vunpack.c.l.b16 %v9842
  %v9865 = vunpack.c.l.b16 %v9843
  %v9866 = vunpack.c.l.b16 %v9844
  %v9867 = vunpack.c.l.b16 %v9845
  %v9868 = vunpack.c.l.b16 %v9846
  %v9869 = vpack.c.b16 %v9862, %v9861
  %v9870 = vpack.c.b16 %v9864, %v9863
  %v9871 = vpack.c.b16 %v9866, %v9865
  %v9872 = vpack.c.b16 %v9868, %v9867
  %v9878 = vsel %vm9684, %v9838, 0
  %9880 = vmatprep.subr.bf16.mxu0 0
  %9881 = vmatpush1.bf16.msra.mxu0 0
  %9882 = vmatprep.subr.bf16.mxu0 0
  %9883 = vmatpush1.bf16.msra.mxu0 0
  %9884 = vmatprep.subr.bf16.mxu0 0
  %9885 = vmatpush1.bf16.msra.mxu0 0
  %9886 = vmatprep.subr.bf16.mxu0 0
  %9887 = vmatpush1.bf16.msra.mxu0 0
  %9888 = vmatprep.subr.bf16.mxu0 0
  %9889 = vmatpush1.bf16.msra.mxu0 %v9872
  %9890 = vmatprep.subr.bf16.mxu0 0
  %9891 = vmatpush1.bf16.msra.mxu0 %v9871
  %9892 = vmatprep.subr.bf16.mxu0 0
  %9893 = vmatpush1.bf16.msra.mxu0 %v9870
  %9894 = vmatprep.subr.bf16.mxu0 0
  %9895 = vmatpush1.bf16.msra.mxu0 %v9869
  %9896 = vmatprep.subr.bf16.mxu0 0
  %9897 = vmatpush2.bf16.msra.mxu0 0
  %9898 = vmatprep.subr.bf16.mxu0 0
  %9899 = vmatpush2.bf16.msra.mxu0 0
  %9900 = vmatprep.subr.bf16.mxu0 0
  %9901 = vmatpush2.bf16.msra.mxu0 0
  %9902 = vmatprep.subr.bf16.mxu0 0
  %9903 = vmatpush2.bf16.msra.mxu0 0
  %9904 = vmatprep.subr.bf16.mxu0 0
  %9905 = vmatpush2.bf16.msra.mxu0 0
  %9906 = vmatprep.subr.bf16.mxu0 0
  %9907 = vmatpush2.bf16.msra.mxu0 0
  %9908 = vmatprep.subr.bf16.mxu0 0
  %9909 = vmatpush2.bf16.msra.mxu0 0
  %9910 = vmatprep.subr.bf16.mxu0 0
  %9911 = vmatpush2.bf16.msra.mxu0 0
  %9912 = vmatprep.mubr.bf16.mxu0 0
  %9913 = vmatmul.mubr.bf16.gmra.mxu0 %v9878
  %v9914 = vpop.f32.mrf.mxu0
  %v9915 = vadd.f32 %v9851, %v9914
  %v9916 = vpop.f32.mrf.mxu0
  %v9917 = vpop.f32.mrf.mxu0
  %v9918 = vadd.f32 %v9851, %v9917
  %v9919 = vpop.f32.mrf.mxu0
  %9920 = vdwg.mxu0
  %vm9921 = vcmask 23552
  %v9922 = vsel %vm9921, %v9915, -inf
  %9923 = vmax.xlane.f32.xlu0 %v9922
  %v9924 = vpop.xlane.xlu0 %9923
  %v9925 = vsel %vm9921, %v9918, -inf
  %9926 = vmax.xlane.f32.xlu0 %v9925
  %v9927 = vpop.xlane.xlu0 %9926
  %v9928 = vsub.f32 %v9915, %v9924
  %v9929 = vsub.f32 %v9918, %v9927
  %v9930 = vmul.f32 %v9928, 1.442695
  %v9931 = vpow.pop %v9930
  %v9932 = vmul.f32 %v9929, 1.442695
  %v9933 = vpow.pop %v9932
  %v9934 = vsel %vm9921, %v9931, 0.0
  %9935 = vadd.xlane.f32.xlu0 %v9934
  %v9936 = vpop.xlane.xlu0 %9935
  %v9937 = vsel %vm9921, %v9933, 0.0
  %9938 = vadd.xlane.f32.xlu0 %v9937
  %v9939 = vpop.xlane.xlu0 %9938
  %v9940 = vrcp.pop %v9936
  %v9941 = vmul.f32 %v9931, %v9940
  %v9942 = vrcp.pop %v9939
  %v9943 = vmul.f32 %v9933, %v9942
  %9944 = vst.msk [vmem:[%s13] sm:$0xff] %vm9921, %v9941
  %9945 = vst.msk [vmem:[%s13 + $0x8] sm:$0xff] %vm9921, %v9943
  // Predicated region
  $region114: #{my_gnn_forward.1} parent=0 // pred_check
    _
  $region115: #{my_gnn_forward.1} parent=0 // pred_check_branch
    %9947 = sbr.rel (0) target = $region117
  $region116: #{my_gnn_forward.1} parent=0 // pred_region
    _
  $region117: #{my_gnn_forward.1} parent=0 // pred_fallthru
    _
  // Predicated region
  $region118: #{my_gnn_forward.1} parent=0 // pred_check
    _
  $region119: #{my_gnn_forward.1} parent=0 // pred_check_branch
    %9949 = sbr.rel (0) target = $region121
  $region120: #{my_gnn_forward.1} parent=0 // pred_region
    _
  $region121: #{my_gnn_forward.1} parent=0 // pred_fallthru
    _
  %9950 = vsyncmov [#allocation6]
  %s9951 = vpop.sfrf %9950
  %p9952 = scmp.eq.s32.totalorder %s9951, 0
  %p9953 = pneg %p9952
  %9955 = shalt.err (%p9953)
  %s9956 = scalar_lea.sflag [#allocation6], 1
  %9957 = vsyncmov %s9956
  %s9958 = vpop.sfrf %9957
  %p9959 = scmp.eq.s32.totalorder %s9958, 0
  %p9960 = pneg %p9959
  %9962 = shalt.err (%p9960)

</llo_original>
